<compile_context>
chip_gen: v7x
topology: tpu7x:2x2x1
jax: 0.10.0
libtpu: 0.0.40
codegen_flags: <defaults>
</compile_context>

<pallas_src>
import functools
import math

import jax
import jax.numpy as jnp
from jax import lax
from jax.experimental import pallas as pl
from jax.experimental.pallas import tpu as pltpu

WEIGHT_SPARSITY = 0.4   # SparseWeights(module, 0.4)
ACT_SPARSITY = 0.4      # ActivationSparsity(act_sparsity=0.4)


def _k_winners(pre, k):
    """Inference-mode k-winner-take-all along the feature (lane) axis.

    Keeps every entry >= the k-th largest value of its row (ties at the k-th
    value are all kept, identical to the rank-based formulation with strict >),
    zeroes the rest.  Implemented as an iterative threshold descent: start at
    the row max and step down through distinct values until at least k elements
    clear the threshold.  Uses only (B, H) lane reductions and VPU selects.
    """
    h = pre.shape[-1]
    if k >= h:
        return pre
    kf = jnp.float32(k)

    thr = jnp.max(pre, axis=-1, keepdims=True)                               # (B, 1)
    cnt = jnp.sum(jnp.where(pre >= thr, 1.0, 0.0), axis=-1, keepdims=True)   # (B, 1)

    def lower_threshold(_, carry):
        thr, cnt = carry
        need_more = cnt < kf
        below = jnp.where(pre < thr, pre, -jnp.inf)
        nxt = jnp.max(below, axis=-1, keepdims=True)
        ncnt = jnp.sum(jnp.where(pre >= nxt, 1.0, 0.0), axis=-1, keepdims=True)
        thr = jnp.where(need_more, nxt, thr)
        cnt = jnp.where(need_more, ncnt, cnt)
        return thr, cnt

    # At most k-1 descents are needed (each distinct value adds >= 1 to cnt).
    thr, _ = lax.fori_loop(0, k - 1, lower_threshold, (thr, cnt), unroll=True)
    return jnp.where(pre >= thr, pre, jnp.zeros_like(pre))


def _cell_seq_kernel(k_winners, seq_len, batch,
                     zs_ref, h0_ref, whzT_ref, whhT_ref, bh_ref, wxT_ref, bx_ref,
                     x_out_ref, h_out_ref):
    """Whole sequence in a single kernel invocation (no grid).

    zs_ref: (T, B, 2tx), h0_ref: (B, H); weights are pre-transposed.
    x_out_ref: (T*B, 2tx), h_out_ref: (T*B, H)   (wrapper reshapes back).
    """
    # Hoist weight/bias loads and the bias broadcast out of the time loop.
    whz = whzT_ref[...]                                   # (2tx, H)
    whh = whhT_ref[...]                                   # (H, H)
    hidden = whh.shape[1]
    bh = jnp.broadcast_to(bh_ref[...], (batch, hidden))   # (B, H)

    def step(t, h_prev):
        z = zs_ref[t]                                     # (B, 2tx) current timestep
        # linear_h on the (implicit) concat [z, h_prev]: two MXU matmuls, f32 acc.
        pre = (jnp.dot(z, whz, preferred_element_type=jnp.float32)
               + jnp.dot(h_prev, whh, preferred_element_type=jnp.float32)
               + bh)
        h = _k_winners(pre, k_winners)
        row = pl.multiple_of(t * batch, batch)            # sublane-aligned store
        h_out_ref[pl.ds(row, batch), :] = h
        return h

    lax.fori_loop(0, seq_len, step, h0_ref[...], unroll=True)

    # linear_x batched over the whole sequence: one (T*B, H) @ (H, 2tx) matmul
    # + a single lane-contiguous store (instead of T tiny M=8 matmuls/stores).
    h_all = h_out_ref[...]
    x_out_ref[...] = (jnp.dot(h_all, wxT_ref[...], preferred_element_type=jnp.float32)
                      + bx_ref[...])


def recurrent_cell_forward_seq(zs, h0, params):
    """Fused recurrence.

    zs: (T, B, 2tx), h0: (B, H) -> (x_out (T, B, 2tx), h (T, B, H)).
    """
    whzT, whhT, bh, wxT, bx = params   # (2tx,H), (H,H), (1,H), (H,2tx), (1,2tx)
    seq_len, batch, two_tx = zs.shape
    hidden = whhT.shape[1]
    k_winners = int(round((1.0 - ACT_SPARSITY) * hidden))

    vmem = pl.BlockSpec(memory_space=pltpu.MemorySpace.VMEM)   # whole array, VMEM-resident
    kernel = functools.partial(_cell_seq_kernel, k_winners, seq_len, batch)

    x_flat, h_flat = pl.pallas_call(
        kernel,
        out_shape=(jax.ShapeDtypeStruct((seq_len * batch, two_tx), jnp.float32),
                   jax.ShapeDtypeStruct((seq_len * batch, hidden), jnp.float32)),
        in_specs=[vmem] * 7,
        out_specs=(vmem, vmem),
    )(zs, h0, whzT, whhT, bh, wxT, bx)

    return (x_flat.reshape(seq_len, batch, two_tx),
            h_flat.reshape(seq_len, batch, hidden))


def recurrent_cell_forward(z, h_pre, params):
    """Single RecurrentCell step (matches the PyTorch module forward):
    z: (B, 2tx), h_pre: (B, H) -> (x_out (B, 2tx), h (B, H))."""
    x_all, h_all = recurrent_cell_forward_seq(z[None], h_pre, params)
    return x_all[0], h_all[0]


def init_sparse_linear(key, out_features, in_features, weight_sparsity):
    """Deterministic re-implementation of normalizeSparseWeights + SparseWeights
    re-zeroing (kaiming-uniform scaled by the sparse fan-in, then exactly
    numZeros random inputs per output unit are zeroed)."""
    kw, kb, km = jax.random.split(key, 3)

    fan = int(in_features * weight_sparsity)
    gain = math.sqrt(2.0 / (1.0 + 5.0))          # calculate_gain('leaky_relu', sqrt(5))
    std = gain / math.sqrt(fan)
    w_bound = math.sqrt(3.0) * std
    w = jax.random.uniform(kw, (out_features, in_features), jnp.float32,
                           -w_bound, w_bound)

    b_bound = 1.0 / math.sqrt(fan)
    b = jax.random.uniform(kb, (out_features,), jnp.float32, -b_bound, b_bound)

    # zero exactly numZeros randomly-chosen inputs per output unit
    num_zeros = int(round((1.0 - weight_sparsity) * in_features))
    scores = jax.random.uniform(km, (out_features, in_features))
    order = jnp.argsort(scores, axis=1)
    rows = jnp.arange(out_features)[:, None]
    zero_mask = jnp.zeros((out_features, in_features), bool)
    zero_mask = zero_mask.at[rows, order[:, :num_zeros]].set(True)
    w = jnp.where(zero_mask, 0.0, w)
    return w, b


def _reference_seq(zs, h0, params, k):
    """Pure-JAX reference (rank-based k-WTA, high-precision matmuls)."""
    whzT, whhT, bh, wxT, bx = params
    hi = lax.Precision.HIGHEST

    def step(h, z):
        pre = (jnp.dot(z, whzT, precision=hi)
               + jnp.dot(h, whhT, precision=hi) + bh)
        rank = jnp.sum((pre[:, None, :] > pre[:, :, None]).astype(jnp.int32), axis=-1)
        h_new = jnp.where(rank < k, pre, 0.0)
        x = jnp.dot(h_new, wxT, precision=hi) + bx
        return h_new, (x, h_new)

    _, (xs, hs) = lax.scan(step, h0, zs)
    return xs, hs


if __name__ == "__main__":
    tx = 8          # => 2*tx = 16 input/output features for z / x_out
    hidden = 32
    batch = 8       # fills the 8-sublane f32 tile
    seq_len = 6

    key = jax.random.PRNGKey(0)
    k_h, k_x, k_z, k_hp = jax.random.split(key, 4)

    # linear_h: Linear(hidden + 2*tx -> hidden) ; linear_x: Linear(hidden -> 2*tx)
    w_h, b_h = init_sparse_linear(k_h, hidden, hidden + 2 * tx, WEIGHT_SPARSITY)
    w_x, b_x = init_sparse_linear(k_x, 2 * tx, hidden, WEIGHT_SPARSITY)
    # Split W_h along the concat order [z, h_pre] and pre-transpose everything.
    params = (jnp.asarray(w_h[:, :2 * tx].T),     # W_hz^T : (2tx, H)
              jnp.asarray(w_h[:, 2 * tx:].T),     # W_hh^T : (H, H)
              b_h[None, :],                       # (1, H)
              jnp.asarray(w_x.T),                 # W_x^T  : (H, 2tx)
              b_x[None, :])                       # (1, 2tx)

    zs = jax.random.normal(k_z, (seq_len, batch, 2 * tx), jnp.float32)
    h0 = jax.random.normal(k_hp, (batch, hidden), jnp.float32)

    # Fused kernel: whole sequence in one pallas_call / one grid step.
    x_seq, h_seq = jax.jit(recurrent_cell_forward_seq)(zs, h0, params)
    jax.block_until_ready((x_seq, h_seq))
    assert x_seq.shape == (seq_len, batch, 2 * tx)
    assert h_seq.shape == (seq_len, batch, hidden)

    # Correctness vs pure-JAX rank-based reference.
    k_winners = int(round((1.0 - ACT_SPARSITY) * hidden))
    x_ref, h_ref = _reference_seq(zs, h0, params, k_winners)
    assert jnp.allclose(x_seq, x_ref, atol=1e-4, rtol=1e-4)
    assert jnp.allclose(h_seq, h_ref, atol=1e-4, rtol=1e-4)

    # Single-step module API (T=1 call into the same kernel) matches step 0.
    x0, h1 = recurrent_cell_forward(zs[0], h0, params)
    assert jnp.allclose(x0, x_seq[0], atol=1e-6, rtol=1e-6)
    assert jnp.allclose(h1, h_seq[0], atol=1e-6, rtol=1e-6)

    # Each row of h keeps exactly k_winners activations (no ties expected
    # with continuous random inputs).
    nnz = jnp.sum(h_seq != 0.0, axis=-1)
    assert bool(jnp.all(nnz == k_winners)), (nnz, k_winners)

    print("KERNEL_OK")
</pallas_src>

<mosaic_0001>
module attributes {stable_mosaic.version = 11 : i64} {
  func.func @_cell_seq_kernel(%arg0: memref<6x8x16xf32, #tpu.memory_space<vmem>>, %arg1: memref<8x32xf32, #tpu.memory_space<vmem>>, %arg2: memref<16x32xf32, #tpu.memory_space<vmem>>, %arg3: memref<32x32xf32, #tpu.memory_space<vmem>>, %arg4: memref<1x32xf32, #tpu.memory_space<vmem>>, %arg5: memref<32x16xf32, #tpu.memory_space<vmem>>, %arg6: memref<1x16xf32, #tpu.memory_space<vmem>>, %arg7: memref<48x16xf32, #tpu.memory_space<vmem>>, %arg8: memref<48x32xf32, #tpu.memory_space<vmem>>) attributes {dimension_semantics = [], scalar_prefetch = 0 : i64, scratch_operands = 0 : i64, tpu.core_type = #tpu.core_type<tc>} {
    %c0 = arith.constant 0 : index
    %c0_0 = arith.constant 0 : index
    %0 = vector.load %arg2[%c0, %c0_0] : memref<16x32xf32, #tpu.memory_space<vmem>>, vector<16x32xf32>
    %c0_1 = arith.constant 0 : index
    %c0_2 = arith.constant 0 : index
    %1 = vector.load %arg3[%c0_1, %c0_2] : memref<32x32xf32, #tpu.memory_space<vmem>>, vector<32x32xf32>
    %c0_3 = arith.constant 0 : index
    %c0_4 = arith.constant 0 : index
    %2 = vector.load %arg4[%c0_3, %c0_4] : memref<1x32xf32, #tpu.memory_space<vmem>>, vector<1x32xf32>
    %3 = vector.shape_cast %2 : vector<1x32xf32> to vector<1x32xf32>
    %4 = vector.broadcast %3 : vector<1x32xf32> to vector<8x32xf32>
    %c0_5 = arith.constant 0 : index
    %c0_6 = arith.constant 0 : index
    %5 = vector.load %arg1[%c0_5, %c0_6] : memref<8x32xf32, #tpu.memory_space<vmem>>, vector<8x32xf32>
    %c0_i32 = arith.constant 0 : i32
    %6 = arith.index_cast %c0_i32 : i32 to index
    %c0_7 = arith.constant 0 : index
    %c0_8 = arith.constant 0 : index
    %7 = vector.load %arg0[%6, %c0_7, %c0_8] : memref<6x8x16xf32, #tpu.memory_space<vmem>>, vector<1x8x16xf32>
    %8 = vector.shape_cast %7 : vector<1x8x16xf32> to vector<8x16xf32>
    %cst = arith.constant dense<0.000000e+00> : vector<8x32xf32>
    %9 = tpu.matmul %8, %0, %cst {dimension_numbers = #tpu.dot_dimension_numbers<[1], [0], [0], [1], [0, 0, 1, 1], [], []>} : vector<8x16xf32>, vector<16x32xf32>, vector<8x32xf32> -> vector<8x32xf32>
    %cst_9 = arith.constant dense<0.000000e+00> : vector<8x32xf32>
    %10 = tpu.matmul %5, %1, %cst_9 {dimension_numbers = #tpu.dot_dimension_numbers<[1], [0], [0], [1], [0, 0, 1, 1], [], []>} : vector<8x32xf32>, vector<32x32xf32>, vector<8x32xf32> -> vector<8x32xf32>
    %11 = arith.addf %9, %10 : vector<8x32xf32>
    %12 = arith.addf %11, %4 : vector<8x32xf32>
    %cst_10 = arith.constant dense<0xFF800000> : vector<8xf32>
    %13 = vector.multi_reduction <maximumf>, %12, %cst_10 [1] : vector<8x32xf32> to vector<8xf32>
    %14 = vector.shape_cast %13 : vector<8xf32> to vector<8x1xf32>
    %15 = vector.broadcast %14 : vector<8x1xf32> to vector<8x32xf32>
    %16 = arith.cmpf oge, %12, %15 : vector<8x32xf32>
    %cst_11 = arith.constant 1.000000e+00 : f32
    %cst_12 = arith.constant 0.000000e+00 : f32
    %17 = vector.broadcast %cst_11 : f32 to vector<8x32xf32>
    %18 = vector.broadcast %cst_12 : f32 to vector<8x32xf32>
    %19 = arith.select %16, %17, %18 : vector<8x32xi1>, vector<8x32xf32>
    %cst_13 = arith.constant dense<0.000000e+00> : vector<8xf32>
    %20 = vector.multi_reduction <add>, %19, %cst_13 [1] : vector<8x32xf32> to vector<8xf32>
    %21 = vector.shape_cast %20 : vector<8xf32> to vector<8x1xf32>
    %cst_14 = arith.constant 1.900000e+01 : f32
    %c0_i32_15 = arith.constant 0 : i32
    %22 = vector.broadcast %cst_14 : f32 to vector<8x1xf32>
    %23 = arith.cmpf olt, %21, %22 : vector<8x1xf32>
    %24 = vector.broadcast %14 : vector<8x1xf32> to vector<8x32xf32>
    %25 = arith.cmpf olt, %12, %24 : vector<8x32xf32>
    %cst_16 = arith.constant 0xFF800000 : f32
    %26 = vector.broadcast %cst_16 : f32 to vector<8x32xf32>
    %27 = arith.select %25, %12, %26 : vector<8x32xi1>, vector<8x32xf32>
    %cst_17 = arith.constant dense<0xFF800000> : vector<8xf32>
    %28 = vector.multi_reduction <maximumf>, %27, %cst_17 [1] : vector<8x32xf32> to vector<8xf32>
    %29 = vector.shape_cast %28 : vector<8xf32> to vector<8x1xf32>
    %30 = vector.broadcast %29 : vector<8x1xf32> to vector<8x32xf32>
    %31 = arith.cmpf oge, %12, %30 : vector<8x32xf32>
    %cst_18 = arith.constant 1.000000e+00 : f32
    %cst_19 = arith.constant 0.000000e+00 : f32
    %32 = vector.broadcast %cst_18 : f32 to vector<8x32xf32>
    %33 = vector.broadcast %cst_19 : f32 to vector<8x32xf32>
    %34 = arith.select %31, %32, %33 : vector<8x32xi1>, vector<8x32xf32>
    %cst_20 = arith.constant dense<0.000000e+00> : vector<8xf32>
    %35 = vector.multi_reduction <add>, %34, %cst_20 [1] : vector<8x32xf32> to vector<8xf32>
    %36 = vector.shape_cast %35 : vector<8xf32> to vector<8x1xf32>
    %37 = arith.select %23, %29, %14 : vector<8x1xi1>, vector<8x1xf32>
    %38 = arith.select %23, %36, %21 : vector<8x1xi1>, vector<8x1xf32>
    %c1_i32 = arith.constant 1 : i32
    %39 = vector.broadcast %cst_14 : f32 to vector<8x1xf32>
    %40 = arith.cmpf olt, %38, %39 : vector<8x1xf32>
    %41 = vector.broadcast %37 : vector<8x1xf32> to vector<8x32xf32>
    %42 = arith.cmpf olt, %12, %41 : vector<8x32xf32>
    %cst_21 = arith.constant 0xFF800000 : f32
    %43 = vector.broadcast %cst_21 : f32 to vector<8x32xf32>
    %44 = arith.select %42, %12, %43 : vector<8x32xi1>, vector<8x32xf32>
    %cst_22 = arith.constant dense<0xFF800000> : vector<8xf32>
    %45 = vector.multi_reduction <maximumf>, %44, %cst_22 [1] : vector<8x32xf32> to vector<8xf32>
    %46 = vector.shape_cast %45 : vector<8xf32> to vector<8x1xf32>
    %47 = vector.broadcast %46 : vector<8x1xf32> to vector<8x32xf32>
    %48 = arith.cmpf oge, %12, %47 : vector<8x32xf32>
    %cst_23 = arith.constant 1.000000e+00 : f32
    %cst_24 = arith.constant 0.000000e+00 : f32
    %49 = vector.broadcast %cst_23 : f32 to vector<8x32xf32>
    %50 = vector.broadcast %cst_24 : f32 to vector<8x32xf32>
    %51 = arith.select %48, %49, %50 : vector<8x32xi1>, vector<8x32xf32>
    %cst_25 = arith.constant dense<0.000000e+00> : vector<8xf32>
    %52 = vector.multi_reduction <add>, %51, %cst_25 [1] : vector<8x32xf32> to vector<8xf32>
    %53 = vector.shape_cast %52 : vector<8xf32> to vector<8x1xf32>
    %54 = arith.select %40, %46, %37 : vector<8x1xi1>, vector<8x1xf32>
    %55 = arith.select %40, %53, %38 : vector<8x1xi1>, vector<8x1xf32>
    %c2_i32 = arith.constant 2 : i32
    %56 = vector.broadcast %cst_14 : f32 to vector<8x1xf32>
    %57 = arith.cmpf olt, %55, %56 : vector<8x1xf32>
    %58 = vector.broadcast %54 : vector<8x1xf32> to vector<8x32xf32>
    %59 = arith.cmpf olt, %12, %58 : vector<8x32xf32>
    %cst_26 = arith.constant 0xFF800000 : f32
    %60 = vector.broadcast %cst_26 : f32 to vector<8x32xf32>
    %61 = arith.select %59, %12, %60 : vector<8x32xi1>, vector<8x32xf32>
    %cst_27 = arith.constant dense<0xFF800000> : vector<8xf32>
    %62 = vector.multi_reduction <maximumf>, %61, %cst_27 [1] : vector<8x32xf32> to vector<8xf32>
    %63 = vector.shape_cast %62 : vector<8xf32> to vector<8x1xf32>
    %64 = vector.broadcast %63 : vector<8x1xf32> to vector<8x32xf32>
    %65 = arith.cmpf oge, %12, %64 : vector<8x32xf32>
    %cst_28 = arith.constant 1.000000e+00 : f32
    %cst_29 = arith.constant 0.000000e+00 : f32
    %66 = vector.broadcast %cst_28 : f32 to vector<8x32xf32>
    %67 = vector.broadcast %cst_29 : f32 to vector<8x32xf32>
    %68 = arith.select %65, %66, %67 : vector<8x32xi1>, vector<8x32xf32>
    %cst_30 = arith.constant dense<0.000000e+00> : vector<8xf32>
    %69 = vector.multi_reduction <add>, %68, %cst_30 [1] : vector<8x32xf32> to vector<8xf32>
    %70 = vector.shape_cast %69 : vector<8xf32> to vector<8x1xf32>
    %71 = arith.select %57, %63, %54 : vector<8x1xi1>, vector<8x1xf32>
    %72 = arith.select %57, %70, %55 : vector<8x1xi1>, vector<8x1xf32>
    %c3_i32 = arith.constant 3 : i32
    %73 = vector.broadcast %cst_14 : f32 to vector<8x1xf32>
    %74 = arith.cmpf olt, %72, %73 : vector<8x1xf32>
    %75 = vector.broadcast %71 : vector<8x1xf32> to vector<8x32xf32>
    %76 = arith.cmpf olt, %12, %75 : vector<8x32xf32>
    %cst_31 = arith.constant 0xFF800000 : f32
    %77 = vector.broadcast %cst_31 : f32 to vector<8x32xf32>
    %78 = arith.select %76, %12, %77 : vector<8x32xi1>, vector<8x32xf32>
    %cst_32 = arith.constant dense<0xFF800000> : vector<8xf32>
    %79 = vector.multi_reduction <maximumf>, %78, %cst_32 [1] : vector<8x32xf32> to vector<8xf32>
    %80 = vector.shape_cast %79 : vector<8xf32> to vector<8x1xf32>
    %81 = vector.broadcast %80 : vector<8x1xf32> to vector<8x32xf32>
    %82 = arith.cmpf oge, %12, %81 : vector<8x32xf32>
    %cst_33 = arith.constant 1.000000e+00 : f32
    %cst_34 = arith.constant 0.000000e+00 : f32
    %83 = vector.broadcast %cst_33 : f32 to vector<8x32xf32>
    %84 = vector.broadcast %cst_34 : f32 to vector<8x32xf32>
    %85 = arith.select %82, %83, %84 : vector<8x32xi1>, vector<8x32xf32>
    %cst_35 = arith.constant dense<0.000000e+00> : vector<8xf32>
    %86 = vector.multi_reduction <add>, %85, %cst_35 [1] : vector<8x32xf32> to vector<8xf32>
    %87 = vector.shape_cast %86 : vector<8xf32> to vector<8x1xf32>
    %88 = arith.select %74, %80, %71 : vector<8x1xi1>, vector<8x1xf32>
    %89 = arith.select %74, %87, %72 : vector<8x1xi1>, vector<8x1xf32>
    %c4_i32 = arith.constant 4 : i32
    %90 = vector.broadcast %cst_14 : f32 to vector<8x1xf32>
    %91 = arith.cmpf olt, %89, %90 : vector<8x1xf32>
    %92 = vector.broadcast %88 : vector<8x1xf32> to vector<8x32xf32>
    %93 = arith.cmpf olt, %12, %92 : vector<8x32xf32>
    %cst_36 = arith.constant 0xFF800000 : f32
    %94 = vector.broadcast %cst_36 : f32 to vector<8x32xf32>
    %95 = arith.select %93, %12, %94 : vector<8x32xi1>, vector<8x32xf32>
    %cst_37 = arith.constant dense<0xFF800000> : vector<8xf32>
    %96 = vector.multi_reduction <maximumf>, %95, %cst_37 [1] : vector<8x32xf32> to vector<8xf32>
    %97 = vector.shape_cast %96 : vector<8xf32> to vector<8x1xf32>
    %98 = vector.broadcast %97 : vector<8x1xf32> to vector<8x32xf32>
    %99 = arith.cmpf oge, %12, %98 : vector<8x32xf32>
    %cst_38 = arith.constant 1.000000e+00 : f32
    %cst_39 = arith.constant 0.000000e+00 : f32
    %100 = vector.broadcast %cst_38 : f32 to vector<8x32xf32>
    %101 = vector.broadcast %cst_39 : f32 to vector<8x32xf32>
    %102 = arith.select %99, %100, %101 : vector<8x32xi1>, vector<8x32xf32>
    %cst_40 = arith.constant dense<0.000000e+00> : vector<8xf32>
    %103 = vector.multi_reduction <add>, %102, %cst_40 [1] : vector<8x32xf32> to vector<8xf32>
    %104 = vector.shape_cast %103 : vector<8xf32> to vector<8x1xf32>
    %105 = arith.select %91, %97, %88 : vector<8x1xi1>, vector<8x1xf32>
    %106 = arith.select %91, %104, %89 : vector<8x1xi1>, vector<8x1xf32>
    %c5_i32 = arith.constant 5 : i32
    %107 = vector.broadcast %cst_14 : f32 to vector<8x1xf32>
    %108 = arith.cmpf olt, %106, %107 : vector<8x1xf32>
    %109 = vector.broadcast %105 : vector<8x1xf32> to vector<8x32xf32>
    %110 = arith.cmpf olt, %12, %109 : vector<8x32xf32>
    %cst_41 = arith.constant 0xFF800000 : f32
    %111 = vector.broadcast %cst_41 : f32 to vector<8x32xf32>
    %112 = arith.select %110, %12, %111 : vector<8x32xi1>, vector<8x32xf32>
    %cst_42 = arith.constant dense<0xFF800000> : vector<8xf32>
    %113 = vector.multi_reduction <maximumf>, %112, %cst_42 [1] : vector<8x32xf32> to vector<8xf32>
    %114 = vector.shape_cast %113 : vector<8xf32> to vector<8x1xf32>
    %115 = vector.broadcast %114 : vector<8x1xf32> to vector<8x32xf32>
    %116 = arith.cmpf oge, %12, %115 : vector<8x32xf32>
    %cst_43 = arith.constant 1.000000e+00 : f32
    %cst_44 = arith.constant 0.000000e+00 : f32
    %117 = vector.broadcast %cst_43 : f32 to vector<8x32xf32>
    %118 = vector.broadcast %cst_44 : f32 to vector<8x32xf32>
    %119 = arith.select %116, %117, %118 : vector<8x32xi1>, vector<8x32xf32>
    %cst_45 = arith.constant dense<0.000000e+00> : vector<8xf32>
    %120 = vector.multi_reduction <add>, %119, %cst_45 [1] : vector<8x32xf32> to vector<8xf32>
    %121 = vector.shape_cast %120 : vector<8xf32> to vector<8x1xf32>
    %122 = arith.select %108, %114, %105 : vector<8x1xi1>, vector<8x1xf32>
    %123 = arith.select %108, %121, %106 : vector<8x1xi1>, vector<8x1xf32>
    %c6_i32 = arith.constant 6 : i32
    %124 = vector.broadcast %cst_14 : f32 to vector<8x1xf32>
    %125 = arith.cmpf olt, %123, %124 : vector<8x1xf32>
    %126 = vector.broadcast %122 : vector<8x1xf32> to vector<8x32xf32>
    %127 = arith.cmpf olt, %12, %126 : vector<8x32xf32>
    %cst_46 = arith.constant 0xFF800000 : f32
    %128 = vector.broadcast %cst_46 : f32 to vector<8x32xf32>
    %129 = arith.select %127, %12, %128 : vector<8x32xi1>, vector<8x32xf32>
    %cst_47 = arith.constant dense<0xFF800000> : vector<8xf32>
    %130 = vector.multi_reduction <maximumf>, %129, %cst_47 [1] : vector<8x32xf32> to vector<8xf32>
    %131 = vector.shape_cast %130 : vector<8xf32> to vector<8x1xf32>
    %132 = vector.broadcast %131 : vector<8x1xf32> to vector<8x32xf32>
    %133 = arith.cmpf oge, %12, %132 : vector<8x32xf32>
    %cst_48 = arith.constant 1.000000e+00 : f32
    %cst_49 = arith.constant 0.000000e+00 : f32
    %134 = vector.broadcast %cst_48 : f32 to vector<8x32xf32>
    %135 = vector.broadcast %cst_49 : f32 to vector<8x32xf32>
    %136 = arith.select %133, %134, %135 : vector<8x32xi1>, vector<8x32xf32>
    %cst_50 = arith.constant dense<0.000000e+00> : vector<8xf32>
    %137 = vector.multi_reduction <add>, %136, %cst_50 [1] : vector<8x32xf32> to vector<8xf32>
    %138 = vector.shape_cast %137 : vector<8xf32> to vector<8x1xf32>
    %139 = arith.select %125, %131, %122 : vector<8x1xi1>, vector<8x1xf32>
    %140 = arith.select %125, %138, %123 : vector<8x1xi1>, vector<8x1xf32>
    %c7_i32 = arith.constant 7 : i32
    %141 = vector.broadcast %cst_14 : f32 to vector<8x1xf32>
    %142 = arith.cmpf olt, %140, %141 : vector<8x1xf32>
    %143 = vector.broadcast %139 : vector<8x1xf32> to vector<8x32xf32>
    %144 = arith.cmpf olt, %12, %143 : vector<8x32xf32>
    %cst_51 = arith.constant 0xFF800000 : f32
    %145 = vector.broadcast %cst_51 : f32 to vector<8x32xf32>
    %146 = arith.select %144, %12, %145 : vector<8x32xi1>, vector<8x32xf32>
    %cst_52 = arith.constant dense<0xFF800000> : vector<8xf32>
    %147 = vector.multi_reduction <maximumf>, %146, %cst_52 [1] : vector<8x32xf32> to vector<8xf32>
    %148 = vector.shape_cast %147 : vector<8xf32> to vector<8x1xf32>
    %149 = vector.broadcast %148 : vector<8x1xf32> to vector<8x32xf32>
    %150 = arith.cmpf oge, %12, %149 : vector<8x32xf32>
    %cst_53 = arith.constant 1.000000e+00 : f32
    %cst_54 = arith.constant 0.000000e+00 : f32
    %151 = vector.broadcast %cst_53 : f32 to vector<8x32xf32>
    %152 = vector.broadcast %cst_54 : f32 to vector<8x32xf32>
    %153 = arith.select %150, %151, %152 : vector<8x32xi1>, vector<8x32xf32>
    %cst_55 = arith.constant dense<0.000000e+00> : vector<8xf32>
    %154 = vector.multi_reduction <add>, %153, %cst_55 [1] : vector<8x32xf32> to vector<8xf32>
    %155 = vector.shape_cast %154 : vector<8xf32> to vector<8x1xf32>
    %156 = arith.select %142, %148, %139 : vector<8x1xi1>, vector<8x1xf32>
    %157 = arith.select %142, %155, %140 : vector<8x1xi1>, vector<8x1xf32>
    %c8_i32 = arith.constant 8 : i32
    %158 = vector.broadcast %cst_14 : f32 to vector<8x1xf32>
    %159 = arith.cmpf olt, %157, %158 : vector<8x1xf32>
    %160 = vector.broadcast %156 : vector<8x1xf32> to vector<8x32xf32>
    %161 = arith.cmpf olt, %12, %160 : vector<8x32xf32>
    %cst_56 = arith.constant 0xFF800000 : f32
    %162 = vector.broadcast %cst_56 : f32 to vector<8x32xf32>
    %163 = arith.select %161, %12, %162 : vector<8x32xi1>, vector<8x32xf32>
    %cst_57 = arith.constant dense<0xFF800000> : vector<8xf32>
    %164 = vector.multi_reduction <maximumf>, %163, %cst_57 [1] : vector<8x32xf32> to vector<8xf32>
    %165 = vector.shape_cast %164 : vector<8xf32> to vector<8x1xf32>
    %166 = vector.broadcast %165 : vector<8x1xf32> to vector<8x32xf32>
    %167 = arith.cmpf oge, %12, %166 : vector<8x32xf32>
    %cst_58 = arith.constant 1.000000e+00 : f32
    %cst_59 = arith.constant 0.000000e+00 : f32
    %168 = vector.broadcast %cst_58 : f32 to vector<8x32xf32>
    %169 = vector.broadcast %cst_59 : f32 to vector<8x32xf32>
    %170 = arith.select %167, %168, %169 : vector<8x32xi1>, vector<8x32xf32>
    %cst_60 = arith.constant dense<0.000000e+00> : vector<8xf32>
    %171 = vector.multi_reduction <add>, %170, %cst_60 [1] : vector<8x32xf32> to vector<8xf32>
    %172 = vector.shape_cast %171 : vector<8xf32> to vector<8x1xf32>
    %173 = arith.select %159, %165, %156 : vector<8x1xi1>, vector<8x1xf32>
    %174 = arith.select %159, %172, %157 : vector<8x1xi1>, vector<8x1xf32>
    %c9_i32 = arith.constant 9 : i32
    %175 = vector.broadcast %cst_14 : f32 to vector<8x1xf32>
    %176 = arith.cmpf olt, %174, %175 : vector<8x1xf32>
    %177 = vector.broadcast %173 : vector<8x1xf32> to vector<8x32xf32>
    %178 = arith.cmpf olt, %12, %177 : vector<8x32xf32>
    %cst_61 = arith.constant 0xFF800000 : f32
    %179 = vector.broadcast %cst_61 : f32 to vector<8x32xf32>
    %180 = arith.select %178, %12, %179 : vector<8x32xi1>, vector<8x32xf32>
    %cst_62 = arith.constant dense<0xFF800000> : vector<8xf32>
    %181 = vector.multi_reduction <maximumf>, %180, %cst_62 [1] : vector<8x32xf32> to vector<8xf32>
    %182 = vector.shape_cast %181 : vector<8xf32> to vector<8x1xf32>
    %183 = vector.broadcast %182 : vector<8x1xf32> to vector<8x32xf32>
    %184 = arith.cmpf oge, %12, %183 : vector<8x32xf32>
    %cst_63 = arith.constant 1.000000e+00 : f32
    %cst_64 = arith.constant 0.000000e+00 : f32
    %185 = vector.broadcast %cst_63 : f32 to vector<8x32xf32>
    %186 = vector.broadcast %cst_64 : f32 to vector<8x32xf32>
    %187 = arith.select %184, %185, %186 : vector<8x32xi1>, vector<8x32xf32>
    %cst_65 = arith.constant dense<0.000000e+00> : vector<8xf32>
    %188 = vector.multi_reduction <add>, %187, %cst_65 [1] : vector<8x32xf32> to vector<8xf32>
    %189 = vector.shape_cast %188 : vector<8xf32> to vector<8x1xf32>
    %190 = arith.select %176, %182, %173 : vector<8x1xi1>, vector<8x1xf32>
    %191 = arith.select %176, %189, %174 : vector<8x1xi1>, vector<8x1xf32>
    %c10_i32 = arith.constant 10 : i32
    %192 = vector.broadcast %cst_14 : f32 to vector<8x1xf32>
    %193 = arith.cmpf olt, %191, %192 : vector<8x1xf32>
    %194 = vector.broadcast %190 : vector<8x1xf32> to vector<8x32xf32>
    %195 = arith.cmpf olt, %12, %194 : vector<8x32xf32>
    %cst_66 = arith.constant 0xFF800000 : f32
    %196 = vector.broadcast %cst_66 : f32 to vector<8x32xf32>
    %197 = arith.select %195, %12, %196 : vector<8x32xi1>, vector<8x32xf32>
    %cst_67 = arith.constant dense<0xFF800000> : vector<8xf32>
    %198 = vector.multi_reduction <maximumf>, %197, %cst_67 [1] : vector<8x32xf32> to vector<8xf32>
    %199 = vector.shape_cast %198 : vector<8xf32> to vector<8x1xf32>
    %200 = vector.broadcast %199 : vector<8x1xf32> to vector<8x32xf32>
    %201 = arith.cmpf oge, %12, %200 : vector<8x32xf32>
    %cst_68 = arith.constant 1.000000e+00 : f32
    %cst_69 = arith.constant 0.000000e+00 : f32
    %202 = vector.broadcast %cst_68 : f32 to vector<8x32xf32>
    %203 = vector.broadcast %cst_69 : f32 to vector<8x32xf32>
    %204 = arith.select %201, %202, %203 : vector<8x32xi1>, vector<8x32xf32>
    %cst_70 = arith.constant dense<0.000000e+00> : vector<8xf32>
    %205 = vector.multi_reduction <add>, %204, %cst_70 [1] : vector<8x32xf32> to vector<8xf32>
    %206 = vector.shape_cast %205 : vector<8xf32> to vector<8x1xf32>
    %207 = arith.select %193, %199, %190 : vector<8x1xi1>, vector<8x1xf32>
    %208 = arith.select %193, %206, %191 : vector<8x1xi1>, vector<8x1xf32>
    %c11_i32 = arith.constant 11 : i32
    %209 = vector.broadcast %cst_14 : f32 to vector<8x1xf32>
    %210 = arith.cmpf olt, %208, %209 : vector<8x1xf32>
    %211 = vector.broadcast %207 : vector<8x1xf32> to vector<8x32xf32>
    %212 = arith.cmpf olt, %12, %211 : vector<8x32xf32>
    %cst_71 = arith.constant 0xFF800000 : f32
    %213 = vector.broadcast %cst_71 : f32 to vector<8x32xf32>
    %214 = arith.select %212, %12, %213 : vector<8x32xi1>, vector<8x32xf32>
    %cst_72 = arith.constant dense<0xFF800000> : vector<8xf32>
    %215 = vector.multi_reduction <maximumf>, %214, %cst_72 [1] : vector<8x32xf32> to vector<8xf32>
    %216 = vector.shape_cast %215 : vector<8xf32> to vector<8x1xf32>
    %217 = vector.broadcast %216 : vector<8x1xf32> to vector<8x32xf32>
    %218 = arith.cmpf oge, %12, %217 : vector<8x32xf32>
    %cst_73 = arith.constant 1.000000e+00 : f32
    %cst_74 = arith.constant 0.000000e+00 : f32
    %219 = vector.broadcast %cst_73 : f32 to vector<8x32xf32>
    %220 = vector.broadcast %cst_74 : f32 to vector<8x32xf32>
    %221 = arith.select %218, %219, %220 : vector<8x32xi1>, vector<8x32xf32>
    %cst_75 = arith.constant dense<0.000000e+00> : vector<8xf32>
    %222 = vector.multi_reduction <add>, %221, %cst_75 [1] : vector<8x32xf32> to vector<8xf32>
    %223 = vector.shape_cast %222 : vector<8xf32> to vector<8x1xf32>
    %224 = arith.select %210, %216, %207 : vector<8x1xi1>, vector<8x1xf32>
    %225 = arith.select %210, %223, %208 : vector<8x1xi1>, vector<8x1xf32>
    %c12_i32 = arith.constant 12 : i32
    %226 = vector.broadcast %cst_14 : f32 to vector<8x1xf32>
    %227 = arith.cmpf olt, %225, %226 : vector<8x1xf32>
    %228 = vector.broadcast %224 : vector<8x1xf32> to vector<8x32xf32>
    %229 = arith.cmpf olt, %12, %228 : vector<8x32xf32>
    %cst_76 = arith.constant 0xFF800000 : f32
    %230 = vector.broadcast %cst_76 : f32 to vector<8x32xf32>
    %231 = arith.select %229, %12, %230 : vector<8x32xi1>, vector<8x32xf32>
    %cst_77 = arith.constant dense<0xFF800000> : vector<8xf32>
    %232 = vector.multi_reduction <maximumf>, %231, %cst_77 [1] : vector<8x32xf32> to vector<8xf32>
    %233 = vector.shape_cast %232 : vector<8xf32> to vector<8x1xf32>
    %234 = vector.broadcast %233 : vector<8x1xf32> to vector<8x32xf32>
    %235 = arith.cmpf oge, %12, %234 : vector<8x32xf32>
    %cst_78 = arith.constant 1.000000e+00 : f32
    %cst_79 = arith.constant 0.000000e+00 : f32
    %236 = vector.broadcast %cst_78 : f32 to vector<8x32xf32>
    %237 = vector.broadcast %cst_79 : f32 to vector<8x32xf32>
    %238 = arith.select %235, %236, %237 : vector<8x32xi1>, vector<8x32xf32>
    %cst_80 = arith.constant dense<0.000000e+00> : vector<8xf32>
    %239 = vector.multi_reduction <add>, %238, %cst_80 [1] : vector<8x32xf32> to vector<8xf32>
    %240 = vector.shape_cast %239 : vector<8xf32> to vector<8x1xf32>
    %241 = arith.select %227, %233, %224 : vector<8x1xi1>, vector<8x1xf32>
    %242 = arith.select %227, %240, %225 : vector<8x1xi1>, vector<8x1xf32>
    %c13_i32 = arith.constant 13 : i32
    %243 = vector.broadcast %cst_14 : f32 to vector<8x1xf32>
    %244 = arith.cmpf olt, %242, %243 : vector<8x1xf32>
    %245 = vector.broadcast %241 : vector<8x1xf32> to vector<8x32xf32>
    %246 = arith.cmpf olt, %12, %245 : vector<8x32xf32>
    %cst_81 = arith.constant 0xFF800000 : f32
    %247 = vector.broadcast %cst_81 : f32 to vector<8x32xf32>
    %248 = arith.select %246, %12, %247 : vector<8x32xi1>, vector<8x32xf32>
    %cst_82 = arith.constant dense<0xFF800000> : vector<8xf32>
    %249 = vector.multi_reduction <maximumf>, %248, %cst_82 [1] : vector<8x32xf32> to vector<8xf32>
    %250 = vector.shape_cast %249 : vector<8xf32> to vector<8x1xf32>
    %251 = vector.broadcast %250 : vector<8x1xf32> to vector<8x32xf32>
    %252 = arith.cmpf oge, %12, %251 : vector<8x32xf32>
    %cst_83 = arith.constant 1.000000e+00 : f32
    %cst_84 = arith.constant 0.000000e+00 : f32
    %253 = vector.broadcast %cst_83 : f32 to vector<8x32xf32>
    %254 = vector.broadcast %cst_84 : f32 to vector<8x32xf32>
    %255 = arith.select %252, %253, %254 : vector<8x32xi1>, vector<8x32xf32>
    %cst_85 = arith.constant dense<0.000000e+00> : vector<8xf32>
    %256 = vector.multi_reduction <add>, %255, %cst_85 [1] : vector<8x32xf32> to vector<8xf32>
    %257 = vector.shape_cast %256 : vector<8xf32> to vector<8x1xf32>
    %258 = arith.select %244, %250, %241 : vector<8x1xi1>, vector<8x1xf32>
    %259 = arith.select %244, %257, %242 : vector<8x1xi1>, vector<8x1xf32>
    %c14_i32 = arith.constant 14 : i32
    %260 = vector.broadcast %cst_14 : f32 to vector<8x1xf32>
    %261 = arith.cmpf olt, %259, %260 : vector<8x1xf32>
    %262 = vector.broadcast %258 : vector<8x1xf32> to vector<8x32xf32>
    %263 = arith.cmpf olt, %12, %262 : vector<8x32xf32>
    %cst_86 = arith.constant 0xFF800000 : f32
    %264 = vector.broadcast %cst_86 : f32 to vector<8x32xf32>
    %265 = arith.select %263, %12, %264 : vector<8x32xi1>, vector<8x32xf32>
    %cst_87 = arith.constant dense<0xFF800000> : vector<8xf32>
    %266 = vector.multi_reduction <maximumf>, %265, %cst_87 [1] : vector<8x32xf32> to vector<8xf32>
    %267 = vector.shape_cast %266 : vector<8xf32> to vector<8x1xf32>
    %268 = vector.broadcast %267 : vector<8x1xf32> to vector<8x32xf32>
    %269 = arith.cmpf oge, %12, %268 : vector<8x32xf32>
    %cst_88 = arith.constant 1.000000e+00 : f32
    %cst_89 = arith.constant 0.000000e+00 : f32
    %270 = vector.broadcast %cst_88 : f32 to vector<8x32xf32>
    %271 = vector.broadcast %cst_89 : f32 to vector<8x32xf32>
    %272 = arith.select %269, %270, %271 : vector<8x32xi1>, vector<8x32xf32>
    %cst_90 = arith.constant dense<0.000000e+00> : vector<8xf32>
    %273 = vector.multi_reduction <add>, %272, %cst_90 [1] : vector<8x32xf32> to vector<8xf32>
    %274 = vector.shape_cast %273 : vector<8xf32> to vector<8x1xf32>
    %275 = arith.select %261, %267, %258 : vector<8x1xi1>, vector<8x1xf32>
    %276 = arith.select %261, %274, %259 : vector<8x1xi1>, vector<8x1xf32>
    %c15_i32 = arith.constant 15 : i32
    %277 = vector.broadcast %cst_14 : f32 to vector<8x1xf32>
    %278 = arith.cmpf olt, %276, %277 : vector<8x1xf32>
    %279 = vector.broadcast %275 : vector<8x1xf32> to vector<8x32xf32>
    %280 = arith.cmpf olt, %12, %279 : vector<8x32xf32>
    %cst_91 = arith.constant 0xFF800000 : f32
    %281 = vector.broadcast %cst_91 : f32 to vector<8x32xf32>
    %282 = arith.select %280, %12, %281 : vector<8x32xi1>, vector<8x32xf32>
    %cst_92 = arith.constant dense<0xFF800000> : vector<8xf32>
    %283 = vector.multi_reduction <maximumf>, %282, %cst_92 [1] : vector<8x32xf32> to vector<8xf32>
    %284 = vector.shape_cast %283 : vector<8xf32> to vector<8x1xf32>
    %285 = vector.broadcast %284 : vector<8x1xf32> to vector<8x32xf32>
    %286 = arith.cmpf oge, %12, %285 : vector<8x32xf32>
    %cst_93 = arith.constant 1.000000e+00 : f32
    %cst_94 = arith.constant 0.000000e+00 : f32
    %287 = vector.broadcast %cst_93 : f32 to vector<8x32xf32>
    %288 = vector.broadcast %cst_94 : f32 to vector<8x32xf32>
    %289 = arith.select %286, %287, %288 : vector<8x32xi1>, vector<8x32xf32>
    %cst_95 = arith.constant dense<0.000000e+00> : vector<8xf32>
    %290 = vector.multi_reduction <add>, %289, %cst_95 [1] : vector<8x32xf32> to vector<8xf32>
    %291 = vector.shape_cast %290 : vector<8xf32> to vector<8x1xf32>
    %292 = arith.select %278, %284, %275 : vector<8x1xi1>, vector<8x1xf32>
    %293 = arith.select %278, %291, %276 : vector<8x1xi1>, vector<8x1xf32>
    %c16_i32 = arith.constant 16 : i32
    %294 = vector.broadcast %cst_14 : f32 to vector<8x1xf32>
    %295 = arith.cmpf olt, %293, %294 : vector<8x1xf32>
    %296 = vector.broadcast %292 : vector<8x1xf32> to vector<8x32xf32>
    %297 = arith.cmpf olt, %12, %296 : vector<8x32xf32>
    %cst_96 = arith.constant 0xFF800000 : f32
    %298 = vector.broadcast %cst_96 : f32 to vector<8x32xf32>
    %299 = arith.select %297, %12, %298 : vector<8x32xi1>, vector<8x32xf32>
    %cst_97 = arith.constant dense<0xFF800000> : vector<8xf32>
    %300 = vector.multi_reduction <maximumf>, %299, %cst_97 [1] : vector<8x32xf32> to vector<8xf32>
    %301 = vector.shape_cast %300 : vector<8xf32> to vector<8x1xf32>
    %302 = vector.broadcast %301 : vector<8x1xf32> to vector<8x32xf32>
    %303 = arith.cmpf oge, %12, %302 : vector<8x32xf32>
    %cst_98 = arith.constant 1.000000e+00 : f32
    %cst_99 = arith.constant 0.000000e+00 : f32
    %304 = vector.broadcast %cst_98 : f32 to vector<8x32xf32>
    %305 = vector.broadcast %cst_99 : f32 to vector<8x32xf32>
    %306 = arith.select %303, %304, %305 : vector<8x32xi1>, vector<8x32xf32>
    %cst_100 = arith.constant dense<0.000000e+00> : vector<8xf32>
    %307 = vector.multi_reduction <add>, %306, %cst_100 [1] : vector<8x32xf32> to vector<8xf32>
    %308 = vector.shape_cast %307 : vector<8xf32> to vector<8x1xf32>
    %309 = arith.select %295, %301, %292 : vector<8x1xi1>, vector<8x1xf32>
    %310 = arith.select %295, %308, %293 : vector<8x1xi1>, vector<8x1xf32>
    %c17_i32 = arith.constant 17 : i32
    %311 = vector.broadcast %cst_14 : f32 to vector<8x1xf32>
    %312 = arith.cmpf olt, %310, %311 : vector<8x1xf32>
    %313 = vector.broadcast %309 : vector<8x1xf32> to vector<8x32xf32>
    %314 = arith.cmpf olt, %12, %313 : vector<8x32xf32>
    %cst_101 = arith.constant 0xFF800000 : f32
    %315 = vector.broadcast %cst_101 : f32 to vector<8x32xf32>
    %316 = arith.select %314, %12, %315 : vector<8x32xi1>, vector<8x32xf32>
    %cst_102 = arith.constant dense<0xFF800000> : vector<8xf32>
    %317 = vector.multi_reduction <maximumf>, %316, %cst_102 [1] : vector<8x32xf32> to vector<8xf32>
    %318 = vector.shape_cast %317 : vector<8xf32> to vector<8x1xf32>
    %319 = vector.broadcast %318 : vector<8x1xf32> to vector<8x32xf32>
    %320 = arith.cmpf oge, %12, %319 : vector<8x32xf32>
    %cst_103 = arith.constant 1.000000e+00 : f32
    %cst_104 = arith.constant 0.000000e+00 : f32
    %321 = vector.broadcast %cst_103 : f32 to vector<8x32xf32>
    %322 = vector.broadcast %cst_104 : f32 to vector<8x32xf32>
    %323 = arith.select %320, %321, %322 : vector<8x32xi1>, vector<8x32xf32>
    %cst_105 = arith.constant dense<0.000000e+00> : vector<8xf32>
    %324 = vector.multi_reduction <add>, %323, %cst_105 [1] : vector<8x32xf32> to vector<8xf32>
    %325 = vector.shape_cast %324 : vector<8xf32> to vector<8x1xf32>
    %326 = arith.select %312, %318, %309 : vector<8x1xi1>, vector<8x1xf32>
    %327 = arith.select %312, %325, %310 : vector<8x1xi1>, vector<8x1xf32>
    %328 = vector.broadcast %326 : vector<8x1xf32> to vector<8x32xf32>
    %329 = arith.cmpf oge, %12, %328 : vector<8x32xf32>
    %cst_106 = arith.constant 0.000000e+00 : f32
    %330 = vector.broadcast %cst_106 : f32 to vector<8x32xf32>
    %331 = arith.select %329, %12, %330 : vector<8x32xi1>, vector<8x32xf32>
    %c8_i32_107 = arith.constant 8 : i32
    %332 = arith.muli %c0_i32, %c8_i32_107 : i32
    %333 = tpu.assume_multiple %332, 8 : i32
    %334 = arith.index_cast %333 : i32 to index
    %c0_108 = arith.constant 0 : index
    %335 = vector.load %arg8[%334, %c0_108] : memref<48x32xf32, #tpu.memory_space<vmem>>, vector<8x32xf32>
    tpu.vector_store %arg8[%334, %c0_108], %331 {strides = array<i32>} : memref<48x32xf32, #tpu.memory_space<vmem>>, vector<8x32xf32>,
    %c1_i32_109 = arith.constant 1 : i32
    %336 = arith.index_cast %c1_i32_109 : i32 to index
    %c0_110 = arith.constant 0 : index
    %c0_111 = arith.constant 0 : index
    %337 = vector.load %arg0[%336, %c0_110, %c0_111] : memref<6x8x16xf32, #tpu.memory_space<vmem>>, vector<1x8x16xf32>
    %338 = vector.shape_cast %337 : vector<1x8x16xf32> to vector<8x16xf32>
    %cst_112 = arith.constant dense<0.000000e+00> : vector<8x32xf32>
    %339 = tpu.matmul %338, %0, %cst_112 {dimension_numbers = #tpu.dot_dimension_numbers<[1], [0], [0], [1], [0, 0, 1, 1], [], []>} : vector<8x16xf32>, vector<16x32xf32>, vector<8x32xf32> -> vector<8x32xf32>
    %cst_113 = arith.constant dense<0.000000e+00> : vector<8x32xf32>
    %340 = tpu.matmul %331, %1, %cst_113 {dimension_numbers = #tpu.dot_dimension_numbers<[1], [0], [0], [1], [0, 0, 1, 1], [], []>} : vector<8x32xf32>, vector<32x32xf32>, vector<8x32xf32> -> vector<8x32xf32>
    %341 = arith.addf %339, %340 : vector<8x32xf32>
    %342 = arith.addf %341, %4 : vector<8x32xf32>
    %cst_114 = arith.constant dense<0xFF800000> : vector<8xf32>
    %343 = vector.multi_reduction <maximumf>, %342, %cst_114 [1] : vector<8x32xf32> to vector<8xf32>
    %344 = vector.shape_cast %343 : vector<8xf32> to vector<8x1xf32>
    %345 = vector.broadcast %344 : vector<8x1xf32> to vector<8x32xf32>
    %346 = arith.cmpf oge, %342, %345 : vector<8x32xf32>
    %cst_115 = arith.constant 1.000000e+00 : f32
    %cst_116 = arith.constant 0.000000e+00 : f32
    %347 = vector.broadcast %cst_115 : f32 to vector<8x32xf32>
    %348 = vector.broadcast %cst_116 : f32 to vector<8x32xf32>
    %349 = arith.select %346, %347, %348 : vector<8x32xi1>, vector<8x32xf32>
    %cst_117 = arith.constant dense<0.000000e+00> : vector<8xf32>
    %350 = vector.multi_reduction <add>, %349, %cst_117 [1] : vector<8x32xf32> to vector<8xf32>
    %351 = vector.shape_cast %350 : vector<8xf32> to vector<8x1xf32>
    %cst_118 = arith.constant 1.900000e+01 : f32
    %c0_i32_119 = arith.constant 0 : i32
    %352 = vector.broadcast %cst_118 : f32 to vector<8x1xf32>
    %353 = arith.cmpf olt, %351, %352 : vector<8x1xf32>
    %354 = vector.broadcast %344 : vector<8x1xf32> to vector<8x32xf32>
    %355 = arith.cmpf olt, %342, %354 : vector<8x32xf32>
    %cst_120 = arith.constant 0xFF800000 : f32
    %356 = vector.broadcast %cst_120 : f32 to vector<8x32xf32>
    %357 = arith.select %355, %342, %356 : vector<8x32xi1>, vector<8x32xf32>
    %cst_121 = arith.constant dense<0xFF800000> : vector<8xf32>
    %358 = vector.multi_reduction <maximumf>, %357, %cst_121 [1] : vector<8x32xf32> to vector<8xf32>
    %359 = vector.shape_cast %358 : vector<8xf32> to vector<8x1xf32>
    %360 = vector.broadcast %359 : vector<8x1xf32> to vector<8x32xf32>
    %361 = arith.cmpf oge, %342, %360 : vector<8x32xf32>
    %cst_122 = arith.constant 1.000000e+00 : f32
    %cst_123 = arith.constant 0.000000e+00 : f32
    %362 = vector.broadcast %cst_122 : f32 to vector<8x32xf32>
    %363 = vector.broadcast %cst_123 : f32 to vector<8x32xf32>
    %364 = arith.select %361, %362, %363 : vector<8x32xi1>, vector<8x32xf32>
    %cst_124 = arith.constant dense<0.000000e+00> : vector<8xf32>
    %365 = vector.multi_reduction <add>, %364, %cst_124 [1] : vector<8x32xf32> to vector<8xf32>
    %366 = vector.shape_cast %365 : vector<8xf32> to vector<8x1xf32>
    %367 = arith.select %353, %359, %344 : vector<8x1xi1>, vector<8x1xf32>
    %368 = arith.select %353, %366, %351 : vector<8x1xi1>, vector<8x1xf32>
    %c1_i32_125 = arith.constant 1 : i32
    %369 = vector.broadcast %cst_118 : f32 to vector<8x1xf32>
    %370 = arith.cmpf olt, %368, %369 : vector<8x1xf32>
    %371 = vector.broadcast %367 : vector<8x1xf32> to vector<8x32xf32>
    %372 = arith.cmpf olt, %342, %371 : vector<8x32xf32>
    %cst_126 = arith.constant 0xFF800000 : f32
    %373 = vector.broadcast %cst_126 : f32 to vector<8x32xf32>
    %374 = arith.select %372, %342, %373 : vector<8x32xi1>, vector<8x32xf32>
    %cst_127 = arith.constant dense<0xFF800000> : vector<8xf32>
    %375 = vector.multi_reduction <maximumf>, %374, %cst_127 [1] : vector<8x32xf32> to vector<8xf32>
    %376 = vector.shape_cast %375 : vector<8xf32> to vector<8x1xf32>
    %377 = vector.broadcast %376 : vector<8x1xf32> to vector<8x32xf32>
    %378 = arith.cmpf oge, %342, %377 : vector<8x32xf32>
    %cst_128 = arith.constant 1.000000e+00 : f32
    %cst_129 = arith.constant 0.000000e+00 : f32
    %379 = vector.broadcast %cst_128 : f32 to vector<8x32xf32>
    %380 = vector.broadcast %cst_129 : f32 to vector<8x32xf32>
    %381 = arith.select %378, %379, %380 : vector<8x32xi1>, vector<8x32xf32>
    %cst_130 = arith.constant dense<0.000000e+00> : vector<8xf32>
    %382 = vector.multi_reduction <add>, %381, %cst_130 [1] : vector<8x32xf32> to vector<8xf32>
    %383 = vector.shape_cast %382 : vector<8xf32> to vector<8x1xf32>
    %384 = arith.select %370, %376, %367 : vector<8x1xi1>, vector<8x1xf32>
    %385 = arith.select %370, %383, %368 : vector<8x1xi1>, vector<8x1xf32>
    %c2_i32_131 = arith.constant 2 : i32
    %386 = vector.broadcast %cst_118 : f32 to vector<8x1xf32>
    %387 = arith.cmpf olt, %385, %386 : vector<8x1xf32>
    %388 = vector.broadcast %384 : vector<8x1xf32> to vector<8x32xf32>
    %389 = arith.cmpf olt, %342, %388 : vector<8x32xf32>
    %cst_132 = arith.constant 0xFF800000 : f32
    %390 = vector.broadcast %cst_132 : f32 to vector<8x32xf32>
    %391 = arith.select %389, %342, %390 : vector<8x32xi1>, vector<8x32xf32>
    %cst_133 = arith.constant dense<0xFF800000> : vector<8xf32>
    %392 = vector.multi_reduction <maximumf>, %391, %cst_133 [1] : vector<8x32xf32> to vector<8xf32>
    %393 = vector.shape_cast %392 : vector<8xf32> to vector<8x1xf32>
    %394 = vector.broadcast %393 : vector<8x1xf32> to vector<8x32xf32>
    %395 = arith.cmpf oge, %342, %394 : vector<8x32xf32>
    %cst_134 = arith.constant 1.000000e+00 : f32
    %cst_135 = arith.constant 0.000000e+00 : f32
    %396 = vector.broadcast %cst_134 : f32 to vector<8x32xf32>
    %397 = vector.broadcast %cst_135 : f32 to vector<8x32xf32>
    %398 = arith.select %395, %396, %397 : vector<8x32xi1>, vector<8x32xf32>
    %cst_136 = arith.constant dense<0.000000e+00> : vector<8xf32>
    %399 = vector.multi_reduction <add>, %398, %cst_136 [1] : vector<8x32xf32> to vector<8xf32>
    %400 = vector.shape_cast %399 : vector<8xf32> to vector<8x1xf32>
    %401 = arith.select %387, %393, %384 : vector<8x1xi1>, vector<8x1xf32>
    %402 = arith.select %387, %400, %385 : vector<8x1xi1>, vector<8x1xf32>
    %c3_i32_137 = arith.constant 3 : i32
    %403 = vector.broadcast %cst_118 : f32 to vector<8x1xf32>
    %404 = arith.cmpf olt, %402, %403 : vector<8x1xf32>
    %405 = vector.broadcast %401 : vector<8x1xf32> to vector<8x32xf32>
    %406 = arith.cmpf olt, %342, %405 : vector<8x32xf32>
    %cst_138 = arith.constant 0xFF800000 : f32
    %407 = vector.broadcast %cst_138 : f32 to vector<8x32xf32>
    %408 = arith.select %406, %342, %407 : vector<8x32xi1>, vector<8x32xf32>
    %cst_139 = arith.constant dense<0xFF800000> : vector<8xf32>
    %409 = vector.multi_reduction <maximumf>, %408, %cst_139 [1] : vector<8x32xf32> to vector<8xf32>
    %410 = vector.shape_cast %409 : vector<8xf32> to vector<8x1xf32>
    %411 = vector.broadcast %410 : vector<8x1xf32> to vector<8x32xf32>
    %412 = arith.cmpf oge, %342, %411 : vector<8x32xf32>
    %cst_140 = arith.constant 1.000000e+00 : f32
    %cst_141 = arith.constant 0.000000e+00 : f32
    %413 = vector.broadcast %cst_140 : f32 to vector<8x32xf32>
    %414 = vector.broadcast %cst_141 : f32 to vector<8x32xf32>
    %415 = arith.select %412, %413, %414 : vector<8x32xi1>, vector<8x32xf32>
    %cst_142 = arith.constant dense<0.000000e+00> : vector<8xf32>
    %416 = vector.multi_reduction <add>, %415, %cst_142 [1] : vector<8x32xf32> to vector<8xf32>
    %417 = vector.shape_cast %416 : vector<8xf32> to vector<8x1xf32>
    %418 = arith.select %404, %410, %401 : vector<8x1xi1>, vector<8x1xf32>
    %419 = arith.select %404, %417, %402 : vector<8x1xi1>, vector<8x1xf32>
    %c4_i32_143 = arith.constant 4 : i32
    %420 = vector.broadcast %cst_118 : f32 to vector<8x1xf32>
    %421 = arith.cmpf olt, %419, %420 : vector<8x1xf32>
    %422 = vector.broadcast %418 : vector<8x1xf32> to vector<8x32xf32>
    %423 = arith.cmpf olt, %342, %422 : vector<8x32xf32>
    %cst_144 = arith.constant 0xFF800000 : f32
    %424 = vector.broadcast %cst_144 : f32 to vector<8x32xf32>
    %425 = arith.select %423, %342, %424 : vector<8x32xi1>, vector<8x32xf32>
    %cst_145 = arith.constant dense<0xFF800000> : vector<8xf32>
    %426 = vector.multi_reduction <maximumf>, %425, %cst_145 [1] : vector<8x32xf32> to vector<8xf32>
    %427 = vector.shape_cast %426 : vector<8xf32> to vector<8x1xf32>
    %428 = vector.broadcast %427 : vector<8x1xf32> to vector<8x32xf32>
    %429 = arith.cmpf oge, %342, %428 : vector<8x32xf32>
    %cst_146 = arith.constant 1.000000e+00 : f32
    %cst_147 = arith.constant 0.000000e+00 : f32
    %430 = vector.broadcast %cst_146 : f32 to vector<8x32xf32>
    %431 = vector.broadcast %cst_147 : f32 to vector<8x32xf32>
    %432 = arith.select %429, %430, %431 : vector<8x32xi1>, vector<8x32xf32>
    %cst_148 = arith.constant dense<0.000000e+00> : vector<8xf32>
    %433 = vector.multi_reduction <add>, %432, %cst_148 [1] : vector<8x32xf32> to vector<8xf32>
    %434 = vector.shape_cast %433 : vector<8xf32> to vector<8x1xf32>
    %435 = arith.select %421, %427, %418 : vector<8x1xi1>, vector<8x1xf32>
    %436 = arith.select %421, %434, %419 : vector<8x1xi1>, vector<8x1xf32>
    %c5_i32_149 = arith.constant 5 : i32
    %437 = vector.broadcast %cst_118 : f32 to vector<8x1xf32>
    %438 = arith.cmpf olt, %436, %437 : vector<8x1xf32>
    %439 = vector.broadcast %435 : vector<8x1xf32> to vector<8x32xf32>
    %440 = arith.cmpf olt, %342, %439 : vector<8x32xf32>
    %cst_150 = arith.constant 0xFF800000 : f32
    %441 = vector.broadcast %cst_150 : f32 to vector<8x32xf32>
    %442 = arith.select %440, %342, %441 : vector<8x32xi1>, vector<8x32xf32>
    %cst_151 = arith.constant dense<0xFF800000> : vector<8xf32>
    %443 = vector.multi_reduction <maximumf>, %442, %cst_151 [1] : vector<8x32xf32> to vector<8xf32>
    %444 = vector.shape_cast %443 : vector<8xf32> to vector<8x1xf32>
    %445 = vector.broadcast %444 : vector<8x1xf32> to vector<8x32xf32>
    %446 = arith.cmpf oge, %342, %445 : vector<8x32xf32>
    %cst_152 = arith.constant 1.000000e+00 : f32
    %cst_153 = arith.constant 0.000000e+00 : f32
    %447 = vector.broadcast %cst_152 : f32 to vector<8x32xf32>
    %448 = vector.broadcast %cst_153 : f32 to vector<8x32xf32>
    %449 = arith.select %446, %447, %448 : vector<8x32xi1>, vector<8x32xf32>
    %cst_154 = arith.constant dense<0.000000e+00> : vector<8xf32>
    %450 = vector.multi_reduction <add>, %449, %cst_154 [1] : vector<8x32xf32> to vector<8xf32>
    %451 = vector.shape_cast %450 : vector<8xf32> to vector<8x1xf32>
    %452 = arith.select %438, %444, %435 : vector<8x1xi1>, vector<8x1xf32>
    %453 = arith.select %438, %451, %436 : vector<8x1xi1>, vector<8x1xf32>
    %c6_i32_155 = arith.constant 6 : i32
    %454 = vector.broadcast %cst_118 : f32 to vector<8x1xf32>
    %455 = arith.cmpf olt, %453, %454 : vector<8x1xf32>
    %456 = vector.broadcast %452 : vector<8x1xf32> to vector<8x32xf32>
    %457 = arith.cmpf olt, %342, %456 : vector<8x32xf32>
    %cst_156 = arith.constant 0xFF800000 : f32
    %458 = vector.broadcast %cst_156 : f32 to vector<8x32xf32>
    %459 = arith.select %457, %342, %458 : vector<8x32xi1>, vector<8x32xf32>
    %cst_157 = arith.constant dense<0xFF800000> : vector<8xf32>
    %460 = vector.multi_reduction <maximumf>, %459, %cst_157 [1] : vector<8x32xf32> to vector<8xf32>
    %461 = vector.shape_cast %460 : vector<8xf32> to vector<8x1xf32>
    %462 = vector.broadcast %461 : vector<8x1xf32> to vector<8x32xf32>
    %463 = arith.cmpf oge, %342, %462 : vector<8x32xf32>
    %cst_158 = arith.constant 1.000000e+00 : f32
    %cst_159 = arith.constant 0.000000e+00 : f32
    %464 = vector.broadcast %cst_158 : f32 to vector<8x32xf32>
    %465 = vector.broadcast %cst_159 : f32 to vector<8x32xf32>
    %466 = arith.select %463, %464, %465 : vector<8x32xi1>, vector<8x32xf32>
    %cst_160 = arith.constant dense<0.000000e+00> : vector<8xf32>
    %467 = vector.multi_reduction <add>, %466, %cst_160 [1] : vector<8x32xf32> to vector<8xf32>
    %468 = vector.shape_cast %467 : vector<8xf32> to vector<8x1xf32>
    %469 = arith.select %455, %461, %452 : vector<8x1xi1>, vector<8x1xf32>
    %470 = arith.select %455, %468, %453 : vector<8x1xi1>, vector<8x1xf32>
    %c7_i32_161 = arith.constant 7 : i32
    %471 = vector.broadcast %cst_118 : f32 to vector<8x1xf32>
    %472 = arith.cmpf olt, %470, %471 : vector<8x1xf32>
    %473 = vector.broadcast %469 : vector<8x1xf32> to vector<8x32xf32>
    %474 = arith.cmpf olt, %342, %473 : vector<8x32xf32>
    %cst_162 = arith.constant 0xFF800000 : f32
    %475 = vector.broadcast %cst_162 : f32 to vector<8x32xf32>
    %476 = arith.select %474, %342, %475 : vector<8x32xi1>, vector<8x32xf32>
    %cst_163 = arith.constant dense<0xFF800000> : vector<8xf32>
    %477 = vector.multi_reduction <maximumf>, %476, %cst_163 [1] : vector<8x32xf32> to vector<8xf32>
    %478 = vector.shape_cast %477 : vector<8xf32> to vector<8x1xf32>
    %479 = vector.broadcast %478 : vector<8x1xf32> to vector<8x32xf32>
    %480 = arith.cmpf oge, %342, %479 : vector<8x32xf32>
    %cst_164 = arith.constant 1.000000e+00 : f32
    %cst_165 = arith.constant 0.000000e+00 : f32
    %481 = vector.broadcast %cst_164 : f32 to vector<8x32xf32>
    %482 = vector.broadcast %cst_165 : f32 to vector<8x32xf32>
    %483 = arith.select %480, %481, %482 : vector<8x32xi1>, vector<8x32xf32>
    %cst_166 = arith.constant dense<0.000000e+00> : vector<8xf32>
    %484 = vector.multi_reduction <add>, %483, %cst_166 [1] : vector<8x32xf32> to vector<8xf32>
    %485 = vector.shape_cast %484 : vector<8xf32> to vector<8x1xf32>
    %486 = arith.select %472, %478, %469 : vector<8x1xi1>, vector<8x1xf32>
    %487 = arith.select %472, %485, %470 : vector<8x1xi1>, vector<8x1xf32>
    %c8_i32_167 = arith.constant 8 : i32
    %488 = vector.broadcast %cst_118 : f32 to vector<8x1xf32>
    %489 = arith.cmpf olt, %487, %488 : vector<8x1xf32>
    %490 = vector.broadcast %486 : vector<8x1xf32> to vector<8x32xf32>
    %491 = arith.cmpf olt, %342, %490 : vector<8x32xf32>
    %cst_168 = arith.constant 0xFF800000 : f32
    %492 = vector.broadcast %cst_168 : f32 to vector<8x32xf32>
    %493 = arith.select %491, %342, %492 : vector<8x32xi1>, vector<8x32xf32>
    %cst_169 = arith.constant dense<0xFF800000> : vector<8xf32>
    %494 = vector.multi_reduction <maximumf>, %493, %cst_169 [1] : vector<8x32xf32> to vector<8xf32>
    %495 = vector.shape_cast %494 : vector<8xf32> to vector<8x1xf32>
    %496 = vector.broadcast %495 : vector<8x1xf32> to vector<8x32xf32>
    %497 = arith.cmpf oge, %342, %496 : vector<8x32xf32>
    %cst_170 = arith.constant 1.000000e+00 : f32
    %cst_171 = arith.constant 0.000000e+00 : f32
    %498 = vector.broadcast %cst_170 : f32 to vector<8x32xf32>
    %499 = vector.broadcast %cst_171 : f32 to vector<8x32xf32>
    %500 = arith.select %497, %498, %499 : vector<8x32xi1>, vector<8x32xf32>
    %cst_172 = arith.constant dense<0.000000e+00> : vector<8xf32>
    %501 = vector.multi_reduction <add>, %500, %cst_172 [1] : vector<8x32xf32> to vector<8xf32>
    %502 = vector.shape_cast %501 : vector<8xf32> to vector<8x1xf32>
    %503 = arith.select %489, %495, %486 : vector<8x1xi1>, vector<8x1xf32>
    %504 = arith.select %489, %502, %487 : vector<8x1xi1>, vector<8x1xf32>
    %c9_i32_173 = arith.constant 9 : i32
    %505 = vector.broadcast %cst_118 : f32 to vector<8x1xf32>
    %506 = arith.cmpf olt, %504, %505 : vector<8x1xf32>
    %507 = vector.broadcast %503 : vector<8x1xf32> to vector<8x32xf32>
    %508 = arith.cmpf olt, %342, %507 : vector<8x32xf32>
    %cst_174 = arith.constant 0xFF800000 : f32
    %509 = vector.broadcast %cst_174 : f32 to vector<8x32xf32>
    %510 = arith.select %508, %342, %509 : vector<8x32xi1>, vector<8x32xf32>
    %cst_175 = arith.constant dense<0xFF800000> : vector<8xf32>
    %511 = vector.multi_reduction <maximumf>, %510, %cst_175 [1] : vector<8x32xf32> to vector<8xf32>
    %512 = vector.shape_cast %511 : vector<8xf32> to vector<8x1xf32>
    %513 = vector.broadcast %512 : vector<8x1xf32> to vector<8x32xf32>
    %514 = arith.cmpf oge, %342, %513 : vector<8x32xf32>
    %cst_176 = arith.constant 1.000000e+00 : f32
    %cst_177 = arith.constant 0.000000e+00 : f32
    %515 = vector.broadcast %cst_176 : f32 to vector<8x32xf32>
    %516 = vector.broadcast %cst_177 : f32 to vector<8x32xf32>
    %517 = arith.select %514, %515, %516 : vector<8x32xi1>, vector<8x32xf32>
    %cst_178 = arith.constant dense<0.000000e+00> : vector<8xf32>
    %518 = vector.multi_reduction <add>, %517, %cst_178 [1] : vector<8x32xf32> to vector<8xf32>
    %519 = vector.shape_cast %518 : vector<8xf32> to vector<8x1xf32>
    %520 = arith.select %506, %512, %503 : vector<8x1xi1>, vector<8x1xf32>
    %521 = arith.select %506, %519, %504 : vector<8x1xi1>, vector<8x1xf32>
    %c10_i32_179 = arith.constant 10 : i32
    %522 = vector.broadcast %cst_118 : f32 to vector<8x1xf32>
    %523 = arith.cmpf olt, %521, %522 : vector<8x1xf32>
    %524 = vector.broadcast %520 : vector<8x1xf32> to vector<8x32xf32>
    %525 = arith.cmpf olt, %342, %524 : vector<8x32xf32>
    %cst_180 = arith.constant 0xFF800000 : f32
    %526 = vector.broadcast %cst_180 : f32 to vector<8x32xf32>
    %527 = arith.select %525, %342, %526 : vector<8x32xi1>, vector<8x32xf32>
    %cst_181 = arith.constant dense<0xFF800000> : vector<8xf32>
    %528 = vector.multi_reduction <maximumf>, %527, %cst_181 [1] : vector<8x32xf32> to vector<8xf32>
    %529 = vector.shape_cast %528 : vector<8xf32> to vector<8x1xf32>
    %530 = vector.broadcast %529 : vector<8x1xf32> to vector<8x32xf32>
    %531 = arith.cmpf oge, %342, %530 : vector<8x32xf32>
    %cst_182 = arith.constant 1.000000e+00 : f32
    %cst_183 = arith.constant 0.000000e+00 : f32
    %532 = vector.broadcast %cst_182 : f32 to vector<8x32xf32>
    %533 = vector.broadcast %cst_183 : f32 to vector<8x32xf32>
    %534 = arith.select %531, %532, %533 : vector<8x32xi1>, vector<8x32xf32>
    %cst_184 = arith.constant dense<0.000000e+00> : vector<8xf32>
    %535 = vector.multi_reduction <add>, %534, %cst_184 [1] : vector<8x32xf32> to vector<8xf32>
    %536 = vector.shape_cast %535 : vector<8xf32> to vector<8x1xf32>
    %537 = arith.select %523, %529, %520 : vector<8x1xi1>, vector<8x1xf32>
    %538 = arith.select %523, %536, %521 : vector<8x1xi1>, vector<8x1xf32>
    %c11_i32_185 = arith.constant 11 : i32
    %539 = vector.broadcast %cst_118 : f32 to vector<8x1xf32>
    %540 = arith.cmpf olt, %538, %539 : vector<8x1xf32>
    %541 = vector.broadcast %537 : vector<8x1xf32> to vector<8x32xf32>
    %542 = arith.cmpf olt, %342, %541 : vector<8x32xf32>
    %cst_186 = arith.constant 0xFF800000 : f32
    %543 = vector.broadcast %cst_186 : f32 to vector<8x32xf32>
    %544 = arith.select %542, %342, %543 : vector<8x32xi1>, vector<8x32xf32>
    %cst_187 = arith.constant dense<0xFF800000> : vector<8xf32>
    %545 = vector.multi_reduction <maximumf>, %544, %cst_187 [1] : vector<8x32xf32> to vector<8xf32>
    %546 = vector.shape_cast %545 : vector<8xf32> to vector<8x1xf32>
    %547 = vector.broadcast %546 : vector<8x1xf32> to vector<8x32xf32>
    %548 = arith.cmpf oge, %342, %547 : vector<8x32xf32>
    %cst_188 = arith.constant 1.000000e+00 : f32
    %cst_189 = arith.constant 0.000000e+00 : f32
    %549 = vector.broadcast %cst_188 : f32 to vector<8x32xf32>
    %550 = vector.broadcast %cst_189 : f32 to vector<8x32xf32>
    %551 = arith.select %548, %549, %550 : vector<8x32xi1>, vector<8x32xf32>
    %cst_190 = arith.constant dense<0.000000e+00> : vector<8xf32>
    %552 = vector.multi_reduction <add>, %551, %cst_190 [1] : vector<8x32xf32> to vector<8xf32>
    %553 = vector.shape_cast %552 : vector<8xf32> to vector<8x1xf32>
    %554 = arith.select %540, %546, %537 : vector<8x1xi1>, vector<8x1xf32>
    %555 = arith.select %540, %553, %538 : vector<8x1xi1>, vector<8x1xf32>
    %c12_i32_191 = arith.constant 12 : i32
    %556 = vector.broadcast %cst_118 : f32 to vector<8x1xf32>
    %557 = arith.cmpf olt, %555, %556 : vector<8x1xf32>
    %558 = vector.broadcast %554 : vector<8x1xf32> to vector<8x32xf32>
    %559 = arith.cmpf olt, %342, %558 : vector<8x32xf32>
    %cst_192 = arith.constant 0xFF800000 : f32
    %560 = vector.broadcast %cst_192 : f32 to vector<8x32xf32>
    %561 = arith.select %559, %342, %560 : vector<8x32xi1>, vector<8x32xf32>
    %cst_193 = arith.constant dense<0xFF800000> : vector<8xf32>
    %562 = vector.multi_reduction <maximumf>, %561, %cst_193 [1] : vector<8x32xf32> to vector<8xf32>
    %563 = vector.shape_cast %562 : vector<8xf32> to vector<8x1xf32>
    %564 = vector.broadcast %563 : vector<8x1xf32> to vector<8x32xf32>
    %565 = arith.cmpf oge, %342, %564 : vector<8x32xf32>
    %cst_194 = arith.constant 1.000000e+00 : f32
    %cst_195 = arith.constant 0.000000e+00 : f32
    %566 = vector.broadcast %cst_194 : f32 to vector<8x32xf32>
    %567 = vector.broadcast %cst_195 : f32 to vector<8x32xf32>
    %568 = arith.select %565, %566, %567 : vector<8x32xi1>, vector<8x32xf32>
    %cst_196 = arith.constant dense<0.000000e+00> : vector<8xf32>
    %569 = vector.multi_reduction <add>, %568, %cst_196 [1] : vector<8x32xf32> to vector<8xf32>
    %570 = vector.shape_cast %569 : vector<8xf32> to vector<8x1xf32>
    %571 = arith.select %557, %563, %554 : vector<8x1xi1>, vector<8x1xf32>
    %572 = arith.select %557, %570, %555 : vector<8x1xi1>, vector<8x1xf32>
    %c13_i32_197 = arith.constant 13 : i32
    %573 = vector.broadcast %cst_118 : f32 to vector<8x1xf32>
    %574 = arith.cmpf olt, %572, %573 : vector<8x1xf32>
    %575 = vector.broadcast %571 : vector<8x1xf32> to vector<8x32xf32>
    %576 = arith.cmpf olt, %342, %575 : vector<8x32xf32>
    %cst_198 = arith.constant 0xFF800000 : f32
    %577 = vector.broadcast %cst_198 : f32 to vector<8x32xf32>
    %578 = arith.select %576, %342, %577 : vector<8x32xi1>, vector<8x32xf32>
    %cst_199 = arith.constant dense<0xFF800000> : vector<8xf32>
    %579 = vector.multi_reduction <maximumf>, %578, %cst_199 [1] : vector<8x32xf32> to vector<8xf32>
    %580 = vector.shape_cast %579 : vector<8xf32> to vector<8x1xf32>
    %581 = vector.broadcast %580 : vector<8x1xf32> to vector<8x32xf32>
    %582 = arith.cmpf oge, %342, %581 : vector<8x32xf32>
    %cst_200 = arith.constant 1.000000e+00 : f32
    %cst_201 = arith.constant 0.000000e+00 : f32
    %583 = vector.broadcast %cst_200 : f32 to vector<8x32xf32>
    %584 = vector.broadcast %cst_201 : f32 to vector<8x32xf32>
    %585 = arith.select %582, %583, %584 : vector<8x32xi1>, vector<8x32xf32>
    %cst_202 = arith.constant dense<0.000000e+00> : vector<8xf32>
    %586 = vector.multi_reduction <add>, %585, %cst_202 [1] : vector<8x32xf32> to vector<8xf32>
    %587 = vector.shape_cast %586 : vector<8xf32> to vector<8x1xf32>
    %588 = arith.select %574, %580, %571 : vector<8x1xi1>, vector<8x1xf32>
    %589 = arith.select %574, %587, %572 : vector<8x1xi1>, vector<8x1xf32>
    %c14_i32_203 = arith.constant 14 : i32
    %590 = vector.broadcast %cst_118 : f32 to vector<8x1xf32>
    %591 = arith.cmpf olt, %589, %590 : vector<8x1xf32>
    %592 = vector.broadcast %588 : vector<8x1xf32> to vector<8x32xf32>
    %593 = arith.cmpf olt, %342, %592 : vector<8x32xf32>
    %cst_204 = arith.constant 0xFF800000 : f32
    %594 = vector.broadcast %cst_204 : f32 to vector<8x32xf32>
    %595 = arith.select %593, %342, %594 : vector<8x32xi1>, vector<8x32xf32>
    %cst_205 = arith.constant dense<0xFF800000> : vector<8xf32>
    %596 = vector.multi_reduction <maximumf>, %595, %cst_205 [1] : vector<8x32xf32> to vector<8xf32>
    %597 = vector.shape_cast %596 : vector<8xf32> to vector<8x1xf32>
    %598 = vector.broadcast %597 : vector<8x1xf32> to vector<8x32xf32>
    %599 = arith.cmpf oge, %342, %598 : vector<8x32xf32>
    %cst_206 = arith.constant 1.000000e+00 : f32
    %cst_207 = arith.constant 0.000000e+00 : f32
    %600 = vector.broadcast %cst_206 : f32 to vector<8x32xf32>
    %601 = vector.broadcast %cst_207 : f32 to vector<8x32xf32>
    %602 = arith.select %599, %600, %601 : vector<8x32xi1>, vector<8x32xf32>
    %cst_208 = arith.constant dense<0.000000e+00> : vector<8xf32>
    %603 = vector.multi_reduction <add>, %602, %cst_208 [1] : vector<8x32xf32> to vector<8xf32>
    %604 = vector.shape_cast %603 : vector<8xf32> to vector<8x1xf32>
    %605 = arith.select %591, %597, %588 : vector<8x1xi1>, vector<8x1xf32>
    %606 = arith.select %591, %604, %589 : vector<8x1xi1>, vector<8x1xf32>
    %c15_i32_209 = arith.constant 15 : i32
    %607 = vector.broadcast %cst_118 : f32 to vector<8x1xf32>
    %608 = arith.cmpf olt, %606, %607 : vector<8x1xf32>
    %609 = vector.broadcast %605 : vector<8x1xf32> to vector<8x32xf32>
    %610 = arith.cmpf olt, %342, %609 : vector<8x32xf32>
    %cst_210 = arith.constant 0xFF800000 : f32
    %611 = vector.broadcast %cst_210 : f32 to vector<8x32xf32>
    %612 = arith.select %610, %342, %611 : vector<8x32xi1>, vector<8x32xf32>
    %cst_211 = arith.constant dense<0xFF800000> : vector<8xf32>
    %613 = vector.multi_reduction <maximumf>, %612, %cst_211 [1] : vector<8x32xf32> to vector<8xf32>
    %614 = vector.shape_cast %613 : vector<8xf32> to vector<8x1xf32>
    %615 = vector.broadcast %614 : vector<8x1xf32> to vector<8x32xf32>
    %616 = arith.cmpf oge, %342, %615 : vector<8x32xf32>
    %cst_212 = arith.constant 1.000000e+00 : f32
    %cst_213 = arith.constant 0.000000e+00 : f32
    %617 = vector.broadcast %cst_212 : f32 to vector<8x32xf32>
    %618 = vector.broadcast %cst_213 : f32 to vector<8x32xf32>
    %619 = arith.select %616, %617, %618 : vector<8x32xi1>, vector<8x32xf32>
    %cst_214 = arith.constant dense<0.000000e+00> : vector<8xf32>
    %620 = vector.multi_reduction <add>, %619, %cst_214 [1] : vector<8x32xf32> to vector<8xf32>
    %621 = vector.shape_cast %620 : vector<8xf32> to vector<8x1xf32>
    %622 = arith.select %608, %614, %605 : vector<8x1xi1>, vector<8x1xf32>
    %623 = arith.select %608, %621, %606 : vector<8x1xi1>, vector<8x1xf32>
    %c16_i32_215 = arith.constant 16 : i32
    %624 = vector.broadcast %cst_118 : f32 to vector<8x1xf32>
    %625 = arith.cmpf olt, %623, %624 : vector<8x1xf32>
    %626 = vector.broadcast %622 : vector<8x1xf32> to vector<8x32xf32>
    %627 = arith.cmpf olt, %342, %626 : vector<8x32xf32>
    %cst_216 = arith.constant 0xFF800000 : f32
    %628 = vector.broadcast %cst_216 : f32 to vector<8x32xf32>
    %629 = arith.select %627, %342, %628 : vector<8x32xi1>, vector<8x32xf32>
    %cst_217 = arith.constant dense<0xFF800000> : vector<8xf32>
    %630 = vector.multi_reduction <maximumf>, %629, %cst_217 [1] : vector<8x32xf32> to vector<8xf32>
    %631 = vector.shape_cast %630 : vector<8xf32> to vector<8x1xf32>
    %632 = vector.broadcast %631 : vector<8x1xf32> to vector<8x32xf32>
    %633 = arith.cmpf oge, %342, %632 : vector<8x32xf32>
    %cst_218 = arith.constant 1.000000e+00 : f32
    %cst_219 = arith.constant 0.000000e+00 : f32
    %634 = vector.broadcast %cst_218 : f32 to vector<8x32xf32>
    %635 = vector.broadcast %cst_219 : f32 to vector<8x32xf32>
    %636 = arith.select %633, %634, %635 : vector<8x32xi1>, vector<8x32xf32>
    %cst_220 = arith.constant dense<0.000000e+00> : vector<8xf32>
    %637 = vector.multi_reduction <add>, %636, %cst_220 [1] : vector<8x32xf32> to vector<8xf32>
    %638 = vector.shape_cast %637 : vector<8xf32> to vector<8x1xf32>
    %639 = arith.select %625, %631, %622 : vector<8x1xi1>, vector<8x1xf32>
    %640 = arith.select %625, %638, %623 : vector<8x1xi1>, vector<8x1xf32>
    %c17_i32_221 = arith.constant 17 : i32
    %641 = vector.broadcast %cst_118 : f32 to vector<8x1xf32>
    %642 = arith.cmpf olt, %640, %641 : vector<8x1xf32>
    %643 = vector.broadcast %639 : vector<8x1xf32> to vector<8x32xf32>
    %644 = arith.cmpf olt, %342, %643 : vector<8x32xf32>
    %cst_222 = arith.constant 0xFF800000 : f32
    %645 = vector.broadcast %cst_222 : f32 to vector<8x32xf32>
    %646 = arith.select %644, %342, %645 : vector<8x32xi1>, vector<8x32xf32>
    %cst_223 = arith.constant dense<0xFF800000> : vector<8xf32>
    %647 = vector.multi_reduction <maximumf>, %646, %cst_223 [1] : vector<8x32xf32> to vector<8xf32>
    %648 = vector.shape_cast %647 : vector<8xf32> to vector<8x1xf32>
    %649 = vector.broadcast %648 : vector<8x1xf32> to vector<8x32xf32>
    %650 = arith.cmpf oge, %342, %649 : vector<8x32xf32>
    %cst_224 = arith.constant 1.000000e+00 : f32
    %cst_225 = arith.constant 0.000000e+00 : f32
    %651 = vector.broadcast %cst_224 : f32 to vector<8x32xf32>
    %652 = vector.broadcast %cst_225 : f32 to vector<8x32xf32>
    %653 = arith.select %650, %651, %652 : vector<8x32xi1>, vector<8x32xf32>
    %cst_226 = arith.constant dense<0.000000e+00> : vector<8xf32>
    %654 = vector.multi_reduction <add>, %653, %cst_226 [1] : vector<8x32xf32> to vector<8xf32>
    %655 = vector.shape_cast %654 : vector<8xf32> to vector<8x1xf32>
    %656 = arith.select %642, %648, %639 : vector<8x1xi1>, vector<8x1xf32>
    %657 = arith.select %642, %655, %640 : vector<8x1xi1>, vector<8x1xf32>
    %658 = vector.broadcast %656 : vector<8x1xf32> to vector<8x32xf32>
    %659 = arith.cmpf oge, %342, %658 : vector<8x32xf32>
    %cst_227 = arith.constant 0.000000e+00 : f32
    %660 = vector.broadcast %cst_227 : f32 to vector<8x32xf32>
    %661 = arith.select %659, %342, %660 : vector<8x32xi1>, vector<8x32xf32>
    %c8_i32_228 = arith.constant 8 : i32
    %662 = arith.muli %c1_i32_109, %c8_i32_228 : i32
    %663 = tpu.assume_multiple %662, 8 : i32
    %664 = arith.index_cast %663 : i32 to index
    %c0_229 = arith.constant 0 : index
    %665 = vector.load %arg8[%664, %c0_229] : memref<48x32xf32, #tpu.memory_space<vmem>>, vector<8x32xf32>
    tpu.vector_store %arg8[%664, %c0_229], %661 {strides = array<i32>} : memref<48x32xf32, #tpu.memory_space<vmem>>, vector<8x32xf32>,
    %c2_i32_230 = arith.constant 2 : i32
    %666 = arith.index_cast %c2_i32_230 : i32 to index
    %c0_231 = arith.constant 0 : index
    %c0_232 = arith.constant 0 : index
    %667 = vector.load %arg0[%666, %c0_231, %c0_232] : memref<6x8x16xf32, #tpu.memory_space<vmem>>, vector<1x8x16xf32>
    %668 = vector.shape_cast %667 : vector<1x8x16xf32> to vector<8x16xf32>
    %cst_233 = arith.constant dense<0.000000e+00> : vector<8x32xf32>
    %669 = tpu.matmul %668, %0, %cst_233 {dimension_numbers = #tpu.dot_dimension_numbers<[1], [0], [0], [1], [0, 0, 1, 1], [], []>} : vector<8x16xf32>, vector<16x32xf32>, vector<8x32xf32> -> vector<8x32xf32>
    %cst_234 = arith.constant dense<0.000000e+00> : vector<8x32xf32>
    %670 = tpu.matmul %661, %1, %cst_234 {dimension_numbers = #tpu.dot_dimension_numbers<[1], [0], [0], [1], [0, 0, 1, 1], [], []>} : vector<8x32xf32>, vector<32x32xf32>, vector<8x32xf32> -> vector<8x32xf32>
    %671 = arith.addf %669, %670 : vector<8x32xf32>
    %672 = arith.addf %671, %4 : vector<8x32xf32>
    %cst_235 = arith.constant dense<0xFF800000> : vector<8xf32>
    %673 = vector.multi_reduction <maximumf>, %672, %cst_235 [1] : vector<8x32xf32> to vector<8xf32>
    %674 = vector.shape_cast %673 : vector<8xf32> to vector<8x1xf32>
    %675 = vector.broadcast %674 : vector<8x1xf32> to vector<8x32xf32>
    %676 = arith.cmpf oge, %672, %675 : vector<8x32xf32>
    %cst_236 = arith.constant 1.000000e+00 : f32
    %cst_237 = arith.constant 0.000000e+00 : f32
    %677 = vector.broadcast %cst_236 : f32 to vector<8x32xf32>
    %678 = vector.broadcast %cst_237 : f32 to vector<8x32xf32>
    %679 = arith.select %676, %677, %678 : vector<8x32xi1>, vector<8x32xf32>
    %cst_238 = arith.constant dense<0.000000e+00> : vector<8xf32>
    %680 = vector.multi_reduction <add>, %679, %cst_238 [1] : vector<8x32xf32> to vector<8xf32>
    %681 = vector.shape_cast %680 : vector<8xf32> to vector<8x1xf32>
    %cst_239 = arith.constant 1.900000e+01 : f32
    %c0_i32_240 = arith.constant 0 : i32
    %682 = vector.broadcast %cst_239 : f32 to vector<8x1xf32>
    %683 = arith.cmpf olt, %681, %682 : vector<8x1xf32>
    %684 = vector.broadcast %674 : vector<8x1xf32> to vector<8x32xf32>
    %685 = arith.cmpf olt, %672, %684 : vector<8x32xf32>
    %cst_241 = arith.constant 0xFF800000 : f32
    %686 = vector.broadcast %cst_241 : f32 to vector<8x32xf32>
    %687 = arith.select %685, %672, %686 : vector<8x32xi1>, vector<8x32xf32>
    %cst_242 = arith.constant dense<0xFF800000> : vector<8xf32>
    %688 = vector.multi_reduction <maximumf>, %687, %cst_242 [1] : vector<8x32xf32> to vector<8xf32>
    %689 = vector.shape_cast %688 : vector<8xf32> to vector<8x1xf32>
    %690 = vector.broadcast %689 : vector<8x1xf32> to vector<8x32xf32>
    %691 = arith.cmpf oge, %672, %690 : vector<8x32xf32>
    %cst_243 = arith.constant 1.000000e+00 : f32
    %cst_244 = arith.constant 0.000000e+00 : f32
    %692 = vector.broadcast %cst_243 : f32 to vector<8x32xf32>
    %693 = vector.broadcast %cst_244 : f32 to vector<8x32xf32>
    %694 = arith.select %691, %692, %693 : vector<8x32xi1>, vector<8x32xf32>
    %cst_245 = arith.constant dense<0.000000e+00> : vector<8xf32>
    %695 = vector.multi_reduction <add>, %694, %cst_245 [1] : vector<8x32xf32> to vector<8xf32>
    %696 = vector.shape_cast %695 : vector<8xf32> to vector<8x1xf32>
    %697 = arith.select %683, %689, %674 : vector<8x1xi1>, vector<8x1xf32>
    %698 = arith.select %683, %696, %681 : vector<8x1xi1>, vector<8x1xf32>
    %c1_i32_246 = arith.constant 1 : i32
    %699 = vector.broadcast %cst_239 : f32 to vector<8x1xf32>
    %700 = arith.cmpf olt, %698, %699 : vector<8x1xf32>
    %701 = vector.broadcast %697 : vector<8x1xf32> to vector<8x32xf32>
    %702 = arith.cmpf olt, %672, %701 : vector<8x32xf32>
    %cst_247 = arith.constant 0xFF800000 : f32
    %703 = vector.broadcast %cst_247 : f32 to vector<8x32xf32>
    %704 = arith.select %702, %672, %703 : vector<8x32xi1>, vector<8x32xf32>
    %cst_248 = arith.constant dense<0xFF800000> : vector<8xf32>
    %705 = vector.multi_reduction <maximumf>, %704, %cst_248 [1] : vector<8x32xf32> to vector<8xf32>
    %706 = vector.shape_cast %705 : vector<8xf32> to vector<8x1xf32>
    %707 = vector.broadcast %706 : vector<8x1xf32> to vector<8x32xf32>
    %708 = arith.cmpf oge, %672, %707 : vector<8x32xf32>
    %cst_249 = arith.constant 1.000000e+00 : f32
    %cst_250 = arith.constant 0.000000e+00 : f32
    %709 = vector.broadcast %cst_249 : f32 to vector<8x32xf32>
    %710 = vector.broadcast %cst_250 : f32 to vector<8x32xf32>
    %711 = arith.select %708, %709, %710 : vector<8x32xi1>, vector<8x32xf32>
    %cst_251 = arith.constant dense<0.000000e+00> : vector<8xf32>
    %712 = vector.multi_reduction <add>, %711, %cst_251 [1] : vector<8x32xf32> to vector<8xf32>
    %713 = vector.shape_cast %712 : vector<8xf32> to vector<8x1xf32>
    %714 = arith.select %700, %706, %697 : vector<8x1xi1>, vector<8x1xf32>
    %715 = arith.select %700, %713, %698 : vector<8x1xi1>, vector<8x1xf32>
    %c2_i32_252 = arith.constant 2 : i32
    %716 = vector.broadcast %cst_239 : f32 to vector<8x1xf32>
    %717 = arith.cmpf olt, %715, %716 : vector<8x1xf32>
    %718 = vector.broadcast %714 : vector<8x1xf32> to vector<8x32xf32>
    %719 = arith.cmpf olt, %672, %718 : vector<8x32xf32>
    %cst_253 = arith.constant 0xFF800000 : f32
    %720 = vector.broadcast %cst_253 : f32 to vector<8x32xf32>
    %721 = arith.select %719, %672, %720 : vector<8x32xi1>, vector<8x32xf32>
    %cst_254 = arith.constant dense<0xFF800000> : vector<8xf32>
    %722 = vector.multi_reduction <maximumf>, %721, %cst_254 [1] : vector<8x32xf32> to vector<8xf32>
    %723 = vector.shape_cast %722 : vector<8xf32> to vector<8x1xf32>
    %724 = vector.broadcast %723 : vector<8x1xf32> to vector<8x32xf32>
    %725 = arith.cmpf oge, %672, %724 : vector<8x32xf32>
    %cst_255 = arith.constant 1.000000e+00 : f32
    %cst_256 = arith.constant 0.000000e+00 : f32
    %726 = vector.broadcast %cst_255 : f32 to vector<8x32xf32>
    %727 = vector.broadcast %cst_256 : f32 to vector<8x32xf32>
    %728 = arith.select %725, %726, %727 : vector<8x32xi1>, vector<8x32xf32>
    %cst_257 = arith.constant dense<0.000000e+00> : vector<8xf32>
    %729 = vector.multi_reduction <add>, %728, %cst_257 [1] : vector<8x32xf32> to vector<8xf32>
    %730 = vector.shape_cast %729 : vector<8xf32> to vector<8x1xf32>
    %731 = arith.select %717, %723, %714 : vector<8x1xi1>, vector<8x1xf32>
    %732 = arith.select %717, %730, %715 : vector<8x1xi1>, vector<8x1xf32>
    %c3_i32_258 = arith.constant 3 : i32
    %733 = vector.broadcast %cst_239 : f32 to vector<8x1xf32>
    %734 = arith.cmpf olt, %732, %733 : vector<8x1xf32>
    %735 = vector.broadcast %731 : vector<8x1xf32> to vector<8x32xf32>
    %736 = arith.cmpf olt, %672, %735 : vector<8x32xf32>
    %cst_259 = arith.constant 0xFF800000 : f32
    %737 = vector.broadcast %cst_259 : f32 to vector<8x32xf32>
    %738 = arith.select %736, %672, %737 : vector<8x32xi1>, vector<8x32xf32>
    %cst_260 = arith.constant dense<0xFF800000> : vector<8xf32>
    %739 = vector.multi_reduction <maximumf>, %738, %cst_260 [1] : vector<8x32xf32> to vector<8xf32>
    %740 = vector.shape_cast %739 : vector<8xf32> to vector<8x1xf32>
    %741 = vector.broadcast %740 : vector<8x1xf32> to vector<8x32xf32>
    %742 = arith.cmpf oge, %672, %741 : vector<8x32xf32>
    %cst_261 = arith.constant 1.000000e+00 : f32
    %cst_262 = arith.constant 0.000000e+00 : f32
    %743 = vector.broadcast %cst_261 : f32 to vector<8x32xf32>
    %744 = vector.broadcast %cst_262 : f32 to vector<8x32xf32>
    %745 = arith.select %742, %743, %744 : vector<8x32xi1>, vector<8x32xf32>
    %cst_263 = arith.constant dense<0.000000e+00> : vector<8xf32>
    %746 = vector.multi_reduction <add>, %745, %cst_263 [1] : vector<8x32xf32> to vector<8xf32>
    %747 = vector.shape_cast %746 : vector<8xf32> to vector<8x1xf32>
    %748 = arith.select %734, %740, %731 : vector<8x1xi1>, vector<8x1xf32>
    %749 = arith.select %734, %747, %732 : vector<8x1xi1>, vector<8x1xf32>
    %c4_i32_264 = arith.constant 4 : i32
    %750 = vector.broadcast %cst_239 : f32 to vector<8x1xf32>
    %751 = arith.cmpf olt, %749, %750 : vector<8x1xf32>
    %752 = vector.broadcast %748 : vector<8x1xf32> to vector<8x32xf32>
    %753 = arith.cmpf olt, %672, %752 : vector<8x32xf32>
    %cst_265 = arith.constant 0xFF800000 : f32
    %754 = vector.broadcast %cst_265 : f32 to vector<8x32xf32>
    %755 = arith.select %753, %672, %754 : vector<8x32xi1>, vector<8x32xf32>
    %cst_266 = arith.constant dense<0xFF800000> : vector<8xf32>
    %756 = vector.multi_reduction <maximumf>, %755, %cst_266 [1] : vector<8x32xf32> to vector<8xf32>
    %757 = vector.shape_cast %756 : vector<8xf32> to vector<8x1xf32>
    %758 = vector.broadcast %757 : vector<8x1xf32> to vector<8x32xf32>
    %759 = arith.cmpf oge, %672, %758 : vector<8x32xf32>
    %cst_267 = arith.constant 1.000000e+00 : f32
    %cst_268 = arith.constant 0.000000e+00 : f32
    %760 = vector.broadcast %cst_267 : f32 to vector<8x32xf32>
    %761 = vector.broadcast %cst_268 : f32 to vector<8x32xf32>
    %762 = arith.select %759, %760, %761 : vector<8x32xi1>, vector<8x32xf32>
    %cst_269 = arith.constant dense<0.000000e+00> : vector<8xf32>
    %763 = vector.multi_reduction <add>, %762, %cst_269 [1] : vector<8x32xf32> to vector<8xf32>
    %764 = vector.shape_cast %763 : vector<8xf32> to vector<8x1xf32>
    %765 = arith.select %751, %757, %748 : vector<8x1xi1>, vector<8x1xf32>
    %766 = arith.select %751, %764, %749 : vector<8x1xi1>, vector<8x1xf32>
    %c5_i32_270 = arith.constant 5 : i32
    %767 = vector.broadcast %cst_239 : f32 to vector<8x1xf32>
    %768 = arith.cmpf olt, %766, %767 : vector<8x1xf32>
    %769 = vector.broadcast %765 : vector<8x1xf32> to vector<8x32xf32>
    %770 = arith.cmpf olt, %672, %769 : vector<8x32xf32>
    %cst_271 = arith.constant 0xFF800000 : f32
    %771 = vector.broadcast %cst_271 : f32 to vector<8x32xf32>
    %772 = arith.select %770, %672, %771 : vector<8x32xi1>, vector<8x32xf32>
    %cst_272 = arith.constant dense<0xFF800000> : vector<8xf32>
    %773 = vector.multi_reduction <maximumf>, %772, %cst_272 [1] : vector<8x32xf32> to vector<8xf32>
    %774 = vector.shape_cast %773 : vector<8xf32> to vector<8x1xf32>
    %775 = vector.broadcast %774 : vector<8x1xf32> to vector<8x32xf32>
    %776 = arith.cmpf oge, %672, %775 : vector<8x32xf32>
    %cst_273 = arith.constant 1.000000e+00 : f32
    %cst_274 = arith.constant 0.000000e+00 : f32
    %777 = vector.broadcast %cst_273 : f32 to vector<8x32xf32>
    %778 = vector.broadcast %cst_274 : f32 to vector<8x32xf32>
    %779 = arith.select %776, %777, %778 : vector<8x32xi1>, vector<8x32xf32>
    %cst_275 = arith.constant dense<0.000000e+00> : vector<8xf32>
    %780 = vector.multi_reduction <add>, %779, %cst_275 [1] : vector<8x32xf32> to vector<8xf32>
    %781 = vector.shape_cast %780 : vector<8xf32> to vector<8x1xf32>
    %782 = arith.select %768, %774, %765 : vector<8x1xi1>, vector<8x1xf32>
    %783 = arith.select %768, %781, %766 : vector<8x1xi1>, vector<8x1xf32>
    %c6_i32_276 = arith.constant 6 : i32
    %784 = vector.broadcast %cst_239 : f32 to vector<8x1xf32>
    %785 = arith.cmpf olt, %783, %784 : vector<8x1xf32>
    %786 = vector.broadcast %782 : vector<8x1xf32> to vector<8x32xf32>
    %787 = arith.cmpf olt, %672, %786 : vector<8x32xf32>
    %cst_277 = arith.constant 0xFF800000 : f32
    %788 = vector.broadcast %cst_277 : f32 to vector<8x32xf32>
    %789 = arith.select %787, %672, %788 : vector<8x32xi1>, vector<8x32xf32>
    %cst_278 = arith.constant dense<0xFF800000> : vector<8xf32>
    %790 = vector.multi_reduction <maximumf>, %789, %cst_278 [1] : vector<8x32xf32> to vector<8xf32>
    %791 = vector.shape_cast %790 : vector<8xf32> to vector<8x1xf32>
    %792 = vector.broadcast %791 : vector<8x1xf32> to vector<8x32xf32>
    %793 = arith.cmpf oge, %672, %792 : vector<8x32xf32>
    %cst_279 = arith.constant 1.000000e+00 : f32
    %cst_280 = arith.constant 0.000000e+00 : f32
    %794 = vector.broadcast %cst_279 : f32 to vector<8x32xf32>
    %795 = vector.broadcast %cst_280 : f32 to vector<8x32xf32>
    %796 = arith.select %793, %794, %795 : vector<8x32xi1>, vector<8x32xf32>
    %cst_281 = arith.constant dense<0.000000e+00> : vector<8xf32>
    %797 = vector.multi_reduction <add>, %796, %cst_281 [1] : vector<8x32xf32> to vector<8xf32>
    %798 = vector.shape_cast %797 : vector<8xf32> to vector<8x1xf32>
    %799 = arith.select %785, %791, %782 : vector<8x1xi1>, vector<8x1xf32>
    %800 = arith.select %785, %798, %783 : vector<8x1xi1>, vector<8x1xf32>
    %c7_i32_282 = arith.constant 7 : i32
    %801 = vector.broadcast %cst_239 : f32 to vector<8x1xf32>
    %802 = arith.cmpf olt, %800, %801 : vector<8x1xf32>
    %803 = vector.broadcast %799 : vector<8x1xf32> to vector<8x32xf32>
    %804 = arith.cmpf olt, %672, %803 : vector<8x32xf32>
    %cst_283 = arith.constant 0xFF800000 : f32
    %805 = vector.broadcast %cst_283 : f32 to vector<8x32xf32>
    %806 = arith.select %804, %672, %805 : vector<8x32xi1>, vector<8x32xf32>
    %cst_284 = arith.constant dense<0xFF800000> : vector<8xf32>
    %807 = vector.multi_reduction <maximumf>, %806, %cst_284 [1] : vector<8x32xf32> to vector<8xf32>
    %808 = vector.shape_cast %807 : vector<8xf32> to vector<8x1xf32>
    %809 = vector.broadcast %808 : vector<8x1xf32> to vector<8x32xf32>
    %810 = arith.cmpf oge, %672, %809 : vector<8x32xf32>
    %cst_285 = arith.constant 1.000000e+00 : f32
    %cst_286 = arith.constant 0.000000e+00 : f32
    %811 = vector.broadcast %cst_285 : f32 to vector<8x32xf32>
    %812 = vector.broadcast %cst_286 : f32 to vector<8x32xf32>
    %813 = arith.select %810, %811, %812 : vector<8x32xi1>, vector<8x32xf32>
    %cst_287 = arith.constant dense<0.000000e+00> : vector<8xf32>
    %814 = vector.multi_reduction <add>, %813, %cst_287 [1] : vector<8x32xf32> to vector<8xf32>
    %815 = vector.shape_cast %814 : vector<8xf32> to vector<8x1xf32>
    %816 = arith.select %802, %808, %799 : vector<8x1xi1>, vector<8x1xf32>
    %817 = arith.select %802, %815, %800 : vector<8x1xi1>, vector<8x1xf32>
    %c8_i32_288 = arith.constant 8 : i32
    %818 = vector.broadcast %cst_239 : f32 to vector<8x1xf32>
    %819 = arith.cmpf olt, %817, %818 : vector<8x1xf32>
    %820 = vector.broadcast %816 : vector<8x1xf32> to vector<8x32xf32>
    %821 = arith.cmpf olt, %672, %820 : vector<8x32xf32>
    %cst_289 = arith.constant 0xFF800000 : f32
    %822 = vector.broadcast %cst_289 : f32 to vector<8x32xf32>
    %823 = arith.select %821, %672, %822 : vector<8x32xi1>, vector<8x32xf32>
    %cst_290 = arith.constant dense<0xFF800000> : vector<8xf32>
    %824 = vector.multi_reduction <maximumf>, %823, %cst_290 [1] : vector<8x32xf32> to vector<8xf32>
    %825 = vector.shape_cast %824 : vector<8xf32> to vector<8x1xf32>
    %826 = vector.broadcast %825 : vector<8x1xf32> to vector<8x32xf32>
    %827 = arith.cmpf oge, %672, %826 : vector<8x32xf32>
    %cst_291 = arith.constant 1.000000e+00 : f32
    %cst_292 = arith.constant 0.000000e+00 : f32
    %828 = vector.broadcast %cst_291 : f32 to vector<8x32xf32>
    %829 = vector.broadcast %cst_292 : f32 to vector<8x32xf32>
    %830 = arith.select %827, %828, %829 : vector<8x32xi1>, vector<8x32xf32>
    %cst_293 = arith.constant dense<0.000000e+00> : vector<8xf32>
    %831 = vector.multi_reduction <add>, %830, %cst_293 [1] : vector<8x32xf32> to vector<8xf32>
    %832 = vector.shape_cast %831 : vector<8xf32> to vector<8x1xf32>
    %833 = arith.select %819, %825, %816 : vector<8x1xi1>, vector<8x1xf32>
    %834 = arith.select %819, %832, %817 : vector<8x1xi1>, vector<8x1xf32>
    %c9_i32_294 = arith.constant 9 : i32
    %835 = vector.broadcast %cst_239 : f32 to vector<8x1xf32>
    %836 = arith.cmpf olt, %834, %835 : vector<8x1xf32>
    %837 = vector.broadcast %833 : vector<8x1xf32> to vector<8x32xf32>
    %838 = arith.cmpf olt, %672, %837 : vector<8x32xf32>
    %cst_295 = arith.constant 0xFF800000 : f32
    %839 = vector.broadcast %cst_295 : f32 to vector<8x32xf32>
    %840 = arith.select %838, %672, %839 : vector<8x32xi1>, vector<8x32xf32>
    %cst_296 = arith.constant dense<0xFF800000> : vector<8xf32>
    %841 = vector.multi_reduction <maximumf>, %840, %cst_296 [1] : vector<8x32xf32> to vector<8xf32>
    %842 = vector.shape_cast %841 : vector<8xf32> to vector<8x1xf32>
    %843 = vector.broadcast %842 : vector<8x1xf32> to vector<8x32xf32>
    %844 = arith.cmpf oge, %672, %843 : vector<8x32xf32>
    %cst_297 = arith.constant 1.000000e+00 : f32
    %cst_298 = arith.constant 0.000000e+00 : f32
    %845 = vector.broadcast %cst_297 : f32 to vector<8x32xf32>
    %846 = vector.broadcast %cst_298 : f32 to vector<8x32xf32>
    %847 = arith.select %844, %845, %846 : vector<8x32xi1>, vector<8x32xf32>
    %cst_299 = arith.constant dense<0.000000e+00> : vector<8xf32>
    %848 = vector.multi_reduction <add>, %847, %cst_299 [1] : vector<8x32xf32> to vector<8xf32>
    %849 = vector.shape_cast %848 : vector<8xf32> to vector<8x1xf32>
    %850 = arith.select %836, %842, %833 : vector<8x1xi1>, vector<8x1xf32>
    %851 = arith.select %836, %849, %834 : vector<8x1xi1>, vector<8x1xf32>
    %c10_i32_300 = arith.constant 10 : i32
    %852 = vector.broadcast %cst_239 : f32 to vector<8x1xf32>
    %853 = arith.cmpf olt, %851, %852 : vector<8x1xf32>
    %854 = vector.broadcast %850 : vector<8x1xf32> to vector<8x32xf32>
    %855 = arith.cmpf olt, %672, %854 : vector<8x32xf32>
    %cst_301 = arith.constant 0xFF800000 : f32
    %856 = vector.broadcast %cst_301 : f32 to vector<8x32xf32>
    %857 = arith.select %855, %672, %856 : vector<8x32xi1>, vector<8x32xf32>
    %cst_302 = arith.constant dense<0xFF800000> : vector<8xf32>
    %858 = vector.multi_reduction <maximumf>, %857, %cst_302 [1] : vector<8x32xf32> to vector<8xf32>
    %859 = vector.shape_cast %858 : vector<8xf32> to vector<8x1xf32>
    %860 = vector.broadcast %859 : vector<8x1xf32> to vector<8x32xf32>
    %861 = arith.cmpf oge, %672, %860 : vector<8x32xf32>
    %cst_303 = arith.constant 1.000000e+00 : f32
    %cst_304 = arith.constant 0.000000e+00 : f32
    %862 = vector.broadcast %cst_303 : f32 to vector<8x32xf32>
    %863 = vector.broadcast %cst_304 : f32 to vector<8x32xf32>
    %864 = arith.select %861, %862, %863 : vector<8x32xi1>, vector<8x32xf32>
    %cst_305 = arith.constant dense<0.000000e+00> : vector<8xf32>
    %865 = vector.multi_reduction <add>, %864, %cst_305 [1] : vector<8x32xf32> to vector<8xf32>
    %866 = vector.shape_cast %865 : vector<8xf32> to vector<8x1xf32>
    %867 = arith.select %853, %859, %850 : vector<8x1xi1>, vector<8x1xf32>
    %868 = arith.select %853, %866, %851 : vector<8x1xi1>, vector<8x1xf32>
    %c11_i32_306 = arith.constant 11 : i32
    %869 = vector.broadcast %cst_239 : f32 to vector<8x1xf32>
    %870 = arith.cmpf olt, %868, %869 : vector<8x1xf32>
    %871 = vector.broadcast %867 : vector<8x1xf32> to vector<8x32xf32>
    %872 = arith.cmpf olt, %672, %871 : vector<8x32xf32>
    %cst_307 = arith.constant 0xFF800000 : f32
    %873 = vector.broadcast %cst_307 : f32 to vector<8x32xf32>
    %874 = arith.select %872, %672, %873 : vector<8x32xi1>, vector<8x32xf32>
    %cst_308 = arith.constant dense<0xFF800000> : vector<8xf32>
    %875 = vector.multi_reduction <maximumf>, %874, %cst_308 [1] : vector<8x32xf32> to vector<8xf32>
    %876 = vector.shape_cast %875 : vector<8xf32> to vector<8x1xf32>
    %877 = vector.broadcast %876 : vector<8x1xf32> to vector<8x32xf32>
    %878 = arith.cmpf oge, %672, %877 : vector<8x32xf32>
    %cst_309 = arith.constant 1.000000e+00 : f32
    %cst_310 = arith.constant 0.000000e+00 : f32
    %879 = vector.broadcast %cst_309 : f32 to vector<8x32xf32>
    %880 = vector.broadcast %cst_310 : f32 to vector<8x32xf32>
    %881 = arith.select %878, %879, %880 : vector<8x32xi1>, vector<8x32xf32>
    %cst_311 = arith.constant dense<0.000000e+00> : vector<8xf32>
    %882 = vector.multi_reduction <add>, %881, %cst_311 [1] : vector<8x32xf32> to vector<8xf32>
    %883 = vector.shape_cast %882 : vector<8xf32> to vector<8x1xf32>
    %884 = arith.select %870, %876, %867 : vector<8x1xi1>, vector<8x1xf32>
    %885 = arith.select %870, %883, %868 : vector<8x1xi1>, vector<8x1xf32>
    %c12_i32_312 = arith.constant 12 : i32
    %886 = vector.broadcast %cst_239 : f32 to vector<8x1xf32>
    %887 = arith.cmpf olt, %885, %886 : vector<8x1xf32>
    %888 = vector.broadcast %884 : vector<8x1xf32> to vector<8x32xf32>
    %889 = arith.cmpf olt, %672, %888 : vector<8x32xf32>
    %cst_313 = arith.constant 0xFF800000 : f32
    %890 = vector.broadcast %cst_313 : f32 to vector<8x32xf32>
    %891 = arith.select %889, %672, %890 : vector<8x32xi1>, vector<8x32xf32>
    %cst_314 = arith.constant dense<0xFF800000> : vector<8xf32>
    %892 = vector.multi_reduction <maximumf>, %891, %cst_314 [1] : vector<8x32xf32> to vector<8xf32>
    %893 = vector.shape_cast %892 : vector<8xf32> to vector<8x1xf32>
    %894 = vector.broadcast %893 : vector<8x1xf32> to vector<8x32xf32>
    %895 = arith.cmpf oge, %672, %894 : vector<8x32xf32>
    %cst_315 = arith.constant 1.000000e+00 : f32
    %cst_316 = arith.constant 0.000000e+00 : f32
    %896 = vector.broadcast %cst_315 : f32 to vector<8x32xf32>
    %897 = vector.broadcast %cst_316 : f32 to vector<8x32xf32>
    %898 = arith.select %895, %896, %897 : vector<8x32xi1>, vector<8x32xf32>
    %cst_317 = arith.constant dense<0.000000e+00> : vector<8xf32>
    %899 = vector.multi_reduction <add>, %898, %cst_317 [1] : vector<8x32xf32> to vector<8xf32>
    %900 = vector.shape_cast %899 : vector<8xf32> to vector<8x1xf32>
    %901 = arith.select %887, %893, %884 : vector<8x1xi1>, vector<8x1xf32>
    %902 = arith.select %887, %900, %885 : vector<8x1xi1>, vector<8x1xf32>
    %c13_i32_318 = arith.constant 13 : i32
    %903 = vector.broadcast %cst_239 : f32 to vector<8x1xf32>
    %904 = arith.cmpf olt, %902, %903 : vector<8x1xf32>
    %905 = vector.broadcast %901 : vector<8x1xf32> to vector<8x32xf32>
    %906 = arith.cmpf olt, %672, %905 : vector<8x32xf32>
    %cst_319 = arith.constant 0xFF800000 : f32
    %907 = vector.broadcast %cst_319 : f32 to vector<8x32xf32>
    %908 = arith.select %906, %672, %907 : vector<8x32xi1>, vector<8x32xf32>
    %cst_320 = arith.constant dense<0xFF800000> : vector<8xf32>
    %909 = vector.multi_reduction <maximumf>, %908, %cst_320 [1] : vector<8x32xf32> to vector<8xf32>
    %910 = vector.shape_cast %909 : vector<8xf32> to vector<8x1xf32>
    %911 = vector.broadcast %910 : vector<8x1xf32> to vector<8x32xf32>
    %912 = arith.cmpf oge, %672, %911 : vector<8x32xf32>
    %cst_321 = arith.constant 1.000000e+00 : f32
    %cst_322 = arith.constant 0.000000e+00 : f32
    %913 = vector.broadcast %cst_321 : f32 to vector<8x32xf32>
    %914 = vector.broadcast %cst_322 : f32 to vector<8x32xf32>
    %915 = arith.select %912, %913, %914 : vector<8x32xi1>, vector<8x32xf32>
    %cst_323 = arith.constant dense<0.000000e+00> : vector<8xf32>
    %916 = vector.multi_reduction <add>, %915, %cst_323 [1] : vector<8x32xf32> to vector<8xf32>
    %917 = vector.shape_cast %916 : vector<8xf32> to vector<8x1xf32>
    %918 = arith.select %904, %910, %901 : vector<8x1xi1>, vector<8x1xf32>
    %919 = arith.select %904, %917, %902 : vector<8x1xi1>, vector<8x1xf32>
    %c14_i32_324 = arith.constant 14 : i32
    %920 = vector.broadcast %cst_239 : f32 to vector<8x1xf32>
    %921 = arith.cmpf olt, %919, %920 : vector<8x1xf32>
    %922 = vector.broadcast %918 : vector<8x1xf32> to vector<8x32xf32>
    %923 = arith.cmpf olt, %672, %922 : vector<8x32xf32>
    %cst_325 = arith.constant 0xFF800000 : f32
    %924 = vector.broadcast %cst_325 : f32 to vector<8x32xf32>
    %925 = arith.select %923, %672, %924 : vector<8x32xi1>, vector<8x32xf32>
    %cst_326 = arith.constant dense<0xFF800000> : vector<8xf32>
    %926 = vector.multi_reduction <maximumf>, %925, %cst_326 [1] : vector<8x32xf32> to vector<8xf32>
    %927 = vector.shape_cast %926 : vector<8xf32> to vector<8x1xf32>
    %928 = vector.broadcast %927 : vector<8x1xf32> to vector<8x32xf32>
    %929 = arith.cmpf oge, %672, %928 : vector<8x32xf32>
    %cst_327 = arith.constant 1.000000e+00 : f32
    %cst_328 = arith.constant 0.000000e+00 : f32
    %930 = vector.broadcast %cst_327 : f32 to vector<8x32xf32>
    %931 = vector.broadcast %cst_328 : f32 to vector<8x32xf32>
    %932 = arith.select %929, %930, %931 : vector<8x32xi1>, vector<8x32xf32>
    %cst_329 = arith.constant dense<0.000000e+00> : vector<8xf32>
    %933 = vector.multi_reduction <add>, %932, %cst_329 [1] : vector<8x32xf32> to vector<8xf32>
    %934 = vector.shape_cast %933 : vector<8xf32> to vector<8x1xf32>
    %935 = arith.select %921, %927, %918 : vector<8x1xi1>, vector<8x1xf32>
    %936 = arith.select %921, %934, %919 : vector<8x1xi1>, vector<8x1xf32>
    %c15_i32_330 = arith.constant 15 : i32
    %937 = vector.broadcast %cst_239 : f32 to vector<8x1xf32>
    %938 = arith.cmpf olt, %936, %937 : vector<8x1xf32>
    %939 = vector.broadcast %935 : vector<8x1xf32> to vector<8x32xf32>
    %940 = arith.cmpf olt, %672, %939 : vector<8x32xf32>
    %cst_331 = arith.constant 0xFF800000 : f32
    %941 = vector.broadcast %cst_331 : f32 to vector<8x32xf32>
    %942 = arith.select %940, %672, %941 : vector<8x32xi1>, vector<8x32xf32>
    %cst_332 = arith.constant dense<0xFF800000> : vector<8xf32>
    %943 = vector.multi_reduction <maximumf>, %942, %cst_332 [1] : vector<8x32xf32> to vector<8xf32>
    %944 = vector.shape_cast %943 : vector<8xf32> to vector<8x1xf32>
    %945 = vector.broadcast %944 : vector<8x1xf32> to vector<8x32xf32>
    %946 = arith.cmpf oge, %672, %945 : vector<8x32xf32>
    %cst_333 = arith.constant 1.000000e+00 : f32
    %cst_334 = arith.constant 0.000000e+00 : f32
    %947 = vector.broadcast %cst_333 : f32 to vector<8x32xf32>
    %948 = vector.broadcast %cst_334 : f32 to vector<8x32xf32>
    %949 = arith.select %946, %947, %948 : vector<8x32xi1>, vector<8x32xf32>
    %cst_335 = arith.constant dense<0.000000e+00> : vector<8xf32>
    %950 = vector.multi_reduction <add>, %949, %cst_335 [1] : vector<8x32xf32> to vector<8xf32>
    %951 = vector.shape_cast %950 : vector<8xf32> to vector<8x1xf32>
    %952 = arith.select %938, %944, %935 : vector<8x1xi1>, vector<8x1xf32>
    %953 = arith.select %938, %951, %936 : vector<8x1xi1>, vector<8x1xf32>
    %c16_i32_336 = arith.constant 16 : i32
    %954 = vector.broadcast %cst_239 : f32 to vector<8x1xf32>
    %955 = arith.cmpf olt, %953, %954 : vector<8x1xf32>
    %956 = vector.broadcast %952 : vector<8x1xf32> to vector<8x32xf32>
    %957 = arith.cmpf olt, %672, %956 : vector<8x32xf32>
    %cst_337 = arith.constant 0xFF800000 : f32
    %958 = vector.broadcast %cst_337 : f32 to vector<8x32xf32>
    %959 = arith.select %957, %672, %958 : vector<8x32xi1>, vector<8x32xf32>
    %cst_338 = arith.constant dense<0xFF800000> : vector<8xf32>
    %960 = vector.multi_reduction <maximumf>, %959, %cst_338 [1] : vector<8x32xf32> to vector<8xf32>
    %961 = vector.shape_cast %960 : vector<8xf32> to vector<8x1xf32>
    %962 = vector.broadcast %961 : vector<8x1xf32> to vector<8x32xf32>
    %963 = arith.cmpf oge, %672, %962 : vector<8x32xf32>
    %cst_339 = arith.constant 1.000000e+00 : f32
    %cst_340 = arith.constant 0.000000e+00 : f32
    %964 = vector.broadcast %cst_339 : f32 to vector<8x32xf32>
    %965 = vector.broadcast %cst_340 : f32 to vector<8x32xf32>
    %966 = arith.select %963, %964, %965 : vector<8x32xi1>, vector<8x32xf32>
    %cst_341 = arith.constant dense<0.000000e+00> : vector<8xf32>
    %967 = vector.multi_reduction <add>, %966, %cst_341 [1] : vector<8x32xf32> to vector<8xf32>
    %968 = vector.shape_cast %967 : vector<8xf32> to vector<8x1xf32>
    %969 = arith.select %955, %961, %952 : vector<8x1xi1>, vector<8x1xf32>
    %970 = arith.select %955, %968, %953 : vector<8x1xi1>, vector<8x1xf32>
    %c17_i32_342 = arith.constant 17 : i32
    %971 = vector.broadcast %cst_239 : f32 to vector<8x1xf32>
    %972 = arith.cmpf olt, %970, %971 : vector<8x1xf32>
    %973 = vector.broadcast %969 : vector<8x1xf32> to vector<8x32xf32>
    %974 = arith.cmpf olt, %672, %973 : vector<8x32xf32>
    %cst_343 = arith.constant 0xFF800000 : f32
    %975 = vector.broadcast %cst_343 : f32 to vector<8x32xf32>
    %976 = arith.select %974, %672, %975 : vector<8x32xi1>, vector<8x32xf32>
    %cst_344 = arith.constant dense<0xFF800000> : vector<8xf32>
    %977 = vector.multi_reduction <maximumf>, %976, %cst_344 [1] : vector<8x32xf32> to vector<8xf32>
    %978 = vector.shape_cast %977 : vector<8xf32> to vector<8x1xf32>
    %979 = vector.broadcast %978 : vector<8x1xf32> to vector<8x32xf32>
    %980 = arith.cmpf oge, %672, %979 : vector<8x32xf32>
    %cst_345 = arith.constant 1.000000e+00 : f32
    %cst_346 = arith.constant 0.000000e+00 : f32
    %981 = vector.broadcast %cst_345 : f32 to vector<8x32xf32>
    %982 = vector.broadcast %cst_346 : f32 to vector<8x32xf32>
    %983 = arith.select %980, %981, %982 : vector<8x32xi1>, vector<8x32xf32>
    %cst_347 = arith.constant dense<0.000000e+00> : vector<8xf32>
    %984 = vector.multi_reduction <add>, %983, %cst_347 [1] : vector<8x32xf32> to vector<8xf32>
    %985 = vector.shape_cast %984 : vector<8xf32> to vector<8x1xf32>
    %986 = arith.select %972, %978, %969 : vector<8x1xi1>, vector<8x1xf32>
    %987 = arith.select %972, %985, %970 : vector<8x1xi1>, vector<8x1xf32>
    %988 = vector.broadcast %986 : vector<8x1xf32> to vector<8x32xf32>
    %989 = arith.cmpf oge, %672, %988 : vector<8x32xf32>
    %cst_348 = arith.constant 0.000000e+00 : f32
    %990 = vector.broadcast %cst_348 : f32 to vector<8x32xf32>
    %991 = arith.select %989, %672, %990 : vector<8x32xi1>, vector<8x32xf32>
    %c8_i32_349 = arith.constant 8 : i32
    %992 = arith.muli %c2_i32_230, %c8_i32_349 : i32
    %993 = tpu.assume_multiple %992, 8 : i32
    %994 = arith.index_cast %993 : i32 to index
    %c0_350 = arith.constant 0 : index
    %995 = vector.load %arg8[%994, %c0_350] : memref<48x32xf32, #tpu.memory_space<vmem>>, vector<8x32xf32>
    tpu.vector_store %arg8[%994, %c0_350], %991 {strides = array<i32>} : memref<48x32xf32, #tpu.memory_space<vmem>>, vector<8x32xf32>,
    %c3_i32_351 = arith.constant 3 : i32
    %996 = arith.index_cast %c3_i32_351 : i32 to index
    %c0_352 = arith.constant 0 : index
    %c0_353 = arith.constant 0 : index
    %997 = vector.load %arg0[%996, %c0_352, %c0_353] : memref<6x8x16xf32, #tpu.memory_space<vmem>>, vector<1x8x16xf32>
    %998 = vector.shape_cast %997 : vector<1x8x16xf32> to vector<8x16xf32>
    %cst_354 = arith.constant dense<0.000000e+00> : vector<8x32xf32>
    %999 = tpu.matmul %998, %0, %cst_354 {dimension_numbers = #tpu.dot_dimension_numbers<[1], [0], [0], [1], [0, 0, 1, 1], [], []>} : vector<8x16xf32>, vector<16x32xf32>, vector<8x32xf32> -> vector<8x32xf32>
    %cst_355 = arith.constant dense<0.000000e+00> : vector<8x32xf32>
    %1000 = tpu.matmul %991, %1, %cst_355 {dimension_numbers = #tpu.dot_dimension_numbers<[1], [0], [0], [1], [0, 0, 1, 1], [], []>} : vector<8x32xf32>, vector<32x32xf32>, vector<8x32xf32> -> vector<8x32xf32>
    %1001 = arith.addf %999, %1000 : vector<8x32xf32>
    %1002 = arith.addf %1001, %4 : vector<8x32xf32>
    %cst_356 = arith.constant dense<0xFF800000> : vector<8xf32>
    %1003 = vector.multi_reduction <maximumf>, %1002, %cst_356 [1] : vector<8x32xf32> to vector<8xf32>
    %1004 = vector.shape_cast %1003 : vector<8xf32> to vector<8x1xf32>
    %1005 = vector.broadcast %1004 : vector<8x1xf32> to vector<8x32xf32>
    %1006 = arith.cmpf oge, %1002, %1005 : vector<8x32xf32>
    %cst_357 = arith.constant 1.000000e+00 : f32
    %cst_358 = arith.constant 0.000000e+00 : f32
    %1007 = vector.broadcast %cst_357 : f32 to vector<8x32xf32>
    %1008 = vector.broadcast %cst_358 : f32 to vector<8x32xf32>
    %1009 = arith.select %1006, %1007, %1008 : vector<8x32xi1>, vector<8x32xf32>
    %cst_359 = arith.constant dense<0.000000e+00> : vector<8xf32>
    %1010 = vector.multi_reduction <add>, %1009, %cst_359 [1] : vector<8x32xf32> to vector<8xf32>
    %1011 = vector.shape_cast %1010 : vector<8xf32> to vector<8x1xf32>
    %cst_360 = arith.constant 1.900000e+01 : f32
    %c0_i32_361 = arith.constant 0 : i32
    %1012 = vector.broadcast %cst_360 : f32 to vector<8x1xf32>
    %1013 = arith.cmpf olt, %1011, %1012 : vector<8x1xf32>
    %1014 = vector.broadcast %1004 : vector<8x1xf32> to vector<8x32xf32>
    %1015 = arith.cmpf olt, %1002, %1014 : vector<8x32xf32>
    %cst_362 = arith.constant 0xFF800000 : f32
    %1016 = vector.broadcast %cst_362 : f32 to vector<8x32xf32>
    %1017 = arith.select %1015, %1002, %1016 : vector<8x32xi1>, vector<8x32xf32>
    %cst_363 = arith.constant dense<0xFF800000> : vector<8xf32>
    %1018 = vector.multi_reduction <maximumf>, %1017, %cst_363 [1] : vector<8x32xf32> to vector<8xf32>
    %1019 = vector.shape_cast %1018 : vector<8xf32> to vector<8x1xf32>
    %1020 = vector.broadcast %1019 : vector<8x1xf32> to vector<8x32xf32>
    %1021 = arith.cmpf oge, %1002, %1020 : vector<8x32xf32>
    %cst_364 = arith.constant 1.000000e+00 : f32
    %cst_365 = arith.constant 0.000000e+00 : f32
    %1022 = vector.broadcast %cst_364 : f32 to vector<8x32xf32>
    %1023 = vector.broadcast %cst_365 : f32 to vector<8x32xf32>
    %1024 = arith.select %1021, %1022, %1023 : vector<8x32xi1>, vector<8x32xf32>
    %cst_366 = arith.constant dense<0.000000e+00> : vector<8xf32>
    %1025 = vector.multi_reduction <add>, %1024, %cst_366 [1] : vector<8x32xf32> to vector<8xf32>
    %1026 = vector.shape_cast %1025 : vector<8xf32> to vector<8x1xf32>
    %1027 = arith.select %1013, %1019, %1004 : vector<8x1xi1>, vector<8x1xf32>
    %1028 = arith.select %1013, %1026, %1011 : vector<8x1xi1>, vector<8x1xf32>
    %c1_i32_367 = arith.constant 1 : i32
    %1029 = vector.broadcast %cst_360 : f32 to vector<8x1xf32>
    %1030 = arith.cmpf olt, %1028, %1029 : vector<8x1xf32>
    %1031 = vector.broadcast %1027 : vector<8x1xf32> to vector<8x32xf32>
    %1032 = arith.cmpf olt, %1002, %1031 : vector<8x32xf32>
    %cst_368 = arith.constant 0xFF800000 : f32
    %1033 = vector.broadcast %cst_368 : f32 to vector<8x32xf32>
    %1034 = arith.select %1032, %1002, %1033 : vector<8x32xi1>, vector<8x32xf32>
    %cst_369 = arith.constant dense<0xFF800000> : vector<8xf32>
    %1035 = vector.multi_reduction <maximumf>, %1034, %cst_369 [1] : vector<8x32xf32> to vector<8xf32>
    %1036 = vector.shape_cast %1035 : vector<8xf32> to vector<8x1xf32>
    %1037 = vector.broadcast %1036 : vector<8x1xf32> to vector<8x32xf32>
    %1038 = arith.cmpf oge, %1002, %1037 : vector<8x32xf32>
    %cst_370 = arith.constant 1.000000e+00 : f32
    %cst_371 = arith.constant 0.000000e+00 : f32
    %1039 = vector.broadcast %cst_370 : f32 to vector<8x32xf32>
    %1040 = vector.broadcast %cst_371 : f32 to vector<8x32xf32>
    %1041 = arith.select %1038, %1039, %1040 : vector<8x32xi1>, vector<8x32xf32>
    %cst_372 = arith.constant dense<0.000000e+00> : vector<8xf32>
    %1042 = vector.multi_reduction <add>, %1041, %cst_372 [1] : vector<8x32xf32> to vector<8xf32>
    %1043 = vector.shape_cast %1042 : vector<8xf32> to vector<8x1xf32>
    %1044 = arith.select %1030, %1036, %1027 : vector<8x1xi1>, vector<8x1xf32>
    %1045 = arith.select %1030, %1043, %1028 : vector<8x1xi1>, vector<8x1xf32>
    %c2_i32_373 = arith.constant 2 : i32
    %1046 = vector.broadcast %cst_360 : f32 to vector<8x1xf32>
    %1047 = arith.cmpf olt, %1045, %1046 : vector<8x1xf32>
    %1048 = vector.broadcast %1044 : vector<8x1xf32> to vector<8x32xf32>
    %1049 = arith.cmpf olt, %1002, %1048 : vector<8x32xf32>
    %cst_374 = arith.constant 0xFF800000 : f32
    %1050 = vector.broadcast %cst_374 : f32 to vector<8x32xf32>
    %1051 = arith.select %1049, %1002, %1050 : vector<8x32xi1>, vector<8x32xf32>
    %cst_375 = arith.constant dense<0xFF800000> : vector<8xf32>
    %1052 = vector.multi_reduction <maximumf>, %1051, %cst_375 [1] : vector<8x32xf32> to vector<8xf32>
    %1053 = vector.shape_cast %1052 : vector<8xf32> to vector<8x1xf32>
    %1054 = vector.broadcast %1053 : vector<8x1xf32> to vector<8x32xf32>
    %1055 = arith.cmpf oge, %1002, %1054 : vector<8x32xf32>
    %cst_376 = arith.constant 1.000000e+00 : f32
    %cst_377 = arith.constant 0.000000e+00 : f32
    %1056 = vector.broadcast %cst_376 : f32 to vector<8x32xf32>
    %1057 = vector.broadcast %cst_377 : f32 to vector<8x32xf32>
    %1058 = arith.select %1055, %1056, %1057 : vector<8x32xi1>, vector<8x32xf32>
    %cst_378 = arith.constant dense<0.000000e+00> : vector<8xf32>
    %1059 = vector.multi_reduction <add>, %1058, %cst_378 [1] : vector<8x32xf32> to vector<8xf32>
    %1060 = vector.shape_cast %1059 : vector<8xf32> to vector<8x1xf32>
    %1061 = arith.select %1047, %1053, %1044 : vector<8x1xi1>, vector<8x1xf32>
    %1062 = arith.select %1047, %1060, %1045 : vector<8x1xi1>, vector<8x1xf32>
    %c3_i32_379 = arith.constant 3 : i32
    %1063 = vector.broadcast %cst_360 : f32 to vector<8x1xf32>
    %1064 = arith.cmpf olt, %1062, %1063 : vector<8x1xf32>
    %1065 = vector.broadcast %1061 : vector<8x1xf32> to vector<8x32xf32>
    %1066 = arith.cmpf olt, %1002, %1065 : vector<8x32xf32>
    %cst_380 = arith.constant 0xFF800000 : f32
    %1067 = vector.broadcast %cst_380 : f32 to vector<8x32xf32>
    %1068 = arith.select %1066, %1002, %1067 : vector<8x32xi1>, vector<8x32xf32>
    %cst_381 = arith.constant dense<0xFF800000> : vector<8xf32>
    %1069 = vector.multi_reduction <maximumf>, %1068, %cst_381 [1] : vector<8x32xf32> to vector<8xf32>
    %1070 = vector.shape_cast %1069 : vector<8xf32> to vector<8x1xf32>
    %1071 = vector.broadcast %1070 : vector<8x1xf32> to vector<8x32xf32>
    %1072 = arith.cmpf oge, %1002, %1071 : vector<8x32xf32>
    %cst_382 = arith.constant 1.000000e+00 : f32
    %cst_383 = arith.constant 0.000000e+00 : f32
    %1073 = vector.broadcast %cst_382 : f32 to vector<8x32xf32>
    %1074 = vector.broadcast %cst_383 : f32 to vector<8x32xf32>
    %1075 = arith.select %1072, %1073, %1074 : vector<8x32xi1>, vector<8x32xf32>
    %cst_384 = arith.constant dense<0.000000e+00> : vector<8xf32>
    %1076 = vector.multi_reduction <add>, %1075, %cst_384 [1] : vector<8x32xf32> to vector<8xf32>
    %1077 = vector.shape_cast %1076 : vector<8xf32> to vector<8x1xf32>
    %1078 = arith.select %1064, %1070, %1061 : vector<8x1xi1>, vector<8x1xf32>
    %1079 = arith.select %1064, %1077, %1062 : vector<8x1xi1>, vector<8x1xf32>
    %c4_i32_385 = arith.constant 4 : i32
    %1080 = vector.broadcast %cst_360 : f32 to vector<8x1xf32>
    %1081 = arith.cmpf olt, %1079, %1080 : vector<8x1xf32>
    %1082 = vector.broadcast %1078 : vector<8x1xf32> to vector<8x32xf32>
    %1083 = arith.cmpf olt, %1002, %1082 : vector<8x32xf32>
    %cst_386 = arith.constant 0xFF800000 : f32
    %1084 = vector.broadcast %cst_386 : f32 to vector<8x32xf32>
    %1085 = arith.select %1083, %1002, %1084 : vector<8x32xi1>, vector<8x32xf32>
    %cst_387 = arith.constant dense<0xFF800000> : vector<8xf32>
    %1086 = vector.multi_reduction <maximumf>, %1085, %cst_387 [1] : vector<8x32xf32> to vector<8xf32>
    %1087 = vector.shape_cast %1086 : vector<8xf32> to vector<8x1xf32>
    %1088 = vector.broadcast %1087 : vector<8x1xf32> to vector<8x32xf32>
    %1089 = arith.cmpf oge, %1002, %1088 : vector<8x32xf32>
    %cst_388 = arith.constant 1.000000e+00 : f32
    %cst_389 = arith.constant 0.000000e+00 : f32
    %1090 = vector.broadcast %cst_388 : f32 to vector<8x32xf32>
    %1091 = vector.broadcast %cst_389 : f32 to vector<8x32xf32>
    %1092 = arith.select %1089, %1090, %1091 : vector<8x32xi1>, vector<8x32xf32>
    %cst_390 = arith.constant dense<0.000000e+00> : vector<8xf32>
    %1093 = vector.multi_reduction <add>, %1092, %cst_390 [1] : vector<8x32xf32> to vector<8xf32>
    %1094 = vector.shape_cast %1093 : vector<8xf32> to vector<8x1xf32>
    %1095 = arith.select %1081, %1087, %1078 : vector<8x1xi1>, vector<8x1xf32>
    %1096 = arith.select %1081, %1094, %1079 : vector<8x1xi1>, vector<8x1xf32>
    %c5_i32_391 = arith.constant 5 : i32
    %1097 = vector.broadcast %cst_360 : f32 to vector<8x1xf32>
    %1098 = arith.cmpf olt, %1096, %1097 : vector<8x1xf32>
    %1099 = vector.broadcast %1095 : vector<8x1xf32> to vector<8x32xf32>
    %1100 = arith.cmpf olt, %1002, %1099 : vector<8x32xf32>
    %cst_392 = arith.constant 0xFF800000 : f32
    %1101 = vector.broadcast %cst_392 : f32 to vector<8x32xf32>
    %1102 = arith.select %1100, %1002, %1101 : vector<8x32xi1>, vector<8x32xf32>
    %cst_393 = arith.constant dense<0xFF800000> : vector<8xf32>
    %1103 = vector.multi_reduction <maximumf>, %1102, %cst_393 [1] : vector<8x32xf32> to vector<8xf32>
    %1104 = vector.shape_cast %1103 : vector<8xf32> to vector<8x1xf32>
    %1105 = vector.broadcast %1104 : vector<8x1xf32> to vector<8x32xf32>
    %1106 = arith.cmpf oge, %1002, %1105 : vector<8x32xf32>
    %cst_394 = arith.constant 1.000000e+00 : f32
    %cst_395 = arith.constant 0.000000e+00 : f32
    %1107 = vector.broadcast %cst_394 : f32 to vector<8x32xf32>
    %1108 = vector.broadcast %cst_395 : f32 to vector<8x32xf32>
    %1109 = arith.select %1106, %1107, %1108 : vector<8x32xi1>, vector<8x32xf32>
    %cst_396 = arith.constant dense<0.000000e+00> : vector<8xf32>
    %1110 = vector.multi_reduction <add>, %1109, %cst_396 [1] : vector<8x32xf32> to vector<8xf32>
    %1111 = vector.shape_cast %1110 : vector<8xf32> to vector<8x1xf32>
    %1112 = arith.select %1098, %1104, %1095 : vector<8x1xi1>, vector<8x1xf32>
    %1113 = arith.select %1098, %1111, %1096 : vector<8x1xi1>, vector<8x1xf32>
    %c6_i32_397 = arith.constant 6 : i32
    %1114 = vector.broadcast %cst_360 : f32 to vector<8x1xf32>
    %1115 = arith.cmpf olt, %1113, %1114 : vector<8x1xf32>
    %1116 = vector.broadcast %1112 : vector<8x1xf32> to vector<8x32xf32>
    %1117 = arith.cmpf olt, %1002, %1116 : vector<8x32xf32>
    %cst_398 = arith.constant 0xFF800000 : f32
    %1118 = vector.broadcast %cst_398 : f32 to vector<8x32xf32>
    %1119 = arith.select %1117, %1002, %1118 : vector<8x32xi1>, vector<8x32xf32>
    %cst_399 = arith.constant dense<0xFF800000> : vector<8xf32>
    %1120 = vector.multi_reduction <maximumf>, %1119, %cst_399 [1] : vector<8x32xf32> to vector<8xf32>
    %1121 = vector.shape_cast %1120 : vector<8xf32> to vector<8x1xf32>
    %1122 = vector.broadcast %1121 : vector<8x1xf32> to vector<8x32xf32>
    %1123 = arith.cmpf oge, %1002, %1122 : vector<8x32xf32>
    %cst_400 = arith.constant 1.000000e+00 : f32
    %cst_401 = arith.constant 0.000000e+00 : f32
    %1124 = vector.broadcast %cst_400 : f32 to vector<8x32xf32>
    %1125 = vector.broadcast %cst_401 : f32 to vector<8x32xf32>
    %1126 = arith.select %1123, %1124, %1125 : vector<8x32xi1>, vector<8x32xf32>
    %cst_402 = arith.constant dense<0.000000e+00> : vector<8xf32>
    %1127 = vector.multi_reduction <add>, %1126, %cst_402 [1] : vector<8x32xf32> to vector<8xf32>
    %1128 = vector.shape_cast %1127 : vector<8xf32> to vector<8x1xf32>
    %1129 = arith.select %1115, %1121, %1112 : vector<8x1xi1>, vector<8x1xf32>
    %1130 = arith.select %1115, %1128, %1113 : vector<8x1xi1>, vector<8x1xf32>
    %c7_i32_403 = arith.constant 7 : i32
    %1131 = vector.broadcast %cst_360 : f32 to vector<8x1xf32>
    %1132 = arith.cmpf olt, %1130, %1131 : vector<8x1xf32>
    %1133 = vector.broadcast %1129 : vector<8x1xf32> to vector<8x32xf32>
    %1134 = arith.cmpf olt, %1002, %1133 : vector<8x32xf32>
    %cst_404 = arith.constant 0xFF800000 : f32
    %1135 = vector.broadcast %cst_404 : f32 to vector<8x32xf32>
    %1136 = arith.select %1134, %1002, %1135 : vector<8x32xi1>, vector<8x32xf32>
    %cst_405 = arith.constant dense<0xFF800000> : vector<8xf32>
    %1137 = vector.multi_reduction <maximumf>, %1136, %cst_405 [1] : vector<8x32xf32> to vector<8xf32>
    %1138 = vector.shape_cast %1137 : vector<8xf32> to vector<8x1xf32>
    %1139 = vector.broadcast %1138 : vector<8x1xf32> to vector<8x32xf32>
    %1140 = arith.cmpf oge, %1002, %1139 : vector<8x32xf32>
    %cst_406 = arith.constant 1.000000e+00 : f32
    %cst_407 = arith.constant 0.000000e+00 : f32
    %1141 = vector.broadcast %cst_406 : f32 to vector<8x32xf32>
    %1142 = vector.broadcast %cst_407 : f32 to vector<8x32xf32>
    %1143 = arith.select %1140, %1141, %1142 : vector<8x32xi1>, vector<8x32xf32>
    %cst_408 = arith.constant dense<0.000000e+00> : vector<8xf32>
    %1144 = vector.multi_reduction <add>, %1143, %cst_408 [1] : vector<8x32xf32> to vector<8xf32>
    %1145 = vector.shape_cast %1144 : vector<8xf32> to vector<8x1xf32>
    %1146 = arith.select %1132, %1138, %1129 : vector<8x1xi1>, vector<8x1xf32>
    %1147 = arith.select %1132, %1145, %1130 : vector<8x1xi1>, vector<8x1xf32>
    %c8_i32_409 = arith.constant 8 : i32
    %1148 = vector.broadcast %cst_360 : f32 to vector<8x1xf32>
    %1149 = arith.cmpf olt, %1147, %1148 : vector<8x1xf32>
    %1150 = vector.broadcast %1146 : vector<8x1xf32> to vector<8x32xf32>
    %1151 = arith.cmpf olt, %1002, %1150 : vector<8x32xf32>
    %cst_410 = arith.constant 0xFF800000 : f32
    %1152 = vector.broadcast %cst_410 : f32 to vector<8x32xf32>
    %1153 = arith.select %1151, %1002, %1152 : vector<8x32xi1>, vector<8x32xf32>
    %cst_411 = arith.constant dense<0xFF800000> : vector<8xf32>
    %1154 = vector.multi_reduction <maximumf>, %1153, %cst_411 [1] : vector<8x32xf32> to vector<8xf32>
    %1155 = vector.shape_cast %1154 : vector<8xf32> to vector<8x1xf32>
    %1156 = vector.broadcast %1155 : vector<8x1xf32> to vector<8x32xf32>
    %1157 = arith.cmpf oge, %1002, %1156 : vector<8x32xf32>
    %cst_412 = arith.constant 1.000000e+00 : f32
    %cst_413 = arith.constant 0.000000e+00 : f32
    %1158 = vector.broadcast %cst_412 : f32 to vector<8x32xf32>
    %1159 = vector.broadcast %cst_413 : f32 to vector<8x32xf32>
    %1160 = arith.select %1157, %1158, %1159 : vector<8x32xi1>, vector<8x32xf32>
    %cst_414 = arith.constant dense<0.000000e+00> : vector<8xf32>
    %1161 = vector.multi_reduction <add>, %1160, %cst_414 [1] : vector<8x32xf32> to vector<8xf32>
    %1162 = vector.shape_cast %1161 : vector<8xf32> to vector<8x1xf32>
    %1163 = arith.select %1149, %1155, %1146 : vector<8x1xi1>, vector<8x1xf32>
    %1164 = arith.select %1149, %1162, %1147 : vector<8x1xi1>, vector<8x1xf32>
    %c9_i32_415 = arith.constant 9 : i32
    %1165 = vector.broadcast %cst_360 : f32 to vector<8x1xf32>
    %1166 = arith.cmpf olt, %1164, %1165 : vector<8x1xf32>
    %1167 = vector.broadcast %1163 : vector<8x1xf32> to vector<8x32xf32>
    %1168 = arith.cmpf olt, %1002, %1167 : vector<8x32xf32>
    %cst_416 = arith.constant 0xFF800000 : f32
    %1169 = vector.broadcast %cst_416 : f32 to vector<8x32xf32>
    %1170 = arith.select %1168, %1002, %1169 : vector<8x32xi1>, vector<8x32xf32>
    %cst_417 = arith.constant dense<0xFF800000> : vector<8xf32>
    %1171 = vector.multi_reduction <maximumf>, %1170, %cst_417 [1] : vector<8x32xf32> to vector<8xf32>
    %1172 = vector.shape_cast %1171 : vector<8xf32> to vector<8x1xf32>
    %1173 = vector.broadcast %1172 : vector<8x1xf32> to vector<8x32xf32>
    %1174 = arith.cmpf oge, %1002, %1173 : vector<8x32xf32>
    %cst_418 = arith.constant 1.000000e+00 : f32
    %cst_419 = arith.constant 0.000000e+00 : f32
    %1175 = vector.broadcast %cst_418 : f32 to vector<8x32xf32>
    %1176 = vector.broadcast %cst_419 : f32 to vector<8x32xf32>
    %1177 = arith.select %1174, %1175, %1176 : vector<8x32xi1>, vector<8x32xf32>
    %cst_420 = arith.constant dense<0.000000e+00> : vector<8xf32>
    %1178 = vector.multi_reduction <add>, %1177, %cst_420 [1] : vector<8x32xf32> to vector<8xf32>
    %1179 = vector.shape_cast %1178 : vector<8xf32> to vector<8x1xf32>
    %1180 = arith.select %1166, %1172, %1163 : vector<8x1xi1>, vector<8x1xf32>
    %1181 = arith.select %1166, %1179, %1164 : vector<8x1xi1>, vector<8x1xf32>
    %c10_i32_421 = arith.constant 10 : i32
    %1182 = vector.broadcast %cst_360 : f32 to vector<8x1xf32>
    %1183 = arith.cmpf olt, %1181, %1182 : vector<8x1xf32>
    %1184 = vector.broadcast %1180 : vector<8x1xf32> to vector<8x32xf32>
    %1185 = arith.cmpf olt, %1002, %1184 : vector<8x32xf32>
    %cst_422 = arith.constant 0xFF800000 : f32
    %1186 = vector.broadcast %cst_422 : f32 to vector<8x32xf32>
    %1187 = arith.select %1185, %1002, %1186 : vector<8x32xi1>, vector<8x32xf32>
    %cst_423 = arith.constant dense<0xFF800000> : vector<8xf32>
    %1188 = vector.multi_reduction <maximumf>, %1187, %cst_423 [1] : vector<8x32xf32> to vector<8xf32>
    %1189 = vector.shape_cast %1188 : vector<8xf32> to vector<8x1xf32>
    %1190 = vector.broadcast %1189 : vector<8x1xf32> to vector<8x32xf32>
    %1191 = arith.cmpf oge, %1002, %1190 : vector<8x32xf32>
    %cst_424 = arith.constant 1.000000e+00 : f32
    %cst_425 = arith.constant 0.000000e+00 : f32
    %1192 = vector.broadcast %cst_424 : f32 to vector<8x32xf32>
    %1193 = vector.broadcast %cst_425 : f32 to vector<8x32xf32>
    %1194 = arith.select %1191, %1192, %1193 : vector<8x32xi1>, vector<8x32xf32>
    %cst_426 = arith.constant dense<0.000000e+00> : vector<8xf32>
    %1195 = vector.multi_reduction <add>, %1194, %cst_426 [1] : vector<8x32xf32> to vector<8xf32>
    %1196 = vector.shape_cast %1195 : vector<8xf32> to vector<8x1xf32>
    %1197 = arith.select %1183, %1189, %1180 : vector<8x1xi1>, vector<8x1xf32>
    %1198 = arith.select %1183, %1196, %1181 : vector<8x1xi1>, vector<8x1xf32>
    %c11_i32_427 = arith.constant 11 : i32
    %1199 = vector.broadcast %cst_360 : f32 to vector<8x1xf32>
    %1200 = arith.cmpf olt, %1198, %1199 : vector<8x1xf32>
    %1201 = vector.broadcast %1197 : vector<8x1xf32> to vector<8x32xf32>
    %1202 = arith.cmpf olt, %1002, %1201 : vector<8x32xf32>
    %cst_428 = arith.constant 0xFF800000 : f32
    %1203 = vector.broadcast %cst_428 : f32 to vector<8x32xf32>
    %1204 = arith.select %1202, %1002, %1203 : vector<8x32xi1>, vector<8x32xf32>
    %cst_429 = arith.constant dense<0xFF800000> : vector<8xf32>
    %1205 = vector.multi_reduction <maximumf>, %1204, %cst_429 [1] : vector<8x32xf32> to vector<8xf32>
    %1206 = vector.shape_cast %1205 : vector<8xf32> to vector<8x1xf32>
    %1207 = vector.broadcast %1206 : vector<8x1xf32> to vector<8x32xf32>
    %1208 = arith.cmpf oge, %1002, %1207 : vector<8x32xf32>
    %cst_430 = arith.constant 1.000000e+00 : f32
    %cst_431 = arith.constant 0.000000e+00 : f32
    %1209 = vector.broadcast %cst_430 : f32 to vector<8x32xf32>
    %1210 = vector.broadcast %cst_431 : f32 to vector<8x32xf32>
    %1211 = arith.select %1208, %1209, %1210 : vector<8x32xi1>, vector<8x32xf32>
    %cst_432 = arith.constant dense<0.000000e+00> : vector<8xf32>
    %1212 = vector.multi_reduction <add>, %1211, %cst_432 [1] : vector<8x32xf32> to vector<8xf32>
    %1213 = vector.shape_cast %1212 : vector<8xf32> to vector<8x1xf32>
    %1214 = arith.select %1200, %1206, %1197 : vector<8x1xi1>, vector<8x1xf32>
    %1215 = arith.select %1200, %1213, %1198 : vector<8x1xi1>, vector<8x1xf32>
    %c12_i32_433 = arith.constant 12 : i32
    %1216 = vector.broadcast %cst_360 : f32 to vector<8x1xf32>
    %1217 = arith.cmpf olt, %1215, %1216 : vector<8x1xf32>
    %1218 = vector.broadcast %1214 : vector<8x1xf32> to vector<8x32xf32>
    %1219 = arith.cmpf olt, %1002, %1218 : vector<8x32xf32>
    %cst_434 = arith.constant 0xFF800000 : f32
    %1220 = vector.broadcast %cst_434 : f32 to vector<8x32xf32>
    %1221 = arith.select %1219, %1002, %1220 : vector<8x32xi1>, vector<8x32xf32>
    %cst_435 = arith.constant dense<0xFF800000> : vector<8xf32>
    %1222 = vector.multi_reduction <maximumf>, %1221, %cst_435 [1] : vector<8x32xf32> to vector<8xf32>
    %1223 = vector.shape_cast %1222 : vector<8xf32> to vector<8x1xf32>
    %1224 = vector.broadcast %1223 : vector<8x1xf32> to vector<8x32xf32>
    %1225 = arith.cmpf oge, %1002, %1224 : vector<8x32xf32>
    %cst_436 = arith.constant 1.000000e+00 : f32
    %cst_437 = arith.constant 0.000000e+00 : f32
    %1226 = vector.broadcast %cst_436 : f32 to vector<8x32xf32>
    %1227 = vector.broadcast %cst_437 : f32 to vector<8x32xf32>
    %1228 = arith.select %1225, %1226, %1227 : vector<8x32xi1>, vector<8x32xf32>
    %cst_438 = arith.constant dense<0.000000e+00> : vector<8xf32>
    %1229 = vector.multi_reduction <add>, %1228, %cst_438 [1] : vector<8x32xf32> to vector<8xf32>
    %1230 = vector.shape_cast %1229 : vector<8xf32> to vector<8x1xf32>
    %1231 = arith.select %1217, %1223, %1214 : vector<8x1xi1>, vector<8x1xf32>
    %1232 = arith.select %1217, %1230, %1215 : vector<8x1xi1>, vector<8x1xf32>
    %c13_i32_439 = arith.constant 13 : i32
    %1233 = vector.broadcast %cst_360 : f32 to vector<8x1xf32>
    %1234 = arith.cmpf olt, %1232, %1233 : vector<8x1xf32>
    %1235 = vector.broadcast %1231 : vector<8x1xf32> to vector<8x32xf32>
    %1236 = arith.cmpf olt, %1002, %1235 : vector<8x32xf32>
    %cst_440 = arith.constant 0xFF800000 : f32
    %1237 = vector.broadcast %cst_440 : f32 to vector<8x32xf32>
    %1238 = arith.select %1236, %1002, %1237 : vector<8x32xi1>, vector<8x32xf32>
    %cst_441 = arith.constant dense<0xFF800000> : vector<8xf32>
    %1239 = vector.multi_reduction <maximumf>, %1238, %cst_441 [1] : vector<8x32xf32> to vector<8xf32>
    %1240 = vector.shape_cast %1239 : vector<8xf32> to vector<8x1xf32>
    %1241 = vector.broadcast %1240 : vector<8x1xf32> to vector<8x32xf32>
    %1242 = arith.cmpf oge, %1002, %1241 : vector<8x32xf32>
    %cst_442 = arith.constant 1.000000e+00 : f32
    %cst_443 = arith.constant 0.000000e+00 : f32
    %1243 = vector.broadcast %cst_442 : f32 to vector<8x32xf32>
    %1244 = vector.broadcast %cst_443 : f32 to vector<8x32xf32>
    %1245 = arith.select %1242, %1243, %1244 : vector<8x32xi1>, vector<8x32xf32>
    %cst_444 = arith.constant dense<0.000000e+00> : vector<8xf32>
    %1246 = vector.multi_reduction <add>, %1245, %cst_444 [1] : vector<8x32xf32> to vector<8xf32>
    %1247 = vector.shape_cast %1246 : vector<8xf32> to vector<8x1xf32>
    %1248 = arith.select %1234, %1240, %1231 : vector<8x1xi1>, vector<8x1xf32>
    %1249 = arith.select %1234, %1247, %1232 : vector<8x1xi1>, vector<8x1xf32>
    %c14_i32_445 = arith.constant 14 : i32
    %1250 = vector.broadcast %cst_360 : f32 to vector<8x1xf32>
    %1251 = arith.cmpf olt, %1249, %1250 : vector<8x1xf32>
    %1252 = vector.broadcast %1248 : vector<8x1xf32> to vector<8x32xf32>
    %1253 = arith.cmpf olt, %1002, %1252 : vector<8x32xf32>
    %cst_446 = arith.constant 0xFF800000 : f32
    %1254 = vector.broadcast %cst_446 : f32 to vector<8x32xf32>
    %1255 = arith.select %1253, %1002, %1254 : vector<8x32xi1>, vector<8x32xf32>
    %cst_447 = arith.constant dense<0xFF800000> : vector<8xf32>
    %1256 = vector.multi_reduction <maximumf>, %1255, %cst_447 [1] : vector<8x32xf32> to vector<8xf32>
    %1257 = vector.shape_cast %1256 : vector<8xf32> to vector<8x1xf32>
    %1258 = vector.broadcast %1257 : vector<8x1xf32> to vector<8x32xf32>
    %1259 = arith.cmpf oge, %1002, %1258 : vector<8x32xf32>
    %cst_448 = arith.constant 1.000000e+00 : f32
    %cst_449 = arith.constant 0.000000e+00 : f32
    %1260 = vector.broadcast %cst_448 : f32 to vector<8x32xf32>
    %1261 = vector.broadcast %cst_449 : f32 to vector<8x32xf32>
    %1262 = arith.select %1259, %1260, %1261 : vector<8x32xi1>, vector<8x32xf32>
    %cst_450 = arith.constant dense<0.000000e+00> : vector<8xf32>
    %1263 = vector.multi_reduction <add>, %1262, %cst_450 [1] : vector<8x32xf32> to vector<8xf32>
    %1264 = vector.shape_cast %1263 : vector<8xf32> to vector<8x1xf32>
    %1265 = arith.select %1251, %1257, %1248 : vector<8x1xi1>, vector<8x1xf32>
    %1266 = arith.select %1251, %1264, %1249 : vector<8x1xi1>, vector<8x1xf32>
    %c15_i32_451 = arith.constant 15 : i32
    %1267 = vector.broadcast %cst_360 : f32 to vector<8x1xf32>
    %1268 = arith.cmpf olt, %1266, %1267 : vector<8x1xf32>
    %1269 = vector.broadcast %1265 : vector<8x1xf32> to vector<8x32xf32>
    %1270 = arith.cmpf olt, %1002, %1269 : vector<8x32xf32>
    %cst_452 = arith.constant 0xFF800000 : f32
    %1271 = vector.broadcast %cst_452 : f32 to vector<8x32xf32>
    %1272 = arith.select %1270, %1002, %1271 : vector<8x32xi1>, vector<8x32xf32>
    %cst_453 = arith.constant dense<0xFF800000> : vector<8xf32>
    %1273 = vector.multi_reduction <maximumf>, %1272, %cst_453 [1] : vector<8x32xf32> to vector<8xf32>
    %1274 = vector.shape_cast %1273 : vector<8xf32> to vector<8x1xf32>
    %1275 = vector.broadcast %1274 : vector<8x1xf32> to vector<8x32xf32>
    %1276 = arith.cmpf oge, %1002, %1275 : vector<8x32xf32>
    %cst_454 = arith.constant 1.000000e+00 : f32
    %cst_455 = arith.constant 0.000000e+00 : f32
    %1277 = vector.broadcast %cst_454 : f32 to vector<8x32xf32>
    %1278 = vector.broadcast %cst_455 : f32 to vector<8x32xf32>
    %1279 = arith.select %1276, %1277, %1278 : vector<8x32xi1>, vector<8x32xf32>
    %cst_456 = arith.constant dense<0.000000e+00> : vector<8xf32>
    %1280 = vector.multi_reduction <add>, %1279, %cst_456 [1] : vector<8x32xf32> to vector<8xf32>
    %1281 = vector.shape_cast %1280 : vector<8xf32> to vector<8x1xf32>
    %1282 = arith.select %1268, %1274, %1265 : vector<8x1xi1>, vector<8x1xf32>
    %1283 = arith.select %1268, %1281, %1266 : vector<8x1xi1>, vector<8x1xf32>
    %c16_i32_457 = arith.constant 16 : i32
    %1284 = vector.broadcast %cst_360 : f32 to vector<8x1xf32>
    %1285 = arith.cmpf olt, %1283, %1284 : vector<8x1xf32>
    %1286 = vector.broadcast %1282 : vector<8x1xf32> to vector<8x32xf32>
    %1287 = arith.cmpf olt, %1002, %1286 : vector<8x32xf32>
    %cst_458 = arith.constant 0xFF800000 : f32
    %1288 = vector.broadcast %cst_458 : f32 to vector<8x32xf32>
    %1289 = arith.select %1287, %1002, %1288 : vector<8x32xi1>, vector<8x32xf32>
    %cst_459 = arith.constant dense<0xFF800000> : vector<8xf32>
    %1290 = vector.multi_reduction <maximumf>, %1289, %cst_459 [1] : vector<8x32xf32> to vector<8xf32>
    %1291 = vector.shape_cast %1290 : vector<8xf32> to vector<8x1xf32>
    %1292 = vector.broadcast %1291 : vector<8x1xf32> to vector<8x32xf32>
    %1293 = arith.cmpf oge, %1002, %1292 : vector<8x32xf32>
    %cst_460 = arith.constant 1.000000e+00 : f32
    %cst_461 = arith.constant 0.000000e+00 : f32
    %1294 = vector.broadcast %cst_460 : f32 to vector<8x32xf32>
    %1295 = vector.broadcast %cst_461 : f32 to vector<8x32xf32>
    %1296 = arith.select %1293, %1294, %1295 : vector<8x32xi1>, vector<8x32xf32>
    %cst_462 = arith.constant dense<0.000000e+00> : vector<8xf32>
    %1297 = vector.multi_reduction <add>, %1296, %cst_462 [1] : vector<8x32xf32> to vector<8xf32>
    %1298 = vector.shape_cast %1297 : vector<8xf32> to vector<8x1xf32>
    %1299 = arith.select %1285, %1291, %1282 : vector<8x1xi1>, vector<8x1xf32>
    %1300 = arith.select %1285, %1298, %1283 : vector<8x1xi1>, vector<8x1xf32>
    %c17_i32_463 = arith.constant 17 : i32
    %1301 = vector.broadcast %cst_360 : f32 to vector<8x1xf32>
    %1302 = arith.cmpf olt, %1300, %1301 : vector<8x1xf32>
    %1303 = vector.broadcast %1299 : vector<8x1xf32> to vector<8x32xf32>
    %1304 = arith.cmpf olt, %1002, %1303 : vector<8x32xf32>
    %cst_464 = arith.constant 0xFF800000 : f32
    %1305 = vector.broadcast %cst_464 : f32 to vector<8x32xf32>
    %1306 = arith.select %1304, %1002, %1305 : vector<8x32xi1>, vector<8x32xf32>
    %cst_465 = arith.constant dense<0xFF800000> : vector<8xf32>
    %1307 = vector.multi_reduction <maximumf>, %1306, %cst_465 [1] : vector<8x32xf32> to vector<8xf32>
    %1308 = vector.shape_cast %1307 : vector<8xf32> to vector<8x1xf32>
    %1309 = vector.broadcast %1308 : vector<8x1xf32> to vector<8x32xf32>
    %1310 = arith.cmpf oge, %1002, %1309 : vector<8x32xf32>
    %cst_466 = arith.constant 1.000000e+00 : f32
    %cst_467 = arith.constant 0.000000e+00 : f32
    %1311 = vector.broadcast %cst_466 : f32 to vector<8x32xf32>
    %1312 = vector.broadcast %cst_467 : f32 to vector<8x32xf32>
    %1313 = arith.select %1310, %1311, %1312 : vector<8x32xi1>, vector<8x32xf32>
    %cst_468 = arith.constant dense<0.000000e+00> : vector<8xf32>
    %1314 = vector.multi_reduction <add>, %1313, %cst_468 [1] : vector<8x32xf32> to vector<8xf32>
    %1315 = vector.shape_cast %1314 : vector<8xf32> to vector<8x1xf32>
    %1316 = arith.select %1302, %1308, %1299 : vector<8x1xi1>, vector<8x1xf32>
    %1317 = arith.select %1302, %1315, %1300 : vector<8x1xi1>, vector<8x1xf32>
    %1318 = vector.broadcast %1316 : vector<8x1xf32> to vector<8x32xf32>
    %1319 = arith.cmpf oge, %1002, %1318 : vector<8x32xf32>
    %cst_469 = arith.constant 0.000000e+00 : f32
    %1320 = vector.broadcast %cst_469 : f32 to vector<8x32xf32>
    %1321 = arith.select %1319, %1002, %1320 : vector<8x32xi1>, vector<8x32xf32>
    %c8_i32_470 = arith.constant 8 : i32
    %1322 = arith.muli %c3_i32_351, %c8_i32_470 : i32
    %1323 = tpu.assume_multiple %1322, 8 : i32
    %1324 = arith.index_cast %1323 : i32 to index
    %c0_471 = arith.constant 0 : index
    %1325 = vector.load %arg8[%1324, %c0_471] : memref<48x32xf32, #tpu.memory_space<vmem>>, vector<8x32xf32>
    tpu.vector_store %arg8[%1324, %c0_471], %1321 {strides = array<i32>} : memref<48x32xf32, #tpu.memory_space<vmem>>, vector<8x32xf32>,
    %c4_i32_472 = arith.constant 4 : i32
    %1326 = arith.index_cast %c4_i32_472 : i32 to index
    %c0_473 = arith.constant 0 : index
    %c0_474 = arith.constant 0 : index
    %1327 = vector.load %arg0[%1326, %c0_473, %c0_474] : memref<6x8x16xf32, #tpu.memory_space<vmem>>, vector<1x8x16xf32>
    %1328 = vector.shape_cast %1327 : vector<1x8x16xf32> to vector<8x16xf32>
    %cst_475 = arith.constant dense<0.000000e+00> : vector<8x32xf32>
    %1329 = tpu.matmul %1328, %0, %cst_475 {dimension_numbers = #tpu.dot_dimension_numbers<[1], [0], [0], [1], [0, 0, 1, 1], [], []>} : vector<8x16xf32>, vector<16x32xf32>, vector<8x32xf32> -> vector<8x32xf32>
    %cst_476 = arith.constant dense<0.000000e+00> : vector<8x32xf32>
    %1330 = tpu.matmul %1321, %1, %cst_476 {dimension_numbers = #tpu.dot_dimension_numbers<[1], [0], [0], [1], [0, 0, 1, 1], [], []>} : vector<8x32xf32>, vector<32x32xf32>, vector<8x32xf32> -> vector<8x32xf32>
    %1331 = arith.addf %1329, %1330 : vector<8x32xf32>
    %1332 = arith.addf %1331, %4 : vector<8x32xf32>
    %cst_477 = arith.constant dense<0xFF800000> : vector<8xf32>
    %1333 = vector.multi_reduction <maximumf>, %1332, %cst_477 [1] : vector<8x32xf32> to vector<8xf32>
    %1334 = vector.shape_cast %1333 : vector<8xf32> to vector<8x1xf32>
    %1335 = vector.broadcast %1334 : vector<8x1xf32> to vector<8x32xf32>
    %1336 = arith.cmpf oge, %1332, %1335 : vector<8x32xf32>
    %cst_478 = arith.constant 1.000000e+00 : f32
    %cst_479 = arith.constant 0.000000e+00 : f32
    %1337 = vector.broadcast %cst_478 : f32 to vector<8x32xf32>
    %1338 = vector.broadcast %cst_479 : f32 to vector<8x32xf32>
    %1339 = arith.select %1336, %1337, %1338 : vector<8x32xi1>, vector<8x32xf32>
    %cst_480 = arith.constant dense<0.000000e+00> : vector<8xf32>
    %1340 = vector.multi_reduction <add>, %1339, %cst_480 [1] : vector<8x32xf32> to vector<8xf32>
    %1341 = vector.shape_cast %1340 : vector<8xf32> to vector<8x1xf32>
    %cst_481 = arith.constant 1.900000e+01 : f32
    %c0_i32_482 = arith.constant 0 : i32
    %1342 = vector.broadcast %cst_481 : f32 to vector<8x1xf32>
    %1343 = arith.cmpf olt, %1341, %1342 : vector<8x1xf32>
    %1344 = vector.broadcast %1334 : vector<8x1xf32> to vector<8x32xf32>
    %1345 = arith.cmpf olt, %1332, %1344 : vector<8x32xf32>
    %cst_483 = arith.constant 0xFF800000 : f32
    %1346 = vector.broadcast %cst_483 : f32 to vector<8x32xf32>
    %1347 = arith.select %1345, %1332, %1346 : vector<8x32xi1>, vector<8x32xf32>
    %cst_484 = arith.constant dense<0xFF800000> : vector<8xf32>
    %1348 = vector.multi_reduction <maximumf>, %1347, %cst_484 [1] : vector<8x32xf32> to vector<8xf32>
    %1349 = vector.shape_cast %1348 : vector<8xf32> to vector<8x1xf32>
    %1350 = vector.broadcast %1349 : vector<8x1xf32> to vector<8x32xf32>
    %1351 = arith.cmpf oge, %1332, %1350 : vector<8x32xf32>
    %cst_485 = arith.constant 1.000000e+00 : f32
    %cst_486 = arith.constant 0.000000e+00 : f32
    %1352 = vector.broadcast %cst_485 : f32 to vector<8x32xf32>
    %1353 = vector.broadcast %cst_486 : f32 to vector<8x32xf32>
    %1354 = arith.select %1351, %1352, %1353 : vector<8x32xi1>, vector<8x32xf32>
    %cst_487 = arith.constant dense<0.000000e+00> : vector<8xf32>
    %1355 = vector.multi_reduction <add>, %1354, %cst_487 [1] : vector<8x32xf32> to vector<8xf32>
    %1356 = vector.shape_cast %1355 : vector<8xf32> to vector<8x1xf32>
    %1357 = arith.select %1343, %1349, %1334 : vector<8x1xi1>, vector<8x1xf32>
    %1358 = arith.select %1343, %1356, %1341 : vector<8x1xi1>, vector<8x1xf32>
    %c1_i32_488 = arith.constant 1 : i32
    %1359 = vector.broadcast %cst_481 : f32 to vector<8x1xf32>
    %1360 = arith.cmpf olt, %1358, %1359 : vector<8x1xf32>
    %1361 = vector.broadcast %1357 : vector<8x1xf32> to vector<8x32xf32>
    %1362 = arith.cmpf olt, %1332, %1361 : vector<8x32xf32>
    %cst_489 = arith.constant 0xFF800000 : f32
    %1363 = vector.broadcast %cst_489 : f32 to vector<8x32xf32>
    %1364 = arith.select %1362, %1332, %1363 : vector<8x32xi1>, vector<8x32xf32>
    %cst_490 = arith.constant dense<0xFF800000> : vector<8xf32>
    %1365 = vector.multi_reduction <maximumf>, %1364, %cst_490 [1] : vector<8x32xf32> to vector<8xf32>
    %1366 = vector.shape_cast %1365 : vector<8xf32> to vector<8x1xf32>
    %1367 = vector.broadcast %1366 : vector<8x1xf32> to vector<8x32xf32>
    %1368 = arith.cmpf oge, %1332, %1367 : vector<8x32xf32>
    %cst_491 = arith.constant 1.000000e+00 : f32
    %cst_492 = arith.constant 0.000000e+00 : f32
    %1369 = vector.broadcast %cst_491 : f32 to vector<8x32xf32>
    %1370 = vector.broadcast %cst_492 : f32 to vector<8x32xf32>
    %1371 = arith.select %1368, %1369, %1370 : vector<8x32xi1>, vector<8x32xf32>
    %cst_493 = arith.constant dense<0.000000e+00> : vector<8xf32>
    %1372 = vector.multi_reduction <add>, %1371, %cst_493 [1] : vector<8x32xf32> to vector<8xf32>
    %1373 = vector.shape_cast %1372 : vector<8xf32> to vector<8x1xf32>
    %1374 = arith.select %1360, %1366, %1357 : vector<8x1xi1>, vector<8x1xf32>
    %1375 = arith.select %1360, %1373, %1358 : vector<8x1xi1>, vector<8x1xf32>
    %c2_i32_494 = arith.constant 2 : i32
    %1376 = vector.broadcast %cst_481 : f32 to vector<8x1xf32>
    %1377 = arith.cmpf olt, %1375, %1376 : vector<8x1xf32>
    %1378 = vector.broadcast %1374 : vector<8x1xf32> to vector<8x32xf32>
    %1379 = arith.cmpf olt, %1332, %1378 : vector<8x32xf32>
    %cst_495 = arith.constant 0xFF800000 : f32
    %1380 = vector.broadcast %cst_495 : f32 to vector<8x32xf32>
    %1381 = arith.select %1379, %1332, %1380 : vector<8x32xi1>, vector<8x32xf32>
    %cst_496 = arith.constant dense<0xFF800000> : vector<8xf32>
    %1382 = vector.multi_reduction <maximumf>, %1381, %cst_496 [1] : vector<8x32xf32> to vector<8xf32>
    %1383 = vector.shape_cast %1382 : vector<8xf32> to vector<8x1xf32>
    %1384 = vector.broadcast %1383 : vector<8x1xf32> to vector<8x32xf32>
    %1385 = arith.cmpf oge, %1332, %1384 : vector<8x32xf32>
    %cst_497 = arith.constant 1.000000e+00 : f32
    %cst_498 = arith.constant 0.000000e+00 : f32
    %1386 = vector.broadcast %cst_497 : f32 to vector<8x32xf32>
    %1387 = vector.broadcast %cst_498 : f32 to vector<8x32xf32>
    %1388 = arith.select %1385, %1386, %1387 : vector<8x32xi1>, vector<8x32xf32>
    %cst_499 = arith.constant dense<0.000000e+00> : vector<8xf32>
    %1389 = vector.multi_reduction <add>, %1388, %cst_499 [1] : vector<8x32xf32> to vector<8xf32>
    %1390 = vector.shape_cast %1389 : vector<8xf32> to vector<8x1xf32>
    %1391 = arith.select %1377, %1383, %1374 : vector<8x1xi1>, vector<8x1xf32>
    %1392 = arith.select %1377, %1390, %1375 : vector<8x1xi1>, vector<8x1xf32>
    %c3_i32_500 = arith.constant 3 : i32
    %1393 = vector.broadcast %cst_481 : f32 to vector<8x1xf32>
    %1394 = arith.cmpf olt, %1392, %1393 : vector<8x1xf32>
    %1395 = vector.broadcast %1391 : vector<8x1xf32> to vector<8x32xf32>
    %1396 = arith.cmpf olt, %1332, %1395 : vector<8x32xf32>
    %cst_501 = arith.constant 0xFF800000 : f32
    %1397 = vector.broadcast %cst_501 : f32 to vector<8x32xf32>
    %1398 = arith.select %1396, %1332, %1397 : vector<8x32xi1>, vector<8x32xf32>
    %cst_502 = arith.constant dense<0xFF800000> : vector<8xf32>
    %1399 = vector.multi_reduction <maximumf>, %1398, %cst_502 [1] : vector<8x32xf32> to vector<8xf32>
    %1400 = vector.shape_cast %1399 : vector<8xf32> to vector<8x1xf32>
    %1401 = vector.broadcast %1400 : vector<8x1xf32> to vector<8x32xf32>
    %1402 = arith.cmpf oge, %1332, %1401 : vector<8x32xf32>
    %cst_503 = arith.constant 1.000000e+00 : f32
    %cst_504 = arith.constant 0.000000e+00 : f32
    %1403 = vector.broadcast %cst_503 : f32 to vector<8x32xf32>
    %1404 = vector.broadcast %cst_504 : f32 to vector<8x32xf32>
    %1405 = arith.select %1402, %1403, %1404 : vector<8x32xi1>, vector<8x32xf32>
    %cst_505 = arith.constant dense<0.000000e+00> : vector<8xf32>
    %1406 = vector.multi_reduction <add>, %1405, %cst_505 [1] : vector<8x32xf32> to vector<8xf32>
    %1407 = vector.shape_cast %1406 : vector<8xf32> to vector<8x1xf32>
    %1408 = arith.select %1394, %1400, %1391 : vector<8x1xi1>, vector<8x1xf32>
    %1409 = arith.select %1394, %1407, %1392 : vector<8x1xi1>, vector<8x1xf32>
    %c4_i32_506 = arith.constant 4 : i32
    %1410 = vector.broadcast %cst_481 : f32 to vector<8x1xf32>
    %1411 = arith.cmpf olt, %1409, %1410 : vector<8x1xf32>
    %1412 = vector.broadcast %1408 : vector<8x1xf32> to vector<8x32xf32>
    %1413 = arith.cmpf olt, %1332, %1412 : vector<8x32xf32>
    %cst_507 = arith.constant 0xFF800000 : f32
    %1414 = vector.broadcast %cst_507 : f32 to vector<8x32xf32>
    %1415 = arith.select %1413, %1332, %1414 : vector<8x32xi1>, vector<8x32xf32>
    %cst_508 = arith.constant dense<0xFF800000> : vector<8xf32>
    %1416 = vector.multi_reduction <maximumf>, %1415, %cst_508 [1] : vector<8x32xf32> to vector<8xf32>
    %1417 = vector.shape_cast %1416 : vector<8xf32> to vector<8x1xf32>
    %1418 = vector.broadcast %1417 : vector<8x1xf32> to vector<8x32xf32>
    %1419 = arith.cmpf oge, %1332, %1418 : vector<8x32xf32>
    %cst_509 = arith.constant 1.000000e+00 : f32
    %cst_510 = arith.constant 0.000000e+00 : f32
    %1420 = vector.broadcast %cst_509 : f32 to vector<8x32xf32>
    %1421 = vector.broadcast %cst_510 : f32 to vector<8x32xf32>
    %1422 = arith.select %1419, %1420, %1421 : vector<8x32xi1>, vector<8x32xf32>
    %cst_511 = arith.constant dense<0.000000e+00> : vector<8xf32>
    %1423 = vector.multi_reduction <add>, %1422, %cst_511 [1] : vector<8x32xf32> to vector<8xf32>
    %1424 = vector.shape_cast %1423 : vector<8xf32> to vector<8x1xf32>
    %1425 = arith.select %1411, %1417, %1408 : vector<8x1xi1>, vector<8x1xf32>
    %1426 = arith.select %1411, %1424, %1409 : vector<8x1xi1>, vector<8x1xf32>
    %c5_i32_512 = arith.constant 5 : i32
    %1427 = vector.broadcast %cst_481 : f32 to vector<8x1xf32>
    %1428 = arith.cmpf olt, %1426, %1427 : vector<8x1xf32>
    %1429 = vector.broadcast %1425 : vector<8x1xf32> to vector<8x32xf32>
    %1430 = arith.cmpf olt, %1332, %1429 : vector<8x32xf32>
    %cst_513 = arith.constant 0xFF800000 : f32
    %1431 = vector.broadcast %cst_513 : f32 to vector<8x32xf32>
    %1432 = arith.select %1430, %1332, %1431 : vector<8x32xi1>, vector<8x32xf32>
    %cst_514 = arith.constant dense<0xFF800000> : vector<8xf32>
    %1433 = vector.multi_reduction <maximumf>, %1432, %cst_514 [1] : vector<8x32xf32> to vector<8xf32>
    %1434 = vector.shape_cast %1433 : vector<8xf32> to vector<8x1xf32>
    %1435 = vector.broadcast %1434 : vector<8x1xf32> to vector<8x32xf32>
    %1436 = arith.cmpf oge, %1332, %1435 : vector<8x32xf32>
    %cst_515 = arith.constant 1.000000e+00 : f32
    %cst_516 = arith.constant 0.000000e+00 : f32
    %1437 = vector.broadcast %cst_515 : f32 to vector<8x32xf32>
    %1438 = vector.broadcast %cst_516 : f32 to vector<8x32xf32>
    %1439 = arith.select %1436, %1437, %1438 : vector<8x32xi1>, vector<8x32xf32>
    %cst_517 = arith.constant dense<0.000000e+00> : vector<8xf32>
    %1440 = vector.multi_reduction <add>, %1439, %cst_517 [1] : vector<8x32xf32> to vector<8xf32>
    %1441 = vector.shape_cast %1440 : vector<8xf32> to vector<8x1xf32>
    %1442 = arith.select %1428, %1434, %1425 : vector<8x1xi1>, vector<8x1xf32>
    %1443 = arith.select %1428, %1441, %1426 : vector<8x1xi1>, vector<8x1xf32>
    %c6_i32_518 = arith.constant 6 : i32
    %1444 = vector.broadcast %cst_481 : f32 to vector<8x1xf32>
    %1445 = arith.cmpf olt, %1443, %1444 : vector<8x1xf32>
    %1446 = vector.broadcast %1442 : vector<8x1xf32> to vector<8x32xf32>
    %1447 = arith.cmpf olt, %1332, %1446 : vector<8x32xf32>
    %cst_519 = arith.constant 0xFF800000 : f32
    %1448 = vector.broadcast %cst_519 : f32 to vector<8x32xf32>
    %1449 = arith.select %1447, %1332, %1448 : vector<8x32xi1>, vector<8x32xf32>
    %cst_520 = arith.constant dense<0xFF800000> : vector<8xf32>
    %1450 = vector.multi_reduction <maximumf>, %1449, %cst_520 [1] : vector<8x32xf32> to vector<8xf32>
    %1451 = vector.shape_cast %1450 : vector<8xf32> to vector<8x1xf32>
    %1452 = vector.broadcast %1451 : vector<8x1xf32> to vector<8x32xf32>
    %1453 = arith.cmpf oge, %1332, %1452 : vector<8x32xf32>
    %cst_521 = arith.constant 1.000000e+00 : f32
    %cst_522 = arith.constant 0.000000e+00 : f32
    %1454 = vector.broadcast %cst_521 : f32 to vector<8x32xf32>
    %1455 = vector.broadcast %cst_522 : f32 to vector<8x32xf32>
    %1456 = arith.select %1453, %1454, %1455 : vector<8x32xi1>, vector<8x32xf32>
    %cst_523 = arith.constant dense<0.000000e+00> : vector<8xf32>
    %1457 = vector.multi_reduction <add>, %1456, %cst_523 [1] : vector<8x32xf32> to vector<8xf32>
    %1458 = vector.shape_cast %1457 : vector<8xf32> to vector<8x1xf32>
    %1459 = arith.select %1445, %1451, %1442 : vector<8x1xi1>, vector<8x1xf32>
    %1460 = arith.select %1445, %1458, %1443 : vector<8x1xi1>, vector<8x1xf32>
    %c7_i32_524 = arith.constant 7 : i32
    %1461 = vector.broadcast %cst_481 : f32 to vector<8x1xf32>
    %1462 = arith.cmpf olt, %1460, %1461 : vector<8x1xf32>
    %1463 = vector.broadcast %1459 : vector<8x1xf32> to vector<8x32xf32>
    %1464 = arith.cmpf olt, %1332, %1463 : vector<8x32xf32>
    %cst_525 = arith.constant 0xFF800000 : f32
    %1465 = vector.broadcast %cst_525 : f32 to vector<8x32xf32>
    %1466 = arith.select %1464, %1332, %1465 : vector<8x32xi1>, vector<8x32xf32>
    %cst_526 = arith.constant dense<0xFF800000> : vector<8xf32>
    %1467 = vector.multi_reduction <maximumf>, %1466, %cst_526 [1] : vector<8x32xf32> to vector<8xf32>
    %1468 = vector.shape_cast %1467 : vector<8xf32> to vector<8x1xf32>
    %1469 = vector.broadcast %1468 : vector<8x1xf32> to vector<8x32xf32>
    %1470 = arith.cmpf oge, %1332, %1469 : vector<8x32xf32>
    %cst_527 = arith.constant 1.000000e+00 : f32
    %cst_528 = arith.constant 0.000000e+00 : f32
    %1471 = vector.broadcast %cst_527 : f32 to vector<8x32xf32>
    %1472 = vector.broadcast %cst_528 : f32 to vector<8x32xf32>
    %1473 = arith.select %1470, %1471, %1472 : vector<8x32xi1>, vector<8x32xf32>
    %cst_529 = arith.constant dense<0.000000e+00> : vector<8xf32>
    %1474 = vector.multi_reduction <add>, %1473, %cst_529 [1] : vector<8x32xf32> to vector<8xf32>
    %1475 = vector.shape_cast %1474 : vector<8xf32> to vector<8x1xf32>
    %1476 = arith.select %1462, %1468, %1459 : vector<8x1xi1>, vector<8x1xf32>
    %1477 = arith.select %1462, %1475, %1460 : vector<8x1xi1>, vector<8x1xf32>
    %c8_i32_530 = arith.constant 8 : i32
    %1478 = vector.broadcast %cst_481 : f32 to vector<8x1xf32>
    %1479 = arith.cmpf olt, %1477, %1478 : vector<8x1xf32>
    %1480 = vector.broadcast %1476 : vector<8x1xf32> to vector<8x32xf32>
    %1481 = arith.cmpf olt, %1332, %1480 : vector<8x32xf32>
    %cst_531 = arith.constant 0xFF800000 : f32
    %1482 = vector.broadcast %cst_531 : f32 to vector<8x32xf32>
    %1483 = arith.select %1481, %1332, %1482 : vector<8x32xi1>, vector<8x32xf32>
    %cst_532 = arith.constant dense<0xFF800000> : vector<8xf32>
    %1484 = vector.multi_reduction <maximumf>, %1483, %cst_532 [1] : vector<8x32xf32> to vector<8xf32>
    %1485 = vector.shape_cast %1484 : vector<8xf32> to vector<8x1xf32>
    %1486 = vector.broadcast %1485 : vector<8x1xf32> to vector<8x32xf32>
    %1487 = arith.cmpf oge, %1332, %1486 : vector<8x32xf32>
    %cst_533 = arith.constant 1.000000e+00 : f32
    %cst_534 = arith.constant 0.000000e+00 : f32
    %1488 = vector.broadcast %cst_533 : f32 to vector<8x32xf32>
    %1489 = vector.broadcast %cst_534 : f32 to vector<8x32xf32>
    %1490 = arith.select %1487, %1488, %1489 : vector<8x32xi1>, vector<8x32xf32>
    %cst_535 = arith.constant dense<0.000000e+00> : vector<8xf32>
    %1491 = vector.multi_reduction <add>, %1490, %cst_535 [1] : vector<8x32xf32> to vector<8xf32>
    %1492 = vector.shape_cast %1491 : vector<8xf32> to vector<8x1xf32>
    %1493 = arith.select %1479, %1485, %1476 : vector<8x1xi1>, vector<8x1xf32>
    %1494 = arith.select %1479, %1492, %1477 : vector<8x1xi1>, vector<8x1xf32>
    %c9_i32_536 = arith.constant 9 : i32
    %1495 = vector.broadcast %cst_481 : f32 to vector<8x1xf32>
    %1496 = arith.cmpf olt, %1494, %1495 : vector<8x1xf32>
    %1497 = vector.broadcast %1493 : vector<8x1xf32> to vector<8x32xf32>
    %1498 = arith.cmpf olt, %1332, %1497 : vector<8x32xf32>
    %cst_537 = arith.constant 0xFF800000 : f32
    %1499 = vector.broadcast %cst_537 : f32 to vector<8x32xf32>
    %1500 = arith.select %1498, %1332, %1499 : vector<8x32xi1>, vector<8x32xf32>
    %cst_538 = arith.constant dense<0xFF800000> : vector<8xf32>
    %1501 = vector.multi_reduction <maximumf>, %1500, %cst_538 [1] : vector<8x32xf32> to vector<8xf32>
    %1502 = vector.shape_cast %1501 : vector<8xf32> to vector<8x1xf32>
    %1503 = vector.broadcast %1502 : vector<8x1xf32> to vector<8x32xf32>
    %1504 = arith.cmpf oge, %1332, %1503 : vector<8x32xf32>
    %cst_539 = arith.constant 1.000000e+00 : f32
    %cst_540 = arith.constant 0.000000e+00 : f32
    %1505 = vector.broadcast %cst_539 : f32 to vector<8x32xf32>
    %1506 = vector.broadcast %cst_540 : f32 to vector<8x32xf32>
    %1507 = arith.select %1504, %1505, %1506 : vector<8x32xi1>, vector<8x32xf32>
    %cst_541 = arith.constant dense<0.000000e+00> : vector<8xf32>
    %1508 = vector.multi_reduction <add>, %1507, %cst_541 [1] : vector<8x32xf32> to vector<8xf32>
    %1509 = vector.shape_cast %1508 : vector<8xf32> to vector<8x1xf32>
    %1510 = arith.select %1496, %1502, %1493 : vector<8x1xi1>, vector<8x1xf32>
    %1511 = arith.select %1496, %1509, %1494 : vector<8x1xi1>, vector<8x1xf32>
    %c10_i32_542 = arith.constant 10 : i32
    %1512 = vector.broadcast %cst_481 : f32 to vector<8x1xf32>
    %1513 = arith.cmpf olt, %1511, %1512 : vector<8x1xf32>
    %1514 = vector.broadcast %1510 : vector<8x1xf32> to vector<8x32xf32>
    %1515 = arith.cmpf olt, %1332, %1514 : vector<8x32xf32>
    %cst_543 = arith.constant 0xFF800000 : f32
    %1516 = vector.broadcast %cst_543 : f32 to vector<8x32xf32>
    %1517 = arith.select %1515, %1332, %1516 : vector<8x32xi1>, vector<8x32xf32>
    %cst_544 = arith.constant dense<0xFF800000> : vector<8xf32>
    %1518 = vector.multi_reduction <maximumf>, %1517, %cst_544 [1] : vector<8x32xf32> to vector<8xf32>
    %1519 = vector.shape_cast %1518 : vector<8xf32> to vector<8x1xf32>
    %1520 = vector.broadcast %1519 : vector<8x1xf32> to vector<8x32xf32>
    %1521 = arith.cmpf oge, %1332, %1520 : vector<8x32xf32>
    %cst_545 = arith.constant 1.000000e+00 : f32
    %cst_546 = arith.constant 0.000000e+00 : f32
    %1522 = vector.broadcast %cst_545 : f32 to vector<8x32xf32>
    %1523 = vector.broadcast %cst_546 : f32 to vector<8x32xf32>
    %1524 = arith.select %1521, %1522, %1523 : vector<8x32xi1>, vector<8x32xf32>
    %cst_547 = arith.constant dense<0.000000e+00> : vector<8xf32>
    %1525 = vector.multi_reduction <add>, %1524, %cst_547 [1] : vector<8x32xf32> to vector<8xf32>
    %1526 = vector.shape_cast %1525 : vector<8xf32> to vector<8x1xf32>
    %1527 = arith.select %1513, %1519, %1510 : vector<8x1xi1>, vector<8x1xf32>
    %1528 = arith.select %1513, %1526, %1511 : vector<8x1xi1>, vector<8x1xf32>
    %c11_i32_548 = arith.constant 11 : i32
    %1529 = vector.broadcast %cst_481 : f32 to vector<8x1xf32>
    %1530 = arith.cmpf olt, %1528, %1529 : vector<8x1xf32>
    %1531 = vector.broadcast %1527 : vector<8x1xf32> to vector<8x32xf32>
    %1532 = arith.cmpf olt, %1332, %1531 : vector<8x32xf32>
    %cst_549 = arith.constant 0xFF800000 : f32
    %1533 = vector.broadcast %cst_549 : f32 to vector<8x32xf32>
    %1534 = arith.select %1532, %1332, %1533 : vector<8x32xi1>, vector<8x32xf32>
    %cst_550 = arith.constant dense<0xFF800000> : vector<8xf32>
    %1535 = vector.multi_reduction <maximumf>, %1534, %cst_550 [1] : vector<8x32xf32> to vector<8xf32>
    %1536 = vector.shape_cast %1535 : vector<8xf32> to vector<8x1xf32>
    %1537 = vector.broadcast %1536 : vector<8x1xf32> to vector<8x32xf32>
    %1538 = arith.cmpf oge, %1332, %1537 : vector<8x32xf32>
    %cst_551 = arith.constant 1.000000e+00 : f32
    %cst_552 = arith.constant 0.000000e+00 : f32
    %1539 = vector.broadcast %cst_551 : f32 to vector<8x32xf32>
    %1540 = vector.broadcast %cst_552 : f32 to vector<8x32xf32>
    %1541 = arith.select %1538, %1539, %1540 : vector<8x32xi1>, vector<8x32xf32>
    %cst_553 = arith.constant dense<0.000000e+00> : vector<8xf32>
    %1542 = vector.multi_reduction <add>, %1541, %cst_553 [1] : vector<8x32xf32> to vector<8xf32>
    %1543 = vector.shape_cast %1542 : vector<8xf32> to vector<8x1xf32>
    %1544 = arith.select %1530, %1536, %1527 : vector<8x1xi1>, vector<8x1xf32>
    %1545 = arith.select %1530, %1543, %1528 : vector<8x1xi1>, vector<8x1xf32>
    %c12_i32_554 = arith.constant 12 : i32
    %1546 = vector.broadcast %cst_481 : f32 to vector<8x1xf32>
    %1547 = arith.cmpf olt, %1545, %1546 : vector<8x1xf32>
    %1548 = vector.broadcast %1544 : vector<8x1xf32> to vector<8x32xf32>
    %1549 = arith.cmpf olt, %1332, %1548 : vector<8x32xf32>
    %cst_555 = arith.constant 0xFF800000 : f32
    %1550 = vector.broadcast %cst_555 : f32 to vector<8x32xf32>
    %1551 = arith.select %1549, %1332, %1550 : vector<8x32xi1>, vector<8x32xf32>
    %cst_556 = arith.constant dense<0xFF800000> : vector<8xf32>
    %1552 = vector.multi_reduction <maximumf>, %1551, %cst_556 [1] : vector<8x32xf32> to vector<8xf32>
    %1553 = vector.shape_cast %1552 : vector<8xf32> to vector<8x1xf32>
    %1554 = vector.broadcast %1553 : vector<8x1xf32> to vector<8x32xf32>
    %1555 = arith.cmpf oge, %1332, %1554 : vector<8x32xf32>
    %cst_557 = arith.constant 1.000000e+00 : f32
    %cst_558 = arith.constant 0.000000e+00 : f32
    %1556 = vector.broadcast %cst_557 : f32 to vector<8x32xf32>
    %1557 = vector.broadcast %cst_558 : f32 to vector<8x32xf32>
    %1558 = arith.select %1555, %1556, %1557 : vector<8x32xi1>, vector<8x32xf32>
    %cst_559 = arith.constant dense<0.000000e+00> : vector<8xf32>
    %1559 = vector.multi_reduction <add>, %1558, %cst_559 [1] : vector<8x32xf32> to vector<8xf32>
    %1560 = vector.shape_cast %1559 : vector<8xf32> to vector<8x1xf32>
    %1561 = arith.select %1547, %1553, %1544 : vector<8x1xi1>, vector<8x1xf32>
    %1562 = arith.select %1547, %1560, %1545 : vector<8x1xi1>, vector<8x1xf32>
    %c13_i32_560 = arith.constant 13 : i32
    %1563 = vector.broadcast %cst_481 : f32 to vector<8x1xf32>
    %1564 = arith.cmpf olt, %1562, %1563 : vector<8x1xf32>
    %1565 = vector.broadcast %1561 : vector<8x1xf32> to vector<8x32xf32>
    %1566 = arith.cmpf olt, %1332, %1565 : vector<8x32xf32>
    %cst_561 = arith.constant 0xFF800000 : f32
    %1567 = vector.broadcast %cst_561 : f32 to vector<8x32xf32>
    %1568 = arith.select %1566, %1332, %1567 : vector<8x32xi1>, vector<8x32xf32>
    %cst_562 = arith.constant dense<0xFF800000> : vector<8xf32>
    %1569 = vector.multi_reduction <maximumf>, %1568, %cst_562 [1] : vector<8x32xf32> to vector<8xf32>
    %1570 = vector.shape_cast %1569 : vector<8xf32> to vector<8x1xf32>
    %1571 = vector.broadcast %1570 : vector<8x1xf32> to vector<8x32xf32>
    %1572 = arith.cmpf oge, %1332, %1571 : vector<8x32xf32>
    %cst_563 = arith.constant 1.000000e+00 : f32
    %cst_564 = arith.constant 0.000000e+00 : f32
    %1573 = vector.broadcast %cst_563 : f32 to vector<8x32xf32>
    %1574 = vector.broadcast %cst_564 : f32 to vector<8x32xf32>
    %1575 = arith.select %1572, %1573, %1574 : vector<8x32xi1>, vector<8x32xf32>
    %cst_565 = arith.constant dense<0.000000e+00> : vector<8xf32>
    %1576 = vector.multi_reduction <add>, %1575, %cst_565 [1] : vector<8x32xf32> to vector<8xf32>
    %1577 = vector.shape_cast %1576 : vector<8xf32> to vector<8x1xf32>
    %1578 = arith.select %1564, %1570, %1561 : vector<8x1xi1>, vector<8x1xf32>
    %1579 = arith.select %1564, %1577, %1562 : vector<8x1xi1>, vector<8x1xf32>
    %c14_i32_566 = arith.constant 14 : i32
    %1580 = vector.broadcast %cst_481 : f32 to vector<8x1xf32>
    %1581 = arith.cmpf olt, %1579, %1580 : vector<8x1xf32>
    %1582 = vector.broadcast %1578 : vector<8x1xf32> to vector<8x32xf32>
    %1583 = arith.cmpf olt, %1332, %1582 : vector<8x32xf32>
    %cst_567 = arith.constant 0xFF800000 : f32
    %1584 = vector.broadcast %cst_567 : f32 to vector<8x32xf32>
    %1585 = arith.select %1583, %1332, %1584 : vector<8x32xi1>, vector<8x32xf32>
    %cst_568 = arith.constant dense<0xFF800000> : vector<8xf32>
    %1586 = vector.multi_reduction <maximumf>, %1585, %cst_568 [1] : vector<8x32xf32> to vector<8xf32>
    %1587 = vector.shape_cast %1586 : vector<8xf32> to vector<8x1xf32>
    %1588 = vector.broadcast %1587 : vector<8x1xf32> to vector<8x32xf32>
    %1589 = arith.cmpf oge, %1332, %1588 : vector<8x32xf32>
    %cst_569 = arith.constant 1.000000e+00 : f32
    %cst_570 = arith.constant 0.000000e+00 : f32
    %1590 = vector.broadcast %cst_569 : f32 to vector<8x32xf32>
    %1591 = vector.broadcast %cst_570 : f32 to vector<8x32xf32>
    %1592 = arith.select %1589, %1590, %1591 : vector<8x32xi1>, vector<8x32xf32>
    %cst_571 = arith.constant dense<0.000000e+00> : vector<8xf32>
    %1593 = vector.multi_reduction <add>, %1592, %cst_571 [1] : vector<8x32xf32> to vector<8xf32>
    %1594 = vector.shape_cast %1593 : vector<8xf32> to vector<8x1xf32>
    %1595 = arith.select %1581, %1587, %1578 : vector<8x1xi1>, vector<8x1xf32>
    %1596 = arith.select %1581, %1594, %1579 : vector<8x1xi1>, vector<8x1xf32>
    %c15_i32_572 = arith.constant 15 : i32
    %1597 = vector.broadcast %cst_481 : f32 to vector<8x1xf32>
    %1598 = arith.cmpf olt, %1596, %1597 : vector<8x1xf32>
    %1599 = vector.broadcast %1595 : vector<8x1xf32> to vector<8x32xf32>
    %1600 = arith.cmpf olt, %1332, %1599 : vector<8x32xf32>
    %cst_573 = arith.constant 0xFF800000 : f32
    %1601 = vector.broadcast %cst_573 : f32 to vector<8x32xf32>
    %1602 = arith.select %1600, %1332, %1601 : vector<8x32xi1>, vector<8x32xf32>
    %cst_574 = arith.constant dense<0xFF800000> : vector<8xf32>
    %1603 = vector.multi_reduction <maximumf>, %1602, %cst_574 [1] : vector<8x32xf32> to vector<8xf32>
    %1604 = vector.shape_cast %1603 : vector<8xf32> to vector<8x1xf32>
    %1605 = vector.broadcast %1604 : vector<8x1xf32> to vector<8x32xf32>
    %1606 = arith.cmpf oge, %1332, %1605 : vector<8x32xf32>
    %cst_575 = arith.constant 1.000000e+00 : f32
    %cst_576 = arith.constant 0.000000e+00 : f32
    %1607 = vector.broadcast %cst_575 : f32 to vector<8x32xf32>
    %1608 = vector.broadcast %cst_576 : f32 to vector<8x32xf32>
    %1609 = arith.select %1606, %1607, %1608 : vector<8x32xi1>, vector<8x32xf32>
    %cst_577 = arith.constant dense<0.000000e+00> : vector<8xf32>
    %1610 = vector.multi_reduction <add>, %1609, %cst_577 [1] : vector<8x32xf32> to vector<8xf32>
    %1611 = vector.shape_cast %1610 : vector<8xf32> to vector<8x1xf32>
    %1612 = arith.select %1598, %1604, %1595 : vector<8x1xi1>, vector<8x1xf32>
    %1613 = arith.select %1598, %1611, %1596 : vector<8x1xi1>, vector<8x1xf32>
    %c16_i32_578 = arith.constant 16 : i32
    %1614 = vector.broadcast %cst_481 : f32 to vector<8x1xf32>
    %1615 = arith.cmpf olt, %1613, %1614 : vector<8x1xf32>
    %1616 = vector.broadcast %1612 : vector<8x1xf32> to vector<8x32xf32>
    %1617 = arith.cmpf olt, %1332, %1616 : vector<8x32xf32>
    %cst_579 = arith.constant 0xFF800000 : f32
    %1618 = vector.broadcast %cst_579 : f32 to vector<8x32xf32>
    %1619 = arith.select %1617, %1332, %1618 : vector<8x32xi1>, vector<8x32xf32>
    %cst_580 = arith.constant dense<0xFF800000> : vector<8xf32>
    %1620 = vector.multi_reduction <maximumf>, %1619, %cst_580 [1] : vector<8x32xf32> to vector<8xf32>
    %1621 = vector.shape_cast %1620 : vector<8xf32> to vector<8x1xf32>
    %1622 = vector.broadcast %1621 : vector<8x1xf32> to vector<8x32xf32>
    %1623 = arith.cmpf oge, %1332, %1622 : vector<8x32xf32>
    %cst_581 = arith.constant 1.000000e+00 : f32
    %cst_582 = arith.constant 0.000000e+00 : f32
    %1624 = vector.broadcast %cst_581 : f32 to vector<8x32xf32>
    %1625 = vector.broadcast %cst_582 : f32 to vector<8x32xf32>
    %1626 = arith.select %1623, %1624, %1625 : vector<8x32xi1>, vector<8x32xf32>
    %cst_583 = arith.constant dense<0.000000e+00> : vector<8xf32>
    %1627 = vector.multi_reduction <add>, %1626, %cst_583 [1] : vector<8x32xf32> to vector<8xf32>
    %1628 = vector.shape_cast %1627 : vector<8xf32> to vector<8x1xf32>
    %1629 = arith.select %1615, %1621, %1612 : vector<8x1xi1>, vector<8x1xf32>
    %1630 = arith.select %1615, %1628, %1613 : vector<8x1xi1>, vector<8x1xf32>
    %c17_i32_584 = arith.constant 17 : i32
    %1631 = vector.broadcast %cst_481 : f32 to vector<8x1xf32>
    %1632 = arith.cmpf olt, %1630, %1631 : vector<8x1xf32>
    %1633 = vector.broadcast %1629 : vector<8x1xf32> to vector<8x32xf32>
    %1634 = arith.cmpf olt, %1332, %1633 : vector<8x32xf32>
    %cst_585 = arith.constant 0xFF800000 : f32
    %1635 = vector.broadcast %cst_585 : f32 to vector<8x32xf32>
    %1636 = arith.select %1634, %1332, %1635 : vector<8x32xi1>, vector<8x32xf32>
    %cst_586 = arith.constant dense<0xFF800000> : vector<8xf32>
    %1637 = vector.multi_reduction <maximumf>, %1636, %cst_586 [1] : vector<8x32xf32> to vector<8xf32>
    %1638 = vector.shape_cast %1637 : vector<8xf32> to vector<8x1xf32>
    %1639 = vector.broadcast %1638 : vector<8x1xf32> to vector<8x32xf32>
    %1640 = arith.cmpf oge, %1332, %1639 : vector<8x32xf32>
    %cst_587 = arith.constant 1.000000e+00 : f32
    %cst_588 = arith.constant 0.000000e+00 : f32
    %1641 = vector.broadcast %cst_587 : f32 to vector<8x32xf32>
    %1642 = vector.broadcast %cst_588 : f32 to vector<8x32xf32>
    %1643 = arith.select %1640, %1641, %1642 : vector<8x32xi1>, vector<8x32xf32>
    %cst_589 = arith.constant dense<0.000000e+00> : vector<8xf32>
    %1644 = vector.multi_reduction <add>, %1643, %cst_589 [1] : vector<8x32xf32> to vector<8xf32>
    %1645 = vector.shape_cast %1644 : vector<8xf32> to vector<8x1xf32>
    %1646 = arith.select %1632, %1638, %1629 : vector<8x1xi1>, vector<8x1xf32>
    %1647 = arith.select %1632, %1645, %1630 : vector<8x1xi1>, vector<8x1xf32>
    %1648 = vector.broadcast %1646 : vector<8x1xf32> to vector<8x32xf32>
    %1649 = arith.cmpf oge, %1332, %1648 : vector<8x32xf32>
    %cst_590 = arith.constant 0.000000e+00 : f32
    %1650 = vector.broadcast %cst_590 : f32 to vector<8x32xf32>
    %1651 = arith.select %1649, %1332, %1650 : vector<8x32xi1>, vector<8x32xf32>
    %c8_i32_591 = arith.constant 8 : i32
    %1652 = arith.muli %c4_i32_472, %c8_i32_591 : i32
    %1653 = tpu.assume_multiple %1652, 8 : i32
    %1654 = arith.index_cast %1653 : i32 to index
    %c0_592 = arith.constant 0 : index
    %1655 = vector.load %arg8[%1654, %c0_592] : memref<48x32xf32, #tpu.memory_space<vmem>>, vector<8x32xf32>
    tpu.vector_store %arg8[%1654, %c0_592], %1651 {strides = array<i32>} : memref<48x32xf32, #tpu.memory_space<vmem>>, vector<8x32xf32>,
    %c5_i32_593 = arith.constant 5 : i32
    %1656 = arith.index_cast %c5_i32_593 : i32 to index
    %c0_594 = arith.constant 0 : index
    %c0_595 = arith.constant 0 : index
    %1657 = vector.load %arg0[%1656, %c0_594, %c0_595] : memref<6x8x16xf32, #tpu.memory_space<vmem>>, vector<1x8x16xf32>
    %1658 = vector.shape_cast %1657 : vector<1x8x16xf32> to vector<8x16xf32>
    %cst_596 = arith.constant dense<0.000000e+00> : vector<8x32xf32>
    %1659 = tpu.matmul %1658, %0, %cst_596 {dimension_numbers = #tpu.dot_dimension_numbers<[1], [0], [0], [1], [0, 0, 1, 1], [], []>} : vector<8x16xf32>, vector<16x32xf32>, vector<8x32xf32> -> vector<8x32xf32>
    %cst_597 = arith.constant dense<0.000000e+00> : vector<8x32xf32>
    %1660 = tpu.matmul %1651, %1, %cst_597 {dimension_numbers = #tpu.dot_dimension_numbers<[1], [0], [0], [1], [0, 0, 1, 1], [], []>} : vector<8x32xf32>, vector<32x32xf32>, vector<8x32xf32> -> vector<8x32xf32>
    %1661 = arith.addf %1659, %1660 : vector<8x32xf32>
    %1662 = arith.addf %1661, %4 : vector<8x32xf32>
    %cst_598 = arith.constant dense<0xFF800000> : vector<8xf32>
    %1663 = vector.multi_reduction <maximumf>, %1662, %cst_598 [1] : vector<8x32xf32> to vector<8xf32>
    %1664 = vector.shape_cast %1663 : vector<8xf32> to vector<8x1xf32>
    %1665 = vector.broadcast %1664 : vector<8x1xf32> to vector<8x32xf32>
    %1666 = arith.cmpf oge, %1662, %1665 : vector<8x32xf32>
    %cst_599 = arith.constant 1.000000e+00 : f32
    %cst_600 = arith.constant 0.000000e+00 : f32
    %1667 = vector.broadcast %cst_599 : f32 to vector<8x32xf32>
    %1668 = vector.broadcast %cst_600 : f32 to vector<8x32xf32>
    %1669 = arith.select %1666, %1667, %1668 : vector<8x32xi1>, vector<8x32xf32>
    %cst_601 = arith.constant dense<0.000000e+00> : vector<8xf32>
    %1670 = vector.multi_reduction <add>, %1669, %cst_601 [1] : vector<8x32xf32> to vector<8xf32>
    %1671 = vector.shape_cast %1670 : vector<8xf32> to vector<8x1xf32>
    %cst_602 = arith.constant 1.900000e+01 : f32
    %c0_i32_603 = arith.constant 0 : i32
    %1672 = vector.broadcast %cst_602 : f32 to vector<8x1xf32>
    %1673 = arith.cmpf olt, %1671, %1672 : vector<8x1xf32>
    %1674 = vector.broadcast %1664 : vector<8x1xf32> to vector<8x32xf32>
    %1675 = arith.cmpf olt, %1662, %1674 : vector<8x32xf32>
    %cst_604 = arith.constant 0xFF800000 : f32
    %1676 = vector.broadcast %cst_604 : f32 to vector<8x32xf32>
    %1677 = arith.select %1675, %1662, %1676 : vector<8x32xi1>, vector<8x32xf32>
    %cst_605 = arith.constant dense<0xFF800000> : vector<8xf32>
    %1678 = vector.multi_reduction <maximumf>, %1677, %cst_605 [1] : vector<8x32xf32> to vector<8xf32>
    %1679 = vector.shape_cast %1678 : vector<8xf32> to vector<8x1xf32>
    %1680 = vector.broadcast %1679 : vector<8x1xf32> to vector<8x32xf32>
    %1681 = arith.cmpf oge, %1662, %1680 : vector<8x32xf32>
    %cst_606 = arith.constant 1.000000e+00 : f32
    %cst_607 = arith.constant 0.000000e+00 : f32
    %1682 = vector.broadcast %cst_606 : f32 to vector<8x32xf32>
    %1683 = vector.broadcast %cst_607 : f32 to vector<8x32xf32>
    %1684 = arith.select %1681, %1682, %1683 : vector<8x32xi1>, vector<8x32xf32>
    %cst_608 = arith.constant dense<0.000000e+00> : vector<8xf32>
    %1685 = vector.multi_reduction <add>, %1684, %cst_608 [1] : vector<8x32xf32> to vector<8xf32>
    %1686 = vector.shape_cast %1685 : vector<8xf32> to vector<8x1xf32>
    %1687 = arith.select %1673, %1679, %1664 : vector<8x1xi1>, vector<8x1xf32>
    %1688 = arith.select %1673, %1686, %1671 : vector<8x1xi1>, vector<8x1xf32>
    %c1_i32_609 = arith.constant 1 : i32
    %1689 = vector.broadcast %cst_602 : f32 to vector<8x1xf32>
    %1690 = arith.cmpf olt, %1688, %1689 : vector<8x1xf32>
    %1691 = vector.broadcast %1687 : vector<8x1xf32> to vector<8x32xf32>
    %1692 = arith.cmpf olt, %1662, %1691 : vector<8x32xf32>
    %cst_610 = arith.constant 0xFF800000 : f32
    %1693 = vector.broadcast %cst_610 : f32 to vector<8x32xf32>
    %1694 = arith.select %1692, %1662, %1693 : vector<8x32xi1>, vector<8x32xf32>
    %cst_611 = arith.constant dense<0xFF800000> : vector<8xf32>
    %1695 = vector.multi_reduction <maximumf>, %1694, %cst_611 [1] : vector<8x32xf32> to vector<8xf32>
    %1696 = vector.shape_cast %1695 : vector<8xf32> to vector<8x1xf32>
    %1697 = vector.broadcast %1696 : vector<8x1xf32> to vector<8x32xf32>
    %1698 = arith.cmpf oge, %1662, %1697 : vector<8x32xf32>
    %cst_612 = arith.constant 1.000000e+00 : f32
    %cst_613 = arith.constant 0.000000e+00 : f32
    %1699 = vector.broadcast %cst_612 : f32 to vector<8x32xf32>
    %1700 = vector.broadcast %cst_613 : f32 to vector<8x32xf32>
    %1701 = arith.select %1698, %1699, %1700 : vector<8x32xi1>, vector<8x32xf32>
    %cst_614 = arith.constant dense<0.000000e+00> : vector<8xf32>
    %1702 = vector.multi_reduction <add>, %1701, %cst_614 [1] : vector<8x32xf32> to vector<8xf32>
    %1703 = vector.shape_cast %1702 : vector<8xf32> to vector<8x1xf32>
    %1704 = arith.select %1690, %1696, %1687 : vector<8x1xi1>, vector<8x1xf32>
    %1705 = arith.select %1690, %1703, %1688 : vector<8x1xi1>, vector<8x1xf32>
    %c2_i32_615 = arith.constant 2 : i32
    %1706 = vector.broadcast %cst_602 : f32 to vector<8x1xf32>
    %1707 = arith.cmpf olt, %1705, %1706 : vector<8x1xf32>
    %1708 = vector.broadcast %1704 : vector<8x1xf32> to vector<8x32xf32>
    %1709 = arith.cmpf olt, %1662, %1708 : vector<8x32xf32>
    %cst_616 = arith.constant 0xFF800000 : f32
    %1710 = vector.broadcast %cst_616 : f32 to vector<8x32xf32>
    %1711 = arith.select %1709, %1662, %1710 : vector<8x32xi1>, vector<8x32xf32>
    %cst_617 = arith.constant dense<0xFF800000> : vector<8xf32>
    %1712 = vector.multi_reduction <maximumf>, %1711, %cst_617 [1] : vector<8x32xf32> to vector<8xf32>
    %1713 = vector.shape_cast %1712 : vector<8xf32> to vector<8x1xf32>
    %1714 = vector.broadcast %1713 : vector<8x1xf32> to vector<8x32xf32>
    %1715 = arith.cmpf oge, %1662, %1714 : vector<8x32xf32>
    %cst_618 = arith.constant 1.000000e+00 : f32
    %cst_619 = arith.constant 0.000000e+00 : f32
    %1716 = vector.broadcast %cst_618 : f32 to vector<8x32xf32>
    %1717 = vector.broadcast %cst_619 : f32 to vector<8x32xf32>
    %1718 = arith.select %1715, %1716, %1717 : vector<8x32xi1>, vector<8x32xf32>
    %cst_620 = arith.constant dense<0.000000e+00> : vector<8xf32>
    %1719 = vector.multi_reduction <add>, %1718, %cst_620 [1] : vector<8x32xf32> to vector<8xf32>
    %1720 = vector.shape_cast %1719 : vector<8xf32> to vector<8x1xf32>
    %1721 = arith.select %1707, %1713, %1704 : vector<8x1xi1>, vector<8x1xf32>
    %1722 = arith.select %1707, %1720, %1705 : vector<8x1xi1>, vector<8x1xf32>
    %c3_i32_621 = arith.constant 3 : i32
    %1723 = vector.broadcast %cst_602 : f32 to vector<8x1xf32>
    %1724 = arith.cmpf olt, %1722, %1723 : vector<8x1xf32>
    %1725 = vector.broadcast %1721 : vector<8x1xf32> to vector<8x32xf32>
    %1726 = arith.cmpf olt, %1662, %1725 : vector<8x32xf32>
    %cst_622 = arith.constant 0xFF800000 : f32
    %1727 = vector.broadcast %cst_622 : f32 to vector<8x32xf32>
    %1728 = arith.select %1726, %1662, %1727 : vector<8x32xi1>, vector<8x32xf32>
    %cst_623 = arith.constant dense<0xFF800000> : vector<8xf32>
    %1729 = vector.multi_reduction <maximumf>, %1728, %cst_623 [1] : vector<8x32xf32> to vector<8xf32>
    %1730 = vector.shape_cast %1729 : vector<8xf32> to vector<8x1xf32>
    %1731 = vector.broadcast %1730 : vector<8x1xf32> to vector<8x32xf32>
    %1732 = arith.cmpf oge, %1662, %1731 : vector<8x32xf32>
    %cst_624 = arith.constant 1.000000e+00 : f32
    %cst_625 = arith.constant 0.000000e+00 : f32
    %1733 = vector.broadcast %cst_624 : f32 to vector<8x32xf32>
    %1734 = vector.broadcast %cst_625 : f32 to vector<8x32xf32>
    %1735 = arith.select %1732, %1733, %1734 : vector<8x32xi1>, vector<8x32xf32>
    %cst_626 = arith.constant dense<0.000000e+00> : vector<8xf32>
    %1736 = vector.multi_reduction <add>, %1735, %cst_626 [1] : vector<8x32xf32> to vector<8xf32>
    %1737 = vector.shape_cast %1736 : vector<8xf32> to vector<8x1xf32>
    %1738 = arith.select %1724, %1730, %1721 : vector<8x1xi1>, vector<8x1xf32>
    %1739 = arith.select %1724, %1737, %1722 : vector<8x1xi1>, vector<8x1xf32>
    %c4_i32_627 = arith.constant 4 : i32
    %1740 = vector.broadcast %cst_602 : f32 to vector<8x1xf32>
    %1741 = arith.cmpf olt, %1739, %1740 : vector<8x1xf32>
    %1742 = vector.broadcast %1738 : vector<8x1xf32> to vector<8x32xf32>
    %1743 = arith.cmpf olt, %1662, %1742 : vector<8x32xf32>
    %cst_628 = arith.constant 0xFF800000 : f32
    %1744 = vector.broadcast %cst_628 : f32 to vector<8x32xf32>
    %1745 = arith.select %1743, %1662, %1744 : vector<8x32xi1>, vector<8x32xf32>
    %cst_629 = arith.constant dense<0xFF800000> : vector<8xf32>
    %1746 = vector.multi_reduction <maximumf>, %1745, %cst_629 [1] : vector<8x32xf32> to vector<8xf32>
    %1747 = vector.shape_cast %1746 : vector<8xf32> to vector<8x1xf32>
    %1748 = vector.broadcast %1747 : vector<8x1xf32> to vector<8x32xf32>
    %1749 = arith.cmpf oge, %1662, %1748 : vector<8x32xf32>
    %cst_630 = arith.constant 1.000000e+00 : f32
    %cst_631 = arith.constant 0.000000e+00 : f32
    %1750 = vector.broadcast %cst_630 : f32 to vector<8x32xf32>
    %1751 = vector.broadcast %cst_631 : f32 to vector<8x32xf32>
    %1752 = arith.select %1749, %1750, %1751 : vector<8x32xi1>, vector<8x32xf32>
    %cst_632 = arith.constant dense<0.000000e+00> : vector<8xf32>
    %1753 = vector.multi_reduction <add>, %1752, %cst_632 [1] : vector<8x32xf32> to vector<8xf32>
    %1754 = vector.shape_cast %1753 : vector<8xf32> to vector<8x1xf32>
    %1755 = arith.select %1741, %1747, %1738 : vector<8x1xi1>, vector<8x1xf32>
    %1756 = arith.select %1741, %1754, %1739 : vector<8x1xi1>, vector<8x1xf32>
    %c5_i32_633 = arith.constant 5 : i32
    %1757 = vector.broadcast %cst_602 : f32 to vector<8x1xf32>
    %1758 = arith.cmpf olt, %1756, %1757 : vector<8x1xf32>
    %1759 = vector.broadcast %1755 : vector<8x1xf32> to vector<8x32xf32>
    %1760 = arith.cmpf olt, %1662, %1759 : vector<8x32xf32>
    %cst_634 = arith.constant 0xFF800000 : f32
    %1761 = vector.broadcast %cst_634 : f32 to vector<8x32xf32>
    %1762 = arith.select %1760, %1662, %1761 : vector<8x32xi1>, vector<8x32xf32>
    %cst_635 = arith.constant dense<0xFF800000> : vector<8xf32>
    %1763 = vector.multi_reduction <maximumf>, %1762, %cst_635 [1] : vector<8x32xf32> to vector<8xf32>
    %1764 = vector.shape_cast %1763 : vector<8xf32> to vector<8x1xf32>
    %1765 = vector.broadcast %1764 : vector<8x1xf32> to vector<8x32xf32>
    %1766 = arith.cmpf oge, %1662, %1765 : vector<8x32xf32>
    %cst_636 = arith.constant 1.000000e+00 : f32
    %cst_637 = arith.constant 0.000000e+00 : f32
    %1767 = vector.broadcast %cst_636 : f32 to vector<8x32xf32>
    %1768 = vector.broadcast %cst_637 : f32 to vector<8x32xf32>
    %1769 = arith.select %1766, %1767, %1768 : vector<8x32xi1>, vector<8x32xf32>
    %cst_638 = arith.constant dense<0.000000e+00> : vector<8xf32>
    %1770 = vector.multi_reduction <add>, %1769, %cst_638 [1] : vector<8x32xf32> to vector<8xf32>
    %1771 = vector.shape_cast %1770 : vector<8xf32> to vector<8x1xf32>
    %1772 = arith.select %1758, %1764, %1755 : vector<8x1xi1>, vector<8x1xf32>
    %1773 = arith.select %1758, %1771, %1756 : vector<8x1xi1>, vector<8x1xf32>
    %c6_i32_639 = arith.constant 6 : i32
    %1774 = vector.broadcast %cst_602 : f32 to vector<8x1xf32>
    %1775 = arith.cmpf olt, %1773, %1774 : vector<8x1xf32>
    %1776 = vector.broadcast %1772 : vector<8x1xf32> to vector<8x32xf32>
    %1777 = arith.cmpf olt, %1662, %1776 : vector<8x32xf32>
    %cst_640 = arith.constant 0xFF800000 : f32
    %1778 = vector.broadcast %cst_640 : f32 to vector<8x32xf32>
    %1779 = arith.select %1777, %1662, %1778 : vector<8x32xi1>, vector<8x32xf32>
    %cst_641 = arith.constant dense<0xFF800000> : vector<8xf32>
    %1780 = vector.multi_reduction <maximumf>, %1779, %cst_641 [1] : vector<8x32xf32> to vector<8xf32>
    %1781 = vector.shape_cast %1780 : vector<8xf32> to vector<8x1xf32>
    %1782 = vector.broadcast %1781 : vector<8x1xf32> to vector<8x32xf32>
    %1783 = arith.cmpf oge, %1662, %1782 : vector<8x32xf32>
    %cst_642 = arith.constant 1.000000e+00 : f32
    %cst_643 = arith.constant 0.000000e+00 : f32
    %1784 = vector.broadcast %cst_642 : f32 to vector<8x32xf32>
    %1785 = vector.broadcast %cst_643 : f32 to vector<8x32xf32>
    %1786 = arith.select %1783, %1784, %1785 : vector<8x32xi1>, vector<8x32xf32>
    %cst_644 = arith.constant dense<0.000000e+00> : vector<8xf32>
    %1787 = vector.multi_reduction <add>, %1786, %cst_644 [1] : vector<8x32xf32> to vector<8xf32>
    %1788 = vector.shape_cast %1787 : vector<8xf32> to vector<8x1xf32>
    %1789 = arith.select %1775, %1781, %1772 : vector<8x1xi1>, vector<8x1xf32>
    %1790 = arith.select %1775, %1788, %1773 : vector<8x1xi1>, vector<8x1xf32>
    %c7_i32_645 = arith.constant 7 : i32
    %1791 = vector.broadcast %cst_602 : f32 to vector<8x1xf32>
    %1792 = arith.cmpf olt, %1790, %1791 : vector<8x1xf32>
    %1793 = vector.broadcast %1789 : vector<8x1xf32> to vector<8x32xf32>
    %1794 = arith.cmpf olt, %1662, %1793 : vector<8x32xf32>
    %cst_646 = arith.constant 0xFF800000 : f32
    %1795 = vector.broadcast %cst_646 : f32 to vector<8x32xf32>
    %1796 = arith.select %1794, %1662, %1795 : vector<8x32xi1>, vector<8x32xf32>
    %cst_647 = arith.constant dense<0xFF800000> : vector<8xf32>
    %1797 = vector.multi_reduction <maximumf>, %1796, %cst_647 [1] : vector<8x32xf32> to vector<8xf32>
    %1798 = vector.shape_cast %1797 : vector<8xf32> to vector<8x1xf32>
    %1799 = vector.broadcast %1798 : vector<8x1xf32> to vector<8x32xf32>
    %1800 = arith.cmpf oge, %1662, %1799 : vector<8x32xf32>
    %cst_648 = arith.constant 1.000000e+00 : f32
    %cst_649 = arith.constant 0.000000e+00 : f32
    %1801 = vector.broadcast %cst_648 : f32 to vector<8x32xf32>
    %1802 = vector.broadcast %cst_649 : f32 to vector<8x32xf32>
    %1803 = arith.select %1800, %1801, %1802 : vector<8x32xi1>, vector<8x32xf32>
    %cst_650 = arith.constant dense<0.000000e+00> : vector<8xf32>
    %1804 = vector.multi_reduction <add>, %1803, %cst_650 [1] : vector<8x32xf32> to vector<8xf32>
    %1805 = vector.shape_cast %1804 : vector<8xf32> to vector<8x1xf32>
    %1806 = arith.select %1792, %1798, %1789 : vector<8x1xi1>, vector<8x1xf32>
    %1807 = arith.select %1792, %1805, %1790 : vector<8x1xi1>, vector<8x1xf32>
    %c8_i32_651 = arith.constant 8 : i32
    %1808 = vector.broadcast %cst_602 : f32 to vector<8x1xf32>
    %1809 = arith.cmpf olt, %1807, %1808 : vector<8x1xf32>
    %1810 = vector.broadcast %1806 : vector<8x1xf32> to vector<8x32xf32>
    %1811 = arith.cmpf olt, %1662, %1810 : vector<8x32xf32>
    %cst_652 = arith.constant 0xFF800000 : f32
    %1812 = vector.broadcast %cst_652 : f32 to vector<8x32xf32>
    %1813 = arith.select %1811, %1662, %1812 : vector<8x32xi1>, vector<8x32xf32>
    %cst_653 = arith.constant dense<0xFF800000> : vector<8xf32>
    %1814 = vector.multi_reduction <maximumf>, %1813, %cst_653 [1] : vector<8x32xf32> to vector<8xf32>
    %1815 = vector.shape_cast %1814 : vector<8xf32> to vector<8x1xf32>
    %1816 = vector.broadcast %1815 : vector<8x1xf32> to vector<8x32xf32>
    %1817 = arith.cmpf oge, %1662, %1816 : vector<8x32xf32>
    %cst_654 = arith.constant 1.000000e+00 : f32
    %cst_655 = arith.constant 0.000000e+00 : f32
    %1818 = vector.broadcast %cst_654 : f32 to vector<8x32xf32>
    %1819 = vector.broadcast %cst_655 : f32 to vector<8x32xf32>
    %1820 = arith.select %1817, %1818, %1819 : vector<8x32xi1>, vector<8x32xf32>
    %cst_656 = arith.constant dense<0.000000e+00> : vector<8xf32>
    %1821 = vector.multi_reduction <add>, %1820, %cst_656 [1] : vector<8x32xf32> to vector<8xf32>
    %1822 = vector.shape_cast %1821 : vector<8xf32> to vector<8x1xf32>
    %1823 = arith.select %1809, %1815, %1806 : vector<8x1xi1>, vector<8x1xf32>
    %1824 = arith.select %1809, %1822, %1807 : vector<8x1xi1>, vector<8x1xf32>
    %c9_i32_657 = arith.constant 9 : i32
    %1825 = vector.broadcast %cst_602 : f32 to vector<8x1xf32>
    %1826 = arith.cmpf olt, %1824, %1825 : vector<8x1xf32>
    %1827 = vector.broadcast %1823 : vector<8x1xf32> to vector<8x32xf32>
    %1828 = arith.cmpf olt, %1662, %1827 : vector<8x32xf32>
    %cst_658 = arith.constant 0xFF800000 : f32
    %1829 = vector.broadcast %cst_658 : f32 to vector<8x32xf32>
    %1830 = arith.select %1828, %1662, %1829 : vector<8x32xi1>, vector<8x32xf32>
    %cst_659 = arith.constant dense<0xFF800000> : vector<8xf32>
    %1831 = vector.multi_reduction <maximumf>, %1830, %cst_659 [1] : vector<8x32xf32> to vector<8xf32>
    %1832 = vector.shape_cast %1831 : vector<8xf32> to vector<8x1xf32>
    %1833 = vector.broadcast %1832 : vector<8x1xf32> to vector<8x32xf32>
    %1834 = arith.cmpf oge, %1662, %1833 : vector<8x32xf32>
    %cst_660 = arith.constant 1.000000e+00 : f32
    %cst_661 = arith.constant 0.000000e+00 : f32
    %1835 = vector.broadcast %cst_660 : f32 to vector<8x32xf32>
    %1836 = vector.broadcast %cst_661 : f32 to vector<8x32xf32>
    %1837 = arith.select %1834, %1835, %1836 : vector<8x32xi1>, vector<8x32xf32>
    %cst_662 = arith.constant dense<0.000000e+00> : vector<8xf32>
    %1838 = vector.multi_reduction <add>, %1837, %cst_662 [1] : vector<8x32xf32> to vector<8xf32>
    %1839 = vector.shape_cast %1838 : vector<8xf32> to vector<8x1xf32>
    %1840 = arith.select %1826, %1832, %1823 : vector<8x1xi1>, vector<8x1xf32>
    %1841 = arith.select %1826, %1839, %1824 : vector<8x1xi1>, vector<8x1xf32>
    %c10_i32_663 = arith.constant 10 : i32
    %1842 = vector.broadcast %cst_602 : f32 to vector<8x1xf32>
    %1843 = arith.cmpf olt, %1841, %1842 : vector<8x1xf32>
    %1844 = vector.broadcast %1840 : vector<8x1xf32> to vector<8x32xf32>
    %1845 = arith.cmpf olt, %1662, %1844 : vector<8x32xf32>
    %cst_664 = arith.constant 0xFF800000 : f32
    %1846 = vector.broadcast %cst_664 : f32 to vector<8x32xf32>
    %1847 = arith.select %1845, %1662, %1846 : vector<8x32xi1>, vector<8x32xf32>
    %cst_665 = arith.constant dense<0xFF800000> : vector<8xf32>
    %1848 = vector.multi_reduction <maximumf>, %1847, %cst_665 [1] : vector<8x32xf32> to vector<8xf32>
    %1849 = vector.shape_cast %1848 : vector<8xf32> to vector<8x1xf32>
    %1850 = vector.broadcast %1849 : vector<8x1xf32> to vector<8x32xf32>
    %1851 = arith.cmpf oge, %1662, %1850 : vector<8x32xf32>
    %cst_666 = arith.constant 1.000000e+00 : f32
    %cst_667 = arith.constant 0.000000e+00 : f32
    %1852 = vector.broadcast %cst_666 : f32 to vector<8x32xf32>
    %1853 = vector.broadcast %cst_667 : f32 to vector<8x32xf32>
    %1854 = arith.select %1851, %1852, %1853 : vector<8x32xi1>, vector<8x32xf32>
    %cst_668 = arith.constant dense<0.000000e+00> : vector<8xf32>
    %1855 = vector.multi_reduction <add>, %1854, %cst_668 [1] : vector<8x32xf32> to vector<8xf32>
    %1856 = vector.shape_cast %1855 : vector<8xf32> to vector<8x1xf32>
    %1857 = arith.select %1843, %1849, %1840 : vector<8x1xi1>, vector<8x1xf32>
    %1858 = arith.select %1843, %1856, %1841 : vector<8x1xi1>, vector<8x1xf32>
    %c11_i32_669 = arith.constant 11 : i32
    %1859 = vector.broadcast %cst_602 : f32 to vector<8x1xf32>
    %1860 = arith.cmpf olt, %1858, %1859 : vector<8x1xf32>
    %1861 = vector.broadcast %1857 : vector<8x1xf32> to vector<8x32xf32>
    %1862 = arith.cmpf olt, %1662, %1861 : vector<8x32xf32>
    %cst_670 = arith.constant 0xFF800000 : f32
    %1863 = vector.broadcast %cst_670 : f32 to vector<8x32xf32>
    %1864 = arith.select %1862, %1662, %1863 : vector<8x32xi1>, vector<8x32xf32>
    %cst_671 = arith.constant dense<0xFF800000> : vector<8xf32>
    %1865 = vector.multi_reduction <maximumf>, %1864, %cst_671 [1] : vector<8x32xf32> to vector<8xf32>
    %1866 = vector.shape_cast %1865 : vector<8xf32> to vector<8x1xf32>
    %1867 = vector.broadcast %1866 : vector<8x1xf32> to vector<8x32xf32>
    %1868 = arith.cmpf oge, %1662, %1867 : vector<8x32xf32>
    %cst_672 = arith.constant 1.000000e+00 : f32
    %cst_673 = arith.constant 0.000000e+00 : f32
    %1869 = vector.broadcast %cst_672 : f32 to vector<8x32xf32>
    %1870 = vector.broadcast %cst_673 : f32 to vector<8x32xf32>
    %1871 = arith.select %1868, %1869, %1870 : vector<8x32xi1>, vector<8x32xf32>
    %cst_674 = arith.constant dense<0.000000e+00> : vector<8xf32>
    %1872 = vector.multi_reduction <add>, %1871, %cst_674 [1] : vector<8x32xf32> to vector<8xf32>
    %1873 = vector.shape_cast %1872 : vector<8xf32> to vector<8x1xf32>
    %1874 = arith.select %1860, %1866, %1857 : vector<8x1xi1>, vector<8x1xf32>
    %1875 = arith.select %1860, %1873, %1858 : vector<8x1xi1>, vector<8x1xf32>
    %c12_i32_675 = arith.constant 12 : i32
    %1876 = vector.broadcast %cst_602 : f32 to vector<8x1xf32>
    %1877 = arith.cmpf olt, %1875, %1876 : vector<8x1xf32>
    %1878 = vector.broadcast %1874 : vector<8x1xf32> to vector<8x32xf32>
    %1879 = arith.cmpf olt, %1662, %1878 : vector<8x32xf32>
    %cst_676 = arith.constant 0xFF800000 : f32
    %1880 = vector.broadcast %cst_676 : f32 to vector<8x32xf32>
    %1881 = arith.select %1879, %1662, %1880 : vector<8x32xi1>, vector<8x32xf32>
    %cst_677 = arith.constant dense<0xFF800000> : vector<8xf32>
    %1882 = vector.multi_reduction <maximumf>, %1881, %cst_677 [1] : vector<8x32xf32> to vector<8xf32>
    %1883 = vector.shape_cast %1882 : vector<8xf32> to vector<8x1xf32>
    %1884 = vector.broadcast %1883 : vector<8x1xf32> to vector<8x32xf32>
    %1885 = arith.cmpf oge, %1662, %1884 : vector<8x32xf32>
    %cst_678 = arith.constant 1.000000e+00 : f32
    %cst_679 = arith.constant 0.000000e+00 : f32
    %1886 = vector.broadcast %cst_678 : f32 to vector<8x32xf32>
    %1887 = vector.broadcast %cst_679 : f32 to vector<8x32xf32>
    %1888 = arith.select %1885, %1886, %1887 : vector<8x32xi1>, vector<8x32xf32>
    %cst_680 = arith.constant dense<0.000000e+00> : vector<8xf32>
    %1889 = vector.multi_reduction <add>, %1888, %cst_680 [1] : vector<8x32xf32> to vector<8xf32>
    %1890 = vector.shape_cast %1889 : vector<8xf32> to vector<8x1xf32>
    %1891 = arith.select %1877, %1883, %1874 : vector<8x1xi1>, vector<8x1xf32>
    %1892 = arith.select %1877, %1890, %1875 : vector<8x1xi1>, vector<8x1xf32>
    %c13_i32_681 = arith.constant 13 : i32
    %1893 = vector.broadcast %cst_602 : f32 to vector<8x1xf32>
    %1894 = arith.cmpf olt, %1892, %1893 : vector<8x1xf32>
    %1895 = vector.broadcast %1891 : vector<8x1xf32> to vector<8x32xf32>
    %1896 = arith.cmpf olt, %1662, %1895 : vector<8x32xf32>
    %cst_682 = arith.constant 0xFF800000 : f32
    %1897 = vector.broadcast %cst_682 : f32 to vector<8x32xf32>
    %1898 = arith.select %1896, %1662, %1897 : vector<8x32xi1>, vector<8x32xf32>
    %cst_683 = arith.constant dense<0xFF800000> : vector<8xf32>
    %1899 = vector.multi_reduction <maximumf>, %1898, %cst_683 [1] : vector<8x32xf32> to vector<8xf32>
    %1900 = vector.shape_cast %1899 : vector<8xf32> to vector<8x1xf32>
    %1901 = vector.broadcast %1900 : vector<8x1xf32> to vector<8x32xf32>
    %1902 = arith.cmpf oge, %1662, %1901 : vector<8x32xf32>
    %cst_684 = arith.constant 1.000000e+00 : f32
    %cst_685 = arith.constant 0.000000e+00 : f32
    %1903 = vector.broadcast %cst_684 : f32 to vector<8x32xf32>
    %1904 = vector.broadcast %cst_685 : f32 to vector<8x32xf32>
    %1905 = arith.select %1902, %1903, %1904 : vector<8x32xi1>, vector<8x32xf32>
    %cst_686 = arith.constant dense<0.000000e+00> : vector<8xf32>
    %1906 = vector.multi_reduction <add>, %1905, %cst_686 [1] : vector<8x32xf32> to vector<8xf32>
    %1907 = vector.shape_cast %1906 : vector<8xf32> to vector<8x1xf32>
    %1908 = arith.select %1894, %1900, %1891 : vector<8x1xi1>, vector<8x1xf32>
    %1909 = arith.select %1894, %1907, %1892 : vector<8x1xi1>, vector<8x1xf32>
    %c14_i32_687 = arith.constant 14 : i32
    %1910 = vector.broadcast %cst_602 : f32 to vector<8x1xf32>
    %1911 = arith.cmpf olt, %1909, %1910 : vector<8x1xf32>
    %1912 = vector.broadcast %1908 : vector<8x1xf32> to vector<8x32xf32>
    %1913 = arith.cmpf olt, %1662, %1912 : vector<8x32xf32>
    %cst_688 = arith.constant 0xFF800000 : f32
    %1914 = vector.broadcast %cst_688 : f32 to vector<8x32xf32>
    %1915 = arith.select %1913, %1662, %1914 : vector<8x32xi1>, vector<8x32xf32>
    %cst_689 = arith.constant dense<0xFF800000> : vector<8xf32>
    %1916 = vector.multi_reduction <maximumf>, %1915, %cst_689 [1] : vector<8x32xf32> to vector<8xf32>
    %1917 = vector.shape_cast %1916 : vector<8xf32> to vector<8x1xf32>
    %1918 = vector.broadcast %1917 : vector<8x1xf32> to vector<8x32xf32>
    %1919 = arith.cmpf oge, %1662, %1918 : vector<8x32xf32>
    %cst_690 = arith.constant 1.000000e+00 : f32
    %cst_691 = arith.constant 0.000000e+00 : f32
    %1920 = vector.broadcast %cst_690 : f32 to vector<8x32xf32>
    %1921 = vector.broadcast %cst_691 : f32 to vector<8x32xf32>
    %1922 = arith.select %1919, %1920, %1921 : vector<8x32xi1>, vector<8x32xf32>
    %cst_692 = arith.constant dense<0.000000e+00> : vector<8xf32>
    %1923 = vector.multi_reduction <add>, %1922, %cst_692 [1] : vector<8x32xf32> to vector<8xf32>
    %1924 = vector.shape_cast %1923 : vector<8xf32> to vector<8x1xf32>
    %1925 = arith.select %1911, %1917, %1908 : vector<8x1xi1>, vector<8x1xf32>
    %1926 = arith.select %1911, %1924, %1909 : vector<8x1xi1>, vector<8x1xf32>
    %c15_i32_693 = arith.constant 15 : i32
    %1927 = vector.broadcast %cst_602 : f32 to vector<8x1xf32>
    %1928 = arith.cmpf olt, %1926, %1927 : vector<8x1xf32>
    %1929 = vector.broadcast %1925 : vector<8x1xf32> to vector<8x32xf32>
    %1930 = arith.cmpf olt, %1662, %1929 : vector<8x32xf32>
    %cst_694 = arith.constant 0xFF800000 : f32
    %1931 = vector.broadcast %cst_694 : f32 to vector<8x32xf32>
    %1932 = arith.select %1930, %1662, %1931 : vector<8x32xi1>, vector<8x32xf32>
    %cst_695 = arith.constant dense<0xFF800000> : vector<8xf32>
    %1933 = vector.multi_reduction <maximumf>, %1932, %cst_695 [1] : vector<8x32xf32> to vector<8xf32>
    %1934 = vector.shape_cast %1933 : vector<8xf32> to vector<8x1xf32>
    %1935 = vector.broadcast %1934 : vector<8x1xf32> to vector<8x32xf32>
    %1936 = arith.cmpf oge, %1662, %1935 : vector<8x32xf32>
    %cst_696 = arith.constant 1.000000e+00 : f32
    %cst_697 = arith.constant 0.000000e+00 : f32
    %1937 = vector.broadcast %cst_696 : f32 to vector<8x32xf32>
    %1938 = vector.broadcast %cst_697 : f32 to vector<8x32xf32>
    %1939 = arith.select %1936, %1937, %1938 : vector<8x32xi1>, vector<8x32xf32>
    %cst_698 = arith.constant dense<0.000000e+00> : vector<8xf32>
    %1940 = vector.multi_reduction <add>, %1939, %cst_698 [1] : vector<8x32xf32> to vector<8xf32>
    %1941 = vector.shape_cast %1940 : vector<8xf32> to vector<8x1xf32>
    %1942 = arith.select %1928, %1934, %1925 : vector<8x1xi1>, vector<8x1xf32>
    %1943 = arith.select %1928, %1941, %1926 : vector<8x1xi1>, vector<8x1xf32>
    %c16_i32_699 = arith.constant 16 : i32
    %1944 = vector.broadcast %cst_602 : f32 to vector<8x1xf32>
    %1945 = arith.cmpf olt, %1943, %1944 : vector<8x1xf32>
    %1946 = vector.broadcast %1942 : vector<8x1xf32> to vector<8x32xf32>
    %1947 = arith.cmpf olt, %1662, %1946 : vector<8x32xf32>
    %cst_700 = arith.constant 0xFF800000 : f32
    %1948 = vector.broadcast %cst_700 : f32 to vector<8x32xf32>
    %1949 = arith.select %1947, %1662, %1948 : vector<8x32xi1>, vector<8x32xf32>
    %cst_701 = arith.constant dense<0xFF800000> : vector<8xf32>
    %1950 = vector.multi_reduction <maximumf>, %1949, %cst_701 [1] : vector<8x32xf32> to vector<8xf32>
    %1951 = vector.shape_cast %1950 : vector<8xf32> to vector<8x1xf32>
    %1952 = vector.broadcast %1951 : vector<8x1xf32> to vector<8x32xf32>
    %1953 = arith.cmpf oge, %1662, %1952 : vector<8x32xf32>
    %cst_702 = arith.constant 1.000000e+00 : f32
    %cst_703 = arith.constant 0.000000e+00 : f32
    %1954 = vector.broadcast %cst_702 : f32 to vector<8x32xf32>
    %1955 = vector.broadcast %cst_703 : f32 to vector<8x32xf32>
    %1956 = arith.select %1953, %1954, %1955 : vector<8x32xi1>, vector<8x32xf32>
    %cst_704 = arith.constant dense<0.000000e+00> : vector<8xf32>
    %1957 = vector.multi_reduction <add>, %1956, %cst_704 [1] : vector<8x32xf32> to vector<8xf32>
    %1958 = vector.shape_cast %1957 : vector<8xf32> to vector<8x1xf32>
    %1959 = arith.select %1945, %1951, %1942 : vector<8x1xi1>, vector<8x1xf32>
    %1960 = arith.select %1945, %1958, %1943 : vector<8x1xi1>, vector<8x1xf32>
    %c17_i32_705 = arith.constant 17 : i32
    %1961 = vector.broadcast %cst_602 : f32 to vector<8x1xf32>
    %1962 = arith.cmpf olt, %1960, %1961 : vector<8x1xf32>
    %1963 = vector.broadcast %1959 : vector<8x1xf32> to vector<8x32xf32>
    %1964 = arith.cmpf olt, %1662, %1963 : vector<8x32xf32>
    %cst_706 = arith.constant 0xFF800000 : f32
    %1965 = vector.broadcast %cst_706 : f32 to vector<8x32xf32>
    %1966 = arith.select %1964, %1662, %1965 : vector<8x32xi1>, vector<8x32xf32>
    %cst_707 = arith.constant dense<0xFF800000> : vector<8xf32>
    %1967 = vector.multi_reduction <maximumf>, %1966, %cst_707 [1] : vector<8x32xf32> to vector<8xf32>
    %1968 = vector.shape_cast %1967 : vector<8xf32> to vector<8x1xf32>
    %1969 = vector.broadcast %1968 : vector<8x1xf32> to vector<8x32xf32>
    %1970 = arith.cmpf oge, %1662, %1969 : vector<8x32xf32>
    %cst_708 = arith.constant 1.000000e+00 : f32
    %cst_709 = arith.constant 0.000000e+00 : f32
    %1971 = vector.broadcast %cst_708 : f32 to vector<8x32xf32>
    %1972 = vector.broadcast %cst_709 : f32 to vector<8x32xf32>
    %1973 = arith.select %1970, %1971, %1972 : vector<8x32xi1>, vector<8x32xf32>
    %cst_710 = arith.constant dense<0.000000e+00> : vector<8xf32>
    %1974 = vector.multi_reduction <add>, %1973, %cst_710 [1] : vector<8x32xf32> to vector<8xf32>
    %1975 = vector.shape_cast %1974 : vector<8xf32> to vector<8x1xf32>
    %1976 = arith.select %1962, %1968, %1959 : vector<8x1xi1>, vector<8x1xf32>
    %1977 = arith.select %1962, %1975, %1960 : vector<8x1xi1>, vector<8x1xf32>
    %1978 = vector.broadcast %1976 : vector<8x1xf32> to vector<8x32xf32>
    %1979 = arith.cmpf oge, %1662, %1978 : vector<8x32xf32>
    %cst_711 = arith.constant 0.000000e+00 : f32
    %1980 = vector.broadcast %cst_711 : f32 to vector<8x32xf32>
    %1981 = arith.select %1979, %1662, %1980 : vector<8x32xi1>, vector<8x32xf32>
    %c8_i32_712 = arith.constant 8 : i32
    %1982 = arith.muli %c5_i32_593, %c8_i32_712 : i32
    %1983 = tpu.assume_multiple %1982, 8 : i32
    %1984 = arith.index_cast %1983 : i32 to index
    %c0_713 = arith.constant 0 : index
    %1985 = vector.load %arg8[%1984, %c0_713] : memref<48x32xf32, #tpu.memory_space<vmem>>, vector<8x32xf32>
    tpu.vector_store %arg8[%1984, %c0_713], %1981 {strides = array<i32>} : memref<48x32xf32, #tpu.memory_space<vmem>>, vector<8x32xf32>,
    %c6_i32_714 = arith.constant 6 : i32
    %c0_715 = arith.constant 0 : index
    %c0_716 = arith.constant 0 : index
    %1986 = vector.load %arg8[%c0_715, %c0_716] : memref<48x32xf32, #tpu.memory_space<vmem>>, vector<48x32xf32>
    %c0_717 = arith.constant 0 : index
    %c0_718 = arith.constant 0 : index
    %1987 = vector.load %arg5[%c0_717, %c0_718] : memref<32x16xf32, #tpu.memory_space<vmem>>, vector<32x16xf32>
    %cst_719 = arith.constant dense<0.000000e+00> : vector<48x16xf32>
    %1988 = tpu.matmul %1986, %1987, %cst_719 {dimension_numbers = #tpu.dot_dimension_numbers<[1], [0], [0], [1], [0, 0, 1, 1], [], []>} : vector<48x32xf32>, vector<32x16xf32>, vector<48x16xf32> -> vector<48x16xf32>
    %c0_720 = arith.constant 0 : index
    %c0_721 = arith.constant 0 : index
    %1989 = vector.load %arg6[%c0_720, %c0_721] : memref<1x16xf32, #tpu.memory_space<vmem>>, vector<1x16xf32>
    %1990 = vector.broadcast %1989 : vector<1x16xf32> to vector<48x16xf32>
    %1991 = arith.addf %1988, %1990 : vector<48x16xf32>
    %c0_722 = arith.constant 0 : index
    %c0_723 = arith.constant 0 : index
    %1992 = vector.load %arg7[%c0_722, %c0_723] : memref<48x16xf32, #tpu.memory_space<vmem>>, vector<48x16xf32>
    tpu.vector_store %arg7[%c0_722, %c0_723], %1991 {strides = array<i32>} : memref<48x16xf32, #tpu.memory_space<vmem>>, vector<48x16xf32>,
    return
  }
}

</mosaic_0001>

<llo_original>
// kernel: recurrent_cell_forward_seq.1
$region0: #{recurrent_cell_forward_seq.1}
  #allocation0 [shape = 'u32[]', space=smem, size = 0x4, offset = 0x4, fixed_abs, tag = 'smem constant byte address 0x4 - core index']
  #allocation1 [shape = 'u32[144,128]{1,0:T(1,128)}', space=vmem, size = 0x12000, scoped, tag = 'internal scratch']
  %s0 = inlined_call_operand.vmem [shape: f32[6,8,16], index: 0, kind: input, shape index: {}]
  %s1 = inlined_call_operand.hbm [shape: f32[8,32], index: 1, kind: input, shape index: {}]
  %s2 = inlined_call_operand.hbm [shape: f32[16,32], index: 2, kind: input, shape index: {}]
  %s3 = inlined_call_operand.hbm [shape: f32[32,32], index: 3, kind: input, shape index: {}]
  %s4 = inlined_call_operand.vmem [shape: f32[1,32], index: 4, kind: input, shape index: {}]
  %s5 = inlined_call_operand.vmem [shape: f32[32,16], index: 5, kind: input, shape index: {}]
  %s6 = inlined_call_operand.vmem [shape: f32[1,16], index: 6, kind: input, shape index: {}]
  %s7 = inlined_call_operand.hbm [shape: f32[48,16], index: 7, kind: output, shape index: {0}]
  %s8 = inlined_call_operand.hbm [shape: f32[48,32], index: 8, kind: output, shape index: {1}]
  %9 = xla_tuple %s7, %s8
  %s10 = sld [smem:[#allocation0]]
  $region58: #{recurrent_cell_forward_seq.1} parent=0
    _
  %s12 = ssub.s32 1, %s10
  %s13 = scalar_select 0, %s12, %s10
  $region1: #{recurrent_cell_forward_seq.1} parent=0
    #allocation2 [shape = 'u8[4096]{0}', space=vmem, size = 0x1000, scoped, tag = 'input window, operand 1, single buffered']
    #allocation3 [shape = 's32[1]{0}', space=sflag, size = 0x4, scoped, tag = 'scoped memory for recurrent_cell_forward_seq.1']
    #allocation4 [shape = 's32[1]{0}', space=sflag, size = 0x4, scoped, tag = 'scoped memory for recurrent_cell_forward_seq.1']
    #allocation5 [shape = 'u8[8192]{0}', space=vmem, size = 0x2000, scoped, tag = 'input window, operand 2, single buffered']
    #allocation6 [shape = 's32[1]{0}', space=sflag, size = 0x4, scoped, tag = 'scoped memory for recurrent_cell_forward_seq.1']
    #allocation7 [shape = 'u8[16384]{0}', space=vmem, size = 0x4000, scoped, tag = 'input window, operand 3, single buffered']
    #allocation8 [shape = 'u8[24576]{0}', space=vmem, size = 0x6000, scoped, tag = 'output window, operand 0, single buffered']
    #allocation9 [shape = 'u8[24576]{0}', space=vmem, size = 0x6000, scoped, tag = 'output window, operand 1, single buffered']
    #allocation10 [shape = 's32[1]{0}', space=sflag, size = 0x4, scoped, tag = 'scoped memory for recurrent_cell_forward_seq.1']
    %14 = vsyncpa [#allocation3], 0
    %15 = vsyncpa [#allocation6], 0
    %16 = vsyncpa [#allocation4], 0
    %17 = vsyncpa [#allocation10], 0
    // Predicated region
    $region2: #{recurrent_cell_forward_seq.1} parent=1 // pred_check
      _
    $region3: #{recurrent_cell_forward_seq.1} parent=1 // pred_check_branch
      %19 = sbr.rel (0) target = $region5
    $region4: #{recurrent_cell_forward_seq.1} parent=1 // pred_region
      _
    $region5: #{recurrent_cell_forward_seq.1} parent=1 // pred_fallthru
      _
    // Predicated region
    $region6: #{recurrent_cell_forward_seq.1} parent=1 // pred_check
      _
    $region7: #{recurrent_cell_forward_seq.1} parent=1 // pred_check_branch
      %21 = sbr.rel (0) target = $region9
    $region8: #{recurrent_cell_forward_seq.1} parent=1 // pred_region
      %s23 = ssub.s32 128, 128
      %24 = vsyncadd [#allocation3], %s23
      %s26 = sshll.u32 [#allocation2], 4
      %s27 = int_to_ptr.vmem [resolvable:$true] %s26
      %29 = dma.hbm_to_vmem [thread:$0]  %s1, 128, %s27, [#allocation3]
    $region9: #{recurrent_cell_forward_seq.1} parent=1 // pred_fallthru
      _
    // Predicated region
    $region10: #{recurrent_cell_forward_seq.1} parent=1 // pred_check
      _
    $region11: #{recurrent_cell_forward_seq.1} parent=1 // pred_check_branch
      %31 = sbr.rel (0) target = $region13
    $region12: #{recurrent_cell_forward_seq.1} parent=1 // pred_region
      %s33 = ssub.s32 256, 256
      %34 = vsyncadd [#allocation6], %s33
      %s35 = sshll.u32 [#allocation5], 4
      %s36 = int_to_ptr.vmem [resolvable:$true] %s35
      %41 = dma.hbm_to_vmem [thread:$0]  %s2, 256, %s36, [#allocation6], 128, 128, 8
    $region13: #{recurrent_cell_forward_seq.1} parent=1 // pred_fallthru
      _
    // Predicated region
    $region14: #{recurrent_cell_forward_seq.1} parent=1 // pred_check
      _
    $region15: #{recurrent_cell_forward_seq.1} parent=1 // pred_check_branch
      %43 = sbr.rel (0) target = $region17
    $region16: #{recurrent_cell_forward_seq.1} parent=1 // pred_region
      %s45 = ssub.s32 512, 512
      %46 = vsyncadd [#allocation6], %s45
      %s47 = sshll.u32 [#allocation7], 4
      %s48 = int_to_ptr.vmem [resolvable:$true] %s47
      %53 = dma.hbm_to_vmem [thread:$0]  %s3, 512, %s48, [#allocation6], 128, 128, 8
    $region17: #{recurrent_cell_forward_seq.1} parent=1 // pred_fallthru
      _
    // Predicated region
    $region18: #{recurrent_cell_forward_seq.1} parent=1 // pred_check
      _
    $region19: #{recurrent_cell_forward_seq.1} parent=1 // pred_check_branch
      %55 = sbr.rel (0) target = $region21
    $region20: #{recurrent_cell_forward_seq.1} parent=1 // pred_region
      _
    $region21: #{recurrent_cell_forward_seq.1} parent=1 // pred_fallthru
      _
    // Predicated region
    $region22: #{recurrent_cell_forward_seq.1} parent=1 // pred_check
      _
    $region23: #{recurrent_cell_forward_seq.1} parent=1 // pred_check_branch
      %57 = sbr.rel (0) target = $region25
    $region24: #{recurrent_cell_forward_seq.1} parent=1 // pred_region
      _
    $region25: #{recurrent_cell_forward_seq.1} parent=1 // pred_fallthru
      _
    // Predicated region
    $region26: #{recurrent_cell_forward_seq.1} parent=1 // pred_check
      _
    $region27: #{recurrent_cell_forward_seq.1} parent=1 // pred_check_branch
      %59 = sbr.rel (0) target = $region29
    $region28: #{recurrent_cell_forward_seq.1} parent=1 // pred_region
      _
    $region29: #{recurrent_cell_forward_seq.1} parent=1 // pred_fallthru
      _
    // Predicated region
    $region30: #{recurrent_cell_forward_seq.1} parent=1 // pred_check
      _
    $region31: #{recurrent_cell_forward_seq.1} parent=1 // pred_check_branch
      %61 = sbr.rel (0) target = $region33
    $region32: #{recurrent_cell_forward_seq.1} parent=1 // pred_region
      %62 = dma.done [#allocation3], 128
    $region33: #{recurrent_cell_forward_seq.1} parent=1 // pred_fallthru
      _
    // Predicated region
    $region34: #{recurrent_cell_forward_seq.1} parent=1 // pred_check
      _
    $region35: #{recurrent_cell_forward_seq.1} parent=1 // pred_check_branch
      %64 = sbr.rel (0) target = $region37
    $region36: #{recurrent_cell_forward_seq.1} parent=1 // pred_region
      %65 = dma.done [#allocation6], 256
    $region37: #{recurrent_cell_forward_seq.1} parent=1 // pred_fallthru
      _
    // Predicated region
    $region38: #{recurrent_cell_forward_seq.1} parent=1 // pred_check
      _
    $region39: #{recurrent_cell_forward_seq.1} parent=1 // pred_check_branch
      %67 = sbr.rel (0) target = $region41
    $region40: #{recurrent_cell_forward_seq.1} parent=1 // pred_region
      %68 = dma.done [#allocation6], 512
    $region41: #{recurrent_cell_forward_seq.1} parent=1 // pred_fallthru
      _
    %v69 = vld [vmem:[#allocation5] sm:$0xff]
    %v70 = vld [vmem:[#allocation5 + $0x8] sm:$0xff]
    %v71 = vld [vmem:[#allocation7] sm:$0xff]
    %v72 = vld [vmem:[#allocation7 + $0x8] sm:$0xff]
    %v73 = vld [vmem:[#allocation7 + $0x10] sm:$0xff]
    %v74 = vld [vmem:[#allocation7 + $0x18] sm:$0xff]
    %v75 = vld [vmem:[%s4] sm:$0x1]
    %v77 = vlaneseq
    %v78 = vshrl.u32 %v77, 7
    %v79 = vsub.s32 0, %v78
    %v80 = vrot.slane %v75, %v79
    %v82 = vld [vmem:[#allocation2] sm:$0xff]
    %v83 = vld [vmem:[%s0] sm:$0xff]
    %vm84 = vcmask 261120
    %v86 = vsel %vm84, %v82, 0
    %88 = vmatprep.subr.mxu0 0.0
    %89 = vmatpush1.msra.mxu0 %v71
    %90 = vmatprep.subr.mxu0 0.0
    %91 = vmatpush1.msra.mxu0 %v72
    %92 = vmatprep.subr.mxu0 0.0
    %93 = vmatpush1.msra.mxu0 %v73
    %94 = vmatprep.subr.mxu0 0.0
    %95 = vmatpush1.msra.mxu0 %v74
    %96 = vmatprep.subr.mxu0 0.0
    %97 = vmatpush1.msra.mxu0 0.0
    %98 = vmatprep.subr.mxu0 0.0
    %99 = vmatpush1.msra.mxu0 0.0
    %100 = vmatprep.subr.mxu0 0.0
    %101 = vmatpush1.msra.mxu0 0.0
    %102 = vmatprep.subr.mxu0 0.0
    %103 = vmatpush1.msra.mxu0 0.0
    %104 = vmatprep.subr.mxu0 0.0
    %105 = vmatpush1.msra.mxu0 0.0
    %106 = vmatprep.subr.mxu0 0.0
    %107 = vmatpush1.msra.mxu0 0.0
    %108 = vmatprep.subr.mxu0 0.0
    %109 = vmatpush1.msra.mxu0 0.0
    %110 = vmatprep.subr.mxu0 0.0
    %111 = vmatpush1.msra.mxu0 0.0
    %112 = vmatprep.subr.mxu0 0.0
    %113 = vmatpush1.msra.mxu0 0.0
    %114 = vmatprep.subr.mxu0 0.0
    %115 = vmatpush1.msra.mxu0 0.0
    %116 = vmatprep.subr.mxu0 0.0
    %117 = vmatpush1.msra.mxu0 0.0
    %118 = vmatprep.subr.mxu0 0.0
    %119 = vmatpush1.msra.mxu0 0.0
    %120 = vmatprep.subr.mxu0 0.0
    %121 = vmatpush1.msra.mxu0 0.0
    %122 = vmatprep.subr.mxu0 0.0
    %123 = vmatpush1.msra.mxu0 0.0
    %124 = vmatprep.subr.mxu0 0.0
    %125 = vmatpush1.msra.mxu0 0.0
    %126 = vmatprep.subr.mxu0 0.0
    %127 = vmatpush1.msra.mxu0 0.0
    %128 = vmatprep.subr.mxu0 0.0
    %129 = vmatpush1.msra.mxu0 0.0
    %130 = vmatprep.subr.mxu0 0.0
    %131 = vmatpush1.msra.mxu0 0.0
    %132 = vmatprep.subr.mxu0 0.0
    %133 = vmatpush1.msra.mxu0 0.0
    %134 = vmatprep.subr.mxu0 0.0
    %135 = vmatpush1.msra.mxu0 0.0
    %136 = vmatprep.subr.mxu0 0.0
    %137 = vmatpush1.msra.mxu0 0.0
    %138 = vmatprep.subr.mxu0 0.0
    %139 = vmatpush1.msra.mxu0 0.0
    %140 = vmatprep.subr.mxu0 0.0
    %141 = vmatpush1.msra.mxu0 0.0
    %142 = vmatprep.subr.mxu0 0.0
    %143 = vmatpush1.msra.mxu0 0.0
    %144 = vmatprep.subr.mxu0 0.0
    %145 = vmatpush1.msra.mxu0 0.0
    %146 = vmatprep.subr.mxu0 0.0
    %147 = vmatpush1.msra.mxu0 0.0
    %148 = vmatprep.subr.mxu0 0.0
    %149 = vmatpush1.msra.mxu0 0.0
    %150 = vmatprep.subr.mxu0 0.0
    %151 = vmatpush1.msra.mxu0 0.0
    %152 = vmatprep.mubr.f32.mxu0 0.0
    %153 = vmatmul.mubr.f32.gmra.mrb[0].mxu0 %v86
    %v154 = vpop.f32.mrb[0].mxu0
    %v155 = vadd.f32 0.0, %v154
    %v156 = vpop.f32.mrb[0].mxu0
    %157 = vdwg.mxu0
    %vm158 = vcmask 130048
    %v160 = vsel %vm158, %v83, 0
    %162 = vmatprep.subr.mxu0 0.0
    %163 = vmatpush1.msra.mxu0 %v69
    %164 = vmatprep.subr.mxu0 0.0
    %165 = vmatpush1.msra.mxu0 %v70
    %166 = vmatprep.subr.mxu0 0.0
    %167 = vmatpush1.msra.mxu0 0.0
    %168 = vmatprep.subr.mxu0 0.0
    %169 = vmatpush1.msra.mxu0 0.0
    %170 = vmatprep.subr.mxu0 0.0
    %171 = vmatpush1.msra.mxu0 0.0
    %172 = vmatprep.subr.mxu0 0.0
    %173 = vmatpush1.msra.mxu0 0.0
    %174 = vmatprep.subr.mxu0 0.0
    %175 = vmatpush1.msra.mxu0 0.0
    %176 = vmatprep.subr.mxu0 0.0
    %177 = vmatpush1.msra.mxu0 0.0
    %178 = vmatprep.subr.mxu0 0.0
    %179 = vmatpush1.msra.mxu0 0.0
    %180 = vmatprep.subr.mxu0 0.0
    %181 = vmatpush1.msra.mxu0 0.0
    %182 = vmatprep.subr.mxu0 0.0
    %183 = vmatpush1.msra.mxu0 0.0
    %184 = vmatprep.subr.mxu0 0.0
    %185 = vmatpush1.msra.mxu0 0.0
    %186 = vmatprep.subr.mxu0 0.0
    %187 = vmatpush1.msra.mxu0 0.0
    %188 = vmatprep.subr.mxu0 0.0
    %189 = vmatpush1.msra.mxu0 0.0
    %190 = vmatprep.subr.mxu0 0.0
    %191 = vmatpush1.msra.mxu0 0.0
    %192 = vmatprep.subr.mxu0 0.0
    %193 = vmatpush1.msra.mxu0 0.0
    %194 = vmatprep.subr.mxu0 0.0
    %195 = vmatpush1.msra.mxu0 0.0
    %196 = vmatprep.subr.mxu0 0.0
    %197 = vmatpush1.msra.mxu0 0.0
    %198 = vmatprep.subr.mxu0 0.0
    %199 = vmatpush1.msra.mxu0 0.0
    %200 = vmatprep.subr.mxu0 0.0
    %201 = vmatpush1.msra.mxu0 0.0
    %202 = vmatprep.subr.mxu0 0.0
    %203 = vmatpush1.msra.mxu0 0.0
    %204 = vmatprep.subr.mxu0 0.0
    %205 = vmatpush1.msra.mxu0 0.0
    %206 = vmatprep.subr.mxu0 0.0
    %207 = vmatpush1.msra.mxu0 0.0
    %208 = vmatprep.subr.mxu0 0.0
    %209 = vmatpush1.msra.mxu0 0.0
    %210 = vmatprep.subr.mxu0 0.0
    %211 = vmatpush1.msra.mxu0 0.0
    %212 = vmatprep.subr.mxu0 0.0
    %213 = vmatpush1.msra.mxu0 0.0
    %214 = vmatprep.subr.mxu0 0.0
    %215 = vmatpush1.msra.mxu0 0.0
    %216 = vmatprep.subr.mxu0 0.0
    %217 = vmatpush1.msra.mxu0 0.0
    %218 = vmatprep.subr.mxu0 0.0
    %219 = vmatpush1.msra.mxu0 0.0
    %220 = vmatprep.subr.mxu0 0.0
    %221 = vmatpush1.msra.mxu0 0.0
    %222 = vmatprep.subr.mxu0 0.0
    %223 = vmatpush1.msra.mxu0 0.0
    %224 = vmatprep.subr.mxu0 0.0
    %225 = vmatpush1.msra.mxu0 0.0
    %226 = vmatprep.mubr.f32.mxu0 0.0
    %227 = vmatmul.mubr.f32.gmra.mrb[0].mxu0 %v160
    %v228 = vpop.f32.mrb[0].mxu0
    %v229 = vadd.f32 %v155, %v228
    %v230 = vpop.f32.mrb[0].mxu0
    %231 = vdwg.mxu0
    %v232 = vadd.f32 %v229, %v80
    %v233 = vsel %vm84, %v232, -inf
    %234 = vmax.xlane.f32.xlu0 %v233
    %v235 = vpop.xlane.xlu0 %234
    %vm236 = vcmp.ge.f32.partialorder %v232, %v235
    %v237 = vsel %vm236, 1.0, 0.0
    %v238 = vsel %vm84, %v237, 0.0
    %239 = vadd.xlane.f32.xlu0 %v238
    %v240 = vpop.xlane.xlu0 %239
    %vm241 = vcmp.lt.f32.partialorder %v240, 19.0
    %vm242 = vcmp.lt.f32.partialorder %v232, %v235
    %v243 = vsel %vm242, %v232, -inf
    %v244 = vsel %vm84, %v243, -inf
    %245 = vmax.xlane.f32.xlu0 %v244
    %v246 = vpop.xlane.xlu0 %245
    %vm247 = vcmp.ge.f32.partialorder %v232, %v246
    %v248 = vsel %vm247, 1.0, 0.0
    %v249 = vsel %vm84, %v248, 0.0
    %250 = vadd.xlane.f32.xlu0 %v249
    %v251 = vpop.xlane.xlu0 %250
    %v252 = vsel %vm241, %v246, %v235
    %v253 = vsel %vm241, %v251, %v240
    %vm254 = vcmp.lt.f32.partialorder %v253, 19.0
    %vm255 = vcmp.lt.f32.partialorder %v232, %v252
    %v256 = vsel %vm255, %v232, -inf
    %v257 = vsel %vm84, %v256, -inf
    %258 = vmax.xlane.f32.xlu0 %v257
    %v259 = vpop.xlane.xlu0 %258
    %vm260 = vcmp.ge.f32.partialorder %v232, %v259
    %v261 = vsel %vm260, 1.0, 0.0
    %v262 = vsel %vm84, %v261, 0.0
    %263 = vadd.xlane.f32.xlu0 %v262
    %v264 = vpop.xlane.xlu0 %263
    %v265 = vsel %vm254, %v259, %v252
    %v266 = vsel %vm254, %v264, %v253
    %vm267 = vcmp.lt.f32.partialorder %v266, 19.0
    %vm268 = vcmp.lt.f32.partialorder %v232, %v265
    %v269 = vsel %vm268, %v232, -inf
    %v270 = vsel %vm84, %v269, -inf
    %271 = vmax.xlane.f32.xlu0 %v270
    %v272 = vpop.xlane.xlu0 %271
    %vm273 = vcmp.ge.f32.partialorder %v232, %v272
    %v274 = vsel %vm273, 1.0, 0.0
    %v275 = vsel %vm84, %v274, 0.0
    %276 = vadd.xlane.f32.xlu0 %v275
    %v277 = vpop.xlane.xlu0 %276
    %v278 = vsel %vm267, %v272, %v265
    %v279 = vsel %vm267, %v277, %v266
    %vm280 = vcmp.lt.f32.partialorder %v279, 19.0
    %vm281 = vcmp.lt.f32.partialorder %v232, %v278
    %v282 = vsel %vm281, %v232, -inf
    %v283 = vsel %vm84, %v282, -inf
    %284 = vmax.xlane.f32.xlu0 %v283
    %v285 = vpop.xlane.xlu0 %284
    %vm286 = vcmp.ge.f32.partialorder %v232, %v285
    %v287 = vsel %vm286, 1.0, 0.0
    %v288 = vsel %vm84, %v287, 0.0
    %289 = vadd.xlane.f32.xlu0 %v288
    %v290 = vpop.xlane.xlu0 %289
    %v291 = vsel %vm280, %v285, %v278
    %v292 = vsel %vm280, %v290, %v279
    %vm293 = vcmp.lt.f32.partialorder %v292, 19.0
    %vm294 = vcmp.lt.f32.partialorder %v232, %v291
    %v295 = vsel %vm294, %v232, -inf
    %v296 = vsel %vm84, %v295, -inf
    %297 = vmax.xlane.f32.xlu0 %v296
    %v298 = vpop.xlane.xlu0 %297
    %vm299 = vcmp.ge.f32.partialorder %v232, %v298
    %v300 = vsel %vm299, 1.0, 0.0
    %v301 = vsel %vm84, %v300, 0.0
    %302 = vadd.xlane.f32.xlu0 %v301
    %v303 = vpop.xlane.xlu0 %302
    %v304 = vsel %vm293, %v298, %v291
    %v305 = vsel %vm293, %v303, %v292
    %vm306 = vcmp.lt.f32.partialorder %v305, 19.0
    %vm307 = vcmp.lt.f32.partialorder %v232, %v304
    %v308 = vsel %vm307, %v232, -inf
    %v309 = vsel %vm84, %v308, -inf
    %310 = vmax.xlane.f32.xlu0 %v309
    %v311 = vpop.xlane.xlu0 %310
    %vm312 = vcmp.ge.f32.partialorder %v232, %v311
    %v313 = vsel %vm312, 1.0, 0.0
    %v314 = vsel %vm84, %v313, 0.0
    %315 = vadd.xlane.f32.xlu0 %v314
    %v316 = vpop.xlane.xlu0 %315
    %v317 = vsel %vm306, %v311, %v304
    %v318 = vsel %vm306, %v316, %v305
    %vm319 = vcmp.lt.f32.partialorder %v318, 19.0
    %vm320 = vcmp.lt.f32.partialorder %v232, %v317
    %v321 = vsel %vm320, %v232, -inf
    %v322 = vsel %vm84, %v321, -inf
    %323 = vmax.xlane.f32.xlu0 %v322
    %v324 = vpop.xlane.xlu0 %323
    %vm325 = vcmp.ge.f32.partialorder %v232, %v324
    %v326 = vsel %vm325, 1.0, 0.0
    %v327 = vsel %vm84, %v326, 0.0
    %328 = vadd.xlane.f32.xlu0 %v327
    %v329 = vpop.xlane.xlu0 %328
    %v330 = vsel %vm319, %v324, %v317
    %v331 = vsel %vm319, %v329, %v318
    %vm332 = vcmp.lt.f32.partialorder %v331, 19.0
    %vm333 = vcmp.lt.f32.partialorder %v232, %v330
    %v334 = vsel %vm333, %v232, -inf
    %v335 = vsel %vm84, %v334, -inf
    %336 = vmax.xlane.f32.xlu0 %v335
    %v337 = vpop.xlane.xlu0 %336
    %vm338 = vcmp.ge.f32.partialorder %v232, %v337
    %v339 = vsel %vm338, 1.0, 0.0
    %v340 = vsel %vm84, %v339, 0.0
    %341 = vadd.xlane.f32.xlu0 %v340
    %v342 = vpop.xlane.xlu0 %341
    %v343 = vsel %vm332, %v337, %v330
    %v344 = vsel %vm332, %v342, %v331
    %vm345 = vcmp.lt.f32.partialorder %v344, 19.0
    %vm346 = vcmp.lt.f32.partialorder %v232, %v343
    %v347 = vsel %vm346, %v232, -inf
    %v348 = vsel %vm84, %v347, -inf
    %349 = vmax.xlane.f32.xlu0 %v348
    %v350 = vpop.xlane.xlu0 %349
    %vm351 = vcmp.ge.f32.partialorder %v232, %v350
    %v352 = vsel %vm351, 1.0, 0.0
    %v353 = vsel %vm84, %v352, 0.0
    %354 = vadd.xlane.f32.xlu0 %v353
    %v355 = vpop.xlane.xlu0 %354
    %v356 = vsel %vm345, %v350, %v343
    %v357 = vsel %vm345, %v355, %v344
    %vm358 = vcmp.lt.f32.partialorder %v357, 19.0
    %vm359 = vcmp.lt.f32.partialorder %v232, %v356
    %v360 = vsel %vm359, %v232, -inf
    %v361 = vsel %vm84, %v360, -inf
    %362 = vmax.xlane.f32.xlu0 %v361
    %v363 = vpop.xlane.xlu0 %362
    %vm364 = vcmp.ge.f32.partialorder %v232, %v363
    %v365 = vsel %vm364, 1.0, 0.0
    %v366 = vsel %vm84, %v365, 0.0
    %367 = vadd.xlane.f32.xlu0 %v366
    %v368 = vpop.xlane.xlu0 %367
    %v369 = vsel %vm358, %v363, %v356
    %v370 = vsel %vm358, %v368, %v357
    %vm371 = vcmp.lt.f32.partialorder %v370, 19.0
    %vm372 = vcmp.lt.f32.partialorder %v232, %v369
    %v373 = vsel %vm372, %v232, -inf
    %v374 = vsel %vm84, %v373, -inf
    %375 = vmax.xlane.f32.xlu0 %v374
    %v376 = vpop.xlane.xlu0 %375
    %vm377 = vcmp.ge.f32.partialorder %v232, %v376
    %v378 = vsel %vm377, 1.0, 0.0
    %v379 = vsel %vm84, %v378, 0.0
    %380 = vadd.xlane.f32.xlu0 %v379
    %v381 = vpop.xlane.xlu0 %380
    %v382 = vsel %vm371, %v376, %v369
    %v383 = vsel %vm371, %v381, %v370
    %vm384 = vcmp.lt.f32.partialorder %v383, 19.0
    %vm385 = vcmp.lt.f32.partialorder %v232, %v382
    %v386 = vsel %vm385, %v232, -inf
    %v387 = vsel %vm84, %v386, -inf
    %388 = vmax.xlane.f32.xlu0 %v387
    %v389 = vpop.xlane.xlu0 %388
    %vm390 = vcmp.ge.f32.partialorder %v232, %v389
    %v391 = vsel %vm390, 1.0, 0.0
    %v392 = vsel %vm84, %v391, 0.0
    %393 = vadd.xlane.f32.xlu0 %v392
    %v394 = vpop.xlane.xlu0 %393
    %v395 = vsel %vm384, %v389, %v382
    %v396 = vsel %vm384, %v394, %v383
    %vm397 = vcmp.lt.f32.partialorder %v396, 19.0
    %vm398 = vcmp.lt.f32.partialorder %v232, %v395
    %v399 = vsel %vm398, %v232, -inf
    %v400 = vsel %vm84, %v399, -inf
    %401 = vmax.xlane.f32.xlu0 %v400
    %v402 = vpop.xlane.xlu0 %401
    %vm403 = vcmp.ge.f32.partialorder %v232, %v402
    %v404 = vsel %vm403, 1.0, 0.0
    %v405 = vsel %vm84, %v404, 0.0
    %406 = vadd.xlane.f32.xlu0 %v405
    %v407 = vpop.xlane.xlu0 %406
    %v408 = vsel %vm397, %v402, %v395
    %v409 = vsel %vm397, %v407, %v396
    %vm410 = vcmp.lt.f32.partialorder %v409, 19.0
    %vm411 = vcmp.lt.f32.partialorder %v232, %v408
    %v412 = vsel %vm411, %v232, -inf
    %v413 = vsel %vm84, %v412, -inf
    %414 = vmax.xlane.f32.xlu0 %v413
    %v415 = vpop.xlane.xlu0 %414
    %vm416 = vcmp.ge.f32.partialorder %v232, %v415
    %v417 = vsel %vm416, 1.0, 0.0
    %v418 = vsel %vm84, %v417, 0.0
    %419 = vadd.xlane.f32.xlu0 %v418
    %v420 = vpop.xlane.xlu0 %419
    %v421 = vsel %vm410, %v415, %v408
    %v422 = vsel %vm410, %v420, %v409
    %vm423 = vcmp.lt.f32.partialorder %v422, 19.0
    %vm424 = vcmp.lt.f32.partialorder %v232, %v421
    %v425 = vsel %vm424, %v232, -inf
    %v426 = vsel %vm84, %v425, -inf
    %427 = vmax.xlane.f32.xlu0 %v426
    %v428 = vpop.xlane.xlu0 %427
    %vm429 = vcmp.ge.f32.partialorder %v232, %v428
    %v430 = vsel %vm429, 1.0, 0.0
    %v431 = vsel %vm84, %v430, 0.0
    %432 = vadd.xlane.f32.xlu0 %v431
    %v433 = vpop.xlane.xlu0 %432
    %v434 = vsel %vm423, %v428, %v421
    %v435 = vsel %vm423, %v433, %v422
    %vm436 = vcmp.lt.f32.partialorder %v435, 19.0
    %vm437 = vcmp.lt.f32.partialorder %v232, %v434
    %v438 = vsel %vm437, %v232, -inf
    %v439 = vsel %vm84, %v438, -inf
    %440 = vmax.xlane.f32.xlu0 %v439
    %v441 = vpop.xlane.xlu0 %440
    %vm442 = vcmp.ge.f32.partialorder %v232, %v441
    %v443 = vsel %vm442, 1.0, 0.0
    %v444 = vsel %vm84, %v443, 0.0
    %445 = vadd.xlane.f32.xlu0 %v444
    %v446 = vpop.xlane.xlu0 %445
    %v447 = vsel %vm436, %v441, %v434
    %v448 = vsel %vm436, %v446, %v435
    %vm449 = vcmp.lt.f32.partialorder %v448, 19.0
    %vm450 = vcmp.lt.f32.partialorder %v232, %v447
    %v451 = vsel %vm450, %v232, -inf
    %v452 = vsel %vm84, %v451, -inf
    %453 = vmax.xlane.f32.xlu0 %v452
    %v454 = vpop.xlane.xlu0 %453
    %vm455 = vcmp.ge.f32.partialorder %v232, %v454
    %v456 = vsel %vm455, 1.0, 0.0
    %v457 = vsel %vm84, %v456, 0.0
    %458 = vadd.xlane.f32.xlu0 %v457
    %v459 = vpop.xlane.xlu0 %458
    %v460 = vsel %vm449, %v454, %v447
    %v461 = vsel %vm449, %v459, %v448
    %vm462 = vcmp.lt.f32.partialorder %v461, 19.0
    %vm463 = vcmp.lt.f32.partialorder %v232, %v460
    %v464 = vsel %vm463, %v232, -inf
    %v465 = vsel %vm84, %v464, -inf
    %466 = vmax.xlane.f32.xlu0 %v465
    %v467 = vpop.xlane.xlu0 %466
    %v468 = vsel %vm462, %v467, %v460
    %vm469 = vcmp.ge.f32.partialorder %v232, %v468
    %v470 = vsel %vm469, %v232, 0.0
    %471 = vst.msk [vmem:[#allocation9] sm:$0xff] %vm84, %v470
    %s472 = scalar_lea.vmem %s0, 8
    %v473 = vld [vmem:[%s472] sm:$0xff]
    %v475 = vsel %vm84, %v470, 0
    %477 = vmatprep.subr.mxu0 0.0
    %478 = vmatpush1.msra.mxu0 %v71
    %479 = vmatprep.subr.mxu0 0.0
    %480 = vmatpush1.msra.mxu0 %v72
    %481 = vmatprep.subr.mxu0 0.0
    %482 = vmatpush1.msra.mxu0 %v73
    %483 = vmatprep.subr.mxu0 0.0
    %484 = vmatpush1.msra.mxu0 %v74
    %485 = vmatprep.subr.mxu0 0.0
    %486 = vmatpush1.msra.mxu0 0.0
    %487 = vmatprep.subr.mxu0 0.0
    %488 = vmatpush1.msra.mxu0 0.0
    %489 = vmatprep.subr.mxu0 0.0
    %490 = vmatpush1.msra.mxu0 0.0
    %491 = vmatprep.subr.mxu0 0.0
    %492 = vmatpush1.msra.mxu0 0.0
    %493 = vmatprep.subr.mxu0 0.0
    %494 = vmatpush1.msra.mxu0 0.0
    %495 = vmatprep.subr.mxu0 0.0
    %496 = vmatpush1.msra.mxu0 0.0
    %497 = vmatprep.subr.mxu0 0.0
    %498 = vmatpush1.msra.mxu0 0.0
    %499 = vmatprep.subr.mxu0 0.0
    %500 = vmatpush1.msra.mxu0 0.0
    %501 = vmatprep.subr.mxu0 0.0
    %502 = vmatpush1.msra.mxu0 0.0
    %503 = vmatprep.subr.mxu0 0.0
    %504 = vmatpush1.msra.mxu0 0.0
    %505 = vmatprep.subr.mxu0 0.0
    %506 = vmatpush1.msra.mxu0 0.0
    %507 = vmatprep.subr.mxu0 0.0
    %508 = vmatpush1.msra.mxu0 0.0
    %509 = vmatprep.subr.mxu0 0.0
    %510 = vmatpush1.msra.mxu0 0.0
    %511 = vmatprep.subr.mxu0 0.0
    %512 = vmatpush1.msra.mxu0 0.0
    %513 = vmatprep.subr.mxu0 0.0
    %514 = vmatpush1.msra.mxu0 0.0
    %515 = vmatprep.subr.mxu0 0.0
    %516 = vmatpush1.msra.mxu0 0.0
    %517 = vmatprep.subr.mxu0 0.0
    %518 = vmatpush1.msra.mxu0 0.0
    %519 = vmatprep.subr.mxu0 0.0
    %520 = vmatpush1.msra.mxu0 0.0
    %521 = vmatprep.subr.mxu0 0.0
    %522 = vmatpush1.msra.mxu0 0.0
    %523 = vmatprep.subr.mxu0 0.0
    %524 = vmatpush1.msra.mxu0 0.0
    %525 = vmatprep.subr.mxu0 0.0
    %526 = vmatpush1.msra.mxu0 0.0
    %527 = vmatprep.subr.mxu0 0.0
    %528 = vmatpush1.msra.mxu0 0.0
    %529 = vmatprep.subr.mxu0 0.0
    %530 = vmatpush1.msra.mxu0 0.0
    %531 = vmatprep.subr.mxu0 0.0
    %532 = vmatpush1.msra.mxu0 0.0
    %533 = vmatprep.subr.mxu0 0.0
    %534 = vmatpush1.msra.mxu0 0.0
    %535 = vmatprep.subr.mxu0 0.0
    %536 = vmatpush1.msra.mxu0 0.0
    %537 = vmatprep.subr.mxu0 0.0
    %538 = vmatpush1.msra.mxu0 0.0
    %539 = vmatprep.subr.mxu0 0.0
    %540 = vmatpush1.msra.mxu0 0.0
    %541 = vmatprep.mubr.f32.mxu0 0.0
    %542 = vmatmul.mubr.f32.gmra.mrb[0].mxu0 %v475
    %v543 = vpop.f32.mrb[0].mxu0
    %v544 = vadd.f32 0.0, %v543
    %v545 = vpop.f32.mrb[0].mxu0
    %546 = vdwg.mxu0
    %v548 = vsel %vm158, %v473, 0
    %550 = vmatprep.subr.mxu0 0.0
    %551 = vmatpush1.msra.mxu0 %v69
    %552 = vmatprep.subr.mxu0 0.0
    %553 = vmatpush1.msra.mxu0 %v70
    %554 = vmatprep.subr.mxu0 0.0
    %555 = vmatpush1.msra.mxu0 0.0
    %556 = vmatprep.subr.mxu0 0.0
    %557 = vmatpush1.msra.mxu0 0.0
    %558 = vmatprep.subr.mxu0 0.0
    %559 = vmatpush1.msra.mxu0 0.0
    %560 = vmatprep.subr.mxu0 0.0
    %561 = vmatpush1.msra.mxu0 0.0
    %562 = vmatprep.subr.mxu0 0.0
    %563 = vmatpush1.msra.mxu0 0.0
    %564 = vmatprep.subr.mxu0 0.0
    %565 = vmatpush1.msra.mxu0 0.0
    %566 = vmatprep.subr.mxu0 0.0
    %567 = vmatpush1.msra.mxu0 0.0
    %568 = vmatprep.subr.mxu0 0.0
    %569 = vmatpush1.msra.mxu0 0.0
    %570 = vmatprep.subr.mxu0 0.0
    %571 = vmatpush1.msra.mxu0 0.0
    %572 = vmatprep.subr.mxu0 0.0
    %573 = vmatpush1.msra.mxu0 0.0
    %574 = vmatprep.subr.mxu0 0.0
    %575 = vmatpush1.msra.mxu0 0.0
    %576 = vmatprep.subr.mxu0 0.0
    %577 = vmatpush1.msra.mxu0 0.0
    %578 = vmatprep.subr.mxu0 0.0
    %579 = vmatpush1.msra.mxu0 0.0
    %580 = vmatprep.subr.mxu0 0.0
    %581 = vmatpush1.msra.mxu0 0.0
    %582 = vmatprep.subr.mxu0 0.0
    %583 = vmatpush1.msra.mxu0 0.0
    %584 = vmatprep.subr.mxu0 0.0
    %585 = vmatpush1.msra.mxu0 0.0
    %586 = vmatprep.subr.mxu0 0.0
    %587 = vmatpush1.msra.mxu0 0.0
    %588 = vmatprep.subr.mxu0 0.0
    %589 = vmatpush1.msra.mxu0 0.0
    %590 = vmatprep.subr.mxu0 0.0
    %591 = vmatpush1.msra.mxu0 0.0
    %592 = vmatprep.subr.mxu0 0.0
    %593 = vmatpush1.msra.mxu0 0.0
    %594 = vmatprep.subr.mxu0 0.0
    %595 = vmatpush1.msra.mxu0 0.0
    %596 = vmatprep.subr.mxu0 0.0
    %597 = vmatpush1.msra.mxu0 0.0
    %598 = vmatprep.subr.mxu0 0.0
    %599 = vmatpush1.msra.mxu0 0.0
    %600 = vmatprep.subr.mxu0 0.0
    %601 = vmatpush1.msra.mxu0 0.0
    %602 = vmatprep.subr.mxu0 0.0
    %603 = vmatpush1.msra.mxu0 0.0
    %604 = vmatprep.subr.mxu0 0.0
    %605 = vmatpush1.msra.mxu0 0.0
    %606 = vmatprep.subr.mxu0 0.0
    %607 = vmatpush1.msra.mxu0 0.0
    %608 = vmatprep.subr.mxu0 0.0
    %609 = vmatpush1.msra.mxu0 0.0
    %610 = vmatprep.subr.mxu0 0.0
    %611 = vmatpush1.msra.mxu0 0.0
    %612 = vmatprep.subr.mxu0 0.0
    %613 = vmatpush1.msra.mxu0 0.0
    %614 = vmatprep.mubr.f32.mxu0 0.0
    %615 = vmatmul.mubr.f32.gmra.mrb[0].mxu0 %v548
    %v616 = vpop.f32.mrb[0].mxu0
    %v617 = vadd.f32 %v544, %v616
    %v618 = vpop.f32.mrb[0].mxu0
    %619 = vdwg.mxu0
    %v620 = vadd.f32 %v617, %v80
    %v621 = vsel %vm84, %v620, -inf
    %622 = vmax.xlane.f32.xlu0 %v621
    %v623 = vpop.xlane.xlu0 %622
    %vm624 = vcmp.ge.f32.partialorder %v620, %v623
    %v625 = vsel %vm624, 1.0, 0.0
    %v626 = vsel %vm84, %v625, 0.0
    %627 = vadd.xlane.f32.xlu0 %v626
    %v628 = vpop.xlane.xlu0 %627
    %vm629 = vcmp.lt.f32.partialorder %v628, 19.0
    %vm630 = vcmp.lt.f32.partialorder %v620, %v623
    %v631 = vsel %vm630, %v620, -inf
    %v632 = vsel %vm84, %v631, -inf
    %633 = vmax.xlane.f32.xlu0 %v632
    %v634 = vpop.xlane.xlu0 %633
    %vm635 = vcmp.ge.f32.partialorder %v620, %v634
    %v636 = vsel %vm635, 1.0, 0.0
    %v637 = vsel %vm84, %v636, 0.0
    %638 = vadd.xlane.f32.xlu0 %v637
    %v639 = vpop.xlane.xlu0 %638
    %v640 = vsel %vm629, %v634, %v623
    %v641 = vsel %vm629, %v639, %v628
    %vm642 = vcmp.lt.f32.partialorder %v641, 19.0
    %vm643 = vcmp.lt.f32.partialorder %v620, %v640
    %v644 = vsel %vm643, %v620, -inf
    %v645 = vsel %vm84, %v644, -inf
    %646 = vmax.xlane.f32.xlu0 %v645
    %v647 = vpop.xlane.xlu0 %646
    %vm648 = vcmp.ge.f32.partialorder %v620, %v647
    %v649 = vsel %vm648, 1.0, 0.0
    %v650 = vsel %vm84, %v649, 0.0
    %651 = vadd.xlane.f32.xlu0 %v650
    %v652 = vpop.xlane.xlu0 %651
    %v653 = vsel %vm642, %v647, %v640
    %v654 = vsel %vm642, %v652, %v641
    %vm655 = vcmp.lt.f32.partialorder %v654, 19.0
    %vm656 = vcmp.lt.f32.partialorder %v620, %v653
    %v657 = vsel %vm656, %v620, -inf
    %v658 = vsel %vm84, %v657, -inf
    %659 = vmax.xlane.f32.xlu0 %v658
    %v660 = vpop.xlane.xlu0 %659
    %vm661 = vcmp.ge.f32.partialorder %v620, %v660
    %v662 = vsel %vm661, 1.0, 0.0
    %v663 = vsel %vm84, %v662, 0.0
    %664 = vadd.xlane.f32.xlu0 %v663
    %v665 = vpop.xlane.xlu0 %664
    %v666 = vsel %vm655, %v660, %v653
    %v667 = vsel %vm655, %v665, %v654
    %vm668 = vcmp.lt.f32.partialorder %v667, 19.0
    %vm669 = vcmp.lt.f32.partialorder %v620, %v666
    %v670 = vsel %vm669, %v620, -inf
    %v671 = vsel %vm84, %v670, -inf
    %672 = vmax.xlane.f32.xlu0 %v671
    %v673 = vpop.xlane.xlu0 %672
    %vm674 = vcmp.ge.f32.partialorder %v620, %v673
    %v675 = vsel %vm674, 1.0, 0.0
    %v676 = vsel %vm84, %v675, 0.0
    %677 = vadd.xlane.f32.xlu0 %v676
    %v678 = vpop.xlane.xlu0 %677
    %v679 = vsel %vm668, %v673, %v666
    %v680 = vsel %vm668, %v678, %v667
    %vm681 = vcmp.lt.f32.partialorder %v680, 19.0
    %vm682 = vcmp.lt.f32.partialorder %v620, %v679
    %v683 = vsel %vm682, %v620, -inf
    %v684 = vsel %vm84, %v683, -inf
    %685 = vmax.xlane.f32.xlu0 %v684
    %v686 = vpop.xlane.xlu0 %685
    %vm687 = vcmp.ge.f32.partialorder %v620, %v686
    %v688 = vsel %vm687, 1.0, 0.0
    %v689 = vsel %vm84, %v688, 0.0
    %690 = vadd.xlane.f32.xlu0 %v689
    %v691 = vpop.xlane.xlu0 %690
    %v692 = vsel %vm681, %v686, %v679
    %v693 = vsel %vm681, %v691, %v680
    %vm694 = vcmp.lt.f32.partialorder %v693, 19.0
    %vm695 = vcmp.lt.f32.partialorder %v620, %v692
    %v696 = vsel %vm695, %v620, -inf
    %v697 = vsel %vm84, %v696, -inf
    %698 = vmax.xlane.f32.xlu0 %v697
    %v699 = vpop.xlane.xlu0 %698
    %vm700 = vcmp.ge.f32.partialorder %v620, %v699
    %v701 = vsel %vm700, 1.0, 0.0
    %v702 = vsel %vm84, %v701, 0.0
    %703 = vadd.xlane.f32.xlu0 %v702
    %v704 = vpop.xlane.xlu0 %703
    %v705 = vsel %vm694, %v699, %v692
    %v706 = vsel %vm694, %v704, %v693
    %vm707 = vcmp.lt.f32.partialorder %v706, 19.0
    %vm708 = vcmp.lt.f32.partialorder %v620, %v705
    %v709 = vsel %vm708, %v620, -inf
    %v710 = vsel %vm84, %v709, -inf
    %711 = vmax.xlane.f32.xlu0 %v710
    %v712 = vpop.xlane.xlu0 %711
    %vm713 = vcmp.ge.f32.partialorder %v620, %v712
    %v714 = vsel %vm713, 1.0, 0.0
    %v715 = vsel %vm84, %v714, 0.0
    %716 = vadd.xlane.f32.xlu0 %v715
    %v717 = vpop.xlane.xlu0 %716
    %v718 = vsel %vm707, %v712, %v705
    %v719 = vsel %vm707, %v717, %v706
    %vm720 = vcmp.lt.f32.partialorder %v719, 19.0
    %vm721 = vcmp.lt.f32.partialorder %v620, %v718
    %v722 = vsel %vm721, %v620, -inf
    %v723 = vsel %vm84, %v722, -inf
    %724 = vmax.xlane.f32.xlu0 %v723
    %v725 = vpop.xlane.xlu0 %724
    %vm726 = vcmp.ge.f32.partialorder %v620, %v725
    %v727 = vsel %vm726, 1.0, 0.0
    %v728 = vsel %vm84, %v727, 0.0
    %729 = vadd.xlane.f32.xlu0 %v728
    %v730 = vpop.xlane.xlu0 %729
    %v731 = vsel %vm720, %v725, %v718
    %v732 = vsel %vm720, %v730, %v719
    %vm733 = vcmp.lt.f32.partialorder %v732, 19.0
    %vm734 = vcmp.lt.f32.partialorder %v620, %v731
    %v735 = vsel %vm734, %v620, -inf
    %v736 = vsel %vm84, %v735, -inf
    %737 = vmax.xlane.f32.xlu0 %v736
    %v738 = vpop.xlane.xlu0 %737
    %vm739 = vcmp.ge.f32.partialorder %v620, %v738
    %v740 = vsel %vm739, 1.0, 0.0
    %v741 = vsel %vm84, %v740, 0.0
    %742 = vadd.xlane.f32.xlu0 %v741
    %v743 = vpop.xlane.xlu0 %742
    %v744 = vsel %vm733, %v738, %v731
    %v745 = vsel %vm733, %v743, %v732
    %vm746 = vcmp.lt.f32.partialorder %v745, 19.0
    %vm747 = vcmp.lt.f32.partialorder %v620, %v744
    %v748 = vsel %vm747, %v620, -inf
    %v749 = vsel %vm84, %v748, -inf
    %750 = vmax.xlane.f32.xlu0 %v749
    %v751 = vpop.xlane.xlu0 %750
    %vm752 = vcmp.ge.f32.partialorder %v620, %v751
    %v753 = vsel %vm752, 1.0, 0.0
    %v754 = vsel %vm84, %v753, 0.0
    %755 = vadd.xlane.f32.xlu0 %v754
    %v756 = vpop.xlane.xlu0 %755
    %v757 = vsel %vm746, %v751, %v744
    %v758 = vsel %vm746, %v756, %v745
    %vm759 = vcmp.lt.f32.partialorder %v758, 19.0
    %vm760 = vcmp.lt.f32.partialorder %v620, %v757
    %v761 = vsel %vm760, %v620, -inf
    %v762 = vsel %vm84, %v761, -inf
    %763 = vmax.xlane.f32.xlu0 %v762
    %v764 = vpop.xlane.xlu0 %763
    %vm765 = vcmp.ge.f32.partialorder %v620, %v764
    %v766 = vsel %vm765, 1.0, 0.0
    %v767 = vsel %vm84, %v766, 0.0
    %768 = vadd.xlane.f32.xlu0 %v767
    %v769 = vpop.xlane.xlu0 %768
    %v770 = vsel %vm759, %v764, %v757
    %v771 = vsel %vm759, %v769, %v758
    %vm772 = vcmp.lt.f32.partialorder %v771, 19.0
    %vm773 = vcmp.lt.f32.partialorder %v620, %v770
    %v774 = vsel %vm773, %v620, -inf
    %v775 = vsel %vm84, %v774, -inf
    %776 = vmax.xlane.f32.xlu0 %v775
    %v777 = vpop.xlane.xlu0 %776
    %vm778 = vcmp.ge.f32.partialorder %v620, %v777
    %v779 = vsel %vm778, 1.0, 0.0
    %v780 = vsel %vm84, %v779, 0.0
    %781 = vadd.xlane.f32.xlu0 %v780
    %v782 = vpop.xlane.xlu0 %781
    %v783 = vsel %vm772, %v777, %v770
    %v784 = vsel %vm772, %v782, %v771
    %vm785 = vcmp.lt.f32.partialorder %v784, 19.0
    %vm786 = vcmp.lt.f32.partialorder %v620, %v783
    %v787 = vsel %vm786, %v620, -inf
    %v788 = vsel %vm84, %v787, -inf
    %789 = vmax.xlane.f32.xlu0 %v788
    %v790 = vpop.xlane.xlu0 %789
    %vm791 = vcmp.ge.f32.partialorder %v620, %v790
    %v792 = vsel %vm791, 1.0, 0.0
    %v793 = vsel %vm84, %v792, 0.0
    %794 = vadd.xlane.f32.xlu0 %v793
    %v795 = vpop.xlane.xlu0 %794
    %v796 = vsel %vm785, %v790, %v783
    %v797 = vsel %vm785, %v795, %v784
    %vm798 = vcmp.lt.f32.partialorder %v797, 19.0
    %vm799 = vcmp.lt.f32.partialorder %v620, %v796
    %v800 = vsel %vm799, %v620, -inf
    %v801 = vsel %vm84, %v800, -inf
    %802 = vmax.xlane.f32.xlu0 %v801
    %v803 = vpop.xlane.xlu0 %802
    %vm804 = vcmp.ge.f32.partialorder %v620, %v803
    %v805 = vsel %vm804, 1.0, 0.0
    %v806 = vsel %vm84, %v805, 0.0
    %807 = vadd.xlane.f32.xlu0 %v806
    %v808 = vpop.xlane.xlu0 %807
    %v809 = vsel %vm798, %v803, %v796
    %v810 = vsel %vm798, %v808, %v797
    %vm811 = vcmp.lt.f32.partialorder %v810, 19.0
    %vm812 = vcmp.lt.f32.partialorder %v620, %v809
    %v813 = vsel %vm812, %v620, -inf
    %v814 = vsel %vm84, %v813, -inf
    %815 = vmax.xlane.f32.xlu0 %v814
    %v816 = vpop.xlane.xlu0 %815
    %vm817 = vcmp.ge.f32.partialorder %v620, %v816
    %v818 = vsel %vm817, 1.0, 0.0
    %v819 = vsel %vm84, %v818, 0.0
    %820 = vadd.xlane.f32.xlu0 %v819
    %v821 = vpop.xlane.xlu0 %820
    %v822 = vsel %vm811, %v816, %v809
    %v823 = vsel %vm811, %v821, %v810
    %vm824 = vcmp.lt.f32.partialorder %v823, 19.0
    %vm825 = vcmp.lt.f32.partialorder %v620, %v822
    %v826 = vsel %vm825, %v620, -inf
    %v827 = vsel %vm84, %v826, -inf
    %828 = vmax.xlane.f32.xlu0 %v827
    %v829 = vpop.xlane.xlu0 %828
    %vm830 = vcmp.ge.f32.partialorder %v620, %v829
    %v831 = vsel %vm830, 1.0, 0.0
    %v832 = vsel %vm84, %v831, 0.0
    %833 = vadd.xlane.f32.xlu0 %v832
    %v834 = vpop.xlane.xlu0 %833
    %v835 = vsel %vm824, %v829, %v822
    %v836 = vsel %vm824, %v834, %v823
    %vm837 = vcmp.lt.f32.partialorder %v836, 19.0
    %vm838 = vcmp.lt.f32.partialorder %v620, %v835
    %v839 = vsel %vm838, %v620, -inf
    %v840 = vsel %vm84, %v839, -inf
    %841 = vmax.xlane.f32.xlu0 %v840
    %v842 = vpop.xlane.xlu0 %841
    %vm843 = vcmp.ge.f32.partialorder %v620, %v842
    %v844 = vsel %vm843, 1.0, 0.0
    %v845 = vsel %vm84, %v844, 0.0
    %846 = vadd.xlane.f32.xlu0 %v845
    %v847 = vpop.xlane.xlu0 %846
    %v848 = vsel %vm837, %v842, %v835
    %v849 = vsel %vm837, %v847, %v836
    %vm850 = vcmp.lt.f32.partialorder %v849, 19.0
    %vm851 = vcmp.lt.f32.partialorder %v620, %v848
    %v852 = vsel %vm851, %v620, -inf
    %v853 = vsel %vm84, %v852, -inf
    %854 = vmax.xlane.f32.xlu0 %v853
    %v855 = vpop.xlane.xlu0 %854
    %v856 = vsel %vm850, %v855, %v848
    %vm857 = vcmp.ge.f32.partialorder %v620, %v856
    %v858 = vsel %vm857, %v620, 0.0
    %s859 = scalar_lea.vmem [#allocation9], 8
    %860 = vst.msk [vmem:[%s859] sm:$0xff] %vm84, %v858
    %s861 = scalar_lea.vmem %s0, 16
    %v862 = vld [vmem:[%s861] sm:$0xff]
    %v864 = vsel %vm84, %v858, 0
    %866 = vmatprep.subr.mxu0 0.0
    %867 = vmatpush1.msra.mxu0 %v71
    %868 = vmatprep.subr.mxu0 0.0
    %869 = vmatpush1.msra.mxu0 %v72
    %870 = vmatprep.subr.mxu0 0.0
    %871 = vmatpush1.msra.mxu0 %v73
    %872 = vmatprep.subr.mxu0 0.0
    %873 = vmatpush1.msra.mxu0 %v74
    %874 = vmatprep.subr.mxu0 0.0
    %875 = vmatpush1.msra.mxu0 0.0
    %876 = vmatprep.subr.mxu0 0.0
    %877 = vmatpush1.msra.mxu0 0.0
    %878 = vmatprep.subr.mxu0 0.0
    %879 = vmatpush1.msra.mxu0 0.0
    %880 = vmatprep.subr.mxu0 0.0
    %881 = vmatpush1.msra.mxu0 0.0
    %882 = vmatprep.subr.mxu0 0.0
    %883 = vmatpush1.msra.mxu0 0.0
    %884 = vmatprep.subr.mxu0 0.0
    %885 = vmatpush1.msra.mxu0 0.0
    %886 = vmatprep.subr.mxu0 0.0
    %887 = vmatpush1.msra.mxu0 0.0
    %888 = vmatprep.subr.mxu0 0.0
    %889 = vmatpush1.msra.mxu0 0.0
    %890 = vmatprep.subr.mxu0 0.0
    %891 = vmatpush1.msra.mxu0 0.0
    %892 = vmatprep.subr.mxu0 0.0
    %893 = vmatpush1.msra.mxu0 0.0
    %894 = vmatprep.subr.mxu0 0.0
    %895 = vmatpush1.msra.mxu0 0.0
    %896 = vmatprep.subr.mxu0 0.0
    %897 = vmatpush1.msra.mxu0 0.0
    %898 = vmatprep.subr.mxu0 0.0
    %899 = vmatpush1.msra.mxu0 0.0
    %900 = vmatprep.subr.mxu0 0.0
    %901 = vmatpush1.msra.mxu0 0.0
    %902 = vmatprep.subr.mxu0 0.0
    %903 = vmatpush1.msra.mxu0 0.0
    %904 = vmatprep.subr.mxu0 0.0
    %905 = vmatpush1.msra.mxu0 0.0
    %906 = vmatprep.subr.mxu0 0.0
    %907 = vmatpush1.msra.mxu0 0.0
    %908 = vmatprep.subr.mxu0 0.0
    %909 = vmatpush1.msra.mxu0 0.0
    %910 = vmatprep.subr.mxu0 0.0
    %911 = vmatpush1.msra.mxu0 0.0
    %912 = vmatprep.subr.mxu0 0.0
    %913 = vmatpush1.msra.mxu0 0.0
    %914 = vmatprep.subr.mxu0 0.0
    %915 = vmatpush1.msra.mxu0 0.0
    %916 = vmatprep.subr.mxu0 0.0
    %917 = vmatpush1.msra.mxu0 0.0
    %918 = vmatprep.subr.mxu0 0.0
    %919 = vmatpush1.msra.mxu0 0.0
    %920 = vmatprep.subr.mxu0 0.0
    %921 = vmatpush1.msra.mxu0 0.0
    %922 = vmatprep.subr.mxu0 0.0
    %923 = vmatpush1.msra.mxu0 0.0
    %924 = vmatprep.subr.mxu0 0.0
    %925 = vmatpush1.msra.mxu0 0.0
    %926 = vmatprep.subr.mxu0 0.0
    %927 = vmatpush1.msra.mxu0 0.0
    %928 = vmatprep.subr.mxu0 0.0
    %929 = vmatpush1.msra.mxu0 0.0
    %930 = vmatprep.mubr.f32.mxu0 0.0
    %931 = vmatmul.mubr.f32.gmra.mrb[0].mxu0 %v864
    %v932 = vpop.f32.mrb[0].mxu0
    %v933 = vadd.f32 0.0, %v932
    %v934 = vpop.f32.mrb[0].mxu0
    %935 = vdwg.mxu0
    %v937 = vsel %vm158, %v862, 0
    %939 = vmatprep.subr.mxu0 0.0
    %940 = vmatpush1.msra.mxu0 %v69
    %941 = vmatprep.subr.mxu0 0.0
    %942 = vmatpush1.msra.mxu0 %v70
    %943 = vmatprep.subr.mxu0 0.0
    %944 = vmatpush1.msra.mxu0 0.0
    %945 = vmatprep.subr.mxu0 0.0
    %946 = vmatpush1.msra.mxu0 0.0
    %947 = vmatprep.subr.mxu0 0.0
    %948 = vmatpush1.msra.mxu0 0.0
    %949 = vmatprep.subr.mxu0 0.0
    %950 = vmatpush1.msra.mxu0 0.0
    %951 = vmatprep.subr.mxu0 0.0
    %952 = vmatpush1.msra.mxu0 0.0
    %953 = vmatprep.subr.mxu0 0.0
    %954 = vmatpush1.msra.mxu0 0.0
    %955 = vmatprep.subr.mxu0 0.0
    %956 = vmatpush1.msra.mxu0 0.0
    %957 = vmatprep.subr.mxu0 0.0
    %958 = vmatpush1.msra.mxu0 0.0
    %959 = vmatprep.subr.mxu0 0.0
    %960 = vmatpush1.msra.mxu0 0.0
    %961 = vmatprep.subr.mxu0 0.0
    %962 = vmatpush1.msra.mxu0 0.0
    %963 = vmatprep.subr.mxu0 0.0
    %964 = vmatpush1.msra.mxu0 0.0
    %965 = vmatprep.subr.mxu0 0.0
    %966 = vmatpush1.msra.mxu0 0.0
    %967 = vmatprep.subr.mxu0 0.0
    %968 = vmatpush1.msra.mxu0 0.0
    %969 = vmatprep.subr.mxu0 0.0
    %970 = vmatpush1.msra.mxu0 0.0
    %971 = vmatprep.subr.mxu0 0.0
    %972 = vmatpush1.msra.mxu0 0.0
    %973 = vmatprep.subr.mxu0 0.0
    %974 = vmatpush1.msra.mxu0 0.0
    %975 = vmatprep.subr.mxu0 0.0
    %976 = vmatpush1.msra.mxu0 0.0
    %977 = vmatprep.subr.mxu0 0.0
    %978 = vmatpush1.msra.mxu0 0.0
    %979 = vmatprep.subr.mxu0 0.0
    %980 = vmatpush1.msra.mxu0 0.0
    %981 = vmatprep.subr.mxu0 0.0
    %982 = vmatpush1.msra.mxu0 0.0
    %983 = vmatprep.subr.mxu0 0.0
    %984 = vmatpush1.msra.mxu0 0.0
    %985 = vmatprep.subr.mxu0 0.0
    %986 = vmatpush1.msra.mxu0 0.0
    %987 = vmatprep.subr.mxu0 0.0
    %988 = vmatpush1.msra.mxu0 0.0
    %989 = vmatprep.subr.mxu0 0.0
    %990 = vmatpush1.msra.mxu0 0.0
    %991 = vmatprep.subr.mxu0 0.0
    %992 = vmatpush1.msra.mxu0 0.0
    %993 = vmatprep.subr.mxu0 0.0
    %994 = vmatpush1.msra.mxu0 0.0
    %995 = vmatprep.subr.mxu0 0.0
    %996 = vmatpush1.msra.mxu0 0.0
    %997 = vmatprep.subr.mxu0 0.0
    %998 = vmatpush1.msra.mxu0 0.0
    %999 = vmatprep.subr.mxu0 0.0
    %1000 = vmatpush1.msra.mxu0 0.0
    %1001 = vmatprep.subr.mxu0 0.0
    %1002 = vmatpush1.msra.mxu0 0.0
    %1003 = vmatprep.mubr.f32.mxu0 0.0
    %1004 = vmatmul.mubr.f32.gmra.mrb[0].mxu0 %v937
    %v1005 = vpop.f32.mrb[0].mxu0
    %v1006 = vadd.f32 %v933, %v1005
    %v1007 = vpop.f32.mrb[0].mxu0
    %1008 = vdwg.mxu0
    %v1009 = vadd.f32 %v1006, %v80
    %v1010 = vsel %vm84, %v1009, -inf
    %1011 = vmax.xlane.f32.xlu0 %v1010
    %v1012 = vpop.xlane.xlu0 %1011
    %vm1013 = vcmp.ge.f32.partialorder %v1009, %v1012
    %v1014 = vsel %vm1013, 1.0, 0.0
    %v1015 = vsel %vm84, %v1014, 0.0
    %1016 = vadd.xlane.f32.xlu0 %v1015
    %v1017 = vpop.xlane.xlu0 %1016
    %vm1018 = vcmp.lt.f32.partialorder %v1017, 19.0
    %vm1019 = vcmp.lt.f32.partialorder %v1009, %v1012
    %v1020 = vsel %vm1019, %v1009, -inf
    %v1021 = vsel %vm84, %v1020, -inf
    %1022 = vmax.xlane.f32.xlu0 %v1021
    %v1023 = vpop.xlane.xlu0 %1022
    %vm1024 = vcmp.ge.f32.partialorder %v1009, %v1023
    %v1025 = vsel %vm1024, 1.0, 0.0
    %v1026 = vsel %vm84, %v1025, 0.0
    %1027 = vadd.xlane.f32.xlu0 %v1026
    %v1028 = vpop.xlane.xlu0 %1027
    %v1029 = vsel %vm1018, %v1023, %v1012
    %v1030 = vsel %vm1018, %v1028, %v1017
    %vm1031 = vcmp.lt.f32.partialorder %v1030, 19.0
    %vm1032 = vcmp.lt.f32.partialorder %v1009, %v1029
    %v1033 = vsel %vm1032, %v1009, -inf
    %v1034 = vsel %vm84, %v1033, -inf
    %1035 = vmax.xlane.f32.xlu0 %v1034
    %v1036 = vpop.xlane.xlu0 %1035
    %vm1037 = vcmp.ge.f32.partialorder %v1009, %v1036
    %v1038 = vsel %vm1037, 1.0, 0.0
    %v1039 = vsel %vm84, %v1038, 0.0
    %1040 = vadd.xlane.f32.xlu0 %v1039
    %v1041 = vpop.xlane.xlu0 %1040
    %v1042 = vsel %vm1031, %v1036, %v1029
    %v1043 = vsel %vm1031, %v1041, %v1030
    %vm1044 = vcmp.lt.f32.partialorder %v1043, 19.0
    %vm1045 = vcmp.lt.f32.partialorder %v1009, %v1042
    %v1046 = vsel %vm1045, %v1009, -inf
    %v1047 = vsel %vm84, %v1046, -inf
    %1048 = vmax.xlane.f32.xlu0 %v1047
    %v1049 = vpop.xlane.xlu0 %1048
    %vm1050 = vcmp.ge.f32.partialorder %v1009, %v1049
    %v1051 = vsel %vm1050, 1.0, 0.0
    %v1052 = vsel %vm84, %v1051, 0.0
    %1053 = vadd.xlane.f32.xlu0 %v1052
    %v1054 = vpop.xlane.xlu0 %1053
    %v1055 = vsel %vm1044, %v1049, %v1042
    %v1056 = vsel %vm1044, %v1054, %v1043
    %vm1057 = vcmp.lt.f32.partialorder %v1056, 19.0
    %vm1058 = vcmp.lt.f32.partialorder %v1009, %v1055
    %v1059 = vsel %vm1058, %v1009, -inf
    %v1060 = vsel %vm84, %v1059, -inf
    %1061 = vmax.xlane.f32.xlu0 %v1060
    %v1062 = vpop.xlane.xlu0 %1061
    %vm1063 = vcmp.ge.f32.partialorder %v1009, %v1062
    %v1064 = vsel %vm1063, 1.0, 0.0
    %v1065 = vsel %vm84, %v1064, 0.0
    %1066 = vadd.xlane.f32.xlu0 %v1065
    %v1067 = vpop.xlane.xlu0 %1066
    %v1068 = vsel %vm1057, %v1062, %v1055
    %v1069 = vsel %vm1057, %v1067, %v1056
    %vm1070 = vcmp.lt.f32.partialorder %v1069, 19.0
    %vm1071 = vcmp.lt.f32.partialorder %v1009, %v1068
    %v1072 = vsel %vm1071, %v1009, -inf
    %v1073 = vsel %vm84, %v1072, -inf
    %1074 = vmax.xlane.f32.xlu0 %v1073
    %v1075 = vpop.xlane.xlu0 %1074
    %vm1076 = vcmp.ge.f32.partialorder %v1009, %v1075
    %v1077 = vsel %vm1076, 1.0, 0.0
    %v1078 = vsel %vm84, %v1077, 0.0
    %1079 = vadd.xlane.f32.xlu0 %v1078
    %v1080 = vpop.xlane.xlu0 %1079
    %v1081 = vsel %vm1070, %v1075, %v1068
    %v1082 = vsel %vm1070, %v1080, %v1069
    %vm1083 = vcmp.lt.f32.partialorder %v1082, 19.0
    %vm1084 = vcmp.lt.f32.partialorder %v1009, %v1081
    %v1085 = vsel %vm1084, %v1009, -inf
    %v1086 = vsel %vm84, %v1085, -inf
    %1087 = vmax.xlane.f32.xlu0 %v1086
    %v1088 = vpop.xlane.xlu0 %1087
    %vm1089 = vcmp.ge.f32.partialorder %v1009, %v1088
    %v1090 = vsel %vm1089, 1.0, 0.0
    %v1091 = vsel %vm84, %v1090, 0.0
    %1092 = vadd.xlane.f32.xlu0 %v1091
    %v1093 = vpop.xlane.xlu0 %1092
    %v1094 = vsel %vm1083, %v1088, %v1081
    %v1095 = vsel %vm1083, %v1093, %v1082
    %vm1096 = vcmp.lt.f32.partialorder %v1095, 19.0
    %vm1097 = vcmp.lt.f32.partialorder %v1009, %v1094
    %v1098 = vsel %vm1097, %v1009, -inf
    %v1099 = vsel %vm84, %v1098, -inf
    %1100 = vmax.xlane.f32.xlu0 %v1099
    %v1101 = vpop.xlane.xlu0 %1100
    %vm1102 = vcmp.ge.f32.partialorder %v1009, %v1101
    %v1103 = vsel %vm1102, 1.0, 0.0
    %v1104 = vsel %vm84, %v1103, 0.0
    %1105 = vadd.xlane.f32.xlu0 %v1104
    %v1106 = vpop.xlane.xlu0 %1105
    %v1107 = vsel %vm1096, %v1101, %v1094
    %v1108 = vsel %vm1096, %v1106, %v1095
    %vm1109 = vcmp.lt.f32.partialorder %v1108, 19.0
    %vm1110 = vcmp.lt.f32.partialorder %v1009, %v1107
    %v1111 = vsel %vm1110, %v1009, -inf
    %v1112 = vsel %vm84, %v1111, -inf
    %1113 = vmax.xlane.f32.xlu0 %v1112
    %v1114 = vpop.xlane.xlu0 %1113
    %vm1115 = vcmp.ge.f32.partialorder %v1009, %v1114
    %v1116 = vsel %vm1115, 1.0, 0.0
    %v1117 = vsel %vm84, %v1116, 0.0
    %1118 = vadd.xlane.f32.xlu0 %v1117
    %v1119 = vpop.xlane.xlu0 %1118
    %v1120 = vsel %vm1109, %v1114, %v1107
    %v1121 = vsel %vm1109, %v1119, %v1108
    %vm1122 = vcmp.lt.f32.partialorder %v1121, 19.0
    %vm1123 = vcmp.lt.f32.partialorder %v1009, %v1120
    %v1124 = vsel %vm1123, %v1009, -inf
    %v1125 = vsel %vm84, %v1124, -inf
    %1126 = vmax.xlane.f32.xlu0 %v1125
    %v1127 = vpop.xlane.xlu0 %1126
    %vm1128 = vcmp.ge.f32.partialorder %v1009, %v1127
    %v1129 = vsel %vm1128, 1.0, 0.0
    %v1130 = vsel %vm84, %v1129, 0.0
    %1131 = vadd.xlane.f32.xlu0 %v1130
    %v1132 = vpop.xlane.xlu0 %1131
    %v1133 = vsel %vm1122, %v1127, %v1120
    %v1134 = vsel %vm1122, %v1132, %v1121
    %vm1135 = vcmp.lt.f32.partialorder %v1134, 19.0
    %vm1136 = vcmp.lt.f32.partialorder %v1009, %v1133
    %v1137 = vsel %vm1136, %v1009, -inf
    %v1138 = vsel %vm84, %v1137, -inf
    %1139 = vmax.xlane.f32.xlu0 %v1138
    %v1140 = vpop.xlane.xlu0 %1139
    %vm1141 = vcmp.ge.f32.partialorder %v1009, %v1140
    %v1142 = vsel %vm1141, 1.0, 0.0
    %v1143 = vsel %vm84, %v1142, 0.0
    %1144 = vadd.xlane.f32.xlu0 %v1143
    %v1145 = vpop.xlane.xlu0 %1144
    %v1146 = vsel %vm1135, %v1140, %v1133
    %v1147 = vsel %vm1135, %v1145, %v1134
    %vm1148 = vcmp.lt.f32.partialorder %v1147, 19.0
    %vm1149 = vcmp.lt.f32.partialorder %v1009, %v1146
    %v1150 = vsel %vm1149, %v1009, -inf
    %v1151 = vsel %vm84, %v1150, -inf
    %1152 = vmax.xlane.f32.xlu0 %v1151
    %v1153 = vpop.xlane.xlu0 %1152
    %vm1154 = vcmp.ge.f32.partialorder %v1009, %v1153
    %v1155 = vsel %vm1154, 1.0, 0.0
    %v1156 = vsel %vm84, %v1155, 0.0
    %1157 = vadd.xlane.f32.xlu0 %v1156
    %v1158 = vpop.xlane.xlu0 %1157
    %v1159 = vsel %vm1148, %v1153, %v1146
    %v1160 = vsel %vm1148, %v1158, %v1147
    %vm1161 = vcmp.lt.f32.partialorder %v1160, 19.0
    %vm1162 = vcmp.lt.f32.partialorder %v1009, %v1159
    %v1163 = vsel %vm1162, %v1009, -inf
    %v1164 = vsel %vm84, %v1163, -inf
    %1165 = vmax.xlane.f32.xlu0 %v1164
    %v1166 = vpop.xlane.xlu0 %1165
    %vm1167 = vcmp.ge.f32.partialorder %v1009, %v1166
    %v1168 = vsel %vm1167, 1.0, 0.0
    %v1169 = vsel %vm84, %v1168, 0.0
    %1170 = vadd.xlane.f32.xlu0 %v1169
    %v1171 = vpop.xlane.xlu0 %1170
    %v1172 = vsel %vm1161, %v1166, %v1159
    %v1173 = vsel %vm1161, %v1171, %v1160
    %vm1174 = vcmp.lt.f32.partialorder %v1173, 19.0
    %vm1175 = vcmp.lt.f32.partialorder %v1009, %v1172
    %v1176 = vsel %vm1175, %v1009, -inf
    %v1177 = vsel %vm84, %v1176, -inf
    %1178 = vmax.xlane.f32.xlu0 %v1177
    %v1179 = vpop.xlane.xlu0 %1178
    %vm1180 = vcmp.ge.f32.partialorder %v1009, %v1179
    %v1181 = vsel %vm1180, 1.0, 0.0
    %v1182 = vsel %vm84, %v1181, 0.0
    %1183 = vadd.xlane.f32.xlu0 %v1182
    %v1184 = vpop.xlane.xlu0 %1183
    %v1185 = vsel %vm1174, %v1179, %v1172
    %v1186 = vsel %vm1174, %v1184, %v1173
    %vm1187 = vcmp.lt.f32.partialorder %v1186, 19.0
    %vm1188 = vcmp.lt.f32.partialorder %v1009, %v1185
    %v1189 = vsel %vm1188, %v1009, -inf
    %v1190 = vsel %vm84, %v1189, -inf
    %1191 = vmax.xlane.f32.xlu0 %v1190
    %v1192 = vpop.xlane.xlu0 %1191
    %vm1193 = vcmp.ge.f32.partialorder %v1009, %v1192
    %v1194 = vsel %vm1193, 1.0, 0.0
    %v1195 = vsel %vm84, %v1194, 0.0
    %1196 = vadd.xlane.f32.xlu0 %v1195
    %v1197 = vpop.xlane.xlu0 %1196
    %v1198 = vsel %vm1187, %v1192, %v1185
    %v1199 = vsel %vm1187, %v1197, %v1186
    %vm1200 = vcmp.lt.f32.partialorder %v1199, 19.0
    %vm1201 = vcmp.lt.f32.partialorder %v1009, %v1198
    %v1202 = vsel %vm1201, %v1009, -inf
    %v1203 = vsel %vm84, %v1202, -inf
    %1204 = vmax.xlane.f32.xlu0 %v1203
    %v1205 = vpop.xlane.xlu0 %1204
    %vm1206 = vcmp.ge.f32.partialorder %v1009, %v1205
    %v1207 = vsel %vm1206, 1.0, 0.0
    %v1208 = vsel %vm84, %v1207, 0.0
    %1209 = vadd.xlane.f32.xlu0 %v1208
    %v1210 = vpop.xlane.xlu0 %1209
    %v1211 = vsel %vm1200, %v1205, %v1198
    %v1212 = vsel %vm1200, %v1210, %v1199
    %vm1213 = vcmp.lt.f32.partialorder %v1212, 19.0
    %vm1214 = vcmp.lt.f32.partialorder %v1009, %v1211
    %v1215 = vsel %vm1214, %v1009, -inf
    %v1216 = vsel %vm84, %v1215, -inf
    %1217 = vmax.xlane.f32.xlu0 %v1216
    %v1218 = vpop.xlane.xlu0 %1217
    %vm1219 = vcmp.ge.f32.partialorder %v1009, %v1218
    %v1220 = vsel %vm1219, 1.0, 0.0
    %v1221 = vsel %vm84, %v1220, 0.0
    %1222 = vadd.xlane.f32.xlu0 %v1221
    %v1223 = vpop.xlane.xlu0 %1222
    %v1224 = vsel %vm1213, %v1218, %v1211
    %v1225 = vsel %vm1213, %v1223, %v1212
    %vm1226 = vcmp.lt.f32.partialorder %v1225, 19.0
    %vm1227 = vcmp.lt.f32.partialorder %v1009, %v1224
    %v1228 = vsel %vm1227, %v1009, -inf
    %v1229 = vsel %vm84, %v1228, -inf
    %1230 = vmax.xlane.f32.xlu0 %v1229
    %v1231 = vpop.xlane.xlu0 %1230
    %vm1232 = vcmp.ge.f32.partialorder %v1009, %v1231
    %v1233 = vsel %vm1232, 1.0, 0.0
    %v1234 = vsel %vm84, %v1233, 0.0
    %1235 = vadd.xlane.f32.xlu0 %v1234
    %v1236 = vpop.xlane.xlu0 %1235
    %v1237 = vsel %vm1226, %v1231, %v1224
    %v1238 = vsel %vm1226, %v1236, %v1225
    %vm1239 = vcmp.lt.f32.partialorder %v1238, 19.0
    %vm1240 = vcmp.lt.f32.partialorder %v1009, %v1237
    %v1241 = vsel %vm1240, %v1009, -inf
    %v1242 = vsel %vm84, %v1241, -inf
    %1243 = vmax.xlane.f32.xlu0 %v1242
    %v1244 = vpop.xlane.xlu0 %1243
    %v1245 = vsel %vm1239, %v1244, %v1237
    %vm1246 = vcmp.ge.f32.partialorder %v1009, %v1245
    %v1247 = vsel %vm1246, %v1009, 0.0
    %s1248 = scalar_lea.vmem [#allocation9], 16
    %1249 = vst.msk [vmem:[%s1248] sm:$0xff] %vm84, %v1247
    %s1250 = scalar_lea.vmem %s0, 24
    %v1251 = vld [vmem:[%s1250] sm:$0xff]
    %v1253 = vsel %vm84, %v1247, 0
    %1255 = vmatprep.subr.mxu0 0.0
    %1256 = vmatpush1.msra.mxu0 %v71
    %1257 = vmatprep.subr.mxu0 0.0
    %1258 = vmatpush1.msra.mxu0 %v72
    %1259 = vmatprep.subr.mxu0 0.0
    %1260 = vmatpush1.msra.mxu0 %v73
    %1261 = vmatprep.subr.mxu0 0.0
    %1262 = vmatpush1.msra.mxu0 %v74
    %1263 = vmatprep.subr.mxu0 0.0
    %1264 = vmatpush1.msra.mxu0 0.0
    %1265 = vmatprep.subr.mxu0 0.0
    %1266 = vmatpush1.msra.mxu0 0.0
    %1267 = vmatprep.subr.mxu0 0.0
    %1268 = vmatpush1.msra.mxu0 0.0
    %1269 = vmatprep.subr.mxu0 0.0
    %1270 = vmatpush1.msra.mxu0 0.0
    %1271 = vmatprep.subr.mxu0 0.0
    %1272 = vmatpush1.msra.mxu0 0.0
    %1273 = vmatprep.subr.mxu0 0.0
    %1274 = vmatpush1.msra.mxu0 0.0
    %1275 = vmatprep.subr.mxu0 0.0
    %1276 = vmatpush1.msra.mxu0 0.0
    %1277 = vmatprep.subr.mxu0 0.0
    %1278 = vmatpush1.msra.mxu0 0.0
    %1279 = vmatprep.subr.mxu0 0.0
    %1280 = vmatpush1.msra.mxu0 0.0
    %1281 = vmatprep.subr.mxu0 0.0
    %1282 = vmatpush1.msra.mxu0 0.0
    %1283 = vmatprep.subr.mxu0 0.0
    %1284 = vmatpush1.msra.mxu0 0.0
    %1285 = vmatprep.subr.mxu0 0.0
    %1286 = vmatpush1.msra.mxu0 0.0
    %1287 = vmatprep.subr.mxu0 0.0
    %1288 = vmatpush1.msra.mxu0 0.0
    %1289 = vmatprep.subr.mxu0 0.0
    %1290 = vmatpush1.msra.mxu0 0.0
    %1291 = vmatprep.subr.mxu0 0.0
    %1292 = vmatpush1.msra.mxu0 0.0
    %1293 = vmatprep.subr.mxu0 0.0
    %1294 = vmatpush1.msra.mxu0 0.0
    %1295 = vmatprep.subr.mxu0 0.0
    %1296 = vmatpush1.msra.mxu0 0.0
    %1297 = vmatprep.subr.mxu0 0.0
    %1298 = vmatpush1.msra.mxu0 0.0
    %1299 = vmatprep.subr.mxu0 0.0
    %1300 = vmatpush1.msra.mxu0 0.0
    %1301 = vmatprep.subr.mxu0 0.0
    %1302 = vmatpush1.msra.mxu0 0.0
    %1303 = vmatprep.subr.mxu0 0.0
    %1304 = vmatpush1.msra.mxu0 0.0
    %1305 = vmatprep.subr.mxu0 0.0
    %1306 = vmatpush1.msra.mxu0 0.0
    %1307 = vmatprep.subr.mxu0 0.0
    %1308 = vmatpush1.msra.mxu0 0.0
    %1309 = vmatprep.subr.mxu0 0.0
    %1310 = vmatpush1.msra.mxu0 0.0
    %1311 = vmatprep.subr.mxu0 0.0
    %1312 = vmatpush1.msra.mxu0 0.0
    %1313 = vmatprep.subr.mxu0 0.0
    %1314 = vmatpush1.msra.mxu0 0.0
    %1315 = vmatprep.subr.mxu0 0.0
    %1316 = vmatpush1.msra.mxu0 0.0
    %1317 = vmatprep.subr.mxu0 0.0
    %1318 = vmatpush1.msra.mxu0 0.0
    %1319 = vmatprep.mubr.f32.mxu0 0.0
    %1320 = vmatmul.mubr.f32.gmra.mrb[0].mxu0 %v1253
    %v1321 = vpop.f32.mrb[0].mxu0
    %v1322 = vadd.f32 0.0, %v1321
    %v1323 = vpop.f32.mrb[0].mxu0
    %1324 = vdwg.mxu0
    %v1326 = vsel %vm158, %v1251, 0
    %1328 = vmatprep.subr.mxu0 0.0
    %1329 = vmatpush1.msra.mxu0 %v69
    %1330 = vmatprep.subr.mxu0 0.0
    %1331 = vmatpush1.msra.mxu0 %v70
    %1332 = vmatprep.subr.mxu0 0.0
    %1333 = vmatpush1.msra.mxu0 0.0
    %1334 = vmatprep.subr.mxu0 0.0
    %1335 = vmatpush1.msra.mxu0 0.0
    %1336 = vmatprep.subr.mxu0 0.0
    %1337 = vmatpush1.msra.mxu0 0.0
    %1338 = vmatprep.subr.mxu0 0.0
    %1339 = vmatpush1.msra.mxu0 0.0
    %1340 = vmatprep.subr.mxu0 0.0
    %1341 = vmatpush1.msra.mxu0 0.0
    %1342 = vmatprep.subr.mxu0 0.0
    %1343 = vmatpush1.msra.mxu0 0.0
    %1344 = vmatprep.subr.mxu0 0.0
    %1345 = vmatpush1.msra.mxu0 0.0
    %1346 = vmatprep.subr.mxu0 0.0
    %1347 = vmatpush1.msra.mxu0 0.0
    %1348 = vmatprep.subr.mxu0 0.0
    %1349 = vmatpush1.msra.mxu0 0.0
    %1350 = vmatprep.subr.mxu0 0.0
    %1351 = vmatpush1.msra.mxu0 0.0
    %1352 = vmatprep.subr.mxu0 0.0
    %1353 = vmatpush1.msra.mxu0 0.0
    %1354 = vmatprep.subr.mxu0 0.0
    %1355 = vmatpush1.msra.mxu0 0.0
    %1356 = vmatprep.subr.mxu0 0.0
    %1357 = vmatpush1.msra.mxu0 0.0
    %1358 = vmatprep.subr.mxu0 0.0
    %1359 = vmatpush1.msra.mxu0 0.0
    %1360 = vmatprep.subr.mxu0 0.0
    %1361 = vmatpush1.msra.mxu0 0.0
    %1362 = vmatprep.subr.mxu0 0.0
    %1363 = vmatpush1.msra.mxu0 0.0
    %1364 = vmatprep.subr.mxu0 0.0
    %1365 = vmatpush1.msra.mxu0 0.0
    %1366 = vmatprep.subr.mxu0 0.0
    %1367 = vmatpush1.msra.mxu0 0.0
    %1368 = vmatprep.subr.mxu0 0.0
    %1369 = vmatpush1.msra.mxu0 0.0
    %1370 = vmatprep.subr.mxu0 0.0
    %1371 = vmatpush1.msra.mxu0 0.0
    %1372 = vmatprep.subr.mxu0 0.0
    %1373 = vmatpush1.msra.mxu0 0.0
    %1374 = vmatprep.subr.mxu0 0.0
    %1375 = vmatpush1.msra.mxu0 0.0
    %1376 = vmatprep.subr.mxu0 0.0
    %1377 = vmatpush1.msra.mxu0 0.0
    %1378 = vmatprep.subr.mxu0 0.0
    %1379 = vmatpush1.msra.mxu0 0.0
    %1380 = vmatprep.subr.mxu0 0.0
    %1381 = vmatpush1.msra.mxu0 0.0
    %1382 = vmatprep.subr.mxu0 0.0
    %1383 = vmatpush1.msra.mxu0 0.0
    %1384 = vmatprep.subr.mxu0 0.0
    %1385 = vmatpush1.msra.mxu0 0.0
    %1386 = vmatprep.subr.mxu0 0.0
    %1387 = vmatpush1.msra.mxu0 0.0
    %1388 = vmatprep.subr.mxu0 0.0
    %1389 = vmatpush1.msra.mxu0 0.0
    %1390 = vmatprep.subr.mxu0 0.0
    %1391 = vmatpush1.msra.mxu0 0.0
    %1392 = vmatprep.mubr.f32.mxu0 0.0
    %1393 = vmatmul.mubr.f32.gmra.mrb[0].mxu0 %v1326
    %v1394 = vpop.f32.mrb[0].mxu0
    %v1395 = vadd.f32 %v1322, %v1394
    %v1396 = vpop.f32.mrb[0].mxu0
    %1397 = vdwg.mxu0
    %v1398 = vadd.f32 %v1395, %v80
    %v1399 = vsel %vm84, %v1398, -inf
    %1400 = vmax.xlane.f32.xlu0 %v1399
    %v1401 = vpop.xlane.xlu0 %1400
    %vm1402 = vcmp.ge.f32.partialorder %v1398, %v1401
    %v1403 = vsel %vm1402, 1.0, 0.0
    %v1404 = vsel %vm84, %v1403, 0.0
    %1405 = vadd.xlane.f32.xlu0 %v1404
    %v1406 = vpop.xlane.xlu0 %1405
    %vm1407 = vcmp.lt.f32.partialorder %v1406, 19.0
    %vm1408 = vcmp.lt.f32.partialorder %v1398, %v1401
    %v1409 = vsel %vm1408, %v1398, -inf
    %v1410 = vsel %vm84, %v1409, -inf
    %1411 = vmax.xlane.f32.xlu0 %v1410
    %v1412 = vpop.xlane.xlu0 %1411
    %vm1413 = vcmp.ge.f32.partialorder %v1398, %v1412
    %v1414 = vsel %vm1413, 1.0, 0.0
    %v1415 = vsel %vm84, %v1414, 0.0
    %1416 = vadd.xlane.f32.xlu0 %v1415
    %v1417 = vpop.xlane.xlu0 %1416
    %v1418 = vsel %vm1407, %v1412, %v1401
    %v1419 = vsel %vm1407, %v1417, %v1406
    %vm1420 = vcmp.lt.f32.partialorder %v1419, 19.0
    %vm1421 = vcmp.lt.f32.partialorder %v1398, %v1418
    %v1422 = vsel %vm1421, %v1398, -inf
    %v1423 = vsel %vm84, %v1422, -inf
    %1424 = vmax.xlane.f32.xlu0 %v1423
    %v1425 = vpop.xlane.xlu0 %1424
    %vm1426 = vcmp.ge.f32.partialorder %v1398, %v1425
    %v1427 = vsel %vm1426, 1.0, 0.0
    %v1428 = vsel %vm84, %v1427, 0.0
    %1429 = vadd.xlane.f32.xlu0 %v1428
    %v1430 = vpop.xlane.xlu0 %1429
    %v1431 = vsel %vm1420, %v1425, %v1418
    %v1432 = vsel %vm1420, %v1430, %v1419
    %vm1433 = vcmp.lt.f32.partialorder %v1432, 19.0
    %vm1434 = vcmp.lt.f32.partialorder %v1398, %v1431
    %v1435 = vsel %vm1434, %v1398, -inf
    %v1436 = vsel %vm84, %v1435, -inf
    %1437 = vmax.xlane.f32.xlu0 %v1436
    %v1438 = vpop.xlane.xlu0 %1437
    %vm1439 = vcmp.ge.f32.partialorder %v1398, %v1438
    %v1440 = vsel %vm1439, 1.0, 0.0
    %v1441 = vsel %vm84, %v1440, 0.0
    %1442 = vadd.xlane.f32.xlu0 %v1441
    %v1443 = vpop.xlane.xlu0 %1442
    %v1444 = vsel %vm1433, %v1438, %v1431
    %v1445 = vsel %vm1433, %v1443, %v1432
    %vm1446 = vcmp.lt.f32.partialorder %v1445, 19.0
    %vm1447 = vcmp.lt.f32.partialorder %v1398, %v1444
    %v1448 = vsel %vm1447, %v1398, -inf
    %v1449 = vsel %vm84, %v1448, -inf
    %1450 = vmax.xlane.f32.xlu0 %v1449
    %v1451 = vpop.xlane.xlu0 %1450
    %vm1452 = vcmp.ge.f32.partialorder %v1398, %v1451
    %v1453 = vsel %vm1452, 1.0, 0.0
    %v1454 = vsel %vm84, %v1453, 0.0
    %1455 = vadd.xlane.f32.xlu0 %v1454
    %v1456 = vpop.xlane.xlu0 %1455
    %v1457 = vsel %vm1446, %v1451, %v1444
    %v1458 = vsel %vm1446, %v1456, %v1445
    %vm1459 = vcmp.lt.f32.partialorder %v1458, 19.0
    %vm1460 = vcmp.lt.f32.partialorder %v1398, %v1457
    %v1461 = vsel %vm1460, %v1398, -inf
    %v1462 = vsel %vm84, %v1461, -inf
    %1463 = vmax.xlane.f32.xlu0 %v1462
    %v1464 = vpop.xlane.xlu0 %1463
    %vm1465 = vcmp.ge.f32.partialorder %v1398, %v1464
    %v1466 = vsel %vm1465, 1.0, 0.0
    %v1467 = vsel %vm84, %v1466, 0.0
    %1468 = vadd.xlane.f32.xlu0 %v1467
    %v1469 = vpop.xlane.xlu0 %1468
    %v1470 = vsel %vm1459, %v1464, %v1457
    %v1471 = vsel %vm1459, %v1469, %v1458
    %vm1472 = vcmp.lt.f32.partialorder %v1471, 19.0
    %vm1473 = vcmp.lt.f32.partialorder %v1398, %v1470
    %v1474 = vsel %vm1473, %v1398, -inf
    %v1475 = vsel %vm84, %v1474, -inf
    %1476 = vmax.xlane.f32.xlu0 %v1475
    %v1477 = vpop.xlane.xlu0 %1476
    %vm1478 = vcmp.ge.f32.partialorder %v1398, %v1477
    %v1479 = vsel %vm1478, 1.0, 0.0
    %v1480 = vsel %vm84, %v1479, 0.0
    %1481 = vadd.xlane.f32.xlu0 %v1480
    %v1482 = vpop.xlane.xlu0 %1481
    %v1483 = vsel %vm1472, %v1477, %v1470
    %v1484 = vsel %vm1472, %v1482, %v1471
    %vm1485 = vcmp.lt.f32.partialorder %v1484, 19.0
    %vm1486 = vcmp.lt.f32.partialorder %v1398, %v1483
    %v1487 = vsel %vm1486, %v1398, -inf
    %v1488 = vsel %vm84, %v1487, -inf
    %1489 = vmax.xlane.f32.xlu0 %v1488
    %v1490 = vpop.xlane.xlu0 %1489
    %vm1491 = vcmp.ge.f32.partialorder %v1398, %v1490
    %v1492 = vsel %vm1491, 1.0, 0.0
    %v1493 = vsel %vm84, %v1492, 0.0
    %1494 = vadd.xlane.f32.xlu0 %v1493
    %v1495 = vpop.xlane.xlu0 %1494
    %v1496 = vsel %vm1485, %v1490, %v1483
    %v1497 = vsel %vm1485, %v1495, %v1484
    %vm1498 = vcmp.lt.f32.partialorder %v1497, 19.0
    %vm1499 = vcmp.lt.f32.partialorder %v1398, %v1496
    %v1500 = vsel %vm1499, %v1398, -inf
    %v1501 = vsel %vm84, %v1500, -inf
    %1502 = vmax.xlane.f32.xlu0 %v1501
    %v1503 = vpop.xlane.xlu0 %1502
    %vm1504 = vcmp.ge.f32.partialorder %v1398, %v1503
    %v1505 = vsel %vm1504, 1.0, 0.0
    %v1506 = vsel %vm84, %v1505, 0.0
    %1507 = vadd.xlane.f32.xlu0 %v1506
    %v1508 = vpop.xlane.xlu0 %1507
    %v1509 = vsel %vm1498, %v1503, %v1496
    %v1510 = vsel %vm1498, %v1508, %v1497
    %vm1511 = vcmp.lt.f32.partialorder %v1510, 19.0
    %vm1512 = vcmp.lt.f32.partialorder %v1398, %v1509
    %v1513 = vsel %vm1512, %v1398, -inf
    %v1514 = vsel %vm84, %v1513, -inf
    %1515 = vmax.xlane.f32.xlu0 %v1514
    %v1516 = vpop.xlane.xlu0 %1515
    %vm1517 = vcmp.ge.f32.partialorder %v1398, %v1516
    %v1518 = vsel %vm1517, 1.0, 0.0
    %v1519 = vsel %vm84, %v1518, 0.0
    %1520 = vadd.xlane.f32.xlu0 %v1519
    %v1521 = vpop.xlane.xlu0 %1520
    %v1522 = vsel %vm1511, %v1516, %v1509
    %v1523 = vsel %vm1511, %v1521, %v1510
    %vm1524 = vcmp.lt.f32.partialorder %v1523, 19.0
    %vm1525 = vcmp.lt.f32.partialorder %v1398, %v1522
    %v1526 = vsel %vm1525, %v1398, -inf
    %v1527 = vsel %vm84, %v1526, -inf
    %1528 = vmax.xlane.f32.xlu0 %v1527
    %v1529 = vpop.xlane.xlu0 %1528
    %vm1530 = vcmp.ge.f32.partialorder %v1398, %v1529
    %v1531 = vsel %vm1530, 1.0, 0.0
    %v1532 = vsel %vm84, %v1531, 0.0
    %1533 = vadd.xlane.f32.xlu0 %v1532
    %v1534 = vpop.xlane.xlu0 %1533
    %v1535 = vsel %vm1524, %v1529, %v1522
    %v1536 = vsel %vm1524, %v1534, %v1523
    %vm1537 = vcmp.lt.f32.partialorder %v1536, 19.0
    %vm1538 = vcmp.lt.f32.partialorder %v1398, %v1535
    %v1539 = vsel %vm1538, %v1398, -inf
    %v1540 = vsel %vm84, %v1539, -inf
    %1541 = vmax.xlane.f32.xlu0 %v1540
    %v1542 = vpop.xlane.xlu0 %1541
    %vm1543 = vcmp.ge.f32.partialorder %v1398, %v1542
    %v1544 = vsel %vm1543, 1.0, 0.0
    %v1545 = vsel %vm84, %v1544, 0.0
    %1546 = vadd.xlane.f32.xlu0 %v1545
    %v1547 = vpop.xlane.xlu0 %1546
    %v1548 = vsel %vm1537, %v1542, %v1535
    %v1549 = vsel %vm1537, %v1547, %v1536
    %vm1550 = vcmp.lt.f32.partialorder %v1549, 19.0
    %vm1551 = vcmp.lt.f32.partialorder %v1398, %v1548
    %v1552 = vsel %vm1551, %v1398, -inf
    %v1553 = vsel %vm84, %v1552, -inf
    %1554 = vmax.xlane.f32.xlu0 %v1553
    %v1555 = vpop.xlane.xlu0 %1554
    %vm1556 = vcmp.ge.f32.partialorder %v1398, %v1555
    %v1557 = vsel %vm1556, 1.0, 0.0
    %v1558 = vsel %vm84, %v1557, 0.0
    %1559 = vadd.xlane.f32.xlu0 %v1558
    %v1560 = vpop.xlane.xlu0 %1559
    %v1561 = vsel %vm1550, %v1555, %v1548
    %v1562 = vsel %vm1550, %v1560, %v1549
    %vm1563 = vcmp.lt.f32.partialorder %v1562, 19.0
    %vm1564 = vcmp.lt.f32.partialorder %v1398, %v1561
    %v1565 = vsel %vm1564, %v1398, -inf
    %v1566 = vsel %vm84, %v1565, -inf
    %1567 = vmax.xlane.f32.xlu0 %v1566
    %v1568 = vpop.xlane.xlu0 %1567
    %vm1569 = vcmp.ge.f32.partialorder %v1398, %v1568
    %v1570 = vsel %vm1569, 1.0, 0.0
    %v1571 = vsel %vm84, %v1570, 0.0
    %1572 = vadd.xlane.f32.xlu0 %v1571
    %v1573 = vpop.xlane.xlu0 %1572
    %v1574 = vsel %vm1563, %v1568, %v1561
    %v1575 = vsel %vm1563, %v1573, %v1562
    %vm1576 = vcmp.lt.f32.partialorder %v1575, 19.0
    %vm1577 = vcmp.lt.f32.partialorder %v1398, %v1574
    %v1578 = vsel %vm1577, %v1398, -inf
    %v1579 = vsel %vm84, %v1578, -inf
    %1580 = vmax.xlane.f32.xlu0 %v1579
    %v1581 = vpop.xlane.xlu0 %1580
    %vm1582 = vcmp.ge.f32.partialorder %v1398, %v1581
    %v1583 = vsel %vm1582, 1.0, 0.0
    %v1584 = vsel %vm84, %v1583, 0.0
    %1585 = vadd.xlane.f32.xlu0 %v1584
    %v1586 = vpop.xlane.xlu0 %1585
    %v1587 = vsel %vm1576, %v1581, %v1574
    %v1588 = vsel %vm1576, %v1586, %v1575
    %vm1589 = vcmp.lt.f32.partialorder %v1588, 19.0
    %vm1590 = vcmp.lt.f32.partialorder %v1398, %v1587
    %v1591 = vsel %vm1590, %v1398, -inf
    %v1592 = vsel %vm84, %v1591, -inf
    %1593 = vmax.xlane.f32.xlu0 %v1592
    %v1594 = vpop.xlane.xlu0 %1593
    %vm1595 = vcmp.ge.f32.partialorder %v1398, %v1594
    %v1596 = vsel %vm1595, 1.0, 0.0
    %v1597 = vsel %vm84, %v1596, 0.0
    %1598 = vadd.xlane.f32.xlu0 %v1597
    %v1599 = vpop.xlane.xlu0 %1598
    %v1600 = vsel %vm1589, %v1594, %v1587
    %v1601 = vsel %vm1589, %v1599, %v1588
    %vm1602 = vcmp.lt.f32.partialorder %v1601, 19.0
    %vm1603 = vcmp.lt.f32.partialorder %v1398, %v1600
    %v1604 = vsel %vm1603, %v1398, -inf
    %v1605 = vsel %vm84, %v1604, -inf
    %1606 = vmax.xlane.f32.xlu0 %v1605
    %v1607 = vpop.xlane.xlu0 %1606
    %vm1608 = vcmp.ge.f32.partialorder %v1398, %v1607
    %v1609 = vsel %vm1608, 1.0, 0.0
    %v1610 = vsel %vm84, %v1609, 0.0
    %1611 = vadd.xlane.f32.xlu0 %v1610
    %v1612 = vpop.xlane.xlu0 %1611
    %v1613 = vsel %vm1602, %v1607, %v1600
    %v1614 = vsel %vm1602, %v1612, %v1601
    %vm1615 = vcmp.lt.f32.partialorder %v1614, 19.0
    %vm1616 = vcmp.lt.f32.partialorder %v1398, %v1613
    %v1617 = vsel %vm1616, %v1398, -inf
    %v1618 = vsel %vm84, %v1617, -inf
    %1619 = vmax.xlane.f32.xlu0 %v1618
    %v1620 = vpop.xlane.xlu0 %1619
    %vm1621 = vcmp.ge.f32.partialorder %v1398, %v1620
    %v1622 = vsel %vm1621, 1.0, 0.0
    %v1623 = vsel %vm84, %v1622, 0.0
    %1624 = vadd.xlane.f32.xlu0 %v1623
    %v1625 = vpop.xlane.xlu0 %1624
    %v1626 = vsel %vm1615, %v1620, %v1613
    %v1627 = vsel %vm1615, %v1625, %v1614
    %vm1628 = vcmp.lt.f32.partialorder %v1627, 19.0
    %vm1629 = vcmp.lt.f32.partialorder %v1398, %v1626
    %v1630 = vsel %vm1629, %v1398, -inf
    %v1631 = vsel %vm84, %v1630, -inf
    %1632 = vmax.xlane.f32.xlu0 %v1631
    %v1633 = vpop.xlane.xlu0 %1632
    %v1634 = vsel %vm1628, %v1633, %v1626
    %vm1635 = vcmp.ge.f32.partialorder %v1398, %v1634
    %v1636 = vsel %vm1635, %v1398, 0.0
    %s1637 = scalar_lea.vmem [#allocation9], 24
    %1638 = vst.msk [vmem:[%s1637] sm:$0xff] %vm84, %v1636
    %s1639 = scalar_lea.vmem %s0, 32
    %v1640 = vld [vmem:[%s1639] sm:$0xff]
    %v1642 = vsel %vm84, %v1636, 0
    %1644 = vmatprep.subr.mxu0 0.0
    %1645 = vmatpush1.msra.mxu0 %v71
    %1646 = vmatprep.subr.mxu0 0.0
    %1647 = vmatpush1.msra.mxu0 %v72
    %1648 = vmatprep.subr.mxu0 0.0
    %1649 = vmatpush1.msra.mxu0 %v73
    %1650 = vmatprep.subr.mxu0 0.0
    %1651 = vmatpush1.msra.mxu0 %v74
    %1652 = vmatprep.subr.mxu0 0.0
    %1653 = vmatpush1.msra.mxu0 0.0
    %1654 = vmatprep.subr.mxu0 0.0
    %1655 = vmatpush1.msra.mxu0 0.0
    %1656 = vmatprep.subr.mxu0 0.0
    %1657 = vmatpush1.msra.mxu0 0.0
    %1658 = vmatprep.subr.mxu0 0.0
    %1659 = vmatpush1.msra.mxu0 0.0
    %1660 = vmatprep.subr.mxu0 0.0
    %1661 = vmatpush1.msra.mxu0 0.0
    %1662 = vmatprep.subr.mxu0 0.0
    %1663 = vmatpush1.msra.mxu0 0.0
    %1664 = vmatprep.subr.mxu0 0.0
    %1665 = vmatpush1.msra.mxu0 0.0
    %1666 = vmatprep.subr.mxu0 0.0
    %1667 = vmatpush1.msra.mxu0 0.0
    %1668 = vmatprep.subr.mxu0 0.0
    %1669 = vmatpush1.msra.mxu0 0.0
    %1670 = vmatprep.subr.mxu0 0.0
    %1671 = vmatpush1.msra.mxu0 0.0
    %1672 = vmatprep.subr.mxu0 0.0
    %1673 = vmatpush1.msra.mxu0 0.0
    %1674 = vmatprep.subr.mxu0 0.0
    %1675 = vmatpush1.msra.mxu0 0.0
    %1676 = vmatprep.subr.mxu0 0.0
    %1677 = vmatpush1.msra.mxu0 0.0
    %1678 = vmatprep.subr.mxu0 0.0
    %1679 = vmatpush1.msra.mxu0 0.0
    %1680 = vmatprep.subr.mxu0 0.0
    %1681 = vmatpush1.msra.mxu0 0.0
    %1682 = vmatprep.subr.mxu0 0.0
    %1683 = vmatpush1.msra.mxu0 0.0
    %1684 = vmatprep.subr.mxu0 0.0
    %1685 = vmatpush1.msra.mxu0 0.0
    %1686 = vmatprep.subr.mxu0 0.0
    %1687 = vmatpush1.msra.mxu0 0.0
    %1688 = vmatprep.subr.mxu0 0.0
    %1689 = vmatpush1.msra.mxu0 0.0
    %1690 = vmatprep.subr.mxu0 0.0
    %1691 = vmatpush1.msra.mxu0 0.0
    %1692 = vmatprep.subr.mxu0 0.0
    %1693 = vmatpush1.msra.mxu0 0.0
    %1694 = vmatprep.subr.mxu0 0.0
    %1695 = vmatpush1.msra.mxu0 0.0
    %1696 = vmatprep.subr.mxu0 0.0
    %1697 = vmatpush1.msra.mxu0 0.0
    %1698 = vmatprep.subr.mxu0 0.0
    %1699 = vmatpush1.msra.mxu0 0.0
    %1700 = vmatprep.subr.mxu0 0.0
    %1701 = vmatpush1.msra.mxu0 0.0
    %1702 = vmatprep.subr.mxu0 0.0
    %1703 = vmatpush1.msra.mxu0 0.0
    %1704 = vmatprep.subr.mxu0 0.0
    %1705 = vmatpush1.msra.mxu0 0.0
    %1706 = vmatprep.subr.mxu0 0.0
    %1707 = vmatpush1.msra.mxu0 0.0
    %1708 = vmatprep.mubr.f32.mxu0 0.0
    %1709 = vmatmul.mubr.f32.gmra.mrb[0].mxu0 %v1642
    %v1710 = vpop.f32.mrb[0].mxu0
    %v1711 = vadd.f32 0.0, %v1710
    %v1712 = vpop.f32.mrb[0].mxu0
    %1713 = vdwg.mxu0
    %v1715 = vsel %vm158, %v1640, 0
    %1717 = vmatprep.subr.mxu0 0.0
    %1718 = vmatpush1.msra.mxu0 %v69
    %1719 = vmatprep.subr.mxu0 0.0
    %1720 = vmatpush1.msra.mxu0 %v70
    %1721 = vmatprep.subr.mxu0 0.0
    %1722 = vmatpush1.msra.mxu0 0.0
    %1723 = vmatprep.subr.mxu0 0.0
    %1724 = vmatpush1.msra.mxu0 0.0
    %1725 = vmatprep.subr.mxu0 0.0
    %1726 = vmatpush1.msra.mxu0 0.0
    %1727 = vmatprep.subr.mxu0 0.0
    %1728 = vmatpush1.msra.mxu0 0.0
    %1729 = vmatprep.subr.mxu0 0.0
    %1730 = vmatpush1.msra.mxu0 0.0
    %1731 = vmatprep.subr.mxu0 0.0
    %1732 = vmatpush1.msra.mxu0 0.0
    %1733 = vmatprep.subr.mxu0 0.0
    %1734 = vmatpush1.msra.mxu0 0.0
    %1735 = vmatprep.subr.mxu0 0.0
    %1736 = vmatpush1.msra.mxu0 0.0
    %1737 = vmatprep.subr.mxu0 0.0
    %1738 = vmatpush1.msra.mxu0 0.0
    %1739 = vmatprep.subr.mxu0 0.0
    %1740 = vmatpush1.msra.mxu0 0.0
    %1741 = vmatprep.subr.mxu0 0.0
    %1742 = vmatpush1.msra.mxu0 0.0
    %1743 = vmatprep.subr.mxu0 0.0
    %1744 = vmatpush1.msra.mxu0 0.0
    %1745 = vmatprep.subr.mxu0 0.0
    %1746 = vmatpush1.msra.mxu0 0.0
    %1747 = vmatprep.subr.mxu0 0.0
    %1748 = vmatpush1.msra.mxu0 0.0
    %1749 = vmatprep.subr.mxu0 0.0
    %1750 = vmatpush1.msra.mxu0 0.0
    %1751 = vmatprep.subr.mxu0 0.0
    %1752 = vmatpush1.msra.mxu0 0.0
    %1753 = vmatprep.subr.mxu0 0.0
    %1754 = vmatpush1.msra.mxu0 0.0
    %1755 = vmatprep.subr.mxu0 0.0
    %1756 = vmatpush1.msra.mxu0 0.0
    %1757 = vmatprep.subr.mxu0 0.0
    %1758 = vmatpush1.msra.mxu0 0.0
    %1759 = vmatprep.subr.mxu0 0.0
    %1760 = vmatpush1.msra.mxu0 0.0
    %1761 = vmatprep.subr.mxu0 0.0
    %1762 = vmatpush1.msra.mxu0 0.0
    %1763 = vmatprep.subr.mxu0 0.0
    %1764 = vmatpush1.msra.mxu0 0.0
    %1765 = vmatprep.subr.mxu0 0.0
    %1766 = vmatpush1.msra.mxu0 0.0
    %1767 = vmatprep.subr.mxu0 0.0
    %1768 = vmatpush1.msra.mxu0 0.0
    %1769 = vmatprep.subr.mxu0 0.0
    %1770 = vmatpush1.msra.mxu0 0.0
    %1771 = vmatprep.subr.mxu0 0.0
    %1772 = vmatpush1.msra.mxu0 0.0
    %1773 = vmatprep.subr.mxu0 0.0
    %1774 = vmatpush1.msra.mxu0 0.0
    %1775 = vmatprep.subr.mxu0 0.0
    %1776 = vmatpush1.msra.mxu0 0.0
    %1777 = vmatprep.subr.mxu0 0.0
    %1778 = vmatpush1.msra.mxu0 0.0
    %1779 = vmatprep.subr.mxu0 0.0
    %1780 = vmatpush1.msra.mxu0 0.0
    %1781 = vmatprep.mubr.f32.mxu0 0.0
    %1782 = vmatmul.mubr.f32.gmra.mrb[0].mxu0 %v1715
    %v1783 = vpop.f32.mrb[0].mxu0
    %v1784 = vadd.f32 %v1711, %v1783
    %v1785 = vpop.f32.mrb[0].mxu0
    %1786 = vdwg.mxu0
    %v1787 = vadd.f32 %v1784, %v80
    %v1788 = vsel %vm84, %v1787, -inf
    %1789 = vmax.xlane.f32.xlu0 %v1788
    %v1790 = vpop.xlane.xlu0 %1789
    %vm1791 = vcmp.ge.f32.partialorder %v1787, %v1790
    %v1792 = vsel %vm1791, 1.0, 0.0
    %v1793 = vsel %vm84, %v1792, 0.0
    %1794 = vadd.xlane.f32.xlu0 %v1793
    %v1795 = vpop.xlane.xlu0 %1794
    %vm1796 = vcmp.lt.f32.partialorder %v1795, 19.0
    %vm1797 = vcmp.lt.f32.partialorder %v1787, %v1790
    %v1798 = vsel %vm1797, %v1787, -inf
    %v1799 = vsel %vm84, %v1798, -inf
    %1800 = vmax.xlane.f32.xlu0 %v1799
    %v1801 = vpop.xlane.xlu0 %1800
    %vm1802 = vcmp.ge.f32.partialorder %v1787, %v1801
    %v1803 = vsel %vm1802, 1.0, 0.0
    %v1804 = vsel %vm84, %v1803, 0.0
    %1805 = vadd.xlane.f32.xlu0 %v1804
    %v1806 = vpop.xlane.xlu0 %1805
    %v1807 = vsel %vm1796, %v1801, %v1790
    %v1808 = vsel %vm1796, %v1806, %v1795
    %vm1809 = vcmp.lt.f32.partialorder %v1808, 19.0
    %vm1810 = vcmp.lt.f32.partialorder %v1787, %v1807
    %v1811 = vsel %vm1810, %v1787, -inf
    %v1812 = vsel %vm84, %v1811, -inf
    %1813 = vmax.xlane.f32.xlu0 %v1812
    %v1814 = vpop.xlane.xlu0 %1813
    %vm1815 = vcmp.ge.f32.partialorder %v1787, %v1814
    %v1816 = vsel %vm1815, 1.0, 0.0
    %v1817 = vsel %vm84, %v1816, 0.0
    %1818 = vadd.xlane.f32.xlu0 %v1817
    %v1819 = vpop.xlane.xlu0 %1818
    %v1820 = vsel %vm1809, %v1814, %v1807
    %v1821 = vsel %vm1809, %v1819, %v1808
    %vm1822 = vcmp.lt.f32.partialorder %v1821, 19.0
    %vm1823 = vcmp.lt.f32.partialorder %v1787, %v1820
    %v1824 = vsel %vm1823, %v1787, -inf
    %v1825 = vsel %vm84, %v1824, -inf
    %1826 = vmax.xlane.f32.xlu0 %v1825
    %v1827 = vpop.xlane.xlu0 %1826
    %vm1828 = vcmp.ge.f32.partialorder %v1787, %v1827
    %v1829 = vsel %vm1828, 1.0, 0.0
    %v1830 = vsel %vm84, %v1829, 0.0
    %1831 = vadd.xlane.f32.xlu0 %v1830
    %v1832 = vpop.xlane.xlu0 %1831
    %v1833 = vsel %vm1822, %v1827, %v1820
    %v1834 = vsel %vm1822, %v1832, %v1821
    %vm1835 = vcmp.lt.f32.partialorder %v1834, 19.0
    %vm1836 = vcmp.lt.f32.partialorder %v1787, %v1833
    %v1837 = vsel %vm1836, %v1787, -inf
    %v1838 = vsel %vm84, %v1837, -inf
    %1839 = vmax.xlane.f32.xlu0 %v1838
    %v1840 = vpop.xlane.xlu0 %1839
    %vm1841 = vcmp.ge.f32.partialorder %v1787, %v1840
    %v1842 = vsel %vm1841, 1.0, 0.0
    %v1843 = vsel %vm84, %v1842, 0.0
    %1844 = vadd.xlane.f32.xlu0 %v1843
    %v1845 = vpop.xlane.xlu0 %1844
    %v1846 = vsel %vm1835, %v1840, %v1833
    %v1847 = vsel %vm1835, %v1845, %v1834
    %vm1848 = vcmp.lt.f32.partialorder %v1847, 19.0
    %vm1849 = vcmp.lt.f32.partialorder %v1787, %v1846
    %v1850 = vsel %vm1849, %v1787, -inf
    %v1851 = vsel %vm84, %v1850, -inf
    %1852 = vmax.xlane.f32.xlu0 %v1851
    %v1853 = vpop.xlane.xlu0 %1852
    %vm1854 = vcmp.ge.f32.partialorder %v1787, %v1853
    %v1855 = vsel %vm1854, 1.0, 0.0
    %v1856 = vsel %vm84, %v1855, 0.0
    %1857 = vadd.xlane.f32.xlu0 %v1856
    %v1858 = vpop.xlane.xlu0 %1857
    %v1859 = vsel %vm1848, %v1853, %v1846
    %v1860 = vsel %vm1848, %v1858, %v1847
    %vm1861 = vcmp.lt.f32.partialorder %v1860, 19.0
    %vm1862 = vcmp.lt.f32.partialorder %v1787, %v1859
    %v1863 = vsel %vm1862, %v1787, -inf
    %v1864 = vsel %vm84, %v1863, -inf
    %1865 = vmax.xlane.f32.xlu0 %v1864
    %v1866 = vpop.xlane.xlu0 %1865
    %vm1867 = vcmp.ge.f32.partialorder %v1787, %v1866
    %v1868 = vsel %vm1867, 1.0, 0.0
    %v1869 = vsel %vm84, %v1868, 0.0
    %1870 = vadd.xlane.f32.xlu0 %v1869
    %v1871 = vpop.xlane.xlu0 %1870
    %v1872 = vsel %vm1861, %v1866, %v1859
    %v1873 = vsel %vm1861, %v1871, %v1860
    %vm1874 = vcmp.lt.f32.partialorder %v1873, 19.0
    %vm1875 = vcmp.lt.f32.partialorder %v1787, %v1872
    %v1876 = vsel %vm1875, %v1787, -inf
    %v1877 = vsel %vm84, %v1876, -inf
    %1878 = vmax.xlane.f32.xlu0 %v1877
    %v1879 = vpop.xlane.xlu0 %1878
    %vm1880 = vcmp.ge.f32.partialorder %v1787, %v1879
    %v1881 = vsel %vm1880, 1.0, 0.0
    %v1882 = vsel %vm84, %v1881, 0.0
    %1883 = vadd.xlane.f32.xlu0 %v1882
    %v1884 = vpop.xlane.xlu0 %1883
    %v1885 = vsel %vm1874, %v1879, %v1872
    %v1886 = vsel %vm1874, %v1884, %v1873
    %vm1887 = vcmp.lt.f32.partialorder %v1886, 19.0
    %vm1888 = vcmp.lt.f32.partialorder %v1787, %v1885
    %v1889 = vsel %vm1888, %v1787, -inf
    %v1890 = vsel %vm84, %v1889, -inf
    %1891 = vmax.xlane.f32.xlu0 %v1890
    %v1892 = vpop.xlane.xlu0 %1891
    %vm1893 = vcmp.ge.f32.partialorder %v1787, %v1892
    %v1894 = vsel %vm1893, 1.0, 0.0
    %v1895 = vsel %vm84, %v1894, 0.0
    %1896 = vadd.xlane.f32.xlu0 %v1895
    %v1897 = vpop.xlane.xlu0 %1896
    %v1898 = vsel %vm1887, %v1892, %v1885
    %v1899 = vsel %vm1887, %v1897, %v1886
    %vm1900 = vcmp.lt.f32.partialorder %v1899, 19.0
    %vm1901 = vcmp.lt.f32.partialorder %v1787, %v1898
    %v1902 = vsel %vm1901, %v1787, -inf
    %v1903 = vsel %vm84, %v1902, -inf
    %1904 = vmax.xlane.f32.xlu0 %v1903
    %v1905 = vpop.xlane.xlu0 %1904
    %vm1906 = vcmp.ge.f32.partialorder %v1787, %v1905
    %v1907 = vsel %vm1906, 1.0, 0.0
    %v1908 = vsel %vm84, %v1907, 0.0
    %1909 = vadd.xlane.f32.xlu0 %v1908
    %v1910 = vpop.xlane.xlu0 %1909
    %v1911 = vsel %vm1900, %v1905, %v1898
    %v1912 = vsel %vm1900, %v1910, %v1899
    %vm1913 = vcmp.lt.f32.partialorder %v1912, 19.0
    %vm1914 = vcmp.lt.f32.partialorder %v1787, %v1911
    %v1915 = vsel %vm1914, %v1787, -inf
    %v1916 = vsel %vm84, %v1915, -inf
    %1917 = vmax.xlane.f32.xlu0 %v1916
    %v1918 = vpop.xlane.xlu0 %1917
    %vm1919 = vcmp.ge.f32.partialorder %v1787, %v1918
    %v1920 = vsel %vm1919, 1.0, 0.0
    %v1921 = vsel %vm84, %v1920, 0.0
    %1922 = vadd.xlane.f32.xlu0 %v1921
    %v1923 = vpop.xlane.xlu0 %1922
    %v1924 = vsel %vm1913, %v1918, %v1911
    %v1925 = vsel %vm1913, %v1923, %v1912
    %vm1926 = vcmp.lt.f32.partialorder %v1925, 19.0
    %vm1927 = vcmp.lt.f32.partialorder %v1787, %v1924
    %v1928 = vsel %vm1927, %v1787, -inf
    %v1929 = vsel %vm84, %v1928, -inf
    %1930 = vmax.xlane.f32.xlu0 %v1929
    %v1931 = vpop.xlane.xlu0 %1930
    %vm1932 = vcmp.ge.f32.partialorder %v1787, %v1931
    %v1933 = vsel %vm1932, 1.0, 0.0
    %v1934 = vsel %vm84, %v1933, 0.0
    %1935 = vadd.xlane.f32.xlu0 %v1934
    %v1936 = vpop.xlane.xlu0 %1935
    %v1937 = vsel %vm1926, %v1931, %v1924
    %v1938 = vsel %vm1926, %v1936, %v1925
    %vm1939 = vcmp.lt.f32.partialorder %v1938, 19.0
    %vm1940 = vcmp.lt.f32.partialorder %v1787, %v1937
    %v1941 = vsel %vm1940, %v1787, -inf
    %v1942 = vsel %vm84, %v1941, -inf
    %1943 = vmax.xlane.f32.xlu0 %v1942
    %v1944 = vpop.xlane.xlu0 %1943
    %vm1945 = vcmp.ge.f32.partialorder %v1787, %v1944
    %v1946 = vsel %vm1945, 1.0, 0.0
    %v1947 = vsel %vm84, %v1946, 0.0
    %1948 = vadd.xlane.f32.xlu0 %v1947
    %v1949 = vpop.xlane.xlu0 %1948
    %v1950 = vsel %vm1939, %v1944, %v1937
    %v1951 = vsel %vm1939, %v1949, %v1938
    %vm1952 = vcmp.lt.f32.partialorder %v1951, 19.0
    %vm1953 = vcmp.lt.f32.partialorder %v1787, %v1950
    %v1954 = vsel %vm1953, %v1787, -inf
    %v1955 = vsel %vm84, %v1954, -inf
    %1956 = vmax.xlane.f32.xlu0 %v1955
    %v1957 = vpop.xlane.xlu0 %1956
    %vm1958 = vcmp.ge.f32.partialorder %v1787, %v1957
    %v1959 = vsel %vm1958, 1.0, 0.0
    %v1960 = vsel %vm84, %v1959, 0.0
    %1961 = vadd.xlane.f32.xlu0 %v1960
    %v1962 = vpop.xlane.xlu0 %1961
    %v1963 = vsel %vm1952, %v1957, %v1950
    %v1964 = vsel %vm1952, %v1962, %v1951
    %vm1965 = vcmp.lt.f32.partialorder %v1964, 19.0
    %vm1966 = vcmp.lt.f32.partialorder %v1787, %v1963
    %v1967 = vsel %vm1966, %v1787, -inf
    %v1968 = vsel %vm84, %v1967, -inf
    %1969 = vmax.xlane.f32.xlu0 %v1968
    %v1970 = vpop.xlane.xlu0 %1969
    %vm1971 = vcmp.ge.f32.partialorder %v1787, %v1970
    %v1972 = vsel %vm1971, 1.0, 0.0
    %v1973 = vsel %vm84, %v1972, 0.0
    %1974 = vadd.xlane.f32.xlu0 %v1973
    %v1975 = vpop.xlane.xlu0 %1974
    %v1976 = vsel %vm1965, %v1970, %v1963
    %v1977 = vsel %vm1965, %v1975, %v1964
    %vm1978 = vcmp.lt.f32.partialorder %v1977, 19.0
    %vm1979 = vcmp.lt.f32.partialorder %v1787, %v1976
    %v1980 = vsel %vm1979, %v1787, -inf
    %v1981 = vsel %vm84, %v1980, -inf
    %1982 = vmax.xlane.f32.xlu0 %v1981
    %v1983 = vpop.xlane.xlu0 %1982
    %vm1984 = vcmp.ge.f32.partialorder %v1787, %v1983
    %v1985 = vsel %vm1984, 1.0, 0.0
    %v1986 = vsel %vm84, %v1985, 0.0
    %1987 = vadd.xlane.f32.xlu0 %v1986
    %v1988 = vpop.xlane.xlu0 %1987
    %v1989 = vsel %vm1978, %v1983, %v1976
    %v1990 = vsel %vm1978, %v1988, %v1977
    %vm1991 = vcmp.lt.f32.partialorder %v1990, 19.0
    %vm1992 = vcmp.lt.f32.partialorder %v1787, %v1989
    %v1993 = vsel %vm1992, %v1787, -inf
    %v1994 = vsel %vm84, %v1993, -inf
    %1995 = vmax.xlane.f32.xlu0 %v1994
    %v1996 = vpop.xlane.xlu0 %1995
    %vm1997 = vcmp.ge.f32.partialorder %v1787, %v1996
    %v1998 = vsel %vm1997, 1.0, 0.0
    %v1999 = vsel %vm84, %v1998, 0.0
    %2000 = vadd.xlane.f32.xlu0 %v1999
    %v2001 = vpop.xlane.xlu0 %2000
    %v2002 = vsel %vm1991, %v1996, %v1989
    %v2003 = vsel %vm1991, %v2001, %v1990
    %vm2004 = vcmp.lt.f32.partialorder %v2003, 19.0
    %vm2005 = vcmp.lt.f32.partialorder %v1787, %v2002
    %v2006 = vsel %vm2005, %v1787, -inf
    %v2007 = vsel %vm84, %v2006, -inf
    %2008 = vmax.xlane.f32.xlu0 %v2007
    %v2009 = vpop.xlane.xlu0 %2008
    %vm2010 = vcmp.ge.f32.partialorder %v1787, %v2009
    %v2011 = vsel %vm2010, 1.0, 0.0
    %v2012 = vsel %vm84, %v2011, 0.0
    %2013 = vadd.xlane.f32.xlu0 %v2012
    %v2014 = vpop.xlane.xlu0 %2013
    %v2015 = vsel %vm2004, %v2009, %v2002
    %v2016 = vsel %vm2004, %v2014, %v2003
    %vm2017 = vcmp.lt.f32.partialorder %v2016, 19.0
    %vm2018 = vcmp.lt.f32.partialorder %v1787, %v2015
    %v2019 = vsel %vm2018, %v1787, -inf
    %v2020 = vsel %vm84, %v2019, -inf
    %2021 = vmax.xlane.f32.xlu0 %v2020
    %v2022 = vpop.xlane.xlu0 %2021
    %v2023 = vsel %vm2017, %v2022, %v2015
    %vm2024 = vcmp.ge.f32.partialorder %v1787, %v2023
    %v2025 = vsel %vm2024, %v1787, 0.0
    %s2026 = scalar_lea.vmem [#allocation9], 32
    %2027 = vst.msk [vmem:[%s2026] sm:$0xff] %vm84, %v2025
    %s2028 = scalar_lea.vmem %s0, 40
    %v2029 = vld [vmem:[%s2028] sm:$0xff]
    %v2031 = vsel %vm84, %v2025, 0
    %2033 = vmatprep.subr.mxu0 0.0
    %2034 = vmatpush1.msra.mxu0 %v71
    %2035 = vmatprep.subr.mxu0 0.0
    %2036 = vmatpush1.msra.mxu0 %v72
    %2037 = vmatprep.subr.mxu0 0.0
    %2038 = vmatpush1.msra.mxu0 %v73
    %2039 = vmatprep.subr.mxu0 0.0
    %2040 = vmatpush1.msra.mxu0 %v74
    %2041 = vmatprep.subr.mxu0 0.0
    %2042 = vmatpush1.msra.mxu0 0.0
    %2043 = vmatprep.subr.mxu0 0.0
    %2044 = vmatpush1.msra.mxu0 0.0
    %2045 = vmatprep.subr.mxu0 0.0
    %2046 = vmatpush1.msra.mxu0 0.0
    %2047 = vmatprep.subr.mxu0 0.0
    %2048 = vmatpush1.msra.mxu0 0.0
    %2049 = vmatprep.subr.mxu0 0.0
    %2050 = vmatpush1.msra.mxu0 0.0
    %2051 = vmatprep.subr.mxu0 0.0
    %2052 = vmatpush1.msra.mxu0 0.0
    %2053 = vmatprep.subr.mxu0 0.0
    %2054 = vmatpush1.msra.mxu0 0.0
    %2055 = vmatprep.subr.mxu0 0.0
    %2056 = vmatpush1.msra.mxu0 0.0
    %2057 = vmatprep.subr.mxu0 0.0
    %2058 = vmatpush1.msra.mxu0 0.0
    %2059 = vmatprep.subr.mxu0 0.0
    %2060 = vmatpush1.msra.mxu0 0.0
    %2061 = vmatprep.subr.mxu0 0.0
    %2062 = vmatpush1.msra.mxu0 0.0
    %2063 = vmatprep.subr.mxu0 0.0
    %2064 = vmatpush1.msra.mxu0 0.0
    %2065 = vmatprep.subr.mxu0 0.0
    %2066 = vmatpush1.msra.mxu0 0.0
    %2067 = vmatprep.subr.mxu0 0.0
    %2068 = vmatpush1.msra.mxu0 0.0
    %2069 = vmatprep.subr.mxu0 0.0
    %2070 = vmatpush1.msra.mxu0 0.0
    %2071 = vmatprep.subr.mxu0 0.0
    %2072 = vmatpush1.msra.mxu0 0.0
    %2073 = vmatprep.subr.mxu0 0.0
    %2074 = vmatpush1.msra.mxu0 0.0
    %2075 = vmatprep.subr.mxu0 0.0
    %2076 = vmatpush1.msra.mxu0 0.0
    %2077 = vmatprep.subr.mxu0 0.0
    %2078 = vmatpush1.msra.mxu0 0.0
    %2079 = vmatprep.subr.mxu0 0.0
    %2080 = vmatpush1.msra.mxu0 0.0
    %2081 = vmatprep.subr.mxu0 0.0
    %2082 = vmatpush1.msra.mxu0 0.0
    %2083 = vmatprep.subr.mxu0 0.0
    %2084 = vmatpush1.msra.mxu0 0.0
    %2085 = vmatprep.subr.mxu0 0.0
    %2086 = vmatpush1.msra.mxu0 0.0
    %2087 = vmatprep.subr.mxu0 0.0
    %2088 = vmatpush1.msra.mxu0 0.0
    %2089 = vmatprep.subr.mxu0 0.0
    %2090 = vmatpush1.msra.mxu0 0.0
    %2091 = vmatprep.subr.mxu0 0.0
    %2092 = vmatpush1.msra.mxu0 0.0
    %2093 = vmatprep.subr.mxu0 0.0
    %2094 = vmatpush1.msra.mxu0 0.0
    %2095 = vmatprep.subr.mxu0 0.0
    %2096 = vmatpush1.msra.mxu0 0.0
    %2097 = vmatprep.mubr.f32.mxu0 0.0
    %2098 = vmatmul.mubr.f32.gmra.mrb[0].mxu0 %v2031
    %v2099 = vpop.f32.mrb[0].mxu0
    %v2100 = vadd.f32 0.0, %v2099
    %v2101 = vpop.f32.mrb[0].mxu0
    %2102 = vdwg.mxu0
    %v2104 = vsel %vm158, %v2029, 0
    %2106 = vmatprep.subr.mxu0 0.0
    %2107 = vmatpush1.msra.mxu0 %v69
    %2108 = vmatprep.subr.mxu0 0.0
    %2109 = vmatpush1.msra.mxu0 %v70
    %2110 = vmatprep.subr.mxu0 0.0
    %2111 = vmatpush1.msra.mxu0 0.0
    %2112 = vmatprep.subr.mxu0 0.0
    %2113 = vmatpush1.msra.mxu0 0.0
    %2114 = vmatprep.subr.mxu0 0.0
    %2115 = vmatpush1.msra.mxu0 0.0
    %2116 = vmatprep.subr.mxu0 0.0
    %2117 = vmatpush1.msra.mxu0 0.0
    %2118 = vmatprep.subr.mxu0 0.0
    %2119 = vmatpush1.msra.mxu0 0.0
    %2120 = vmatprep.subr.mxu0 0.0
    %2121 = vmatpush1.msra.mxu0 0.0
    %2122 = vmatprep.subr.mxu0 0.0
    %2123 = vmatpush1.msra.mxu0 0.0
    %2124 = vmatprep.subr.mxu0 0.0
    %2125 = vmatpush1.msra.mxu0 0.0
    %2126 = vmatprep.subr.mxu0 0.0
    %2127 = vmatpush1.msra.mxu0 0.0
    %2128 = vmatprep.subr.mxu0 0.0
    %2129 = vmatpush1.msra.mxu0 0.0
    %2130 = vmatprep.subr.mxu0 0.0
    %2131 = vmatpush1.msra.mxu0 0.0
    %2132 = vmatprep.subr.mxu0 0.0
    %2133 = vmatpush1.msra.mxu0 0.0
    %2134 = vmatprep.subr.mxu0 0.0
    %2135 = vmatpush1.msra.mxu0 0.0
    %2136 = vmatprep.subr.mxu0 0.0
    %2137 = vmatpush1.msra.mxu0 0.0
    %2138 = vmatprep.subr.mxu0 0.0
    %2139 = vmatpush1.msra.mxu0 0.0
    %2140 = vmatprep.subr.mxu0 0.0
    %2141 = vmatpush1.msra.mxu0 0.0
    %2142 = vmatprep.subr.mxu0 0.0
    %2143 = vmatpush1.msra.mxu0 0.0
    %2144 = vmatprep.subr.mxu0 0.0
    %2145 = vmatpush1.msra.mxu0 0.0
    %2146 = vmatprep.subr.mxu0 0.0
    %2147 = vmatpush1.msra.mxu0 0.0
    %2148 = vmatprep.subr.mxu0 0.0
    %2149 = vmatpush1.msra.mxu0 0.0
    %2150 = vmatprep.subr.mxu0 0.0
    %2151 = vmatpush1.msra.mxu0 0.0
    %2152 = vmatprep.subr.mxu0 0.0
    %2153 = vmatpush1.msra.mxu0 0.0
    %2154 = vmatprep.subr.mxu0 0.0
    %2155 = vmatpush1.msra.mxu0 0.0
    %2156 = vmatprep.subr.mxu0 0.0
    %2157 = vmatpush1.msra.mxu0 0.0
    %2158 = vmatprep.subr.mxu0 0.0
    %2159 = vmatpush1.msra.mxu0 0.0
    %2160 = vmatprep.subr.mxu0 0.0
    %2161 = vmatpush1.msra.mxu0 0.0
    %2162 = vmatprep.subr.mxu0 0.0
    %2163 = vmatpush1.msra.mxu0 0.0
    %2164 = vmatprep.subr.mxu0 0.0
    %2165 = vmatpush1.msra.mxu0 0.0
    %2166 = vmatprep.subr.mxu0 0.0
    %2167 = vmatpush1.msra.mxu0 0.0
    %2168 = vmatprep.subr.mxu0 0.0
    %2169 = vmatpush1.msra.mxu0 0.0
    %2170 = vmatprep.mubr.f32.mxu0 0.0
    %2171 = vmatmul.mubr.f32.gmra.mrb[0].mxu0 %v2104
    %v2172 = vpop.f32.mrb[0].mxu0
    %v2173 = vadd.f32 %v2100, %v2172
    %v2174 = vpop.f32.mrb[0].mxu0
    %2175 = vdwg.mxu0
    %v2176 = vadd.f32 %v2173, %v80
    %v2177 = vsel %vm84, %v2176, -inf
    %2178 = vmax.xlane.f32.xlu0 %v2177
    %v2179 = vpop.xlane.xlu0 %2178
    %vm2180 = vcmp.ge.f32.partialorder %v2176, %v2179
    %v2181 = vsel %vm2180, 1.0, 0.0
    %v2182 = vsel %vm84, %v2181, 0.0
    %2183 = vadd.xlane.f32.xlu0 %v2182
    %v2184 = vpop.xlane.xlu0 %2183
    %vm2185 = vcmp.lt.f32.partialorder %v2184, 19.0
    %vm2186 = vcmp.lt.f32.partialorder %v2176, %v2179
    %v2187 = vsel %vm2186, %v2176, -inf
    %v2188 = vsel %vm84, %v2187, -inf
    %2189 = vmax.xlane.f32.xlu0 %v2188
    %v2190 = vpop.xlane.xlu0 %2189
    %vm2191 = vcmp.ge.f32.partialorder %v2176, %v2190
    %v2192 = vsel %vm2191, 1.0, 0.0
    %v2193 = vsel %vm84, %v2192, 0.0
    %2194 = vadd.xlane.f32.xlu0 %v2193
    %v2195 = vpop.xlane.xlu0 %2194
    %v2196 = vsel %vm2185, %v2190, %v2179
    %v2197 = vsel %vm2185, %v2195, %v2184
    %vm2198 = vcmp.lt.f32.partialorder %v2197, 19.0
    %vm2199 = vcmp.lt.f32.partialorder %v2176, %v2196
    %v2200 = vsel %vm2199, %v2176, -inf
    %v2201 = vsel %vm84, %v2200, -inf
    %2202 = vmax.xlane.f32.xlu0 %v2201
    %v2203 = vpop.xlane.xlu0 %2202
    %vm2204 = vcmp.ge.f32.partialorder %v2176, %v2203
    %v2205 = vsel %vm2204, 1.0, 0.0
    %v2206 = vsel %vm84, %v2205, 0.0
    %2207 = vadd.xlane.f32.xlu0 %v2206
    %v2208 = vpop.xlane.xlu0 %2207
    %v2209 = vsel %vm2198, %v2203, %v2196
    %v2210 = vsel %vm2198, %v2208, %v2197
    %vm2211 = vcmp.lt.f32.partialorder %v2210, 19.0
    %vm2212 = vcmp.lt.f32.partialorder %v2176, %v2209
    %v2213 = vsel %vm2212, %v2176, -inf
    %v2214 = vsel %vm84, %v2213, -inf
    %2215 = vmax.xlane.f32.xlu0 %v2214
    %v2216 = vpop.xlane.xlu0 %2215
    %vm2217 = vcmp.ge.f32.partialorder %v2176, %v2216
    %v2218 = vsel %vm2217, 1.0, 0.0
    %v2219 = vsel %vm84, %v2218, 0.0
    %2220 = vadd.xlane.f32.xlu0 %v2219
    %v2221 = vpop.xlane.xlu0 %2220
    %v2222 = vsel %vm2211, %v2216, %v2209
    %v2223 = vsel %vm2211, %v2221, %v2210
    %vm2224 = vcmp.lt.f32.partialorder %v2223, 19.0
    %vm2225 = vcmp.lt.f32.partialorder %v2176, %v2222
    %v2226 = vsel %vm2225, %v2176, -inf
    %v2227 = vsel %vm84, %v2226, -inf
    %2228 = vmax.xlane.f32.xlu0 %v2227
    %v2229 = vpop.xlane.xlu0 %2228
    %vm2230 = vcmp.ge.f32.partialorder %v2176, %v2229
    %v2231 = vsel %vm2230, 1.0, 0.0
    %v2232 = vsel %vm84, %v2231, 0.0
    %2233 = vadd.xlane.f32.xlu0 %v2232
    %v2234 = vpop.xlane.xlu0 %2233
    %v2235 = vsel %vm2224, %v2229, %v2222
    %v2236 = vsel %vm2224, %v2234, %v2223
    %vm2237 = vcmp.lt.f32.partialorder %v2236, 19.0
    %vm2238 = vcmp.lt.f32.partialorder %v2176, %v2235
    %v2239 = vsel %vm2238, %v2176, -inf
    %v2240 = vsel %vm84, %v2239, -inf
    %2241 = vmax.xlane.f32.xlu0 %v2240
    %v2242 = vpop.xlane.xlu0 %2241
    %vm2243 = vcmp.ge.f32.partialorder %v2176, %v2242
    %v2244 = vsel %vm2243, 1.0, 0.0
    %v2245 = vsel %vm84, %v2244, 0.0
    %2246 = vadd.xlane.f32.xlu0 %v2245
    %v2247 = vpop.xlane.xlu0 %2246
    %v2248 = vsel %vm2237, %v2242, %v2235
    %v2249 = vsel %vm2237, %v2247, %v2236
    %vm2250 = vcmp.lt.f32.partialorder %v2249, 19.0
    %vm2251 = vcmp.lt.f32.partialorder %v2176, %v2248
    %v2252 = vsel %vm2251, %v2176, -inf
    %v2253 = vsel %vm84, %v2252, -inf
    %2254 = vmax.xlane.f32.xlu0 %v2253
    %v2255 = vpop.xlane.xlu0 %2254
    %vm2256 = vcmp.ge.f32.partialorder %v2176, %v2255
    %v2257 = vsel %vm2256, 1.0, 0.0
    %v2258 = vsel %vm84, %v2257, 0.0
    %2259 = vadd.xlane.f32.xlu0 %v2258
    %v2260 = vpop.xlane.xlu0 %2259
    %v2261 = vsel %vm2250, %v2255, %v2248
    %v2262 = vsel %vm2250, %v2260, %v2249
    %vm2263 = vcmp.lt.f32.partialorder %v2262, 19.0
    %vm2264 = vcmp.lt.f32.partialorder %v2176, %v2261
    %v2265 = vsel %vm2264, %v2176, -inf
    %v2266 = vsel %vm84, %v2265, -inf
    %2267 = vmax.xlane.f32.xlu0 %v2266
    %v2268 = vpop.xlane.xlu0 %2267
    %vm2269 = vcmp.ge.f32.partialorder %v2176, %v2268
    %v2270 = vsel %vm2269, 1.0, 0.0
    %v2271 = vsel %vm84, %v2270, 0.0
    %2272 = vadd.xlane.f32.xlu0 %v2271
    %v2273 = vpop.xlane.xlu0 %2272
    %v2274 = vsel %vm2263, %v2268, %v2261
    %v2275 = vsel %vm2263, %v2273, %v2262
    %vm2276 = vcmp.lt.f32.partialorder %v2275, 19.0
    %vm2277 = vcmp.lt.f32.partialorder %v2176, %v2274
    %v2278 = vsel %vm2277, %v2176, -inf
    %v2279 = vsel %vm84, %v2278, -inf
    %2280 = vmax.xlane.f32.xlu0 %v2279
    %v2281 = vpop.xlane.xlu0 %2280
    %vm2282 = vcmp.ge.f32.partialorder %v2176, %v2281
    %v2283 = vsel %vm2282, 1.0, 0.0
    %v2284 = vsel %vm84, %v2283, 0.0
    %2285 = vadd.xlane.f32.xlu0 %v2284
    %v2286 = vpop.xlane.xlu0 %2285
    %v2287 = vsel %vm2276, %v2281, %v2274
    %v2288 = vsel %vm2276, %v2286, %v2275
    %vm2289 = vcmp.lt.f32.partialorder %v2288, 19.0
    %vm2290 = vcmp.lt.f32.partialorder %v2176, %v2287
    %v2291 = vsel %vm2290, %v2176, -inf
    %v2292 = vsel %vm84, %v2291, -inf
    %2293 = vmax.xlane.f32.xlu0 %v2292
    %v2294 = vpop.xlane.xlu0 %2293
    %vm2295 = vcmp.ge.f32.partialorder %v2176, %v2294
    %v2296 = vsel %vm2295, 1.0, 0.0
    %v2297 = vsel %vm84, %v2296, 0.0
    %2298 = vadd.xlane.f32.xlu0 %v2297
    %v2299 = vpop.xlane.xlu0 %2298
    %v2300 = vsel %vm2289, %v2294, %v2287
    %v2301 = vsel %vm2289, %v2299, %v2288
    %vm2302 = vcmp.lt.f32.partialorder %v2301, 19.0
    %vm2303 = vcmp.lt.f32.partialorder %v2176, %v2300
    %v2304 = vsel %vm2303, %v2176, -inf
    %v2305 = vsel %vm84, %v2304, -inf
    %2306 = vmax.xlane.f32.xlu0 %v2305
    %v2307 = vpop.xlane.xlu0 %2306
    %vm2308 = vcmp.ge.f32.partialorder %v2176, %v2307
    %v2309 = vsel %vm2308, 1.0, 0.0
    %v2310 = vsel %vm84, %v2309, 0.0
    %2311 = vadd.xlane.f32.xlu0 %v2310
    %v2312 = vpop.xlane.xlu0 %2311
    %v2313 = vsel %vm2302, %v2307, %v2300
    %v2314 = vsel %vm2302, %v2312, %v2301
    %vm2315 = vcmp.lt.f32.partialorder %v2314, 19.0
    %vm2316 = vcmp.lt.f32.partialorder %v2176, %v2313
    %v2317 = vsel %vm2316, %v2176, -inf
    %v2318 = vsel %vm84, %v2317, -inf
    %2319 = vmax.xlane.f32.xlu0 %v2318
    %v2320 = vpop.xlane.xlu0 %2319
    %vm2321 = vcmp.ge.f32.partialorder %v2176, %v2320
    %v2322 = vsel %vm2321, 1.0, 0.0
    %v2323 = vsel %vm84, %v2322, 0.0
    %2324 = vadd.xlane.f32.xlu0 %v2323
    %v2325 = vpop.xlane.xlu0 %2324
    %v2326 = vsel %vm2315, %v2320, %v2313
    %v2327 = vsel %vm2315, %v2325, %v2314
    %vm2328 = vcmp.lt.f32.partialorder %v2327, 19.0
    %vm2329 = vcmp.lt.f32.partialorder %v2176, %v2326
    %v2330 = vsel %vm2329, %v2176, -inf
    %v2331 = vsel %vm84, %v2330, -inf
    %2332 = vmax.xlane.f32.xlu0 %v2331
    %v2333 = vpop.xlane.xlu0 %2332
    %vm2334 = vcmp.ge.f32.partialorder %v2176, %v2333
    %v2335 = vsel %vm2334, 1.0, 0.0
    %v2336 = vsel %vm84, %v2335, 0.0
    %2337 = vadd.xlane.f32.xlu0 %v2336
    %v2338 = vpop.xlane.xlu0 %2337
    %v2339 = vsel %vm2328, %v2333, %v2326
    %v2340 = vsel %vm2328, %v2338, %v2327
    %vm2341 = vcmp.lt.f32.partialorder %v2340, 19.0
    %vm2342 = vcmp.lt.f32.partialorder %v2176, %v2339
    %v2343 = vsel %vm2342, %v2176, -inf
    %v2344 = vsel %vm84, %v2343, -inf
    %2345 = vmax.xlane.f32.xlu0 %v2344
    %v2346 = vpop.xlane.xlu0 %2345
    %vm2347 = vcmp.ge.f32.partialorder %v2176, %v2346
    %v2348 = vsel %vm2347, 1.0, 0.0
    %v2349 = vsel %vm84, %v2348, 0.0
    %2350 = vadd.xlane.f32.xlu0 %v2349
    %v2351 = vpop.xlane.xlu0 %2350
    %v2352 = vsel %vm2341, %v2346, %v2339
    %v2353 = vsel %vm2341, %v2351, %v2340
    %vm2354 = vcmp.lt.f32.partialorder %v2353, 19.0
    %vm2355 = vcmp.lt.f32.partialorder %v2176, %v2352
    %v2356 = vsel %vm2355, %v2176, -inf
    %v2357 = vsel %vm84, %v2356, -inf
    %2358 = vmax.xlane.f32.xlu0 %v2357
    %v2359 = vpop.xlane.xlu0 %2358
    %vm2360 = vcmp.ge.f32.partialorder %v2176, %v2359
    %v2361 = vsel %vm2360, 1.0, 0.0
    %v2362 = vsel %vm84, %v2361, 0.0
    %2363 = vadd.xlane.f32.xlu0 %v2362
    %v2364 = vpop.xlane.xlu0 %2363
    %v2365 = vsel %vm2354, %v2359, %v2352
    %v2366 = vsel %vm2354, %v2364, %v2353
    %vm2367 = vcmp.lt.f32.partialorder %v2366, 19.0
    %vm2368 = vcmp.lt.f32.partialorder %v2176, %v2365
    %v2369 = vsel %vm2368, %v2176, -inf
    %v2370 = vsel %vm84, %v2369, -inf
    %2371 = vmax.xlane.f32.xlu0 %v2370
    %v2372 = vpop.xlane.xlu0 %2371
    %vm2373 = vcmp.ge.f32.partialorder %v2176, %v2372
    %v2374 = vsel %vm2373, 1.0, 0.0
    %v2375 = vsel %vm84, %v2374, 0.0
    %2376 = vadd.xlane.f32.xlu0 %v2375
    %v2377 = vpop.xlane.xlu0 %2376
    %v2378 = vsel %vm2367, %v2372, %v2365
    %v2379 = vsel %vm2367, %v2377, %v2366
    %vm2380 = vcmp.lt.f32.partialorder %v2379, 19.0
    %vm2381 = vcmp.lt.f32.partialorder %v2176, %v2378
    %v2382 = vsel %vm2381, %v2176, -inf
    %v2383 = vsel %vm84, %v2382, -inf
    %2384 = vmax.xlane.f32.xlu0 %v2383
    %v2385 = vpop.xlane.xlu0 %2384
    %vm2386 = vcmp.ge.f32.partialorder %v2176, %v2385
    %v2387 = vsel %vm2386, 1.0, 0.0
    %v2388 = vsel %vm84, %v2387, 0.0
    %2389 = vadd.xlane.f32.xlu0 %v2388
    %v2390 = vpop.xlane.xlu0 %2389
    %v2391 = vsel %vm2380, %v2385, %v2378
    %v2392 = vsel %vm2380, %v2390, %v2379
    %vm2393 = vcmp.lt.f32.partialorder %v2392, 19.0
    %vm2394 = vcmp.lt.f32.partialorder %v2176, %v2391
    %v2395 = vsel %vm2394, %v2176, -inf
    %v2396 = vsel %vm84, %v2395, -inf
    %2397 = vmax.xlane.f32.xlu0 %v2396
    %v2398 = vpop.xlane.xlu0 %2397
    %vm2399 = vcmp.ge.f32.partialorder %v2176, %v2398
    %v2400 = vsel %vm2399, 1.0, 0.0
    %v2401 = vsel %vm84, %v2400, 0.0
    %2402 = vadd.xlane.f32.xlu0 %v2401
    %v2403 = vpop.xlane.xlu0 %2402
    %v2404 = vsel %vm2393, %v2398, %v2391
    %v2405 = vsel %vm2393, %v2403, %v2392
    %vm2406 = vcmp.lt.f32.partialorder %v2405, 19.0
    %vm2407 = vcmp.lt.f32.partialorder %v2176, %v2404
    %v2408 = vsel %vm2407, %v2176, -inf
    %v2409 = vsel %vm84, %v2408, -inf
    %2410 = vmax.xlane.f32.xlu0 %v2409
    %v2411 = vpop.xlane.xlu0 %2410
    %v2412 = vsel %vm2406, %v2411, %v2404
    %vm2413 = vcmp.ge.f32.partialorder %v2176, %v2412
    %v2414 = vsel %vm2413, %v2176, 0.0
    %s2415 = scalar_lea.vmem [#allocation9], 40
    %2416 = vst.msk [vmem:[%s2415] sm:$0xff] %vm84, %v2414
    %v2417 = vld [vmem:[#allocation9] sm:$0xff]
    %v2418 = vld [vmem:[#allocation9 + $0x8] sm:$0xff]
    %v2419 = vld [vmem:[#allocation9 + $0x10] sm:$0xff]
    %v2420 = vld [vmem:[#allocation9 + $0x18] sm:$0xff]
    %v2421 = vld [vmem:[#allocation9 + $0x20] sm:$0xff]
    %v2422 = vld [vmem:[#allocation9 + $0x28] sm:$0xff]
    %v2423 = vld [vmem:[%s5] sm:$0xff]
    %v2424 = vld [vmem:[%s5 + $0x8] sm:$0xff]
    %v2425 = vld [vmem:[%s5 + $0x10] sm:$0xff]
    %v2426 = vld [vmem:[%s5 + $0x18] sm:$0xff]
    %v2427 = vld [vmem:[%s6] sm:$0x1]
    %v2429 = vlaneseq
    %v2430 = vshrl.u32 %v2429, 7
    %v2431 = vsub.s32 0, %v2430
    %v2432 = vrot.slane %v2427, %v2431
    %v2435 = vsel %vm84, %v2417, 0
    %v2438 = vsel %vm84, %v2418, 0
    %v2441 = vsel %vm84, %v2419, 0
    %v2444 = vsel %vm84, %v2420, 0
    %v2447 = vsel %vm84, %v2421, 0
    %v2450 = vsel %vm84, %v2422, 0
    %2452 = vmatprep.subr.mxu0 0.0
    %2453 = vmatpush1.msra.mxu0 %v2423
    %2454 = vmatprep.subr.mxu0 0.0
    %2455 = vmatpush1.msra.mxu0 %v2424
    %2456 = vmatprep.subr.mxu0 0.0
    %2457 = vmatpush1.msra.mxu0 %v2425
    %2458 = vmatprep.subr.mxu0 0.0
    %2459 = vmatpush1.msra.mxu0 %v2426
    %2460 = vmatprep.subr.mxu0 0.0
    %2461 = vmatpush1.msra.mxu0 0.0
    %2462 = vmatprep.subr.mxu0 0.0
    %2463 = vmatpush1.msra.mxu0 0.0
    %2464 = vmatprep.subr.mxu0 0.0
    %2465 = vmatpush1.msra.mxu0 0.0
    %2466 = vmatprep.subr.mxu0 0.0
    %2467 = vmatpush1.msra.mxu0 0.0
    %2468 = vmatprep.subr.mxu0 0.0
    %2469 = vmatpush1.msra.mxu0 0.0
    %2470 = vmatprep.subr.mxu0 0.0
    %2471 = vmatpush1.msra.mxu0 0.0
    %2472 = vmatprep.subr.mxu0 0.0
    %2473 = vmatpush1.msra.mxu0 0.0
    %2474 = vmatprep.subr.mxu0 0.0
    %2475 = vmatpush1.msra.mxu0 0.0
    %2476 = vmatprep.subr.mxu0 0.0
    %2477 = vmatpush1.msra.mxu0 0.0
    %2478 = vmatprep.subr.mxu0 0.0
    %2479 = vmatpush1.msra.mxu0 0.0
    %2480 = vmatprep.subr.mxu0 0.0
    %2481 = vmatpush1.msra.mxu0 0.0
    %2482 = vmatprep.subr.mxu0 0.0
    %2483 = vmatpush1.msra.mxu0 0.0
    %2484 = vmatprep.subr.mxu0 0.0
    %2485 = vmatpush1.msra.mxu0 0.0
    %2486 = vmatprep.subr.mxu0 0.0
    %2487 = vmatpush1.msra.mxu0 0.0
    %2488 = vmatprep.subr.mxu0 0.0
    %2489 = vmatpush1.msra.mxu0 0.0
    %2490 = vmatprep.subr.mxu0 0.0
    %2491 = vmatpush1.msra.mxu0 0.0
    %2492 = vmatprep.subr.mxu0 0.0
    %2493 = vmatpush1.msra.mxu0 0.0
    %2494 = vmatprep.subr.mxu0 0.0
    %2495 = vmatpush1.msra.mxu0 0.0
    %2496 = vmatprep.subr.mxu0 0.0
    %2497 = vmatpush1.msra.mxu0 0.0
    %2498 = vmatprep.subr.mxu0 0.0
    %2499 = vmatpush1.msra.mxu0 0.0
    %2500 = vmatprep.subr.mxu0 0.0
    %2501 = vmatpush1.msra.mxu0 0.0
    %2502 = vmatprep.subr.mxu0 0.0
    %2503 = vmatpush1.msra.mxu0 0.0
    %2504 = vmatprep.subr.mxu0 0.0
    %2505 = vmatpush1.msra.mxu0 0.0
    %2506 = vmatprep.subr.mxu0 0.0
    %2507 = vmatpush1.msra.mxu0 0.0
    %2508 = vmatprep.subr.mxu0 0.0
    %2509 = vmatpush1.msra.mxu0 0.0
    %2510 = vmatprep.subr.mxu0 0.0
    %2511 = vmatpush1.msra.mxu0 0.0
    %2512 = vmatprep.subr.mxu0 0.0
    %2513 = vmatpush1.msra.mxu0 0.0
    %2514 = vmatprep.subr.mxu0 0.0
    %2515 = vmatpush1.msra.mxu0 0.0
    %2516 = vmatprep.mubr.f32.mxu0 0.0
    %2517 = vmatmul.mubr.f32.gmra.mrb[0].mxu0 %v2435
    %v2518 = vpop.f32.mrb[0].mxu0
    %v2519 = vadd.f32 %v2432, %v2518
    %v2520 = vpop.f32.mrb[0].mxu0
    %2521 = vmatprep.mubr.f32.mxu0 0.0
    %2522 = vmatmul.mubr.f32.gmra.mrb[0].mxu0 %v2438
    %v2523 = vpop.f32.mrb[0].mxu0
    %v2524 = vadd.f32 %v2432, %v2523
    %v2525 = vpop.f32.mrb[0].mxu0
    %2526 = vmatprep.mubr.f32.mxu0 0.0
    %2527 = vmatmul.mubr.f32.gmra.mrb[0].mxu0 %v2441
    %v2528 = vpop.f32.mrb[0].mxu0
    %v2529 = vadd.f32 %v2432, %v2528
    %v2530 = vpop.f32.mrb[0].mxu0
    %2531 = vmatprep.mubr.f32.mxu0 0.0
    %2532 = vmatmul.mubr.f32.gmra.mrb[0].mxu0 %v2444
    %v2533 = vpop.f32.mrb[0].mxu0
    %v2534 = vadd.f32 %v2432, %v2533
    %v2535 = vpop.f32.mrb[0].mxu0
    %2536 = vmatprep.mubr.f32.mxu0 0.0
    %2537 = vmatmul.mubr.f32.gmra.mrb[0].mxu0 %v2447
    %v2538 = vpop.f32.mrb[0].mxu0
    %v2539 = vadd.f32 %v2432, %v2538
    %v2540 = vpop.f32.mrb[0].mxu0
    %2541 = vmatprep.mubr.f32.mxu0 0.0
    %2542 = vmatmul.mubr.f32.gmra.mrb[0].mxu0 %v2450
    %v2543 = vpop.f32.mrb[0].mxu0
    %v2544 = vadd.f32 %v2432, %v2543
    %v2545 = vpop.f32.mrb[0].mxu0
    %2546 = vdwg.mxu0
    %2547 = vst.msk [vmem:[#allocation8] sm:$0xff] %vm158, %v2519
    %2548 = vst.msk [vmem:[#allocation8 + $0x8] sm:$0xff] %vm158, %v2524
    %2549 = vst.msk [vmem:[#allocation8 + $0x10] sm:$0xff] %vm158, %v2529
    %2550 = vst.msk [vmem:[#allocation8 + $0x18] sm:$0xff] %vm158, %v2534
    %2551 = vst.msk [vmem:[#allocation8 + $0x20] sm:$0xff] %vm158, %v2539
    %2552 = vst.msk [vmem:[#allocation8 + $0x28] sm:$0xff] %vm158, %v2544
    // Predicated region
    $region42: #{recurrent_cell_forward_seq.1} parent=1 // pred_check
      _
    $region43: #{recurrent_cell_forward_seq.1} parent=1 // pred_check_branch
      %2554 = sbr.rel (0) target = $region45
    $region44: #{recurrent_cell_forward_seq.1} parent=1 // pred_region
      %s2556 = ssub.s32 768, 768
      %2557 = vsyncadd [#allocation4], %s2556
      %s2558 = sshll.u32 [#allocation8], 4
      %s2559 = int_to_ptr.vmem [resolvable:$true] %s2558
      %2564 = dma.vmem_to_hbm [thread:$0]  %s2559, 768, %s7, [#allocation4], 128, 128, 8
    $region45: #{recurrent_cell_forward_seq.1} parent=1 // pred_fallthru
      _
    // Predicated region
    $region46: #{recurrent_cell_forward_seq.1} parent=1 // pred_check
      _
    $region47: #{recurrent_cell_forward_seq.1} parent=1 // pred_check_branch
      %2566 = sbr.rel (0) target = $region49
    $region48: #{recurrent_cell_forward_seq.1} parent=1 // pred_region
      %s2568 = ssub.s32 768, 768
      %2569 = vsyncadd [#allocation10], %s2568
      %s2570 = sshll.u32 [#allocation9], 4
      %s2571 = int_to_ptr.vmem [resolvable:$true] %s2570
      %2576 = dma.vmem_to_hbm [thread:$0]  %s2571, 768, %s8, [#allocation10], 128, 128, 8
    $region49: #{recurrent_cell_forward_seq.1} parent=1 // pred_fallthru
      _
    // Predicated region
    $region50: #{recurrent_cell_forward_seq.1} parent=1 // pred_check
      _
    $region51: #{recurrent_cell_forward_seq.1} parent=1 // pred_check_branch
      %2578 = sbr.rel (0) target = $region53
    $region52: #{recurrent_cell_forward_seq.1} parent=1 // pred_region
      %2579 = dma.done [#allocation4], 768
    $region53: #{recurrent_cell_forward_seq.1} parent=1 // pred_fallthru
      _
    // Predicated region
    $region54: #{recurrent_cell_forward_seq.1} parent=1 // pred_check
      _
    $region55: #{recurrent_cell_forward_seq.1} parent=1 // pred_check_branch
      %2581 = sbr.rel (0) target = $region57
    $region56: #{recurrent_cell_forward_seq.1} parent=1 // pred_region
      %2582 = dma.done [#allocation10], 768
    $region57: #{recurrent_cell_forward_seq.1} parent=1 // pred_fallthru
      _
    %2583 = vsyncpa [#allocation3], 1
    %2584 = vsyncpa [#allocation6], 1
    %2585 = vsyncpa [#allocation4], 1
    %2586 = vsyncpa [#allocation10], 1

</llo_original>
